<compile_context>
chip_gen: v7x
topology: tpu7x:2x2x1
jax: 0.10.0
libtpu: 0.0.40
codegen_flags: <defaults>
</compile_context>

<pallas_src>
import functools

import jax
import jax.numpy as jnp
from jax.experimental import pallas as pl
from jax.experimental.pallas import tpu as pltpu

KSIZE = 3          # every conv in FilterNet is 3x3, padding=1
PAD = 1
FILTERS = 32
BN_EPS = 1e-5


# -----------------------------------------------------------------------------
# Pallas kernels
# -----------------------------------------------------------------------------
def _conv3x3_bn_prelu_kernel(x_ref, w_ref, b_ref, alpha_ref, o_ref):
    """Fused 3x3 conv (9 shifted MXU matmuls) + folded-BN bias + PReLU.

    x_ref:     (1, TH+2, W+2, Cin)  bf16  padded input row tile (1-row/col halo)
    w_ref:     (9, Cin, Cout)       bf16  tap-major conv weights, BN scale folded in
    b_ref:     (1, Cout)            f32   folded conv-bias + BN shift
    alpha_ref: (1,)                 f32   PReLU slope (SMEM scalar)
    o_ref:     (1, TH*W, Cout)      f32
    """
    th = x_ref.shape[1] - 2
    w_img = x_ref.shape[2] - 2
    cin = x_ref.shape[3]
    cout = w_ref.shape[2]
    thw = th * w_img

    # Unpack once to f32 so the 9 shifted slices / reshapes stay on the plain
    # (8,128) layout; patches are re-packed to bf16 right before the MXU.
    x = x_ref[0].astype(jnp.float32)                       # (TH+2, W+2, Cin)

    acc = jnp.zeros((thw, cout), jnp.float32)
    for t in range(KSIZE * KSIZE):
        di, dj = t // KSIZE, t % KSIZE
        patch = x[di:di + th, dj:dj + w_img, :].reshape(thw, cin)
        acc = acc + jnp.dot(patch.astype(jnp.bfloat16), w_ref[t],
                            preferred_element_type=jnp.float32)

    y = acc + b_ref[...]                                   # folded BN bias (f32)
    a = alpha_ref[0]
    y = jnp.where(y >= 0.0, y, a * y)                      # PReLU
    o_ref[0] = y


def _outk_softmax_filter_kernel(f_ref, p_ref, w_ref, b_ref, o_ref):
    """Fused out_k conv -> Softmax(channel) -> * local patches -> channel sum.

    f_ref: (1, TH+2, W+2, 2*FILTERS) bf16  padded concat(init, conv05) row tile
    p_ref: (1, TH+2, W+2, C)         f32   padded original input row tile (patches)
    w_ref: (9, 2*FILTERS, C*9)       bf16  out_k weights, columns in (t*C + c) order
    b_ref: (1, C*9)                  f32   out_k bias, same permutation
    o_ref: (1, TH*W, 1)              f32
    """
    th = f_ref.shape[1] - 2
    w_img = f_ref.shape[2] - 2
    cin = f_ref.shape[3]
    c = p_ref.shape[3]
    ckk = w_ref.shape[2]
    thw = th * w_img

    f = f_ref[0].astype(jnp.float32)                       # (TH+2, W+2, 2F)
    xp = p_ref[0]                                          # (TH+2, W+2, C) f32

    # out_k conv as 9 shifted matmuls (logits stay in VMEM / registers).
    logits = jnp.zeros((thw, ckk), jnp.float32)
    for t in range(KSIZE * KSIZE):
        di, dj = t // KSIZE, t % KSIZE
        fp = f[di:di + th, dj:dj + w_img, :].reshape(thw, cin)
        logits = logits + jnp.dot(fp.astype(jnp.bfloat16), w_ref[t],
                                  preferred_element_type=jnp.float32)
    logits = logits + b_ref[...]

    # Stable softmax fused with the patch product:
    #   out = sum_n softmax(logits)_n * patch_n
    #       = (sum_n e_n * patch_n) * reciprocal(sum_n e_n)
    m = jnp.max(logits, axis=-1, keepdims=True)
    e = jnp.exp(logits - m)                                # (THW, CKK) f32
    den = jnp.sum(e, axis=-1, keepdims=True)               # (THW, 1)
    num = jnp.zeros_like(den)
    for t in range(KSIZE * KSIZE):
        di, dj = t // KSIZE, t % KSIZE
        patch_c = xp[di:di + th, dj:dj + w_img, :].reshape(thw, c)   # (THW, C)
        num = num + jnp.sum(e[:, t * c:(t + 1) * c] * patch_c,
                            axis=-1, keepdims=True)
    # Single per-row reciprocal on the EUP instead of THW x CKK divides.
    o_ref[0] = num * pl.reciprocal(den, approx=True)


# -----------------------------------------------------------------------------
# Host-side layout plumbing
# -----------------------------------------------------------------------------
def _pick_tile_rows(h, requested):
    th = max(1, min(requested, h))
    while h % th:
        th -= 1
    return th


def _row_tiles(x_nhwc, th, dtype):
    """Zero-pad H and W by 1 and split H into tiles of `th` output rows with a
    1-row halo on each side:  (B, H, W, C) -> (B * H//th, th+2, W+2, C)."""
    B, H, W, C = x_nhwc.shape
    n_h = H // th
    xp = jnp.pad(x_nhwc, ((0, 0), (PAD, PAD), (PAD, PAD), (0, 0)))
    tiles = jnp.stack([xp[:, h * th:h * th + th + 2] for h in range(n_h)], axis=1)
    return tiles.reshape(B * n_h, th + 2, W + 2 * PAD, C).astype(dtype)


def conv3x3_bn_prelu(x_nhwc, layer, th):
    """One FilterNet block: Conv2d(3x3, pad=1) + folded BN + PReLU."""
    B, H, W, _ = x_nhwc.shape
    cout = layer["w"].shape[2]
    n_h = H // th
    wp = W + 2 * PAD
    tiles = _row_tiles(x_nhwc, th, jnp.bfloat16)            # (B*nH, th+2, W+2, Cin)
    cin = tiles.shape[3]

    y = pl.pallas_call(
        _conv3x3_bn_prelu_kernel,
        out_shape=jax.ShapeDtypeStruct((B * n_h, th * W, cout), jnp.float32),
        grid_spec=pltpu.PrefetchScalarGridSpec(
            num_scalar_prefetch=0,
            grid=(B * n_h,),
            in_specs=[
                pl.BlockSpec((1, th + 2, wp, cin), lambda i: (i, 0, 0, 0)),
                pl.BlockSpec((KSIZE * KSIZE, cin, cout), lambda i: (0, 0, 0)),
                pl.BlockSpec((1, cout), lambda i: (0, 0)),
                pl.BlockSpec(memory_space=pltpu.MemorySpace.SMEM),
            ],
            out_specs=pl.BlockSpec((1, th * W, cout), lambda i: (i, 0, 0)),
        ),
        compiler_params=pltpu.CompilerParams(
            dimension_semantics=("parallel",)),
    )(tiles, layer["w"], layer["bias"], layer["alpha"])
    return y.reshape(B, H, W, cout)


def filter_net_features(x_nhwc, params, th):
    """FilterNet.forward up to (but not including) out_k / softmax."""
    init = conv3x3_bn_prelu(x_nhwc, params["init"], th)
    c1 = conv3x3_bn_prelu(init, params["conv01"], th)
    c2 = conv3x3_bn_prelu(c1, params["conv02"], th)
    c3 = conv3x3_bn_prelu(c2, params["conv03"], th)
    c4 = conv3x3_bn_prelu(jnp.concatenate([c2, c3], axis=-1), params["conv04"], th)
    c5 = conv3x3_bn_prelu(jnp.concatenate([c1, c4], axis=-1), params["conv05"], th)
    return jnp.concatenate([init, c5], axis=-1)             # (B, H, W, 2*FILTERS)


def local_filter_operation(x_nchw, params, kernel=3, padding=1, tile_rows=8):
    """Forward pass of Local_Filter_Operation.  Input NCHW, output (B, 1, H, W)."""
    assert kernel == KSIZE and padding == PAD, "only kernel=3 / padding=1 supported"
    B, C, H, W = x_nchw.shape
    th = _pick_tile_rows(H, tile_rows)
    n_h = H // th
    wp = W + 2 * PAD

    x_nhwc = jnp.transpose(x_nchw, (0, 2, 3, 1))
    feats = filter_net_features(x_nhwc, params, th)         # (B, H, W, 2*FILTERS)

    f_tiles = _row_tiles(feats, th, jnp.bfloat16)           # (B*nH, th+2, W+2, 2F)
    p_tiles = _row_tiles(x_nhwc, th, jnp.float32)           # (B*nH, th+2, W+2, C)

    wk, bk = params["out_k"]["w"], params["out_k"]["bias"]
    cin = f_tiles.shape[3]
    ckk = wk.shape[2]

    out = pl.pallas_call(
        _outk_softmax_filter_kernel,
        out_shape=jax.ShapeDtypeStruct((B * n_h, th * W, 1), jnp.float32),
        grid_spec=pltpu.PrefetchScalarGridSpec(
            num_scalar_prefetch=0,
            grid=(B * n_h,),
            in_specs=[
                pl.BlockSpec((1, th + 2, wp, cin), lambda i: (i, 0, 0, 0)),
                pl.BlockSpec((1, th + 2, wp, C), lambda i: (i, 0, 0, 0)),
                pl.BlockSpec((KSIZE * KSIZE, cin, ckk), lambda i: (0, 0, 0)),
                pl.BlockSpec((1, ckk), lambda i: (0, 0)),
            ],
            out_specs=pl.BlockSpec((1, th * W, 1), lambda i: (i, 0, 0)),
        ),
        compiler_params=pltpu.CompilerParams(
            dimension_semantics=("parallel",)),
    )(f_tiles, p_tiles, wk, bk)

    # (B*nH, th*W, 1) -> (B, 1, H, W) to match torch's sum(dim=1).unsqueeze(1)
    return out.reshape(B, H, W)[:, None, :, :]


# -----------------------------------------------------------------------------
# Deterministic parameter initialization (shapes from FilterNet.__init__)
# -----------------------------------------------------------------------------
def _conv_block_params(key, cin, cout):
    kw, kb, kg, kbt, km, kv = jax.random.split(key, 6)
    fan_in = cin * KSIZE * KSIZE
    bound = float(fan_in) ** -0.5
    # w[t, ci, co] corresponds to torch weight[co, ci, i, j] with t = i*3 + j.
    w = jax.random.uniform(kw, (KSIZE * KSIZE, cin, cout), jnp.float32, -bound, bound)
    conv_b = jax.random.uniform(kb, (cout,), jnp.float32, -bound, bound)
    gamma = jax.random.uniform(kg, (cout,), jnp.float32, 0.8, 1.2)
    beta = jax.random.uniform(kbt, (cout,), jnp.float32, -0.1, 0.1)
    r_mean = jax.random.uniform(km, (cout,), jnp.float32, -0.1, 0.1)
    r_var = jax.random.uniform(kv, (cout,), jnp.float32, 0.5, 1.5)
    scale = gamma / jnp.sqrt(r_var + BN_EPS)                 # eval-mode BN fold
    w_folded = (w * scale[None, None, :]).astype(jnp.bfloat16)
    bias = ((conv_b - r_mean) * scale + beta).reshape(1, cout)
    alpha = jnp.full((1,), 0.25, jnp.float32)                # nn.PReLU() default
    return {"w": w_folded, "bias": bias, "alpha": alpha}


def _out_k_params(key, cin, channels, kernel):
    kw, kb = jax.random.split(key, 2)
    kk = kernel * kernel
    ckk = channels * kk
    fan_in = cin * KSIZE * KSIZE
    bound = float(fan_in) ** -0.5
    # torch output-channel ordering is o = c*k*k + (i*k + j)
    w = jax.random.uniform(kw, (KSIZE * KSIZE, cin, ckk), jnp.float32, -bound, bound)
    b = jax.random.uniform(kb, (ckk,), jnp.float32, -bound, bound)
    # Permute output channels to (t*C + c) so they line up with the in-kernel patch
    # ordering; softmax + product + channel-sum is invariant under this permutation.
    perm = jnp.asarray([(n % channels) * kk + (n // channels) for n in range(ckk)],
                       jnp.int32)
    w = w[:, :, perm].astype(jnp.bfloat16)
    b = b[perm].reshape(1, ckk)
    return {"w": w, "bias": b}


def make_params(key, channels, kernel=3):
    keys = jax.random.split(key, 7)
    return {
        "init":   _conv_block_params(keys[0], channels, FILTERS),
        "conv01": _conv_block_params(keys[1], FILTERS, FILTERS),
        "conv02": _conv_block_params(keys[2], FILTERS, FILTERS),
        "conv03": _conv_block_params(keys[3], FILTERS, FILTERS),
        "conv04": _conv_block_params(keys[4], 2 * FILTERS, FILTERS),
        "conv05": _conv_block_params(keys[5], 2 * FILTERS, FILTERS),
        "out_k":  _out_k_params(keys[6], 2 * FILTERS, channels, kernel),
    }


# -----------------------------------------------------------------------------
if __name__ == "__main__":
    B, C, H, W = 2, 4, 16, 16

    key = jax.random.PRNGKey(0)
    kx, kp = jax.random.split(key)
    x = jax.random.normal(kx, (B, C, H, W), jnp.float32)     # NCHW like torch
    params = make_params(kp, C, KSIZE)

    fwd = jax.jit(functools.partial(local_filter_operation,
                                    kernel=3, padding=1, tile_rows=8))
    out = jax.block_until_ready(fwd(x, params))

    assert out.shape == (B, 1, H, W), out.shape
    assert bool(jnp.all(jnp.isfinite(out)))
    print("KERNEL_OK")
</pallas_src>

<mosaic_0001>
module attributes {stable_mosaic.version = 11 : i64} {
  func.func @_conv3x3_bn_prelu_kernel(%arg0: i32, %arg1: memref<1x10x18x4xbf16, #tpu.memory_space<vmem>>, %arg2: memref<9x4x32xbf16, #tpu.memory_space<vmem>>, %arg3: memref<1x32xf32, #tpu.memory_space<vmem>>, %arg4: memref<1xf32, #tpu.memory_space<smem>>, %arg5: memref<1x128x32xf32, #tpu.memory_space<vmem>>) attributes {dimension_semantics = [#tpu.dimension_semantics<parallel>], iteration_bounds = array<i64: 4>, scalar_prefetch = 0 : i64, scratch_operands = 0 : i64, tpu.core_type = #tpu.core_type<tc>, window_params = [{transform_indices = @transform_0, window_bounds = array<i64: 1, 10, 18, 4>}, {pipeline_mode = #tpu.pipeline_mode<synchronous>, transform_indices = @transform_1, window_bounds = array<i64: 9, 4, 32>}, {pipeline_mode = #tpu.pipeline_mode<synchronous>, transform_indices = @transform_2, window_bounds = array<i64: 1, 32>}, {transform_indices = @transform_3, window_bounds = array<i64: 1>}, {transform_indices = @transform_4, window_bounds = array<i64: 1, 128, 32>}]} {
    %c0 = arith.constant 0 : index
    %c0_0 = arith.constant 0 : index
    %c0_1 = arith.constant 0 : index
    %c0_2 = arith.constant 0 : index
    %0 = vector.load %arg1[%c0, %c0_0, %c0_1, %c0_2] : memref<1x10x18x4xbf16, #tpu.memory_space<vmem>>, vector<1x10x18x4xbf16>
    %1 = vector.shape_cast %0 : vector<1x10x18x4xbf16> to vector<10x18x4xbf16>
    %2 = arith.extf %1 : vector<10x18x4xbf16> to vector<10x18x4xf32>
    %cst = arith.constant 0.000000e+00 : f32
    %3 = vector.broadcast %cst : f32 to vector<128x32xf32>
    %4 = vector.extract_strided_slice %2 {offsets = [0, 0, 0], sizes = [8, 16, 4], strides = [1, 1, 1]} : vector<10x18x4xf32> to vector<8x16x4xf32>
    %5 = vector.shape_cast %4 : vector<8x16x4xf32> to vector<128x4xf32>
    %6 = arith.truncf %5 : vector<128x4xf32> to vector<128x4xbf16>
    %c0_3 = arith.constant 0 : index
    %c0_4 = arith.constant 0 : index
    %c0_5 = arith.constant 0 : index
    %7 = vector.load %arg2[%c0_3, %c0_4, %c0_5] : memref<9x4x32xbf16, #tpu.memory_space<vmem>>, vector<1x4x32xbf16>
    %8 = vector.shape_cast %7 : vector<1x4x32xbf16> to vector<4x32xbf16>
    %cst_6 = arith.constant dense<0.000000e+00> : vector<128x32xf32>
    %9 = tpu.matmul %6, %8, %cst_6 {dimension_numbers = #tpu.dot_dimension_numbers<[1], [0], [0], [1], [0, 0, 1, 1], [], []>} : vector<128x4xbf16>, vector<4x32xbf16>, vector<128x32xf32> -> vector<128x32xf32>
    %10 = arith.addf %3, %9 : vector<128x32xf32>
    %11 = vector.extract_strided_slice %2 {offsets = [0, 1, 0], sizes = [8, 16, 4], strides = [1, 1, 1]} : vector<10x18x4xf32> to vector<8x16x4xf32>
    %12 = vector.shape_cast %11 : vector<8x16x4xf32> to vector<128x4xf32>
    %13 = arith.truncf %12 : vector<128x4xf32> to vector<128x4xbf16>
    %c1 = arith.constant 1 : index
    %c0_7 = arith.constant 0 : index
    %c0_8 = arith.constant 0 : index
    %14 = vector.load %arg2[%c1, %c0_7, %c0_8] : memref<9x4x32xbf16, #tpu.memory_space<vmem>>, vector<1x4x32xbf16>
    %15 = vector.shape_cast %14 : vector<1x4x32xbf16> to vector<4x32xbf16>
    %cst_9 = arith.constant dense<0.000000e+00> : vector<128x32xf32>
    %16 = tpu.matmul %13, %15, %cst_9 {dimension_numbers = #tpu.dot_dimension_numbers<[1], [0], [0], [1], [0, 0, 1, 1], [], []>} : vector<128x4xbf16>, vector<4x32xbf16>, vector<128x32xf32> -> vector<128x32xf32>
    %17 = arith.addf %10, %16 : vector<128x32xf32>
    %18 = vector.extract_strided_slice %2 {offsets = [0, 2, 0], sizes = [8, 16, 4], strides = [1, 1, 1]} : vector<10x18x4xf32> to vector<8x16x4xf32>
    %19 = vector.shape_cast %18 : vector<8x16x4xf32> to vector<128x4xf32>
    %20 = arith.truncf %19 : vector<128x4xf32> to vector<128x4xbf16>
    %c2 = arith.constant 2 : index
    %c0_10 = arith.constant 0 : index
    %c0_11 = arith.constant 0 : index
    %21 = vector.load %arg2[%c2, %c0_10, %c0_11] : memref<9x4x32xbf16, #tpu.memory_space<vmem>>, vector<1x4x32xbf16>
    %22 = vector.shape_cast %21 : vector<1x4x32xbf16> to vector<4x32xbf16>
    %cst_12 = arith.constant dense<0.000000e+00> : vector<128x32xf32>
    %23 = tpu.matmul %20, %22, %cst_12 {dimension_numbers = #tpu.dot_dimension_numbers<[1], [0], [0], [1], [0, 0, 1, 1], [], []>} : vector<128x4xbf16>, vector<4x32xbf16>, vector<128x32xf32> -> vector<128x32xf32>
    %24 = arith.addf %17, %23 : vector<128x32xf32>
    %25 = vector.extract_strided_slice %2 {offsets = [1, 0, 0], sizes = [8, 16, 4], strides = [1, 1, 1]} : vector<10x18x4xf32> to vector<8x16x4xf32>
    %26 = vector.shape_cast %25 : vector<8x16x4xf32> to vector<128x4xf32>
    %27 = arith.truncf %26 : vector<128x4xf32> to vector<128x4xbf16>
    %c3 = arith.constant 3 : index
    %c0_13 = arith.constant 0 : index
    %c0_14 = arith.constant 0 : index
    %28 = vector.load %arg2[%c3, %c0_13, %c0_14] : memref<9x4x32xbf16, #tpu.memory_space<vmem>>, vector<1x4x32xbf16>
    %29 = vector.shape_cast %28 : vector<1x4x32xbf16> to vector<4x32xbf16>
    %cst_15 = arith.constant dense<0.000000e+00> : vector<128x32xf32>
    %30 = tpu.matmul %27, %29, %cst_15 {dimension_numbers = #tpu.dot_dimension_numbers<[1], [0], [0], [1], [0, 0, 1, 1], [], []>} : vector<128x4xbf16>, vector<4x32xbf16>, vector<128x32xf32> -> vector<128x32xf32>
    %31 = arith.addf %24, %30 : vector<128x32xf32>
    %32 = vector.extract_strided_slice %2 {offsets = [1, 1, 0], sizes = [8, 16, 4], strides = [1, 1, 1]} : vector<10x18x4xf32> to vector<8x16x4xf32>
    %33 = vector.shape_cast %32 : vector<8x16x4xf32> to vector<128x4xf32>
    %34 = arith.truncf %33 : vector<128x4xf32> to vector<128x4xbf16>
    %c4 = arith.constant 4 : index
    %c0_16 = arith.constant 0 : index
    %c0_17 = arith.constant 0 : index
    %35 = vector.load %arg2[%c4, %c0_16, %c0_17] : memref<9x4x32xbf16, #tpu.memory_space<vmem>>, vector<1x4x32xbf16>
    %36 = vector.shape_cast %35 : vector<1x4x32xbf16> to vector<4x32xbf16>
    %cst_18 = arith.constant dense<0.000000e+00> : vector<128x32xf32>
    %37 = tpu.matmul %34, %36, %cst_18 {dimension_numbers = #tpu.dot_dimension_numbers<[1], [0], [0], [1], [0, 0, 1, 1], [], []>} : vector<128x4xbf16>, vector<4x32xbf16>, vector<128x32xf32> -> vector<128x32xf32>
    %38 = arith.addf %31, %37 : vector<128x32xf32>
    %39 = vector.extract_strided_slice %2 {offsets = [1, 2, 0], sizes = [8, 16, 4], strides = [1, 1, 1]} : vector<10x18x4xf32> to vector<8x16x4xf32>
    %40 = vector.shape_cast %39 : vector<8x16x4xf32> to vector<128x4xf32>
    %41 = arith.truncf %40 : vector<128x4xf32> to vector<128x4xbf16>
    %c5 = arith.constant 5 : index
    %c0_19 = arith.constant 0 : index
    %c0_20 = arith.constant 0 : index
    %42 = vector.load %arg2[%c5, %c0_19, %c0_20] : memref<9x4x32xbf16, #tpu.memory_space<vmem>>, vector<1x4x32xbf16>
    %43 = vector.shape_cast %42 : vector<1x4x32xbf16> to vector<4x32xbf16>
    %cst_21 = arith.constant dense<0.000000e+00> : vector<128x32xf32>
    %44 = tpu.matmul %41, %43, %cst_21 {dimension_numbers = #tpu.dot_dimension_numbers<[1], [0], [0], [1], [0, 0, 1, 1], [], []>} : vector<128x4xbf16>, vector<4x32xbf16>, vector<128x32xf32> -> vector<128x32xf32>
    %45 = arith.addf %38, %44 : vector<128x32xf32>
    %46 = vector.extract_strided_slice %2 {offsets = [2, 0, 0], sizes = [8, 16, 4], strides = [1, 1, 1]} : vector<10x18x4xf32> to vector<8x16x4xf32>
    %47 = vector.shape_cast %46 : vector<8x16x4xf32> to vector<128x4xf32>
    %48 = arith.truncf %47 : vector<128x4xf32> to vector<128x4xbf16>
    %c6 = arith.constant 6 : index
    %c0_22 = arith.constant 0 : index
    %c0_23 = arith.constant 0 : index
    %49 = vector.load %arg2[%c6, %c0_22, %c0_23] : memref<9x4x32xbf16, #tpu.memory_space<vmem>>, vector<1x4x32xbf16>
    %50 = vector.shape_cast %49 : vector<1x4x32xbf16> to vector<4x32xbf16>
    %cst_24 = arith.constant dense<0.000000e+00> : vector<128x32xf32>
    %51 = tpu.matmul %48, %50, %cst_24 {dimension_numbers = #tpu.dot_dimension_numbers<[1], [0], [0], [1], [0, 0, 1, 1], [], []>} : vector<128x4xbf16>, vector<4x32xbf16>, vector<128x32xf32> -> vector<128x32xf32>
    %52 = arith.addf %45, %51 : vector<128x32xf32>
    %53 = vector.extract_strided_slice %2 {offsets = [2, 1, 0], sizes = [8, 16, 4], strides = [1, 1, 1]} : vector<10x18x4xf32> to vector<8x16x4xf32>
    %54 = vector.shape_cast %53 : vector<8x16x4xf32> to vector<128x4xf32>
    %55 = arith.truncf %54 : vector<128x4xf32> to vector<128x4xbf16>
    %c7 = arith.constant 7 : index
    %c0_25 = arith.constant 0 : index
    %c0_26 = arith.constant 0 : index
    %56 = vector.load %arg2[%c7, %c0_25, %c0_26] : memref<9x4x32xbf16, #tpu.memory_space<vmem>>, vector<1x4x32xbf16>
    %57 = vector.shape_cast %56 : vector<1x4x32xbf16> to vector<4x32xbf16>
    %cst_27 = arith.constant dense<0.000000e+00> : vector<128x32xf32>
    %58 = tpu.matmul %55, %57, %cst_27 {dimension_numbers = #tpu.dot_dimension_numbers<[1], [0], [0], [1], [0, 0, 1, 1], [], []>} : vector<128x4xbf16>, vector<4x32xbf16>, vector<128x32xf32> -> vector<128x32xf32>
    %59 = arith.addf %52, %58 : vector<128x32xf32>
    %60 = vector.extract_strided_slice %2 {offsets = [2, 2, 0], sizes = [8, 16, 4], strides = [1, 1, 1]} : vector<10x18x4xf32> to vector<8x16x4xf32>
    %61 = vector.shape_cast %60 : vector<8x16x4xf32> to vector<128x4xf32>
    %62 = arith.truncf %61 : vector<128x4xf32> to vector<128x4xbf16>
    %c8 = arith.constant 8 : index
    %c0_28 = arith.constant 0 : index
    %c0_29 = arith.constant 0 : index
    %63 = vector.load %arg2[%c8, %c0_28, %c0_29] : memref<9x4x32xbf16, #tpu.memory_space<vmem>>, vector<1x4x32xbf16>
    %64 = vector.shape_cast %63 : vector<1x4x32xbf16> to vector<4x32xbf16>
    %cst_30 = arith.constant dense<0.000000e+00> : vector<128x32xf32>
    %65 = tpu.matmul %62, %64, %cst_30 {dimension_numbers = #tpu.dot_dimension_numbers<[1], [0], [0], [1], [0, 0, 1, 1], [], []>} : vector<128x4xbf16>, vector<4x32xbf16>, vector<128x32xf32> -> vector<128x32xf32>
    %66 = arith.addf %59, %65 : vector<128x32xf32>
    %c0_31 = arith.constant 0 : index
    %c0_32 = arith.constant 0 : index
    %67 = vector.load %arg3[%c0_31, %c0_32] : memref<1x32xf32, #tpu.memory_space<vmem>>, vector<1x32xf32>
    %68 = vector.broadcast %67 : vector<1x32xf32> to vector<128x32xf32>
    %69 = arith.addf %66, %68 : vector<128x32xf32>
    %c0_33 = arith.constant 0 : index
    %70 = memref.load %arg4[%c0_33] : memref<1xf32, #tpu.memory_space<smem>>
    %cst_34 = arith.constant 0.000000e+00 : f32
    %71 = vector.broadcast %cst_34 : f32 to vector<128x32xf32>
    %72 = arith.cmpf oge, %69, %71 : vector<128x32xf32>
    %73 = vector.broadcast %70 : f32 to vector<128x32xf32>
    %74 = arith.mulf %73, %69 : vector<128x32xf32>
    %75 = arith.select %72, %69, %74 : vector<128x32xi1>, vector<128x32xf32>
    %c0_35 = arith.constant 0 : index
    %c0_36 = arith.constant 0 : index
    %c0_37 = arith.constant 0 : index
    %76 = vector.load %arg5[%c0_35, %c0_36, %c0_37] : memref<1x128x32xf32, #tpu.memory_space<vmem>>, vector<1x128x32xf32>
    %77 = vector.shape_cast %76 : vector<1x128x32xf32> to vector<128x32xf32>
    %78 = vector.shape_cast %75 : vector<128x32xf32> to vector<1x128x32xf32>
    tpu.vector_store %arg5[%c0_35, %c0_36, %c0_37], %78 {strides = array<i32>} : memref<1x128x32xf32, #tpu.memory_space<vmem>>, vector<1x128x32xf32>,
    return
  }
  func.func @transform_0(%arg0: i32) -> (i32, i32, i32, i32) {
    %c0_i32 = arith.constant 0 : i32
    %c0_i32_0 = arith.constant 0 : i32
    %c0_i32_1 = arith.constant 0 : i32
    %c0_i32_2 = arith.constant 0 : i32
    return %arg0, %c0_i32, %c0_i32_0, %c0_i32_1 : i32, i32, i32, i32
  }
  func.func @transform_1(%arg0: i32) -> (i32, i32, i32) {
    %c0_i32 = arith.constant 0 : i32
    %c0_i32_0 = arith.constant 0 : i32
    %c0_i32_1 = arith.constant 0 : i32
    %c0_i32_2 = arith.constant 0 : i32
    return %c0_i32, %c0_i32_0, %c0_i32_1 : i32, i32, i32
  }
  func.func @transform_2(%arg0: i32) -> (i32, i32) {
    %c0_i32 = arith.constant 0 : i32
    %c0_i32_0 = arith.constant 0 : i32
    %c0_i32_1 = arith.constant 0 : i32
    return %c0_i32, %c0_i32_0 : i32, i32
  }
  func.func @transform_3(%arg0: i32) -> i32 {
    %c0_i32 = arith.constant 0 : i32
    %c0_i32_0 = arith.constant 0 : i32
    return %c0_i32 : i32
  }
  func.func @transform_4(%arg0: i32) -> (i32, i32, i32) {
    %c0_i32 = arith.constant 0 : i32
    %c0_i32_0 = arith.constant 0 : i32
    %c0_i32_1 = arith.constant 0 : i32
    return %arg0, %c0_i32, %c0_i32_0 : i32, i32, i32
  }
}

module attributes {stable_mosaic.version = 11 : i64} {
  func.func @_conv3x3_bn_prelu_kernel(%arg0: i32, %arg1: memref<1x10x18x32xbf16, #tpu.memory_space<vmem>>, %arg2: memref<9x32x32xbf16, #tpu.memory_space<vmem>>, %arg3: memref<1x32xf32, #tpu.memory_space<vmem>>, %arg4: memref<1xf32, #tpu.memory_space<smem>>, %arg5: memref<1x128x32xf32, #tpu.memory_space<vmem>>) attributes {dimension_semantics = [#tpu.dimension_semantics<parallel>], iteration_bounds = array<i64: 4>, scalar_prefetch = 0 : i64, scratch_operands = 0 : i64, tpu.core_type = #tpu.core_type<tc>, window_params = [{transform_indices = @transform_0, window_bounds = array<i64: 1, 10, 18, 32>}, {pipeline_mode = #tpu.pipeline_mode<synchronous>, transform_indices = @transform_1, window_bounds = array<i64: 9, 32, 32>}, {pipeline_mode = #tpu.pipeline_mode<synchronous>, transform_indices = @transform_2, window_bounds = array<i64: 1, 32>}, {transform_indices = @transform_3, window_bounds = array<i64: 1>}, {transform_indices = @transform_4, window_bounds = array<i64: 1, 128, 32>}]} {
    %c0 = arith.constant 0 : index
    %c0_0 = arith.constant 0 : index
    %c0_1 = arith.constant 0 : index
    %c0_2 = arith.constant 0 : index
    %0 = vector.load %arg1[%c0, %c0_0, %c0_1, %c0_2] : memref<1x10x18x32xbf16, #tpu.memory_space<vmem>>, vector<1x10x18x32xbf16>
    %1 = vector.shape_cast %0 : vector<1x10x18x32xbf16> to vector<10x18x32xbf16>
    %2 = arith.extf %1 : vector<10x18x32xbf16> to vector<10x18x32xf32>
    %cst = arith.constant 0.000000e+00 : f32
    %3 = vector.broadcast %cst : f32 to vector<128x32xf32>
    %4 = vector.extract_strided_slice %2 {offsets = [0, 0, 0], sizes = [8, 16, 32], strides = [1, 1, 1]} : vector<10x18x32xf32> to vector<8x16x32xf32>
    %5 = vector.shape_cast %4 : vector<8x16x32xf32> to vector<128x32xf32>
    %6 = arith.truncf %5 : vector<128x32xf32> to vector<128x32xbf16>
    %c0_3 = arith.constant 0 : index
    %c0_4 = arith.constant 0 : index
    %c0_5 = arith.constant 0 : index
    %7 = vector.load %arg2[%c0_3, %c0_4, %c0_5] : memref<9x32x32xbf16, #tpu.memory_space<vmem>>, vector<1x32x32xbf16>
    %8 = vector.shape_cast %7 : vector<1x32x32xbf16> to vector<32x32xbf16>
    %cst_6 = arith.constant dense<0.000000e+00> : vector<128x32xf32>
    %9 = tpu.matmul %6, %8, %cst_6 {dimension_numbers = #tpu.dot_dimension_numbers<[1], [0], [0], [1], [0, 0, 1, 1], [], []>} : vector<128x32xbf16>, vector<32x32xbf16>, vector<128x32xf32> -> vector<128x32xf32>
    %10 = arith.addf %3, %9 : vector<128x32xf32>
    %11 = vector.extract_strided_slice %2 {offsets = [0, 1, 0], sizes = [8, 16, 32], strides = [1, 1, 1]} : vector<10x18x32xf32> to vector<8x16x32xf32>
    %12 = vector.shape_cast %11 : vector<8x16x32xf32> to vector<128x32xf32>
    %13 = arith.truncf %12 : vector<128x32xf32> to vector<128x32xbf16>
    %c1 = arith.constant 1 : index
    %c0_7 = arith.constant 0 : index
    %c0_8 = arith.constant 0 : index
    %14 = vector.load %arg2[%c1, %c0_7, %c0_8] : memref<9x32x32xbf16, #tpu.memory_space<vmem>>, vector<1x32x32xbf16>
    %15 = vector.shape_cast %14 : vector<1x32x32xbf16> to vector<32x32xbf16>
    %cst_9 = arith.constant dense<0.000000e+00> : vector<128x32xf32>
    %16 = tpu.matmul %13, %15, %cst_9 {dimension_numbers = #tpu.dot_dimension_numbers<[1], [0], [0], [1], [0, 0, 1, 1], [], []>} : vector<128x32xbf16>, vector<32x32xbf16>, vector<128x32xf32> -> vector<128x32xf32>
    %17 = arith.addf %10, %16 : vector<128x32xf32>
    %18 = vector.extract_strided_slice %2 {offsets = [0, 2, 0], sizes = [8, 16, 32], strides = [1, 1, 1]} : vector<10x18x32xf32> to vector<8x16x32xf32>
    %19 = vector.shape_cast %18 : vector<8x16x32xf32> to vector<128x32xf32>
    %20 = arith.truncf %19 : vector<128x32xf32> to vector<128x32xbf16>
    %c2 = arith.constant 2 : index
    %c0_10 = arith.constant 0 : index
    %c0_11 = arith.constant 0 : index
    %21 = vector.load %arg2[%c2, %c0_10, %c0_11] : memref<9x32x32xbf16, #tpu.memory_space<vmem>>, vector<1x32x32xbf16>
    %22 = vector.shape_cast %21 : vector<1x32x32xbf16> to vector<32x32xbf16>
    %cst_12 = arith.constant dense<0.000000e+00> : vector<128x32xf32>
    %23 = tpu.matmul %20, %22, %cst_12 {dimension_numbers = #tpu.dot_dimension_numbers<[1], [0], [0], [1], [0, 0, 1, 1], [], []>} : vector<128x32xbf16>, vector<32x32xbf16>, vector<128x32xf32> -> vector<128x32xf32>
    %24 = arith.addf %17, %23 : vector<128x32xf32>
    %25 = vector.extract_strided_slice %2 {offsets = [1, 0, 0], sizes = [8, 16, 32], strides = [1, 1, 1]} : vector<10x18x32xf32> to vector<8x16x32xf32>
    %26 = vector.shape_cast %25 : vector<8x16x32xf32> to vector<128x32xf32>
    %27 = arith.truncf %26 : vector<128x32xf32> to vector<128x32xbf16>
    %c3 = arith.constant 3 : index
    %c0_13 = arith.constant 0 : index
    %c0_14 = arith.constant 0 : index
    %28 = vector.load %arg2[%c3, %c0_13, %c0_14] : memref<9x32x32xbf16, #tpu.memory_space<vmem>>, vector<1x32x32xbf16>
    %29 = vector.shape_cast %28 : vector<1x32x32xbf16> to vector<32x32xbf16>
    %cst_15 = arith.constant dense<0.000000e+00> : vector<128x32xf32>
    %30 = tpu.matmul %27, %29, %cst_15 {dimension_numbers = #tpu.dot_dimension_numbers<[1], [0], [0], [1], [0, 0, 1, 1], [], []>} : vector<128x32xbf16>, vector<32x32xbf16>, vector<128x32xf32> -> vector<128x32xf32>
    %31 = arith.addf %24, %30 : vector<128x32xf32>
    %32 = vector.extract_strided_slice %2 {offsets = [1, 1, 0], sizes = [8, 16, 32], strides = [1, 1, 1]} : vector<10x18x32xf32> to vector<8x16x32xf32>
    %33 = vector.shape_cast %32 : vector<8x16x32xf32> to vector<128x32xf32>
    %34 = arith.truncf %33 : vector<128x32xf32> to vector<128x32xbf16>
    %c4 = arith.constant 4 : index
    %c0_16 = arith.constant 0 : index
    %c0_17 = arith.constant 0 : index
    %35 = vector.load %arg2[%c4, %c0_16, %c0_17] : memref<9x32x32xbf16, #tpu.memory_space<vmem>>, vector<1x32x32xbf16>
    %36 = vector.shape_cast %35 : vector<1x32x32xbf16> to vector<32x32xbf16>
    %cst_18 = arith.constant dense<0.000000e+00> : vector<128x32xf32>
    %37 = tpu.matmul %34, %36, %cst_18 {dimension_numbers = #tpu.dot_dimension_numbers<[1], [0], [0], [1], [0, 0, 1, 1], [], []>} : vector<128x32xbf16>, vector<32x32xbf16>, vector<128x32xf32> -> vector<128x32xf32>
    %38 = arith.addf %31, %37 : vector<128x32xf32>
    %39 = vector.extract_strided_slice %2 {offsets = [1, 2, 0], sizes = [8, 16, 32], strides = [1, 1, 1]} : vector<10x18x32xf32> to vector<8x16x32xf32>
    %40 = vector.shape_cast %39 : vector<8x16x32xf32> to vector<128x32xf32>
    %41 = arith.truncf %40 : vector<128x32xf32> to vector<128x32xbf16>
    %c5 = arith.constant 5 : index
    %c0_19 = arith.constant 0 : index
    %c0_20 = arith.constant 0 : index
    %42 = vector.load %arg2[%c5, %c0_19, %c0_20] : memref<9x32x32xbf16, #tpu.memory_space<vmem>>, vector<1x32x32xbf16>
    %43 = vector.shape_cast %42 : vector<1x32x32xbf16> to vector<32x32xbf16>
    %cst_21 = arith.constant dense<0.000000e+00> : vector<128x32xf32>
    %44 = tpu.matmul %41, %43, %cst_21 {dimension_numbers = #tpu.dot_dimension_numbers<[1], [0], [0], [1], [0, 0, 1, 1], [], []>} : vector<128x32xbf16>, vector<32x32xbf16>, vector<128x32xf32> -> vector<128x32xf32>
    %45 = arith.addf %38, %44 : vector<128x32xf32>
    %46 = vector.extract_strided_slice %2 {offsets = [2, 0, 0], sizes = [8, 16, 32], strides = [1, 1, 1]} : vector<10x18x32xf32> to vector<8x16x32xf32>
    %47 = vector.shape_cast %46 : vector<8x16x32xf32> to vector<128x32xf32>
    %48 = arith.truncf %47 : vector<128x32xf32> to vector<128x32xbf16>
    %c6 = arith.constant 6 : index
    %c0_22 = arith.constant 0 : index
    %c0_23 = arith.constant 0 : index
    %49 = vector.load %arg2[%c6, %c0_22, %c0_23] : memref<9x32x32xbf16, #tpu.memory_space<vmem>>, vector<1x32x32xbf16>
    %50 = vector.shape_cast %49 : vector<1x32x32xbf16> to vector<32x32xbf16>
    %cst_24 = arith.constant dense<0.000000e+00> : vector<128x32xf32>
    %51 = tpu.matmul %48, %50, %cst_24 {dimension_numbers = #tpu.dot_dimension_numbers<[1], [0], [0], [1], [0, 0, 1, 1], [], []>} : vector<128x32xbf16>, vector<32x32xbf16>, vector<128x32xf32> -> vector<128x32xf32>
    %52 = arith.addf %45, %51 : vector<128x32xf32>
    %53 = vector.extract_strided_slice %2 {offsets = [2, 1, 0], sizes = [8, 16, 32], strides = [1, 1, 1]} : vector<10x18x32xf32> to vector<8x16x32xf32>
    %54 = vector.shape_cast %53 : vector<8x16x32xf32> to vector<128x32xf32>
    %55 = arith.truncf %54 : vector<128x32xf32> to vector<128x32xbf16>
    %c7 = arith.constant 7 : index
    %c0_25 = arith.constant 0 : index
    %c0_26 = arith.constant 0 : index
    %56 = vector.load %arg2[%c7, %c0_25, %c0_26] : memref<9x32x32xbf16, #tpu.memory_space<vmem>>, vector<1x32x32xbf16>
    %57 = vector.shape_cast %56 : vector<1x32x32xbf16> to vector<32x32xbf16>
    %cst_27 = arith.constant dense<0.000000e+00> : vector<128x32xf32>
    %58 = tpu.matmul %55, %57, %cst_27 {dimension_numbers = #tpu.dot_dimension_numbers<[1], [0], [0], [1], [0, 0, 1, 1], [], []>} : vector<128x32xbf16>, vector<32x32xbf16>, vector<128x32xf32> -> vector<128x32xf32>
    %59 = arith.addf %52, %58 : vector<128x32xf32>
    %60 = vector.extract_strided_slice %2 {offsets = [2, 2, 0], sizes = [8, 16, 32], strides = [1, 1, 1]} : vector<10x18x32xf32> to vector<8x16x32xf32>
    %61 = vector.shape_cast %60 : vector<8x16x32xf32> to vector<128x32xf32>
    %62 = arith.truncf %61 : vector<128x32xf32> to vector<128x32xbf16>
    %c8 = arith.constant 8 : index
    %c0_28 = arith.constant 0 : index
    %c0_29 = arith.constant 0 : index
    %63 = vector.load %arg2[%c8, %c0_28, %c0_29] : memref<9x32x32xbf16, #tpu.memory_space<vmem>>, vector<1x32x32xbf16>
    %64 = vector.shape_cast %63 : vector<1x32x32xbf16> to vector<32x32xbf16>
    %cst_30 = arith.constant dense<0.000000e+00> : vector<128x32xf32>
    %65 = tpu.matmul %62, %64, %cst_30 {dimension_numbers = #tpu.dot_dimension_numbers<[1], [0], [0], [1], [0, 0, 1, 1], [], []>} : vector<128x32xbf16>, vector<32x32xbf16>, vector<128x32xf32> -> vector<128x32xf32>
    %66 = arith.addf %59, %65 : vector<128x32xf32>
    %c0_31 = arith.constant 0 : index
    %c0_32 = arith.constant 0 : index
    %67 = vector.load %arg3[%c0_31, %c0_32] : memref<1x32xf32, #tpu.memory_space<vmem>>, vector<1x32xf32>
    %68 = vector.broadcast %67 : vector<1x32xf32> to vector<128x32xf32>
    %69 = arith.addf %66, %68 : vector<128x32xf32>
    %c0_33 = arith.constant 0 : index
    %70 = memref.load %arg4[%c0_33] : memref<1xf32, #tpu.memory_space<smem>>
    %cst_34 = arith.constant 0.000000e+00 : f32
    %71 = vector.broadcast %cst_34 : f32 to vector<128x32xf32>
    %72 = arith.cmpf oge, %69, %71 : vector<128x32xf32>
    %73 = vector.broadcast %70 : f32 to vector<128x32xf32>
    %74 = arith.mulf %73, %69 : vector<128x32xf32>
    %75 = arith.select %72, %69, %74 : vector<128x32xi1>, vector<128x32xf32>
    %c0_35 = arith.constant 0 : index
    %c0_36 = arith.constant 0 : index
    %c0_37 = arith.constant 0 : index
    %76 = vector.load %arg5[%c0_35, %c0_36, %c0_37] : memref<1x128x32xf32, #tpu.memory_space<vmem>>, vector<1x128x32xf32>
    %77 = vector.shape_cast %76 : vector<1x128x32xf32> to vector<128x32xf32>
    %78 = vector.shape_cast %75 : vector<128x32xf32> to vector<1x128x32xf32>
    tpu.vector_store %arg5[%c0_35, %c0_36, %c0_37], %78 {strides = array<i32>} : memref<1x128x32xf32, #tpu.memory_space<vmem>>, vector<1x128x32xf32>,
    return
  }
  func.func @transform_0(%arg0: i32) -> (i32, i32, i32, i32) {
    %c0_i32 = arith.constant 0 : i32
    %c0_i32_0 = arith.constant 0 : i32
    %c0_i32_1 = arith.constant 0 : i32
    %c0_i32_2 = arith.constant 0 : i32
    return %arg0, %c0_i32, %c0_i32_0, %c0_i32_1 : i32, i32, i32, i32
  }
  func.func @transform_1(%arg0: i32) -> (i32, i32, i32) {
    %c0_i32 = arith.constant 0 : i32
    %c0_i32_0 = arith.constant 0 : i32
    %c0_i32_1 = arith.constant 0 : i32
    %c0_i32_2 = arith.constant 0 : i32
    return %c0_i32, %c0_i32_0, %c0_i32_1 : i32, i32, i32
  }
  func.func @transform_2(%arg0: i32) -> (i32, i32) {
    %c0_i32 = arith.constant 0 : i32
    %c0_i32_0 = arith.constant 0 : i32
    %c0_i32_1 = arith.constant 0 : i32
    return %c0_i32, %c0_i32_0 : i32, i32
  }
  func.func @transform_3(%arg0: i32) -> i32 {
    %c0_i32 = arith.constant 0 : i32
    %c0_i32_0 = arith.constant 0 : i32
    return %c0_i32 : i32
  }
  func.func @transform_4(%arg0: i32) -> (i32, i32, i32) {
    %c0_i32 = arith.constant 0 : i32
    %c0_i32_0 = arith.constant 0 : i32
    %c0_i32_1 = arith.constant 0 : i32
    return %arg0, %c0_i32, %c0_i32_0 : i32, i32, i32
  }
}

module attributes {stable_mosaic.version = 11 : i64} {
  func.func @_conv3x3_bn_prelu_kernel(%arg0: i32, %arg1: memref<1x10x18x64xbf16, #tpu.memory_space<vmem>>, %arg2: memref<9x64x32xbf16, #tpu.memory_space<vmem>>, %arg3: memref<1x32xf32, #tpu.memory_space<vmem>>, %arg4: memref<1xf32, #tpu.memory_space<smem>>, %arg5: memref<1x128x32xf32, #tpu.memory_space<vmem>>) attributes {dimension_semantics = [#tpu.dimension_semantics<parallel>], iteration_bounds = array<i64: 4>, scalar_prefetch = 0 : i64, scratch_operands = 0 : i64, tpu.core_type = #tpu.core_type<tc>, window_params = [{transform_indices = @transform_0, window_bounds = array<i64: 1, 10, 18, 64>}, {pipeline_mode = #tpu.pipeline_mode<synchronous>, transform_indices = @transform_1, window_bounds = array<i64: 9, 64, 32>}, {pipeline_mode = #tpu.pipeline_mode<synchronous>, transform_indices = @transform_2, window_bounds = array<i64: 1, 32>}, {transform_indices = @transform_3, window_bounds = array<i64: 1>}, {transform_indices = @transform_4, window_bounds = array<i64: 1, 128, 32>}]} {
    %c0 = arith.constant 0 : index
    %c0_0 = arith.constant 0 : index
    %c0_1 = arith.constant 0 : index
    %c0_2 = arith.constant 0 : index
    %0 = vector.load %arg1[%c0, %c0_0, %c0_1, %c0_2] : memref<1x10x18x64xbf16, #tpu.memory_space<vmem>>, vector<1x10x18x64xbf16>
    %1 = vector.shape_cast %0 : vector<1x10x18x64xbf16> to vector<10x18x64xbf16>
    %2 = arith.extf %1 : vector<10x18x64xbf16> to vector<10x18x64xf32>
    %cst = arith.constant 0.000000e+00 : f32
    %3 = vector.broadcast %cst : f32 to vector<128x32xf32>
    %4 = vector.extract_strided_slice %2 {offsets = [0, 0, 0], sizes = [8, 16, 64], strides = [1, 1, 1]} : vector<10x18x64xf32> to vector<8x16x64xf32>
    %5 = vector.shape_cast %4 : vector<8x16x64xf32> to vector<128x64xf32>
    %6 = arith.truncf %5 : vector<128x64xf32> to vector<128x64xbf16>
    %c0_3 = arith.constant 0 : index
    %c0_4 = arith.constant 0 : index
    %c0_5 = arith.constant 0 : index
    %7 = vector.load %arg2[%c0_3, %c0_4, %c0_5] : memref<9x64x32xbf16, #tpu.memory_space<vmem>>, vector<1x64x32xbf16>
    %8 = vector.shape_cast %7 : vector<1x64x32xbf16> to vector<64x32xbf16>
    %cst_6 = arith.constant dense<0.000000e+00> : vector<128x32xf32>
    %9 = tpu.matmul %6, %8, %cst_6 {dimension_numbers = #tpu.dot_dimension_numbers<[1], [0], [0], [1], [0, 0, 1, 1], [], []>} : vector<128x64xbf16>, vector<64x32xbf16>, vector<128x32xf32> -> vector<128x32xf32>
    %10 = arith.addf %3, %9 : vector<128x32xf32>
    %11 = vector.extract_strided_slice %2 {offsets = [0, 1, 0], sizes = [8, 16, 64], strides = [1, 1, 1]} : vector<10x18x64xf32> to vector<8x16x64xf32>
    %12 = vector.shape_cast %11 : vector<8x16x64xf32> to vector<128x64xf32>
    %13 = arith.truncf %12 : vector<128x64xf32> to vector<128x64xbf16>
    %c1 = arith.constant 1 : index
    %c0_7 = arith.constant 0 : index
    %c0_8 = arith.constant 0 : index
    %14 = vector.load %arg2[%c1, %c0_7, %c0_8] : memref<9x64x32xbf16, #tpu.memory_space<vmem>>, vector<1x64x32xbf16>
    %15 = vector.shape_cast %14 : vector<1x64x32xbf16> to vector<64x32xbf16>
    %cst_9 = arith.constant dense<0.000000e+00> : vector<128x32xf32>
    %16 = tpu.matmul %13, %15, %cst_9 {dimension_numbers = #tpu.dot_dimension_numbers<[1], [0], [0], [1], [0, 0, 1, 1], [], []>} : vector<128x64xbf16>, vector<64x32xbf16>, vector<128x32xf32> -> vector<128x32xf32>
    %17 = arith.addf %10, %16 : vector<128x32xf32>
    %18 = vector.extract_strided_slice %2 {offsets = [0, 2, 0], sizes = [8, 16, 64], strides = [1, 1, 1]} : vector<10x18x64xf32> to vector<8x16x64xf32>
    %19 = vector.shape_cast %18 : vector<8x16x64xf32> to vector<128x64xf32>
    %20 = arith.truncf %19 : vector<128x64xf32> to vector<128x64xbf16>
    %c2 = arith.constant 2 : index
    %c0_10 = arith.constant 0 : index
    %c0_11 = arith.constant 0 : index
    %21 = vector.load %arg2[%c2, %c0_10, %c0_11] : memref<9x64x32xbf16, #tpu.memory_space<vmem>>, vector<1x64x32xbf16>
    %22 = vector.shape_cast %21 : vector<1x64x32xbf16> to vector<64x32xbf16>
    %cst_12 = arith.constant dense<0.000000e+00> : vector<128x32xf32>
    %23 = tpu.matmul %20, %22, %cst_12 {dimension_numbers = #tpu.dot_dimension_numbers<[1], [0], [0], [1], [0, 0, 1, 1], [], []>} : vector<128x64xbf16>, vector<64x32xbf16>, vector<128x32xf32> -> vector<128x32xf32>
    %24 = arith.addf %17, %23 : vector<128x32xf32>
    %25 = vector.extract_strided_slice %2 {offsets = [1, 0, 0], sizes = [8, 16, 64], strides = [1, 1, 1]} : vector<10x18x64xf32> to vector<8x16x64xf32>
    %26 = vector.shape_cast %25 : vector<8x16x64xf32> to vector<128x64xf32>
    %27 = arith.truncf %26 : vector<128x64xf32> to vector<128x64xbf16>
    %c3 = arith.constant 3 : index
    %c0_13 = arith.constant 0 : index
    %c0_14 = arith.constant 0 : index
    %28 = vector.load %arg2[%c3, %c0_13, %c0_14] : memref<9x64x32xbf16, #tpu.memory_space<vmem>>, vector<1x64x32xbf16>
    %29 = vector.shape_cast %28 : vector<1x64x32xbf16> to vector<64x32xbf16>
    %cst_15 = arith.constant dense<0.000000e+00> : vector<128x32xf32>
    %30 = tpu.matmul %27, %29, %cst_15 {dimension_numbers = #tpu.dot_dimension_numbers<[1], [0], [0], [1], [0, 0, 1, 1], [], []>} : vector<128x64xbf16>, vector<64x32xbf16>, vector<128x32xf32> -> vector<128x32xf32>
    %31 = arith.addf %24, %30 : vector<128x32xf32>
    %32 = vector.extract_strided_slice %2 {offsets = [1, 1, 0], sizes = [8, 16, 64], strides = [1, 1, 1]} : vector<10x18x64xf32> to vector<8x16x64xf32>
    %33 = vector.shape_cast %32 : vector<8x16x64xf32> to vector<128x64xf32>
    %34 = arith.truncf %33 : vector<128x64xf32> to vector<128x64xbf16>
    %c4 = arith.constant 4 : index
    %c0_16 = arith.constant 0 : index
    %c0_17 = arith.constant 0 : index
    %35 = vector.load %arg2[%c4, %c0_16, %c0_17] : memref<9x64x32xbf16, #tpu.memory_space<vmem>>, vector<1x64x32xbf16>
    %36 = vector.shape_cast %35 : vector<1x64x32xbf16> to vector<64x32xbf16>
    %cst_18 = arith.constant dense<0.000000e+00> : vector<128x32xf32>
    %37 = tpu.matmul %34, %36, %cst_18 {dimension_numbers = #tpu.dot_dimension_numbers<[1], [0], [0], [1], [0, 0, 1, 1], [], []>} : vector<128x64xbf16>, vector<64x32xbf16>, vector<128x32xf32> -> vector<128x32xf32>
    %38 = arith.addf %31, %37 : vector<128x32xf32>
    %39 = vector.extract_strided_slice %2 {offsets = [1, 2, 0], sizes = [8, 16, 64], strides = [1, 1, 1]} : vector<10x18x64xf32> to vector<8x16x64xf32>
    %40 = vector.shape_cast %39 : vector<8x16x64xf32> to vector<128x64xf32>
    %41 = arith.truncf %40 : vector<128x64xf32> to vector<128x64xbf16>
    %c5 = arith.constant 5 : index
    %c0_19 = arith.constant 0 : index
    %c0_20 = arith.constant 0 : index
    %42 = vector.load %arg2[%c5, %c0_19, %c0_20] : memref<9x64x32xbf16, #tpu.memory_space<vmem>>, vector<1x64x32xbf16>
    %43 = vector.shape_cast %42 : vector<1x64x32xbf16> to vector<64x32xbf16>
    %cst_21 = arith.constant dense<0.000000e+00> : vector<128x32xf32>
    %44 = tpu.matmul %41, %43, %cst_21 {dimension_numbers = #tpu.dot_dimension_numbers<[1], [0], [0], [1], [0, 0, 1, 1], [], []>} : vector<128x64xbf16>, vector<64x32xbf16>, vector<128x32xf32> -> vector<128x32xf32>
    %45 = arith.addf %38, %44 : vector<128x32xf32>
    %46 = vector.extract_strided_slice %2 {offsets = [2, 0, 0], sizes = [8, 16, 64], strides = [1, 1, 1]} : vector<10x18x64xf32> to vector<8x16x64xf32>
    %47 = vector.shape_cast %46 : vector<8x16x64xf32> to vector<128x64xf32>
    %48 = arith.truncf %47 : vector<128x64xf32> to vector<128x64xbf16>
    %c6 = arith.constant 6 : index
    %c0_22 = arith.constant 0 : index
    %c0_23 = arith.constant 0 : index
    %49 = vector.load %arg2[%c6, %c0_22, %c0_23] : memref<9x64x32xbf16, #tpu.memory_space<vmem>>, vector<1x64x32xbf16>
    %50 = vector.shape_cast %49 : vector<1x64x32xbf16> to vector<64x32xbf16>
    %cst_24 = arith.constant dense<0.000000e+00> : vector<128x32xf32>
    %51 = tpu.matmul %48, %50, %cst_24 {dimension_numbers = #tpu.dot_dimension_numbers<[1], [0], [0], [1], [0, 0, 1, 1], [], []>} : vector<128x64xbf16>, vector<64x32xbf16>, vector<128x32xf32> -> vector<128x32xf32>
    %52 = arith.addf %45, %51 : vector<128x32xf32>
    %53 = vector.extract_strided_slice %2 {offsets = [2, 1, 0], sizes = [8, 16, 64], strides = [1, 1, 1]} : vector<10x18x64xf32> to vector<8x16x64xf32>
    %54 = vector.shape_cast %53 : vector<8x16x64xf32> to vector<128x64xf32>
    %55 = arith.truncf %54 : vector<128x64xf32> to vector<128x64xbf16>
    %c7 = arith.constant 7 : index
    %c0_25 = arith.constant 0 : index
    %c0_26 = arith.constant 0 : index
    %56 = vector.load %arg2[%c7, %c0_25, %c0_26] : memref<9x64x32xbf16, #tpu.memory_space<vmem>>, vector<1x64x32xbf16>
    %57 = vector.shape_cast %56 : vector<1x64x32xbf16> to vector<64x32xbf16>
    %cst_27 = arith.constant dense<0.000000e+00> : vector<128x32xf32>
    %58 = tpu.matmul %55, %57, %cst_27 {dimension_numbers = #tpu.dot_dimension_numbers<[1], [0], [0], [1], [0, 0, 1, 1], [], []>} : vector<128x64xbf16>, vector<64x32xbf16>, vector<128x32xf32> -> vector<128x32xf32>
    %59 = arith.addf %52, %58 : vector<128x32xf32>
    %60 = vector.extract_strided_slice %2 {offsets = [2, 2, 0], sizes = [8, 16, 64], strides = [1, 1, 1]} : vector<10x18x64xf32> to vector<8x16x64xf32>
    %61 = vector.shape_cast %60 : vector<8x16x64xf32> to vector<128x64xf32>
    %62 = arith.truncf %61 : vector<128x64xf32> to vector<128x64xbf16>
    %c8 = arith.constant 8 : index
    %c0_28 = arith.constant 0 : index
    %c0_29 = arith.constant 0 : index
    %63 = vector.load %arg2[%c8, %c0_28, %c0_29] : memref<9x64x32xbf16, #tpu.memory_space<vmem>>, vector<1x64x32xbf16>
    %64 = vector.shape_cast %63 : vector<1x64x32xbf16> to vector<64x32xbf16>
    %cst_30 = arith.constant dense<0.000000e+00> : vector<128x32xf32>
    %65 = tpu.matmul %62, %64, %cst_30 {dimension_numbers = #tpu.dot_dimension_numbers<[1], [0], [0], [1], [0, 0, 1, 1], [], []>} : vector<128x64xbf16>, vector<64x32xbf16>, vector<128x32xf32> -> vector<128x32xf32>
    %66 = arith.addf %59, %65 : vector<128x32xf32>
    %c0_31 = arith.constant 0 : index
    %c0_32 = arith.constant 0 : index
    %67 = vector.load %arg3[%c0_31, %c0_32] : memref<1x32xf32, #tpu.memory_space<vmem>>, vector<1x32xf32>
    %68 = vector.broadcast %67 : vector<1x32xf32> to vector<128x32xf32>
    %69 = arith.addf %66, %68 : vector<128x32xf32>
    %c0_33 = arith.constant 0 : index
    %70 = memref.load %arg4[%c0_33] : memref<1xf32, #tpu.memory_space<smem>>
    %cst_34 = arith.constant 0.000000e+00 : f32
    %71 = vector.broadcast %cst_34 : f32 to vector<128x32xf32>
    %72 = arith.cmpf oge, %69, %71 : vector<128x32xf32>
    %73 = vector.broadcast %70 : f32 to vector<128x32xf32>
    %74 = arith.mulf %73, %69 : vector<128x32xf32>
    %75 = arith.select %72, %69, %74 : vector<128x32xi1>, vector<128x32xf32>
    %c0_35 = arith.constant 0 : index
    %c0_36 = arith.constant 0 : index
    %c0_37 = arith.constant 0 : index
    %76 = vector.load %arg5[%c0_35, %c0_36, %c0_37] : memref<1x128x32xf32, #tpu.memory_space<vmem>>, vector<1x128x32xf32>
    %77 = vector.shape_cast %76 : vector<1x128x32xf32> to vector<128x32xf32>
    %78 = vector.shape_cast %75 : vector<128x32xf32> to vector<1x128x32xf32>
    tpu.vector_store %arg5[%c0_35, %c0_36, %c0_37], %78 {strides = array<i32>} : memref<1x128x32xf32, #tpu.memory_space<vmem>>, vector<1x128x32xf32>,
    return
  }
  func.func @transform_0(%arg0: i32) -> (i32, i32, i32, i32) {
    %c0_i32 = arith.constant 0 : i32
    %c0_i32_0 = arith.constant 0 : i32
    %c0_i32_1 = arith.constant 0 : i32
    %c0_i32_2 = arith.constant 0 : i32
    return %arg0, %c0_i32, %c0_i32_0, %c0_i32_1 : i32, i32, i32, i32
  }
  func.func @transform_1(%arg0: i32) -> (i32, i32, i32) {
    %c0_i32 = arith.constant 0 : i32
    %c0_i32_0 = arith.constant 0 : i32
    %c0_i32_1 = arith.constant 0 : i32
    %c0_i32_2 = arith.constant 0 : i32
    return %c0_i32, %c0_i32_0, %c0_i32_1 : i32, i32, i32
  }
  func.func @transform_2(%arg0: i32) -> (i32, i32) {
    %c0_i32 = arith.constant 0 : i32
    %c0_i32_0 = arith.constant 0 : i32
    %c0_i32_1 = arith.constant 0 : i32
    return %c0_i32, %c0_i32_0 : i32, i32
  }
  func.func @transform_3(%arg0: i32) -> i32 {
    %c0_i32 = arith.constant 0 : i32
    %c0_i32_0 = arith.constant 0 : i32
    return %c0_i32 : i32
  }
  func.func @transform_4(%arg0: i32) -> (i32, i32, i32) {
    %c0_i32 = arith.constant 0 : i32
    %c0_i32_0 = arith.constant 0 : i32
    %c0_i32_1 = arith.constant 0 : i32
    return %arg0, %c0_i32, %c0_i32_0 : i32, i32, i32
  }
}

module attributes {stable_mosaic.version = 11 : i64} {
  func.func @_outk_softmax_filter_kernel(%arg0: i32, %arg1: memref<1x10x18x64xbf16, #tpu.memory_space<vmem>>, %arg2: memref<1x10x18x4xf32, #tpu.memory_space<vmem>>, %arg3: memref<9x64x36xbf16, #tpu.memory_space<vmem>>, %arg4: memref<1x36xf32, #tpu.memory_space<vmem>>, %arg5: memref<1x128x1xf32, #tpu.memory_space<vmem>>) attributes {dimension_semantics = [#tpu.dimension_semantics<parallel>], iteration_bounds = array<i64: 4>, scalar_prefetch = 0 : i64, scratch_operands = 0 : i64, tpu.core_type = #tpu.core_type<tc>, window_params = [{transform_indices = @transform_0, window_bounds = array<i64: 1, 10, 18, 64>}, {transform_indices = @transform_1, window_bounds = array<i64: 1, 10, 18, 4>}, {pipeline_mode = #tpu.pipeline_mode<synchronous>, transform_indices = @transform_2, window_bounds = array<i64: 9, 64, 36>}, {pipeline_mode = #tpu.pipeline_mode<synchronous>, transform_indices = @transform_3, window_bounds = array<i64: 1, 36>}, {transform_indices = @transform_4, window_bounds = array<i64: 1, 128, 1>}]} {
    %c0 = arith.constant 0 : index
    %c0_0 = arith.constant 0 : index
    %c0_1 = arith.constant 0 : index
    %c0_2 = arith.constant 0 : index
    %0 = vector.load %arg1[%c0, %c0_0, %c0_1, %c0_2] : memref<1x10x18x64xbf16, #tpu.memory_space<vmem>>, vector<1x10x18x64xbf16>
    %1 = vector.shape_cast %0 : vector<1x10x18x64xbf16> to vector<10x18x64xbf16>
    %2 = arith.extf %1 : vector<10x18x64xbf16> to vector<10x18x64xf32>
    %c0_3 = arith.constant 0 : index
    %c0_4 = arith.constant 0 : index
    %c0_5 = arith.constant 0 : index
    %c0_6 = arith.constant 0 : index
    %3 = vector.load %arg2[%c0_3, %c0_4, %c0_5, %c0_6] : memref<1x10x18x4xf32, #tpu.memory_space<vmem>>, vector<1x10x18x4xf32>
    %4 = vector.shape_cast %3 : vector<1x10x18x4xf32> to vector<10x18x4xf32>
    %cst = arith.constant 0.000000e+00 : f32
    %5 = vector.broadcast %cst : f32 to vector<128x36xf32>
    %6 = vector.extract_strided_slice %2 {offsets = [0, 0, 0], sizes = [8, 16, 64], strides = [1, 1, 1]} : vector<10x18x64xf32> to vector<8x16x64xf32>
    %7 = vector.shape_cast %6 : vector<8x16x64xf32> to vector<128x64xf32>
    %8 = arith.truncf %7 : vector<128x64xf32> to vector<128x64xbf16>
    %c0_7 = arith.constant 0 : index
    %c0_8 = arith.constant 0 : index
    %c0_9 = arith.constant 0 : index
    %9 = vector.load %arg3[%c0_7, %c0_8, %c0_9] : memref<9x64x36xbf16, #tpu.memory_space<vmem>>, vector<1x64x36xbf16>
    %10 = vector.shape_cast %9 : vector<1x64x36xbf16> to vector<64x36xbf16>
    %cst_10 = arith.constant dense<0.000000e+00> : vector<128x36xf32>
    %11 = tpu.matmul %8, %10, %cst_10 {dimension_numbers = #tpu.dot_dimension_numbers<[1], [0], [0], [1], [0, 0, 1, 1], [], []>} : vector<128x64xbf16>, vector<64x36xbf16>, vector<128x36xf32> -> vector<128x36xf32>
    %12 = arith.addf %5, %11 : vector<128x36xf32>
    %13 = vector.extract_strided_slice %2 {offsets = [0, 1, 0], sizes = [8, 16, 64], strides = [1, 1, 1]} : vector<10x18x64xf32> to vector<8x16x64xf32>
    %14 = vector.shape_cast %13 : vector<8x16x64xf32> to vector<128x64xf32>
    %15 = arith.truncf %14 : vector<128x64xf32> to vector<128x64xbf16>
    %c1 = arith.constant 1 : index
    %c0_11 = arith.constant 0 : index
    %c0_12 = arith.constant 0 : index
    %16 = vector.load %arg3[%c1, %c0_11, %c0_12] : memref<9x64x36xbf16, #tpu.memory_space<vmem>>, vector<1x64x36xbf16>
    %17 = vector.shape_cast %16 : vector<1x64x36xbf16> to vector<64x36xbf16>
    %cst_13 = arith.constant dense<0.000000e+00> : vector<128x36xf32>
    %18 = tpu.matmul %15, %17, %cst_13 {dimension_numbers = #tpu.dot_dimension_numbers<[1], [0], [0], [1], [0, 0, 1, 1], [], []>} : vector<128x64xbf16>, vector<64x36xbf16>, vector<128x36xf32> -> vector<128x36xf32>
    %19 = arith.addf %12, %18 : vector<128x36xf32>
    %20 = vector.extract_strided_slice %2 {offsets = [0, 2, 0], sizes = [8, 16, 64], strides = [1, 1, 1]} : vector<10x18x64xf32> to vector<8x16x64xf32>
    %21 = vector.shape_cast %20 : vector<8x16x64xf32> to vector<128x64xf32>
    %22 = arith.truncf %21 : vector<128x64xf32> to vector<128x64xbf16>
    %c2 = arith.constant 2 : index
    %c0_14 = arith.constant 0 : index
    %c0_15 = arith.constant 0 : index
    %23 = vector.load %arg3[%c2, %c0_14, %c0_15] : memref<9x64x36xbf16, #tpu.memory_space<vmem>>, vector<1x64x36xbf16>
    %24 = vector.shape_cast %23 : vector<1x64x36xbf16> to vector<64x36xbf16>
    %cst_16 = arith.constant dense<0.000000e+00> : vector<128x36xf32>
    %25 = tpu.matmul %22, %24, %cst_16 {dimension_numbers = #tpu.dot_dimension_numbers<[1], [0], [0], [1], [0, 0, 1, 1], [], []>} : vector<128x64xbf16>, vector<64x36xbf16>, vector<128x36xf32> -> vector<128x36xf32>
    %26 = arith.addf %19, %25 : vector<128x36xf32>
    %27 = vector.extract_strided_slice %2 {offsets = [1, 0, 0], sizes = [8, 16, 64], strides = [1, 1, 1]} : vector<10x18x64xf32> to vector<8x16x64xf32>
    %28 = vector.shape_cast %27 : vector<8x16x64xf32> to vector<128x64xf32>
    %29 = arith.truncf %28 : vector<128x64xf32> to vector<128x64xbf16>
    %c3 = arith.constant 3 : index
    %c0_17 = arith.constant 0 : index
    %c0_18 = arith.constant 0 : index
    %30 = vector.load %arg3[%c3, %c0_17, %c0_18] : memref<9x64x36xbf16, #tpu.memory_space<vmem>>, vector<1x64x36xbf16>
    %31 = vector.shape_cast %30 : vector<1x64x36xbf16> to vector<64x36xbf16>
    %cst_19 = arith.constant dense<0.000000e+00> : vector<128x36xf32>
    %32 = tpu.matmul %29, %31, %cst_19 {dimension_numbers = #tpu.dot_dimension_numbers<[1], [0], [0], [1], [0, 0, 1, 1], [], []>} : vector<128x64xbf16>, vector<64x36xbf16>, vector<128x36xf32> -> vector<128x36xf32>
    %33 = arith.addf %26, %32 : vector<128x36xf32>
    %34 = vector.extract_strided_slice %2 {offsets = [1, 1, 0], sizes = [8, 16, 64], strides = [1, 1, 1]} : vector<10x18x64xf32> to vector<8x16x64xf32>
    %35 = vector.shape_cast %34 : vector<8x16x64xf32> to vector<128x64xf32>
    %36 = arith.truncf %35 : vector<128x64xf32> to vector<128x64xbf16>
    %c4 = arith.constant 4 : index
    %c0_20 = arith.constant 0 : index
    %c0_21 = arith.constant 0 : index
    %37 = vector.load %arg3[%c4, %c0_20, %c0_21] : memref<9x64x36xbf16, #tpu.memory_space<vmem>>, vector<1x64x36xbf16>
    %38 = vector.shape_cast %37 : vector<1x64x36xbf16> to vector<64x36xbf16>
    %cst_22 = arith.constant dense<0.000000e+00> : vector<128x36xf32>
    %39 = tpu.matmul %36, %38, %cst_22 {dimension_numbers = #tpu.dot_dimension_numbers<[1], [0], [0], [1], [0, 0, 1, 1], [], []>} : vector<128x64xbf16>, vector<64x36xbf16>, vector<128x36xf32> -> vector<128x36xf32>
    %40 = arith.addf %33, %39 : vector<128x36xf32>
    %41 = vector.extract_strided_slice %2 {offsets = [1, 2, 0], sizes = [8, 16, 64], strides = [1, 1, 1]} : vector<10x18x64xf32> to vector<8x16x64xf32>
    %42 = vector.shape_cast %41 : vector<8x16x64xf32> to vector<128x64xf32>
    %43 = arith.truncf %42 : vector<128x64xf32> to vector<128x64xbf16>
    %c5 = arith.constant 5 : index
    %c0_23 = arith.constant 0 : index
    %c0_24 = arith.constant 0 : index
    %44 = vector.load %arg3[%c5, %c0_23, %c0_24] : memref<9x64x36xbf16, #tpu.memory_space<vmem>>, vector<1x64x36xbf16>
    %45 = vector.shape_cast %44 : vector<1x64x36xbf16> to vector<64x36xbf16>
    %cst_25 = arith.constant dense<0.000000e+00> : vector<128x36xf32>
    %46 = tpu.matmul %43, %45, %cst_25 {dimension_numbers = #tpu.dot_dimension_numbers<[1], [0], [0], [1], [0, 0, 1, 1], [], []>} : vector<128x64xbf16>, vector<64x36xbf16>, vector<128x36xf32> -> vector<128x36xf32>
    %47 = arith.addf %40, %46 : vector<128x36xf32>
    %48 = vector.extract_strided_slice %2 {offsets = [2, 0, 0], sizes = [8, 16, 64], strides = [1, 1, 1]} : vector<10x18x64xf32> to vector<8x16x64xf32>
    %49 = vector.shape_cast %48 : vector<8x16x64xf32> to vector<128x64xf32>
    %50 = arith.truncf %49 : vector<128x64xf32> to vector<128x64xbf16>
    %c6 = arith.constant 6 : index
    %c0_26 = arith.constant 0 : index
    %c0_27 = arith.constant 0 : index
    %51 = vector.load %arg3[%c6, %c0_26, %c0_27] : memref<9x64x36xbf16, #tpu.memory_space<vmem>>, vector<1x64x36xbf16>
    %52 = vector.shape_cast %51 : vector<1x64x36xbf16> to vector<64x36xbf16>
    %cst_28 = arith.constant dense<0.000000e+00> : vector<128x36xf32>
    %53 = tpu.matmul %50, %52, %cst_28 {dimension_numbers = #tpu.dot_dimension_numbers<[1], [0], [0], [1], [0, 0, 1, 1], [], []>} : vector<128x64xbf16>, vector<64x36xbf16>, vector<128x36xf32> -> vector<128x36xf32>
    %54 = arith.addf %47, %53 : vector<128x36xf32>
    %55 = vector.extract_strided_slice %2 {offsets = [2, 1, 0], sizes = [8, 16, 64], strides = [1, 1, 1]} : vector<10x18x64xf32> to vector<8x16x64xf32>
    %56 = vector.shape_cast %55 : vector<8x16x64xf32> to vector<128x64xf32>
    %57 = arith.truncf %56 : vector<128x64xf32> to vector<128x64xbf16>
    %c7 = arith.constant 7 : index
    %c0_29 = arith.constant 0 : index
    %c0_30 = arith.constant 0 : index
    %58 = vector.load %arg3[%c7, %c0_29, %c0_30] : memref<9x64x36xbf16, #tpu.memory_space<vmem>>, vector<1x64x36xbf16>
    %59 = vector.shape_cast %58 : vector<1x64x36xbf16> to vector<64x36xbf16>
    %cst_31 = arith.constant dense<0.000000e+00> : vector<128x36xf32>
    %60 = tpu.matmul %57, %59, %cst_31 {dimension_numbers = #tpu.dot_dimension_numbers<[1], [0], [0], [1], [0, 0, 1, 1], [], []>} : vector<128x64xbf16>, vector<64x36xbf16>, vector<128x36xf32> -> vector<128x36xf32>
    %61 = arith.addf %54, %60 : vector<128x36xf32>
    %62 = vector.extract_strided_slice %2 {offsets = [2, 2, 0], sizes = [8, 16, 64], strides = [1, 1, 1]} : vector<10x18x64xf32> to vector<8x16x64xf32>
    %63 = vector.shape_cast %62 : vector<8x16x64xf32> to vector<128x64xf32>
    %64 = arith.truncf %63 : vector<128x64xf32> to vector<128x64xbf16>
    %c8 = arith.constant 8 : index
    %c0_32 = arith.constant 0 : index
    %c0_33 = arith.constant 0 : index
    %65 = vector.load %arg3[%c8, %c0_32, %c0_33] : memref<9x64x36xbf16, #tpu.memory_space<vmem>>, vector<1x64x36xbf16>
    %66 = vector.shape_cast %65 : vector<1x64x36xbf16> to vector<64x36xbf16>
    %cst_34 = arith.constant dense<0.000000e+00> : vector<128x36xf32>
    %67 = tpu.matmul %64, %66, %cst_34 {dimension_numbers = #tpu.dot_dimension_numbers<[1], [0], [0], [1], [0, 0, 1, 1], [], []>} : vector<128x64xbf16>, vector<64x36xbf16>, vector<128x36xf32> -> vector<128x36xf32>
    %68 = arith.addf %61, %67 : vector<128x36xf32>
    %c0_35 = arith.constant 0 : index
    %c0_36 = arith.constant 0 : index
    %69 = vector.load %arg4[%c0_35, %c0_36] : memref<1x36xf32, #tpu.memory_space<vmem>>, vector<1x36xf32>
    %70 = vector.broadcast %69 : vector<1x36xf32> to vector<128x36xf32>
    %71 = arith.addf %68, %70 : vector<128x36xf32>
    %cst_37 = arith.constant dense<0xFF800000> : vector<128xf32>
    %72 = vector.multi_reduction <maximumf>, %71, %cst_37 [1] : vector<128x36xf32> to vector<128xf32>
    %73 = vector.shape_cast %72 : vector<128xf32> to vector<128x1xf32>
    %74 = vector.broadcast %73 : vector<128x1xf32> to vector<128x36xf32>
    %75 = arith.subf %71, %74 : vector<128x36xf32>
    %76 = math.exp %75 : vector<128x36xf32>
    %cst_38 = arith.constant dense<0.000000e+00> : vector<128xf32>
    %77 = vector.multi_reduction <add>, %76, %cst_38 [1] : vector<128x36xf32> to vector<128xf32>
    %78 = vector.shape_cast %77 : vector<128xf32> to vector<128x1xf32>
    %cst_39 = arith.constant 0.000000e+00 : f32
    %79 = vector.broadcast %cst_39 : f32 to vector<128x1xf32>
    %80 = vector.extract_strided_slice %4 {offsets = [0, 0, 0], sizes = [8, 16, 4], strides = [1, 1, 1]} : vector<10x18x4xf32> to vector<8x16x4xf32>
    %81 = vector.shape_cast %80 : vector<8x16x4xf32> to vector<128x4xf32>
    %82 = vector.extract_strided_slice %76 {offsets = [0, 0], sizes = [128, 4], strides = [1, 1]} : vector<128x36xf32> to vector<128x4xf32>
    %83 = arith.mulf %82, %81 : vector<128x4xf32>
    %cst_40 = arith.constant dense<0.000000e+00> : vector<128xf32>
    %84 = vector.multi_reduction <add>, %83, %cst_40 [1] : vector<128x4xf32> to vector<128xf32>
    %85 = vector.shape_cast %84 : vector<128xf32> to vector<128x1xf32>
    %86 = arith.addf %79, %85 : vector<128x1xf32>
    %87 = vector.extract_strided_slice %4 {offsets = [0, 1, 0], sizes = [8, 16, 4], strides = [1, 1, 1]} : vector<10x18x4xf32> to vector<8x16x4xf32>
    %88 = vector.shape_cast %87 : vector<8x16x4xf32> to vector<128x4xf32>
    %89 = vector.extract_strided_slice %76 {offsets = [0, 4], sizes = [128, 4], strides = [1, 1]} : vector<128x36xf32> to vector<128x4xf32>
    %90 = arith.mulf %89, %88 : vector<128x4xf32>
    %cst_41 = arith.constant dense<0.000000e+00> : vector<128xf32>
    %91 = vector.multi_reduction <add>, %90, %cst_41 [1] : vector<128x4xf32> to vector<128xf32>
    %92 = vector.shape_cast %91 : vector<128xf32> to vector<128x1xf32>
    %93 = arith.addf %86, %92 : vector<128x1xf32>
    %94 = vector.extract_strided_slice %4 {offsets = [0, 2, 0], sizes = [8, 16, 4], strides = [1, 1, 1]} : vector<10x18x4xf32> to vector<8x16x4xf32>
    %95 = vector.shape_cast %94 : vector<8x16x4xf32> to vector<128x4xf32>
    %96 = vector.extract_strided_slice %76 {offsets = [0, 8], sizes = [128, 4], strides = [1, 1]} : vector<128x36xf32> to vector<128x4xf32>
    %97 = arith.mulf %96, %95 : vector<128x4xf32>
    %cst_42 = arith.constant dense<0.000000e+00> : vector<128xf32>
    %98 = vector.multi_reduction <add>, %97, %cst_42 [1] : vector<128x4xf32> to vector<128xf32>
    %99 = vector.shape_cast %98 : vector<128xf32> to vector<128x1xf32>
    %100 = arith.addf %93, %99 : vector<128x1xf32>
    %101 = vector.extract_strided_slice %4 {offsets = [1, 0, 0], sizes = [8, 16, 4], strides = [1, 1, 1]} : vector<10x18x4xf32> to vector<8x16x4xf32>
    %102 = vector.shape_cast %101 : vector<8x16x4xf32> to vector<128x4xf32>
    %103 = vector.extract_strided_slice %76 {offsets = [0, 12], sizes = [128, 4], strides = [1, 1]} : vector<128x36xf32> to vector<128x4xf32>
    %104 = arith.mulf %103, %102 : vector<128x4xf32>
    %cst_43 = arith.constant dense<0.000000e+00> : vector<128xf32>
    %105 = vector.multi_reduction <add>, %104, %cst_43 [1] : vector<128x4xf32> to vector<128xf32>
    %106 = vector.shape_cast %105 : vector<128xf32> to vector<128x1xf32>
    %107 = arith.addf %100, %106 : vector<128x1xf32>
    %108 = vector.extract_strided_slice %4 {offsets = [1, 1, 0], sizes = [8, 16, 4], strides = [1, 1, 1]} : vector<10x18x4xf32> to vector<8x16x4xf32>
    %109 = vector.shape_cast %108 : vector<8x16x4xf32> to vector<128x4xf32>
    %110 = vector.extract_strided_slice %76 {offsets = [0, 16], sizes = [128, 4], strides = [1, 1]} : vector<128x36xf32> to vector<128x4xf32>
    %111 = arith.mulf %110, %109 : vector<128x4xf32>
    %cst_44 = arith.constant dense<0.000000e+00> : vector<128xf32>
    %112 = vector.multi_reduction <add>, %111, %cst_44 [1] : vector<128x4xf32> to vector<128xf32>
    %113 = vector.shape_cast %112 : vector<128xf32> to vector<128x1xf32>
    %114 = arith.addf %107, %113 : vector<128x1xf32>
    %115 = vector.extract_strided_slice %4 {offsets = [1, 2, 0], sizes = [8, 16, 4], strides = [1, 1, 1]} : vector<10x18x4xf32> to vector<8x16x4xf32>
    %116 = vector.shape_cast %115 : vector<8x16x4xf32> to vector<128x4xf32>
    %117 = vector.extract_strided_slice %76 {offsets = [0, 20], sizes = [128, 4], strides = [1, 1]} : vector<128x36xf32> to vector<128x4xf32>
    %118 = arith.mulf %117, %116 : vector<128x4xf32>
    %cst_45 = arith.constant dense<0.000000e+00> : vector<128xf32>
    %119 = vector.multi_reduction <add>, %118, %cst_45 [1] : vector<128x4xf32> to vector<128xf32>
    %120 = vector.shape_cast %119 : vector<128xf32> to vector<128x1xf32>
    %121 = arith.addf %114, %120 : vector<128x1xf32>
    %122 = vector.extract_strided_slice %4 {offsets = [2, 0, 0], sizes = [8, 16, 4], strides = [1, 1, 1]} : vector<10x18x4xf32> to vector<8x16x4xf32>
    %123 = vector.shape_cast %122 : vector<8x16x4xf32> to vector<128x4xf32>
    %124 = vector.extract_strided_slice %76 {offsets = [0, 24], sizes = [128, 4], strides = [1, 1]} : vector<128x36xf32> to vector<128x4xf32>
    %125 = arith.mulf %124, %123 : vector<128x4xf32>
    %cst_46 = arith.constant dense<0.000000e+00> : vector<128xf32>
    %126 = vector.multi_reduction <add>, %125, %cst_46 [1] : vector<128x4xf32> to vector<128xf32>
    %127 = vector.shape_cast %126 : vector<128xf32> to vector<128x1xf32>
    %128 = arith.addf %121, %127 : vector<128x1xf32>
    %129 = vector.extract_strided_slice %4 {offsets = [2, 1, 0], sizes = [8, 16, 4], strides = [1, 1, 1]} : vector<10x18x4xf32> to vector<8x16x4xf32>
    %130 = vector.shape_cast %129 : vector<8x16x4xf32> to vector<128x4xf32>
    %131 = vector.extract_strided_slice %76 {offsets = [0, 28], sizes = [128, 4], strides = [1, 1]} : vector<128x36xf32> to vector<128x4xf32>
    %132 = arith.mulf %131, %130 : vector<128x4xf32>
    %cst_47 = arith.constant dense<0.000000e+00> : vector<128xf32>
    %133 = vector.multi_reduction <add>, %132, %cst_47 [1] : vector<128x4xf32> to vector<128xf32>
    %134 = vector.shape_cast %133 : vector<128xf32> to vector<128x1xf32>
    %135 = arith.addf %128, %134 : vector<128x1xf32>
    %136 = vector.extract_strided_slice %4 {offsets = [2, 2, 0], sizes = [8, 16, 4], strides = [1, 1, 1]} : vector<10x18x4xf32> to vector<8x16x4xf32>
    %137 = vector.shape_cast %136 : vector<8x16x4xf32> to vector<128x4xf32>
    %138 = vector.extract_strided_slice %76 {offsets = [0, 32], sizes = [128, 4], strides = [1, 1]} : vector<128x36xf32> to vector<128x4xf32>
    %139 = arith.mulf %138, %137 : vector<128x4xf32>
    %cst_48 = arith.constant dense<0.000000e+00> : vector<128xf32>
    %140 = vector.multi_reduction <add>, %139, %cst_48 [1] : vector<128x4xf32> to vector<128xf32>
    %141 = vector.shape_cast %140 : vector<128xf32> to vector<128x1xf32>
    %142 = arith.addf %135, %141 : vector<128x1xf32>
    %143 = tpu.reciprocal %78 {approx = true} : vector<128x1xf32> -> vector<128x1xf32>
    %144 = arith.mulf %142, %143 : vector<128x1xf32>
    %c0_49 = arith.constant 0 : index
    %c0_50 = arith.constant 0 : index
    %c0_51 = arith.constant 0 : index
    %145 = vector.load %arg5[%c0_49, %c0_50, %c0_51] : memref<1x128x1xf32, #tpu.memory_space<vmem>>, vector<1x128x1xf32>
    %146 = vector.shape_cast %145 : vector<1x128x1xf32> to vector<128x1xf32>
    %147 = vector.shape_cast %144 : vector<128x1xf32> to vector<1x128x1xf32>
    tpu.vector_store %arg5[%c0_49, %c0_50, %c0_51], %147 {strides = array<i32>} : memref<1x128x1xf32, #tpu.memory_space<vmem>>, vector<1x128x1xf32>,
    return
  }
  func.func @transform_0(%arg0: i32) -> (i32, i32, i32, i32) {
    %c0_i32 = arith.constant 0 : i32
    %c0_i32_0 = arith.constant 0 : i32
    %c0_i32_1 = arith.constant 0 : i32
    %c0_i32_2 = arith.constant 0 : i32
    return %arg0, %c0_i32, %c0_i32_0, %c0_i32_1 : i32, i32, i32, i32
  }
  func.func @transform_1(%arg0: i32) -> (i32, i32, i32, i32) {
    %c0_i32 = arith.constant 0 : i32
    %c0_i32_0 = arith.constant 0 : i32
    %c0_i32_1 = arith.constant 0 : i32
    %c0_i32_2 = arith.constant 0 : i32
    return %arg0, %c0_i32, %c0_i32_0, %c0_i32_1 : i32, i32, i32, i32
  }
  func.func @transform_2(%arg0: i32) -> (i32, i32, i32) {
    %c0_i32 = arith.constant 0 : i32
    %c0_i32_0 = arith.constant 0 : i32
    %c0_i32_1 = arith.constant 0 : i32
    %c0_i32_2 = arith.constant 0 : i32
    return %c0_i32, %c0_i32_0, %c0_i32_1 : i32, i32, i32
  }
  func.func @transform_3(%arg0: i32) -> (i32, i32) {
    %c0_i32 = arith.constant 0 : i32
    %c0_i32_0 = arith.constant 0 : i32
    %c0_i32_1 = arith.constant 0 : i32
    return %c0_i32, %c0_i32_0 : i32, i32
  }
  func.func @transform_4(%arg0: i32) -> (i32, i32, i32) {
    %c0_i32 = arith.constant 0 : i32
    %c0_i32_0 = arith.constant 0 : i32
    %c0_i32_1 = arith.constant 0 : i32
    return %arg0, %c0_i32, %c0_i32_0 : i32, i32, i32
  }
}

</mosaic_0001>

<llo_original>
// kernel: local_filter_operation.7
$region0: #{local_filter_operation.7}
  #allocation0 [shape = 'u32[]', space=smem, size = 0x4, offset = 0x4, fixed_abs, tag = 'smem constant byte address 0x4 - core index']
  #allocation1 [shape = 'u32[144,128]{1,0:T(1,128)}', space=vmem, size = 0x12000, scoped, tag = 'internal scratch']
  #allocation2 [shape = 'f32[1]{0:T(128)S(6)}', space=smem, size = 0x200, scoped, tag = 'scoped memory for local_filter_operation.7']
  %s0 = inlined_call_operand.vmem [shape: bf16[4,10,18,4], index: 0, kind: input, shape index: {}]
  %s1 = inlined_call_operand.vmem [shape: bf16[9,4,32], index: 1, kind: input, shape index: {}]
  %s2 = inlined_call_operand.vmem [shape: f32[1,32], index: 2, kind: input, shape index: {}]
  %s3 = inlined_call_operand.<no memory space> [shape: f32[1], index: 3, kind: input, shape index: {}]
  %s4 = inlined_call_operand.vmem [shape: f32[4,128,32], index: 4, kind: output, shape index: {}]
  %s5 = sld [smem:[#allocation0]]
  $region49: #{local_filter_operation.7} parent=0
    _
  %s7 = ssub.s32 1, %s5
  %s8 = scalar_select 0, %s7, %s5
  %9 = sst [smem:[#allocation2]] %s3
  loop: start=0, step=1, limit=6
  $region2: #{local_filter_operation.7} parent=0 // loop_pre_header
    _
  $region3: #{local_filter_operation.7} parent=0 // loop_header
    %s11 = sphi 0, %s15
    %p12 = scmp.ge.s32.totalorder %s11, 6
    %s21 = sphi 0, %s23
    %s24 = sphi 0, %s21
    %s25 = sphi 0, %s24
    %s41 = sphi 0, %s25
    %s45 = sphi 0, %s45
    %s47 = sphi 0, %s45
    %s48 = sphi 0, %s47
    %s62 = sphi 0, %s48
    %s66 = sphi 0, %s66
    %s68 = sphi 0, %s66
    %s69 = sphi 0, %s68
    %s83 = sphi 0, %s69
    %s87 = sphi 0, %s87
    %s89 = sphi 0, %s87
    %s90 = sphi 0, %s89
    %s104 = sphi 0, %s90
    %s110 = sphi 0, %s112
    %s113 = sphi 0, %s110
    %s114 = sphi 0, %s113
    %s130 = sphi 0, %s114
  $region4: #{local_filter_operation.7} parent=0 // loop_header_branch
    %14 = sbr.rel (%p12) target = $region8
  $region5: #{local_filter_operation.7} parent=0 // loop_body
    %s16 = ssub.s32 %s11, 1
    %s17 = ssub.s32 %s11, 2
    %s18 = sadd.s32 %s11, 1
    %s19 = ssub.s32 %s11, %s18
    %p20 = scmp.eq.s32.totalorder %s19, 0
    %s22 = sadd.s32 %s21, 1
    %s23 = scalar_select %p20, %s21, %s22
    %p26 = pneg %p20
    %p27 = scmp.eq.s32.totalorder %s11, 3
    %p28 = por %p26, %p27
    %p29 = scmp.ne.s32.totalorder %s21, %s24
    %p30 = scmp.eq.s32.totalorder %s11, 0
    %p31 = por %p29, %p30
    %p32 = scmp.ne.s32.totalorder %s21, %s24
    %p33 = scmp.eq.s32.totalorder %s16, 3
    %p34 = por %p32, %p33
    %p35 = scmp.ne.s32.totalorder %s24, %s25
    %p36 = scmp.eq.s32.totalorder %s16, 0
    %p37 = por %p35, %p36
    %p38 = scmp.ne.s32.totalorder %s24, %s25
    %p39 = scmp.eq.s32.totalorder %s17, 3
    %p40 = por %p38, %p39
    %p42 = scmp.ne.s32.totalorder %s25, %s41
    %p43 = scmp.eq.s32.totalorder %s17, 0
    %p44 = por %p42, %p43
    %s46 = sadd.s32 %s45, 1
    %p49 = scmp.eq.s32.totalorder %s11, 3
    %p50 = scmp.ne.s32.totalorder %s45, %s47
    %p51 = scmp.eq.s32.totalorder %s11, 0
    %p52 = por %p50, %p51
    %p53 = scmp.ne.s32.totalorder %s45, %s47
    %p54 = scmp.eq.s32.totalorder %s16, 3
    %p55 = por %p53, %p54
    %p56 = scmp.ne.s32.totalorder %s47, %s48
    %p57 = scmp.eq.s32.totalorder %s16, 0
    %p58 = por %p56, %p57
    %p59 = scmp.ne.s32.totalorder %s47, %s48
    %p60 = scmp.eq.s32.totalorder %s17, 3
    %p61 = por %p59, %p60
    %p63 = scmp.ne.s32.totalorder %s48, %s62
    %p64 = scmp.eq.s32.totalorder %s17, 0
    %p65 = por %p63, %p64
    %s67 = sadd.s32 %s66, 1
    %p70 = scmp.eq.s32.totalorder %s11, 3
    %p71 = scmp.ne.s32.totalorder %s66, %s68
    %p72 = scmp.eq.s32.totalorder %s11, 0
    %p73 = por %p71, %p72
    %p74 = scmp.ne.s32.totalorder %s66, %s68
    %p75 = scmp.eq.s32.totalorder %s16, 3
    %p76 = por %p74, %p75
    %p77 = scmp.ne.s32.totalorder %s68, %s69
    %p78 = scmp.eq.s32.totalorder %s16, 0
    %p79 = por %p77, %p78
    %p80 = scmp.ne.s32.totalorder %s68, %s69
    %p81 = scmp.eq.s32.totalorder %s17, 3
    %p82 = por %p80, %p81
    %p84 = scmp.ne.s32.totalorder %s69, %s83
    %p85 = scmp.eq.s32.totalorder %s17, 0
    %p86 = por %p84, %p85
    %s88 = sadd.s32 %s87, 1
    %p91 = scmp.eq.s32.totalorder %s11, 3
    %p92 = scmp.ne.s32.totalorder %s87, %s89
    %p93 = scmp.eq.s32.totalorder %s11, 0
    %p94 = por %p92, %p93
    %p95 = scmp.ne.s32.totalorder %s87, %s89
    %p96 = scmp.eq.s32.totalorder %s16, 3
    %p97 = por %p95, %p96
    %p98 = scmp.ne.s32.totalorder %s89, %s90
    %p99 = scmp.eq.s32.totalorder %s16, 0
    %p100 = por %p98, %p99
    %p101 = scmp.ne.s32.totalorder %s89, %s90
    %p102 = scmp.eq.s32.totalorder %s17, 3
    %p103 = por %p101, %p102
    %p105 = scmp.ne.s32.totalorder %s90, %s104
    %p106 = scmp.eq.s32.totalorder %s17, 0
    %p107 = por %p105, %p106
    %s108 = ssub.s32 %s11, %s18
    %p109 = scmp.eq.s32.totalorder %s108, 0
    %s111 = sadd.s32 %s110, 1
    %s112 = scalar_select %p109, %s110, %s111
    %p115 = pneg %p109
    %p116 = scmp.eq.s32.totalorder %s11, 3
    %p117 = por %p115, %p116
    %p118 = scmp.ne.s32.totalorder %s110, %s113
    %p119 = scmp.eq.s32.totalorder %s11, 0
    %p120 = por %p118, %p119
    %p121 = scmp.ne.s32.totalorder %s110, %s113
    %p122 = scmp.eq.s32.totalorder %s16, 3
    %p123 = por %p121, %p122
    %p124 = scmp.ne.s32.totalorder %s113, %s114
    %p125 = scmp.eq.s32.totalorder %s16, 0
    %p126 = por %p124, %p125
    %p127 = scmp.ne.s32.totalorder %s113, %s114
    %p128 = scmp.eq.s32.totalorder %s17, 3
    %p129 = por %p127, %p128
    %p131 = scmp.ne.s32.totalorder %s114, %s130
    %p132 = scmp.eq.s32.totalorder %s17, 0
    %p133 = por %p131, %p132
    %p134 = scmp.le.s32.totalorder 1, %s11
    %p135 = scmp.lt.s32.totalorder %s11, 5
    %p136 = pnand %p134, %p135
    %p137 = pneg %p136
    // Predicated region
    $region9: #{local_filter_operation.7} parent=5 // pred_check
      _
    $region10: #{local_filter_operation.7} parent=5 // pred_check_branch
      %139 = sbr.rel (%p136) target = $region12
    $region11: #{local_filter_operation.7} parent=5 // pred_region
      %s140 = ssub.s32 %s11, 1
      // Predicated region
      $region13: #{local_filter_operation.7} parent=11 // pred_check
        %p141 = pneg %p58
      $region14: #{local_filter_operation.7} parent=11 // pred_check_branch
        %143 = sbr.rel (%p141) target = $region16
      $region15: #{local_filter_operation.7} parent=11 // pred_region
        _
      $region16: #{local_filter_operation.7} parent=11 // pred_fallthru
        _
      // Predicated region
      $region17: #{local_filter_operation.7} parent=11 // pred_check
        %p144 = pneg %p79
      $region18: #{local_filter_operation.7} parent=11 // pred_check_branch
        %146 = sbr.rel (%p144) target = $region20
      $region19: #{local_filter_operation.7} parent=11 // pred_region
        _
      $region20: #{local_filter_operation.7} parent=11 // pred_fallthru
        _
      // Predicated region
      $region21: #{local_filter_operation.7} parent=11 // pred_check
        %p147 = pneg %p100
      $region22: #{local_filter_operation.7} parent=11 // pred_check_branch
        %149 = sbr.rel (%p147) target = $region24
      $region23: #{local_filter_operation.7} parent=11 // pred_region
        _
      $region24: #{local_filter_operation.7} parent=11 // pred_fallthru
        _
    $region12: #{local_filter_operation.7} parent=5 // pred_fallthru
      _
    %p150 = scmp.lt.s32.totalorder %s11, 4
    // Predicated region
    $region25: #{local_filter_operation.7} parent=5 // pred_check
      %p151 = pneg %p150
    $region26: #{local_filter_operation.7} parent=5 // pred_check_branch
      %153 = sbr.rel (%p151) target = $region28
    $region27: #{local_filter_operation.7} parent=5 // pred_region
      // Predicated region
      $region29: #{local_filter_operation.7} parent=27 // pred_check
        %p154 = pneg %p31
      $region30: #{local_filter_operation.7} parent=27 // pred_check_branch
        %156 = sbr.rel (%p154) target = $region32
      $region31: #{local_filter_operation.7} parent=27 // pred_region
        %p157 = scmp.lt.s32.totalorder %s11, 3
        %s158 = scalar_select %p157, %s11, 3
        %s159 = smul.addr %s158, 30
        %s160 = smul.addr %s159, 4
        %s161 = scalar_lea.vmem %s0, %s160
      $region32: #{local_filter_operation.7} parent=27 // pred_fallthru
        _
    $region28: #{local_filter_operation.7} parent=5 // pred_fallthru
      _
    %p162 = scmp.le.s32.totalorder 1, %s11
    %p163 = scmp.lt.s32.totalorder %s11, 5
    %p164 = pnand %p162, %p163
    %p165 = pneg %p164
    // Predicated region
    $region33: #{local_filter_operation.7} parent=5 // pred_check
      _
    $region34: #{local_filter_operation.7} parent=5 // pred_check_branch
      %167 = sbr.rel (%p164) target = $region36
    $region35: #{local_filter_operation.7} parent=5 // pred_region
      %s168 = ssub.s32 %s11, 1
      %p169 = scmp.lt.s32.totalorder %s16, 3
      %s170 = scalar_select %p169, %s16, 3
      %s171 = smul.addr %s170, 30
      %s172 = smul.addr %s171, 4
      %s173 = scalar_lea.vmem %s0, %s172
      %p174 = pneg %p37
      %p175 = pneg %p34
      %p176 = pneg %p58
      %p177 = pneg %p55
      %p178 = pneg %p79
      %p179 = pneg %p76
      %p180 = pneg %p100
      %p181 = pneg %p97
      %p182 = pneg %p126
      %p183 = pneg %p123
      %p184 = scmp.lt.s32.totalorder %s16, 3
      %s185 = scalar_select %p184, %s16, 3
      %s186 = smul.addr %s185, 16
      %s187 = smul.addr %s186, 8
      %s188 = scalar_lea.vmem %s4, %s187
      %p189 = scmp.lt.s32.totalorder %s16, 3
      %s190 = scalar_select %p189, %s16, 3
      %s191 = smul.addr %s190, 30
      %s192 = smul.addr %s191, 4
      %s193 = scalar_lea.vmem %s0, %s192
      %p194 = scmp.lt.s32.totalorder %s16, 3
      %s195 = scalar_select %p194, %s16, 3
      %s196 = smul.addr %s195, 16
      %s197 = smul.addr %s196, 8
      %s198 = scalar_lea.vmem %s4, %s197
      %v200 = vld [vmem:[%s193] sm:$0xf]
      %v201 = vld [vmem:[%s193 + $0x4] sm:$0xf]
      %v202 = vld [vmem:[%s193 + $0x8] sm:$0x1]
      %v203 = vld [vmem:[%s193 + $0xc] sm:$0xf]
      %v204 = vld [vmem:[%s193 + $0x10] sm:$0xf]
      %v205 = vld [vmem:[%s193 + $0x14] sm:$0x1]
      %v206 = vld [vmem:[%s193 + $0x18] sm:$0xf]
      %v207 = vld [vmem:[%s193 + $0x1c] sm:$0xf]
      %v208 = vld [vmem:[%s193 + $0x20] sm:$0x1]
      %v209 = vld [vmem:[%s193 + $0x24] sm:$0xf]
      %v210 = vld [vmem:[%s193 + $0x28] sm:$0xf]
      %v211 = vld [vmem:[%s193 + $0x2c] sm:$0x1]
      %v212 = vld [vmem:[%s193 + $0x30] sm:$0xf]
      %v213 = vld [vmem:[%s193 + $0x34] sm:$0xf]
      %v214 = vld [vmem:[%s193 + $0x38] sm:$0x1]
      %v215 = vld [vmem:[%s193 + $0x3c] sm:$0xf]
      %v216 = vld [vmem:[%s193 + $0x40] sm:$0xf]
      %v217 = vld [vmem:[%s193 + $0x44] sm:$0x1]
      %v218 = vld [vmem:[%s193 + $0x48] sm:$0xf]
      %v219 = vld [vmem:[%s193 + $0x4c] sm:$0xf]
      %v220 = vld [vmem:[%s193 + $0x50] sm:$0x1]
      %v221 = vld [vmem:[%s193 + $0x54] sm:$0xf]
      %v222 = vld [vmem:[%s193 + $0x58] sm:$0xf]
      %v223 = vld [vmem:[%s193 + $0x5c] sm:$0x1]
      %v224 = vld [vmem:[%s193 + $0x60] sm:$0xf]
      %v225 = vld [vmem:[%s193 + $0x64] sm:$0xf]
      %v226 = vld [vmem:[%s193 + $0x68] sm:$0x1]
      %v227 = vld [vmem:[%s193 + $0x6c] sm:$0xf]
      %v228 = vld [vmem:[%s193 + $0x70] sm:$0xf]
      %v229 = vld [vmem:[%s193 + $0x74] sm:$0x1]
      %v230 = vunpack.c.l.bf16 %v200
      %v231 = vunpack.c.l.bf16 %v201
      %v232 = vunpack.c.l.bf16 %v202
      %v233 = vunpack.c.l.bf16 %v203
      %v234 = vunpack.c.l.bf16 %v204
      %v235 = vunpack.c.l.bf16 %v205
      %v236 = vunpack.c.l.bf16 %v206
      %v237 = vunpack.c.l.bf16 %v207
      %v238 = vunpack.c.l.bf16 %v208
      %v239 = vunpack.c.l.bf16 %v209
      %v240 = vunpack.c.l.bf16 %v210
      %v241 = vunpack.c.l.bf16 %v211
      %v242 = vunpack.c.l.bf16 %v212
      %v243 = vunpack.c.l.bf16 %v213
      %v244 = vunpack.c.l.bf16 %v214
      %v245 = vunpack.c.l.bf16 %v215
      %v246 = vunpack.c.l.bf16 %v216
      %v247 = vunpack.c.l.bf16 %v217
      %v248 = vunpack.c.l.bf16 %v218
      %v249 = vunpack.c.l.bf16 %v219
      %v250 = vunpack.c.l.bf16 %v220
      %v251 = vunpack.c.l.bf16 %v221
      %v252 = vunpack.c.l.bf16 %v222
      %v253 = vunpack.c.l.bf16 %v223
      %v254 = vunpack.c.l.bf16 %v224
      %v255 = vunpack.c.l.bf16 %v225
      %v256 = vunpack.c.l.bf16 %v226
      %v257 = vunpack.c.l.bf16 %v227
      %v258 = vunpack.c.l.bf16 %v228
      %v259 = vunpack.c.l.bf16 %v229
      %v260 = vpack.c.bf16 %v231, %v230
      %v261 = vpack.c.bf16 %v234, %v233
      %v262 = vpack.c.bf16 %v237, %v236
      %v263 = vpack.c.bf16 %v240, %v239
      %v264 = vpack.c.bf16 %v243, %v242
      %v265 = vpack.c.bf16 %v246, %v245
      %v266 = vpack.c.bf16 %v249, %v248
      %v267 = vpack.c.bf16 %v252, %v251
      %v268 = vld [vmem:[%s1] sm:$0x3]
      %vm293 = vcmask 1046528
      %v294 = vrot.slane %v230, 1
      %v295 = vrot.slane %v231, 1
      %v296 = vsel %vm293, %v294, %v295
      %v297 = vrot.slane %v232, 1
      %v298 = vsel %vm293, %v295, %v297
      %v299 = vrot.slane %v233, 1
      %v300 = vrot.slane %v234, 1
      %v301 = vsel %vm293, %v299, %v300
      %v302 = vrot.slane %v235, 1
      %v303 = vsel %vm293, %v300, %v302
      %v304 = vrot.slane %v236, 1
      %v305 = vrot.slane %v237, 1
      %v306 = vsel %vm293, %v304, %v305
      %v307 = vrot.slane %v238, 1
      %v308 = vsel %vm293, %v305, %v307
      %v309 = vrot.slane %v239, 1
      %v310 = vrot.slane %v240, 1
      %v311 = vsel %vm293, %v309, %v310
      %v312 = vrot.slane %v241, 1
      %v313 = vsel %vm293, %v310, %v312
      %v314 = vrot.slane %v242, 1
      %v315 = vrot.slane %v243, 1
      %v316 = vsel %vm293, %v314, %v315
      %v317 = vrot.slane %v244, 1
      %v318 = vsel %vm293, %v315, %v317
      %v319 = vrot.slane %v245, 1
      %v320 = vrot.slane %v246, 1
      %v321 = vsel %vm293, %v319, %v320
      %v322 = vrot.slane %v247, 1
      %v323 = vsel %vm293, %v320, %v322
      %v324 = vrot.slane %v248, 1
      %v325 = vrot.slane %v249, 1
      %v326 = vsel %vm293, %v324, %v325
      %v327 = vrot.slane %v250, 1
      %v328 = vsel %vm293, %v325, %v327
      %v329 = vrot.slane %v251, 1
      %v330 = vrot.slane %v252, 1
      %v331 = vsel %vm293, %v329, %v330
      %v332 = vrot.slane %v253, 1
      %v333 = vsel %vm293, %v330, %v332
      %v350 = vpack.c.bf16 %v298, %v296
      %v351 = vpack.c.bf16 %v303, %v301
      %v352 = vpack.c.bf16 %v308, %v306
      %v353 = vpack.c.bf16 %v313, %v311
      %v354 = vpack.c.bf16 %v318, %v316
      %v355 = vpack.c.bf16 %v323, %v321
      %v356 = vpack.c.bf16 %v328, %v326
      %v357 = vpack.c.bf16 %v333, %v331
      %s358 = scalar_lea.vmem %s1, 2
      %v359 = vld [vmem:[%s358] sm:$0x3]
      %vm360 = vcmask 31744
      %v362 = vsel %vm360, %v350, 0
      %v365 = vsel %vm360, %v351, 0
      %v368 = vsel %vm360, %v352, 0
      %v371 = vsel %vm360, %v353, 0
      %v374 = vsel %vm360, %v354, 0
      %v377 = vsel %vm360, %v355, 0
      %v380 = vsel %vm360, %v356, 0
      %v383 = vsel %vm360, %v357, 0
      %vm385 = vcmask 1041408
      %v387 = vsel %vm385, %v359, 0
      %389 = vmatprep.subr.bf16.mxu0 0
      %390 = vmatpush1.bf16.msra.mxu0 %v387
      %391 = vmatprep.subr.bf16.mxu0 0
      %392 = vmatpush1.bf16.msra.mxu0 0
      %393 = vmatprep.subr.bf16.mxu0 0
      %394 = vmatpush1.bf16.msra.mxu0 0
      %395 = vmatprep.subr.bf16.mxu0 0
      %396 = vmatpush1.bf16.msra.mxu0 0
      %397 = vmatprep.subr.bf16.mxu0 0
      %398 = vmatpush1.bf16.msra.mxu0 0
      %399 = vmatprep.subr.bf16.mxu0 0
      %400 = vmatpush1.bf16.msra.mxu0 0
      %401 = vmatprep.subr.bf16.mxu0 0
      %402 = vmatpush1.bf16.msra.mxu0 0
      %403 = vmatprep.subr.bf16.mxu0 0
      %404 = vmatpush1.bf16.msra.mxu0 0
      %405 = vmatprep.subr.bf16.mxu0 0
      %406 = vmatpush1.bf16.msra.mxu0 0
      %407 = vmatprep.subr.bf16.mxu0 0
      %408 = vmatpush1.bf16.msra.mxu0 0
      %409 = vmatprep.subr.bf16.mxu0 0
      %410 = vmatpush1.bf16.msra.mxu0 0
      %411 = vmatprep.subr.bf16.mxu0 0
      %412 = vmatpush1.bf16.msra.mxu0 0
      %413 = vmatprep.subr.bf16.mxu0 0
      %414 = vmatpush1.bf16.msra.mxu0 0
      %415 = vmatprep.subr.bf16.mxu0 0
      %416 = vmatpush1.bf16.msra.mxu0 0
      %417 = vmatprep.subr.bf16.mxu0 0
      %418 = vmatpush1.bf16.msra.mxu0 0
      %419 = vmatprep.subr.bf16.mxu0 0
      %420 = vmatpush1.bf16.msra.mxu0 0
      %421 = vmatprep.mubr.bf16.mxu0 0
      %422 = vmatmul.mubr.bf16.gmra.mrb[0].mxu0 %v362
      %v423 = vpop.f32.mrb[0].mxu0
      %v424 = vadd.f32 0.0, %v423
      %v425 = vpop.f32.mrb[0].mxu0
      %v426 = vpop.f32.mrb[0].mxu0
      %v427 = vadd.f32 0.0, %v426
      %v428 = vpop.f32.mrb[0].mxu0
      %429 = vmatprep.mubr.bf16.mxu0 0
      %430 = vmatmul.mubr.bf16.gmra.mrb[0].mxu0 %v365
      %v431 = vpop.f32.mrb[0].mxu0
      %v432 = vadd.f32 0.0, %v431
      %v433 = vpop.f32.mrb[0].mxu0
      %v434 = vpop.f32.mrb[0].mxu0
      %v435 = vadd.f32 0.0, %v434
      %v436 = vpop.f32.mrb[0].mxu0
      %437 = vmatprep.mubr.bf16.mxu0 0
      %438 = vmatmul.mubr.bf16.gmra.mrb[0].mxu0 %v368
      %v439 = vpop.f32.mrb[0].mxu0
      %v440 = vadd.f32 0.0, %v439
      %v441 = vpop.f32.mrb[0].mxu0
      %v442 = vpop.f32.mrb[0].mxu0
      %v443 = vadd.f32 0.0, %v442
      %v444 = vpop.f32.mrb[0].mxu0
      %445 = vmatprep.mubr.bf16.mxu0 0
      %446 = vmatmul.mubr.bf16.gmra.mrb[0].mxu0 %v371
      %v447 = vpop.f32.mrb[0].mxu0
      %v448 = vadd.f32 0.0, %v447
      %v449 = vpop.f32.mrb[0].mxu0
      %v450 = vpop.f32.mrb[0].mxu0
      %v451 = vadd.f32 0.0, %v450
      %v452 = vpop.f32.mrb[0].mxu0
      %453 = vmatprep.mubr.bf16.mxu0 0
      %454 = vmatmul.mubr.bf16.gmra.mrb[0].mxu0 %v374
      %v455 = vpop.f32.mrb[0].mxu0
      %v456 = vadd.f32 0.0, %v455
      %v457 = vpop.f32.mrb[0].mxu0
      %v458 = vpop.f32.mrb[0].mxu0
      %v459 = vadd.f32 0.0, %v458
      %v460 = vpop.f32.mrb[0].mxu0
      %461 = vmatprep.mubr.bf16.mxu0 0
      %462 = vmatmul.mubr.bf16.gmra.mrb[0].mxu0 %v377
      %v463 = vpop.f32.mrb[0].mxu0
      %v464 = vadd.f32 0.0, %v463
      %v465 = vpop.f32.mrb[0].mxu0
      %v466 = vpop.f32.mrb[0].mxu0
      %v467 = vadd.f32 0.0, %v466
      %v468 = vpop.f32.mrb[0].mxu0
      %469 = vmatprep.mubr.bf16.mxu0 0
      %470 = vmatmul.mubr.bf16.gmra.mrb[0].mxu0 %v380
      %v471 = vpop.f32.mrb[0].mxu0
      %v472 = vadd.f32 0.0, %v471
      %v473 = vpop.f32.mrb[0].mxu0
      %v474 = vpop.f32.mrb[0].mxu0
      %v475 = vadd.f32 0.0, %v474
      %v476 = vpop.f32.mrb[0].mxu0
      %477 = vmatprep.mubr.bf16.mxu0 0
      %478 = vmatmul.mubr.bf16.gmra.mrb[0].mxu0 %v383
      %v479 = vpop.f32.mrb[0].mxu0
      %v480 = vadd.f32 0.0, %v479
      %v481 = vpop.f32.mrb[0].mxu0
      %v482 = vpop.f32.mrb[0].mxu0
      %v483 = vadd.f32 0.0, %v482
      %v484 = vpop.f32.mrb[0].mxu0
      %485 = vdwg.mxu0
      %v487 = vsel %vm360, %v260, 0
      %v490 = vsel %vm360, %v261, 0
      %v493 = vsel %vm360, %v262, 0
      %v496 = vsel %vm360, %v263, 0
      %v499 = vsel %vm360, %v264, 0
      %v502 = vsel %vm360, %v265, 0
      %v505 = vsel %vm360, %v266, 0
      %v508 = vsel %vm360, %v267, 0
      %v511 = vsel %vm385, %v268, 0
      %513 = vmatprep.subr.bf16.mxu0 0
      %514 = vmatpush1.bf16.msra.mxu0 %v511
      %515 = vmatprep.subr.bf16.mxu0 0
      %516 = vmatpush1.bf16.msra.mxu0 0
      %517 = vmatprep.subr.bf16.mxu0 0
      %518 = vmatpush1.bf16.msra.mxu0 0
      %519 = vmatprep.subr.bf16.mxu0 0
      %520 = vmatpush1.bf16.msra.mxu0 0
      %521 = vmatprep.subr.bf16.mxu0 0
      %522 = vmatpush1.bf16.msra.mxu0 0
      %523 = vmatprep.subr.bf16.mxu0 0
      %524 = vmatpush1.bf16.msra.mxu0 0
      %525 = vmatprep.subr.bf16.mxu0 0
      %526 = vmatpush1.bf16.msra.mxu0 0
      %527 = vmatprep.subr.bf16.mxu0 0
      %528 = vmatpush1.bf16.msra.mxu0 0
      %529 = vmatprep.subr.bf16.mxu0 0
      %530 = vmatpush1.bf16.msra.mxu0 0
      %531 = vmatprep.subr.bf16.mxu0 0
      %532 = vmatpush1.bf16.msra.mxu0 0
      %533 = vmatprep.subr.bf16.mxu0 0
      %534 = vmatpush1.bf16.msra.mxu0 0
      %535 = vmatprep.subr.bf16.mxu0 0
      %536 = vmatpush1.bf16.msra.mxu0 0
      %537 = vmatprep.subr.bf16.mxu0 0
      %538 = vmatpush1.bf16.msra.mxu0 0
      %539 = vmatprep.subr.bf16.mxu0 0
      %540 = vmatpush1.bf16.msra.mxu0 0
      %541 = vmatprep.subr.bf16.mxu0 0
      %542 = vmatpush1.bf16.msra.mxu0 0
      %543 = vmatprep.subr.bf16.mxu0 0
      %544 = vmatpush1.bf16.msra.mxu0 0
      %545 = vmatprep.mubr.bf16.mxu0 0
      %546 = vmatmul.mubr.bf16.gmra.mrb[0].mxu0 %v487
      %v547 = vpop.f32.mrb[0].mxu0
      %v548 = vadd.f32 %v424, %v547
      %v549 = vpop.f32.mrb[0].mxu0
      %v550 = vpop.f32.mrb[0].mxu0
      %v551 = vadd.f32 %v427, %v550
      %v552 = vpop.f32.mrb[0].mxu0
      %553 = vmatprep.mubr.bf16.mxu0 0
      %554 = vmatmul.mubr.bf16.gmra.mrb[0].mxu0 %v490
      %v555 = vpop.f32.mrb[0].mxu0
      %v556 = vadd.f32 %v432, %v555
      %v557 = vpop.f32.mrb[0].mxu0
      %v558 = vpop.f32.mrb[0].mxu0
      %v559 = vadd.f32 %v435, %v558
      %v560 = vpop.f32.mrb[0].mxu0
      %561 = vmatprep.mubr.bf16.mxu0 0
      %562 = vmatmul.mubr.bf16.gmra.mrb[0].mxu0 %v493
      %v563 = vpop.f32.mrb[0].mxu0
      %v564 = vadd.f32 %v440, %v563
      %v565 = vpop.f32.mrb[0].mxu0
      %v566 = vpop.f32.mrb[0].mxu0
      %v567 = vadd.f32 %v443, %v566
      %v568 = vpop.f32.mrb[0].mxu0
      %569 = vmatprep.mubr.bf16.mxu0 0
      %570 = vmatmul.mubr.bf16.gmra.mrb[0].mxu0 %v496
      %v571 = vpop.f32.mrb[0].mxu0
      %v572 = vadd.f32 %v448, %v571
      %v573 = vpop.f32.mrb[0].mxu0
      %v574 = vpop.f32.mrb[0].mxu0
      %v575 = vadd.f32 %v451, %v574
      %v576 = vpop.f32.mrb[0].mxu0
      %577 = vmatprep.mubr.bf16.mxu0 0
      %578 = vmatmul.mubr.bf16.gmra.mrb[0].mxu0 %v499
      %v579 = vpop.f32.mrb[0].mxu0
      %v580 = vadd.f32 %v456, %v579
      %v581 = vpop.f32.mrb[0].mxu0
      %v582 = vpop.f32.mrb[0].mxu0
      %v583 = vadd.f32 %v459, %v582
      %v584 = vpop.f32.mrb[0].mxu0
      %585 = vmatprep.mubr.bf16.mxu0 0
      %586 = vmatmul.mubr.bf16.gmra.mrb[0].mxu0 %v502
      %v587 = vpop.f32.mrb[0].mxu0
      %v588 = vadd.f32 %v464, %v587
      %v589 = vpop.f32.mrb[0].mxu0
      %v590 = vpop.f32.mrb[0].mxu0
      %v591 = vadd.f32 %v467, %v590
      %v592 = vpop.f32.mrb[0].mxu0
      %593 = vmatprep.mubr.bf16.mxu0 0
      %594 = vmatmul.mubr.bf16.gmra.mrb[0].mxu0 %v505
      %v595 = vpop.f32.mrb[0].mxu0
      %v596 = vadd.f32 %v472, %v595
      %v597 = vpop.f32.mrb[0].mxu0
      %v598 = vpop.f32.mrb[0].mxu0
      %v599 = vadd.f32 %v475, %v598
      %v600 = vpop.f32.mrb[0].mxu0
      %601 = vmatprep.mubr.bf16.mxu0 0
      %602 = vmatmul.mubr.bf16.gmra.mrb[0].mxu0 %v508
      %v603 = vpop.f32.mrb[0].mxu0
      %v604 = vadd.f32 %v480, %v603
      %v605 = vpop.f32.mrb[0].mxu0
      %v606 = vpop.f32.mrb[0].mxu0
      %v607 = vadd.f32 %v483, %v606
      %v608 = vpop.f32.mrb[0].mxu0
      %609 = vdwg.mxu0
      %vm610 = vcmask 1045504
      %v611 = vrot.slane %v230, 2
      %v612 = vrot.slane %v231, 2
      %v613 = vsel %vm610, %v611, %v612
      %v614 = vrot.slane %v232, 2
      %v615 = vsel %vm610, %v612, %v614
      %v616 = vrot.slane %v233, 2
      %v617 = vrot.slane %v234, 2
      %v618 = vsel %vm610, %v616, %v617
      %v619 = vrot.slane %v235, 2
      %v620 = vsel %vm610, %v617, %v619
      %v621 = vrot.slane %v236, 2
      %v622 = vrot.slane %v237, 2
      %v623 = vsel %vm610, %v621, %v622
      %v624 = vrot.slane %v238, 2
      %v625 = vsel %vm610, %v622, %v624
      %v626 = vrot.slane %v239, 2
      %v627 = vrot.slane %v240, 2
      %v628 = vsel %vm610, %v626, %v627
      %v629 = vrot.slane %v241, 2
      %v630 = vsel %vm610, %v627, %v629
      %v631 = vrot.slane %v242, 2
      %v632 = vrot.slane %v243, 2
      %v633 = vsel %vm610, %v631, %v632
      %v634 = vrot.slane %v244, 2
      %v635 = vsel %vm610, %v632, %v634
      %v636 = vrot.slane %v245, 2
      %v637 = vrot.slane %v246, 2
      %v638 = vsel %vm610, %v636, %v637
      %v639 = vrot.slane %v247, 2
      %v640 = vsel %vm610, %v637, %v639
      %v641 = vrot.slane %v248, 2
      %v642 = vrot.slane %v249, 2
      %v643 = vsel %vm610, %v641, %v642
      %v644 = vrot.slane %v250, 2
      %v645 = vsel %vm610, %v642, %v644
      %v646 = vrot.slane %v251, 2
      %v647 = vrot.slane %v252, 2
      %v648 = vsel %vm610, %v646, %v647
      %v649 = vrot.slane %v253, 2
      %v650 = vsel %vm610, %v647, %v649
      %v667 = vpack.c.bf16 %v615, %v613
      %v668 = vpack.c.bf16 %v620, %v618
      %v669 = vpack.c.bf16 %v625, %v623
      %v670 = vpack.c.bf16 %v630, %v628
      %v671 = vpack.c.bf16 %v635, %v633
      %v672 = vpack.c.bf16 %v640, %v638
      %v673 = vpack.c.bf16 %v645, %v643
      %v674 = vpack.c.bf16 %v650, %v648
      %s675 = scalar_lea.vmem %s1, 4
      %v676 = vld [vmem:[%s675] sm:$0x3]
      %v678 = vsel %vm360, %v667, 0
      %v681 = vsel %vm360, %v668, 0
      %v684 = vsel %vm360, %v669, 0
      %v687 = vsel %vm360, %v670, 0
      %v690 = vsel %vm360, %v671, 0
      %v693 = vsel %vm360, %v672, 0
      %v696 = vsel %vm360, %v673, 0
      %v699 = vsel %vm360, %v674, 0
      %v702 = vsel %vm385, %v676, 0
      %704 = vmatprep.subr.bf16.mxu0 0
      %705 = vmatpush1.bf16.msra.mxu0 %v702
      %706 = vmatprep.subr.bf16.mxu0 0
      %707 = vmatpush1.bf16.msra.mxu0 0
      %708 = vmatprep.subr.bf16.mxu0 0
      %709 = vmatpush1.bf16.msra.mxu0 0
      %710 = vmatprep.subr.bf16.mxu0 0
      %711 = vmatpush1.bf16.msra.mxu0 0
      %712 = vmatprep.subr.bf16.mxu0 0
      %713 = vmatpush1.bf16.msra.mxu0 0
      %714 = vmatprep.subr.bf16.mxu0 0
      %715 = vmatpush1.bf16.msra.mxu0 0
      %716 = vmatprep.subr.bf16.mxu0 0
      %717 = vmatpush1.bf16.msra.mxu0 0
      %718 = vmatprep.subr.bf16.mxu0 0
      %719 = vmatpush1.bf16.msra.mxu0 0
      %720 = vmatprep.subr.bf16.mxu0 0
      %721 = vmatpush1.bf16.msra.mxu0 0
      %722 = vmatprep.subr.bf16.mxu0 0
      %723 = vmatpush1.bf16.msra.mxu0 0
      %724 = vmatprep.subr.bf16.mxu0 0
      %725 = vmatpush1.bf16.msra.mxu0 0
      %726 = vmatprep.subr.bf16.mxu0 0
      %727 = vmatpush1.bf16.msra.mxu0 0
      %728 = vmatprep.subr.bf16.mxu0 0
      %729 = vmatpush1.bf16.msra.mxu0 0
      %730 = vmatprep.subr.bf16.mxu0 0
      %731 = vmatpush1.bf16.msra.mxu0 0
      %732 = vmatprep.subr.bf16.mxu0 0
      %733 = vmatpush1.bf16.msra.mxu0 0
      %734 = vmatprep.subr.bf16.mxu0 0
      %735 = vmatpush1.bf16.msra.mxu0 0
      %736 = vmatprep.mubr.bf16.mxu0 0
      %737 = vmatmul.mubr.bf16.gmra.mrb[0].mxu0 %v678
      %v738 = vpop.f32.mrb[0].mxu0
      %v739 = vadd.f32 0.0, %v738
      %v740 = vpop.f32.mrb[0].mxu0
      %v741 = vpop.f32.mrb[0].mxu0
      %v742 = vadd.f32 0.0, %v741
      %v743 = vpop.f32.mrb[0].mxu0
      %744 = vmatprep.mubr.bf16.mxu0 0
      %745 = vmatmul.mubr.bf16.gmra.mrb[0].mxu0 %v681
      %v746 = vpop.f32.mrb[0].mxu0
      %v747 = vadd.f32 0.0, %v746
      %v748 = vpop.f32.mrb[0].mxu0
      %v749 = vpop.f32.mrb[0].mxu0
      %v750 = vadd.f32 0.0, %v749
      %v751 = vpop.f32.mrb[0].mxu0
      %752 = vmatprep.mubr.bf16.mxu0 0
      %753 = vmatmul.mubr.bf16.gmra.mrb[0].mxu0 %v684
      %v754 = vpop.f32.mrb[0].mxu0
      %v755 = vadd.f32 0.0, %v754
      %v756 = vpop.f32.mrb[0].mxu0
      %v757 = vpop.f32.mrb[0].mxu0
      %v758 = vadd.f32 0.0, %v757
      %v759 = vpop.f32.mrb[0].mxu0
      %760 = vmatprep.mubr.bf16.mxu0 0
      %761 = vmatmul.mubr.bf16.gmra.mrb[0].mxu0 %v687
      %v762 = vpop.f32.mrb[0].mxu0
      %v763 = vadd.f32 0.0, %v762
      %v764 = vpop.f32.mrb[0].mxu0
      %v765 = vpop.f32.mrb[0].mxu0
      %v766 = vadd.f32 0.0, %v765
      %v767 = vpop.f32.mrb[0].mxu0
      %768 = vmatprep.mubr.bf16.mxu0 0
      %769 = vmatmul.mubr.bf16.gmra.mrb[0].mxu0 %v690
      %v770 = vpop.f32.mrb[0].mxu0
      %v771 = vadd.f32 0.0, %v770
      %v772 = vpop.f32.mrb[0].mxu0
      %v773 = vpop.f32.mrb[0].mxu0
      %v774 = vadd.f32 0.0, %v773
      %v775 = vpop.f32.mrb[0].mxu0
      %776 = vmatprep.mubr.bf16.mxu0 0
      %777 = vmatmul.mubr.bf16.gmra.mrb[0].mxu0 %v693
      %v778 = vpop.f32.mrb[0].mxu0
      %v779 = vadd.f32 0.0, %v778
      %v780 = vpop.f32.mrb[0].mxu0
      %v781 = vpop.f32.mrb[0].mxu0
      %v782 = vadd.f32 0.0, %v781
      %v783 = vpop.f32.mrb[0].mxu0
      %784 = vmatprep.mubr.bf16.mxu0 0
      %785 = vmatmul.mubr.bf16.gmra.mrb[0].mxu0 %v696
      %v786 = vpop.f32.mrb[0].mxu0
      %v787 = vadd.f32 0.0, %v786
      %v788 = vpop.f32.mrb[0].mxu0
      %v789 = vpop.f32.mrb[0].mxu0
      %v790 = vadd.f32 0.0, %v789
      %v791 = vpop.f32.mrb[0].mxu0
      %792 = vmatprep.mubr.bf16.mxu0 0
      %793 = vmatmul.mubr.bf16.gmra.mrb[0].mxu0 %v699
      %v794 = vpop.f32.mrb[0].mxu0
      %v795 = vadd.f32 0.0, %v794
      %v796 = vpop.f32.mrb[0].mxu0
      %v797 = vpop.f32.mrb[0].mxu0
      %v798 = vadd.f32 0.0, %v797
      %v799 = vpop.f32.mrb[0].mxu0
      %800 = vdwg.mxu0
      %v801 = vadd.f32 %v548, %v739
      %v802 = vadd.f32 %v551, %v742
      %v803 = vadd.f32 %v556, %v747
      %v804 = vadd.f32 %v559, %v750
      %v805 = vadd.f32 %v564, %v755
      %v806 = vadd.f32 %v567, %v758
      %v807 = vadd.f32 %v572, %v763
      %v808 = vadd.f32 %v575, %v766
      %v809 = vadd.f32 %v580, %v771
      %v810 = vadd.f32 %v583, %v774
      %v811 = vadd.f32 %v588, %v779
      %v812 = vadd.f32 %v591, %v782
      %v813 = vadd.f32 %v596, %v787
      %v814 = vadd.f32 %v599, %v790
      %v815 = vadd.f32 %v604, %v795
      %v816 = vadd.f32 %v607, %v798
      %v817 = vpack.c.bf16 %v255, %v254
      %s818 = scalar_lea.vmem %s1, 6
      %v819 = vld [vmem:[%s818] sm:$0x3]
      %v821 = vsel %vm360, %v817, 0
      %v824 = vsel %vm385, %v819, 0
      %826 = vmatprep.subr.bf16.mxu0 0
      %827 = vmatpush1.bf16.msra.mxu0 %v824
      %828 = vmatprep.subr.bf16.mxu0 0
      %829 = vmatpush1.bf16.msra.mxu0 0
      %830 = vmatprep.subr.bf16.mxu0 0
      %831 = vmatpush1.bf16.msra.mxu0 0
      %832 = vmatprep.subr.bf16.mxu0 0
      %833 = vmatpush1.bf16.msra.mxu0 0
      %834 = vmatprep.subr.bf16.mxu0 0
      %835 = vmatpush1.bf16.msra.mxu0 0
      %836 = vmatprep.subr.bf16.mxu0 0
      %837 = vmatpush1.bf16.msra.mxu0 0
      %838 = vmatprep.subr.bf16.mxu0 0
      %839 = vmatpush1.bf16.msra.mxu0 0
      %840 = vmatprep.subr.bf16.mxu0 0
      %841 = vmatpush1.bf16.msra.mxu0 0
      %842 = vmatprep.subr.bf16.mxu0 0
      %843 = vmatpush1.bf16.msra.mxu0 0
      %844 = vmatprep.subr.bf16.mxu0 0
      %845 = vmatpush1.bf16.msra.mxu0 0
      %846 = vmatprep.subr.bf16.mxu0 0
      %847 = vmatpush1.bf16.msra.mxu0 0
      %848 = vmatprep.subr.bf16.mxu0 0
      %849 = vmatpush1.bf16.msra.mxu0 0
      %850 = vmatprep.subr.bf16.mxu0 0
      %851 = vmatpush1.bf16.msra.mxu0 0
      %852 = vmatprep.subr.bf16.mxu0 0
      %853 = vmatpush1.bf16.msra.mxu0 0
      %854 = vmatprep.subr.bf16.mxu0 0
      %855 = vmatpush1.bf16.msra.mxu0 0
      %856 = vmatprep.subr.bf16.mxu0 0
      %857 = vmatpush1.bf16.msra.mxu0 0
      %858 = vmatprep.mubr.bf16.mxu0 0
      %859 = vmatmul.mubr.bf16.gmra.mrb[0].mxu0 %v490
      %v860 = vpop.f32.mrb[0].mxu0
      %v861 = vadd.f32 0.0, %v860
      %v862 = vpop.f32.mrb[0].mxu0
      %v863 = vpop.f32.mrb[0].mxu0
      %v864 = vadd.f32 0.0, %v863
      %v865 = vpop.f32.mrb[0].mxu0
      %866 = vmatprep.mubr.bf16.mxu0 0
      %867 = vmatmul.mubr.bf16.gmra.mrb[0].mxu0 %v493
      %v868 = vpop.f32.mrb[0].mxu0
      %v869 = vadd.f32 0.0, %v868
      %v870 = vpop.f32.mrb[0].mxu0
      %v871 = vpop.f32.mrb[0].mxu0
      %v872 = vadd.f32 0.0, %v871
      %v873 = vpop.f32.mrb[0].mxu0
      %874 = vmatprep.mubr.bf16.mxu0 0
      %875 = vmatmul.mubr.bf16.gmra.mrb[0].mxu0 %v496
      %v876 = vpop.f32.mrb[0].mxu0
      %v877 = vadd.f32 0.0, %v876
      %v878 = vpop.f32.mrb[0].mxu0
      %v879 = vpop.f32.mrb[0].mxu0
      %v880 = vadd.f32 0.0, %v879
      %v881 = vpop.f32.mrb[0].mxu0
      %882 = vmatprep.mubr.bf16.mxu0 0
      %883 = vmatmul.mubr.bf16.gmra.mrb[0].mxu0 %v499
      %v884 = vpop.f32.mrb[0].mxu0
      %v885 = vadd.f32 0.0, %v884
      %v886 = vpop.f32.mrb[0].mxu0
      %v887 = vpop.f32.mrb[0].mxu0
      %v888 = vadd.f32 0.0, %v887
      %v889 = vpop.f32.mrb[0].mxu0
      %890 = vmatprep.mubr.bf16.mxu0 0
      %891 = vmatmul.mubr.bf16.gmra.mrb[0].mxu0 %v502
      %v892 = vpop.f32.mrb[0].mxu0
      %v893 = vadd.f32 0.0, %v892
      %v894 = vpop.f32.mrb[0].mxu0
      %v895 = vpop.f32.mrb[0].mxu0
      %v896 = vadd.f32 0.0, %v895
      %v897 = vpop.f32.mrb[0].mxu0
      %898 = vmatprep.mubr.bf16.mxu0 0
      %899 = vmatmul.mubr.bf16.gmra.mrb[0].mxu0 %v505
      %v900 = vpop.f32.mrb[0].mxu0
      %v901 = vadd.f32 0.0, %v900
      %v902 = vpop.f32.mrb[0].mxu0
      %v903 = vpop.f32.mrb[0].mxu0
      %v904 = vadd.f32 0.0, %v903
      %v905 = vpop.f32.mrb[0].mxu0
      %906 = vmatprep.mubr.bf16.mxu0 0
      %907 = vmatmul.mubr.bf16.gmra.mrb[0].mxu0 %v508
      %v908 = vpop.f32.mrb[0].mxu0
      %v909 = vadd.f32 0.0, %v908
      %v910 = vpop.f32.mrb[0].mxu0
      %v911 = vpop.f32.mrb[0].mxu0
      %v912 = vadd.f32 0.0, %v911
      %v913 = vpop.f32.mrb[0].mxu0
      %914 = vmatprep.mubr.bf16.mxu0 0
      %915 = vmatmul.mubr.bf16.gmra.mrb[0].mxu0 %v821
      %v916 = vpop.f32.mrb[0].mxu0
      %v917 = vadd.f32 0.0, %v916
      %v918 = vpop.f32.mrb[0].mxu0
      %v919 = vpop.f32.mrb[0].mxu0
      %v920 = vadd.f32 0.0, %v919
      %v921 = vpop.f32.mrb[0].mxu0
      %922 = vdwg.mxu0
      %v923 = vadd.f32 %v801, %v861
      %v924 = vadd.f32 %v802, %v864
      %v925 = vadd.f32 %v803, %v869
      %v926 = vadd.f32 %v804, %v872
      %v927 = vadd.f32 %v805, %v877
      %v928 = vadd.f32 %v806, %v880
      %v929 = vadd.f32 %v807, %v885
      %v930 = vadd.f32 %v808, %v888
      %v931 = vadd.f32 %v809, %v893
      %v932 = vadd.f32 %v810, %v896
      %v933 = vadd.f32 %v811, %v901
      %v934 = vadd.f32 %v812, %v904
      %v935 = vadd.f32 %v813, %v909
      %v936 = vadd.f32 %v814, %v912
      %v937 = vadd.f32 %v815, %v917
      %v938 = vadd.f32 %v816, %v920
      %v942 = vrot.slane %v254, 1
      %v943 = vrot.slane %v255, 1
      %v944 = vsel %vm293, %v942, %v943
      %v945 = vrot.slane %v256, 1
      %v946 = vsel %vm293, %v943, %v945
      %v949 = vpack.c.bf16 %v946, %v944
      %s950 = scalar_lea.vmem %s1, 8
      %v951 = vld [vmem:[%s950] sm:$0x3]
      %v953 = vsel %vm360, %v949, 0
      %v956 = vsel %vm385, %v951, 0
      %958 = vmatprep.subr.bf16.mxu0 0
      %959 = vmatpush1.bf16.msra.mxu0 %v956
      %960 = vmatprep.subr.bf16.mxu0 0
      %961 = vmatpush1.bf16.msra.mxu0 0
      %962 = vmatprep.subr.bf16.mxu0 0
      %963 = vmatpush1.bf16.msra.mxu0 0
      %964 = vmatprep.subr.bf16.mxu0 0
      %965 = vmatpush1.bf16.msra.mxu0 0
      %966 = vmatprep.subr.bf16.mxu0 0
      %967 = vmatpush1.bf16.msra.mxu0 0
      %968 = vmatprep.subr.bf16.mxu0 0
      %969 = vmatpush1.bf16.msra.mxu0 0
      %970 = vmatprep.subr.bf16.mxu0 0
      %971 = vmatpush1.bf16.msra.mxu0 0
      %972 = vmatprep.subr.bf16.mxu0 0
      %973 = vmatpush1.bf16.msra.mxu0 0
      %974 = vmatprep.subr.bf16.mxu0 0
      %975 = vmatpush1.bf16.msra.mxu0 0
      %976 = vmatprep.subr.bf16.mxu0 0
      %977 = vmatpush1.bf16.msra.mxu0 0
      %978 = vmatprep.subr.bf16.mxu0 0
      %979 = vmatpush1.bf16.msra.mxu0 0
      %980 = vmatprep.subr.bf16.mxu0 0
      %981 = vmatpush1.bf16.msra.mxu0 0
      %982 = vmatprep.subr.bf16.mxu0 0
      %983 = vmatpush1.bf16.msra.mxu0 0
      %984 = vmatprep.subr.bf16.mxu0 0
      %985 = vmatpush1.bf16.msra.mxu0 0
      %986 = vmatprep.subr.bf16.mxu0 0
      %987 = vmatpush1.bf16.msra.mxu0 0
      %988 = vmatprep.subr.bf16.mxu0 0
      %989 = vmatpush1.bf16.msra.mxu0 0
      %990 = vmatprep.mubr.bf16.mxu0 0
      %991 = vmatmul.mubr.bf16.gmra.mrb[0].mxu0 %v365
      %v992 = vpop.f32.mrb[0].mxu0
      %v993 = vadd.f32 0.0, %v992
      %v994 = vpop.f32.mrb[0].mxu0
      %v995 = vpop.f32.mrb[0].mxu0
      %v996 = vadd.f32 0.0, %v995
      %v997 = vpop.f32.mrb[0].mxu0
      %998 = vmatprep.mubr.bf16.mxu0 0
      %999 = vmatmul.mubr.bf16.gmra.mrb[0].mxu0 %v368
      %v1000 = vpop.f32.mrb[0].mxu0
      %v1001 = vadd.f32 0.0, %v1000
      %v1002 = vpop.f32.mrb[0].mxu0
      %v1003 = vpop.f32.mrb[0].mxu0
      %v1004 = vadd.f32 0.0, %v1003
      %v1005 = vpop.f32.mrb[0].mxu0
      %1006 = vmatprep.mubr.bf16.mxu0 0
      %1007 = vmatmul.mubr.bf16.gmra.mrb[0].mxu0 %v371
      %v1008 = vpop.f32.mrb[0].mxu0
      %v1009 = vadd.f32 0.0, %v1008
      %v1010 = vpop.f32.mrb[0].mxu0
      %v1011 = vpop.f32.mrb[0].mxu0
      %v1012 = vadd.f32 0.0, %v1011
      %v1013 = vpop.f32.mrb[0].mxu0
      %1014 = vmatprep.mubr.bf16.mxu0 0
      %1015 = vmatmul.mubr.bf16.gmra.mrb[0].mxu0 %v374
      %v1016 = vpop.f32.mrb[0].mxu0
      %v1017 = vadd.f32 0.0, %v1016
      %v1018 = vpop.f32.mrb[0].mxu0
      %v1019 = vpop.f32.mrb[0].mxu0
      %v1020 = vadd.f32 0.0, %v1019
      %v1021 = vpop.f32.mrb[0].mxu0
      %1022 = vmatprep.mubr.bf16.mxu0 0
      %1023 = vmatmul.mubr.bf16.gmra.mrb[0].mxu0 %v377
      %v1024 = vpop.f32.mrb[0].mxu0
      %v1025 = vadd.f32 0.0, %v1024
      %v1026 = vpop.f32.mrb[0].mxu0
      %v1027 = vpop.f32.mrb[0].mxu0
      %v1028 = vadd.f32 0.0, %v1027
      %v1029 = vpop.f32.mrb[0].mxu0
      %1030 = vmatprep.mubr.bf16.mxu0 0
      %1031 = vmatmul.mubr.bf16.gmra.mrb[0].mxu0 %v380
      %v1032 = vpop.f32.mrb[0].mxu0
      %v1033 = vadd.f32 0.0, %v1032
      %v1034 = vpop.f32.mrb[0].mxu0
      %v1035 = vpop.f32.mrb[0].mxu0
      %v1036 = vadd.f32 0.0, %v1035
      %v1037 = vpop.f32.mrb[0].mxu0
      %1038 = vmatprep.mubr.bf16.mxu0 0
      %1039 = vmatmul.mubr.bf16.gmra.mrb[0].mxu0 %v383
      %v1040 = vpop.f32.mrb[0].mxu0
      %v1041 = vadd.f32 0.0, %v1040
      %v1042 = vpop.f32.mrb[0].mxu0
      %v1043 = vpop.f32.mrb[0].mxu0
      %v1044 = vadd.f32 0.0, %v1043
      %v1045 = vpop.f32.mrb[0].mxu0
      %1046 = vmatprep.mubr.bf16.mxu0 0
      %1047 = vmatmul.mubr.bf16.gmra.mrb[0].mxu0 %v953
      %v1048 = vpop.f32.mrb[0].mxu0
      %v1049 = vadd.f32 0.0, %v1048
      %v1050 = vpop.f32.mrb[0].mxu0
      %v1051 = vpop.f32.mrb[0].mxu0
      %v1052 = vadd.f32 0.0, %v1051
      %v1053 = vpop.f32.mrb[0].mxu0
      %1054 = vdwg.mxu0
      %v1055 = vadd.f32 %v923, %v993
      %v1056 = vadd.f32 %v924, %v996
      %v1057 = vadd.f32 %v925, %v1001
      %v1058 = vadd.f32 %v926, %v1004
      %v1059 = vadd.f32 %v927, %v1009
      %v1060 = vadd.f32 %v928, %v1012
      %v1061 = vadd.f32 %v929, %v1017
      %v1062 = vadd.f32 %v930, %v1020
      %v1063 = vadd.f32 %v931, %v1025
      %v1064 = vadd.f32 %v932, %v1028
      %v1065 = vadd.f32 %v933, %v1033
      %v1066 = vadd.f32 %v934, %v1036
      %v1067 = vadd.f32 %v935, %v1041
      %v1068 = vadd.f32 %v936, %v1044
      %v1069 = vadd.f32 %v937, %v1049
      %v1070 = vadd.f32 %v938, %v1052
      %v1071 = vrot.slane %v254, 2
      %v1072 = vrot.slane %v255, 2
      %v1073 = vsel %vm610, %v1071, %v1072
      %v1074 = vrot.slane %v256, 2
      %v1075 = vsel %vm610, %v1072, %v1074
      %v1078 = vpack.c.bf16 %v1075, %v1073
      %s1079 = scalar_lea.vmem %s1, 10
      %v1080 = vld [vmem:[%s1079] sm:$0x3]
      %v1082 = vsel %vm360, %v1078, 0
      %v1085 = vsel %vm385, %v1080, 0
      %1087 = vmatprep.subr.bf16.mxu0 0
      %1088 = vmatpush1.bf16.msra.mxu0 %v1085
      %1089 = vmatprep.subr.bf16.mxu0 0
      %1090 = vmatpush1.bf16.msra.mxu0 0
      %1091 = vmatprep.subr.bf16.mxu0 0
      %1092 = vmatpush1.bf16.msra.mxu0 0
      %1093 = vmatprep.subr.bf16.mxu0 0
      %1094 = vmatpush1.bf16.msra.mxu0 0
      %1095 = vmatprep.subr.bf16.mxu0 0
      %1096 = vmatpush1.bf16.msra.mxu0 0
      %1097 = vmatprep.subr.bf16.mxu0 0
      %1098 = vmatpush1.bf16.msra.mxu0 0
      %1099 = vmatprep.subr.bf16.mxu0 0
      %1100 = vmatpush1.bf16.msra.mxu0 0
      %1101 = vmatprep.subr.bf16.mxu0 0
      %1102 = vmatpush1.bf16.msra.mxu0 0
      %1103 = vmatprep.subr.bf16.mxu0 0
      %1104 = vmatpush1.bf16.msra.mxu0 0
      %1105 = vmatprep.subr.bf16.mxu0 0
      %1106 = vmatpush1.bf16.msra.mxu0 0
      %1107 = vmatprep.subr.bf16.mxu0 0
      %1108 = vmatpush1.bf16.msra.mxu0 0
      %1109 = vmatprep.subr.bf16.mxu0 0
      %1110 = vmatpush1.bf16.msra.mxu0 0
      %1111 = vmatprep.subr.bf16.mxu0 0
      %1112 = vmatpush1.bf16.msra.mxu0 0
      %1113 = vmatprep.subr.bf16.mxu0 0
      %1114 = vmatpush1.bf16.msra.mxu0 0
      %1115 = vmatprep.subr.bf16.mxu0 0
      %1116 = vmatpush1.bf16.msra.mxu0 0
      %1117 = vmatprep.subr.bf16.mxu0 0
      %1118 = vmatpush1.bf16.msra.mxu0 0
      %1119 = vmatprep.mubr.bf16.mxu0 0
      %1120 = vmatmul.mubr.bf16.gmra.mrb[0].mxu0 %v681
      %v1121 = vpop.f32.mrb[0].mxu0
      %v1122 = vadd.f32 0.0, %v1121
      %v1123 = vpop.f32.mrb[0].mxu0
      %v1124 = vpop.f32.mrb[0].mxu0
      %v1125 = vadd.f32 0.0, %v1124
      %v1126 = vpop.f32.mrb[0].mxu0
      %1127 = vmatprep.mubr.bf16.mxu0 0
      %1128 = vmatmul.mubr.bf16.gmra.mrb[0].mxu0 %v684
      %v1129 = vpop.f32.mrb[0].mxu0
      %v1130 = vadd.f32 0.0, %v1129
      %v1131 = vpop.f32.mrb[0].mxu0
      %v1132 = vpop.f32.mrb[0].mxu0
      %v1133 = vadd.f32 0.0, %v1132
      %v1134 = vpop.f32.mrb[0].mxu0
      %1135 = vmatprep.mubr.bf16.mxu0 0
      %1136 = vmatmul.mubr.bf16.gmra.mrb[0].mxu0 %v687
      %v1137 = vpop.f32.mrb[0].mxu0
      %v1138 = vadd.f32 0.0, %v1137
      %v1139 = vpop.f32.mrb[0].mxu0
      %v1140 = vpop.f32.mrb[0].mxu0
      %v1141 = vadd.f32 0.0, %v1140
      %v1142 = vpop.f32.mrb[0].mxu0
      %1143 = vmatprep.mubr.bf16.mxu0 0
      %1144 = vmatmul.mubr.bf16.gmra.mrb[0].mxu0 %v690
      %v1145 = vpop.f32.mrb[0].mxu0
      %v1146 = vadd.f32 0.0, %v1145
      %v1147 = vpop.f32.mrb[0].mxu0
      %v1148 = vpop.f32.mrb[0].mxu0
      %v1149 = vadd.f32 0.0, %v1148
      %v1150 = vpop.f32.mrb[0].mxu0
      %1151 = vmatprep.mubr.bf16.mxu0 0
      %1152 = vmatmul.mubr.bf16.gmra.mrb[0].mxu0 %v693
      %v1153 = vpop.f32.mrb[0].mxu0
      %v1154 = vadd.f32 0.0, %v1153
      %v1155 = vpop.f32.mrb[0].mxu0
      %v1156 = vpop.f32.mrb[0].mxu0
      %v1157 = vadd.f32 0.0, %v1156
      %v1158 = vpop.f32.mrb[0].mxu0
      %1159 = vmatprep.mubr.bf16.mxu0 0
      %1160 = vmatmul.mubr.bf16.gmra.mrb[0].mxu0 %v696
      %v1161 = vpop.f32.mrb[0].mxu0
      %v1162 = vadd.f32 0.0, %v1161
      %v1163 = vpop.f32.mrb[0].mxu0
      %v1164 = vpop.f32.mrb[0].mxu0
      %v1165 = vadd.f32 0.0, %v1164
      %v1166 = vpop.f32.mrb[0].mxu0
      %1167 = vmatprep.mubr.bf16.mxu0 0
      %1168 = vmatmul.mubr.bf16.gmra.mrb[0].mxu0 %v699
      %v1169 = vpop.f32.mrb[0].mxu0
      %v1170 = vadd.f32 0.0, %v1169
      %v1171 = vpop.f32.mrb[0].mxu0
      %v1172 = vpop.f32.mrb[0].mxu0
      %v1173 = vadd.f32 0.0, %v1172
      %v1174 = vpop.f32.mrb[0].mxu0
      %1175 = vmatprep.mubr.bf16.mxu0 0
      %1176 = vmatmul.mubr.bf16.gmra.mrb[0].mxu0 %v1082
      %v1177 = vpop.f32.mrb[0].mxu0
      %v1178 = vadd.f32 0.0, %v1177
      %v1179 = vpop.f32.mrb[0].mxu0
      %v1180 = vpop.f32.mrb[0].mxu0
      %v1181 = vadd.f32 0.0, %v1180
      %v1182 = vpop.f32.mrb[0].mxu0
      %1183 = vdwg.mxu0
      %v1184 = vadd.f32 %v1055, %v1122
      %v1185 = vadd.f32 %v1056, %v1125
      %v1186 = vadd.f32 %v1057, %v1130
      %v1187 = vadd.f32 %v1058, %v1133
      %v1188 = vadd.f32 %v1059, %v1138
      %v1189 = vadd.f32 %v1060, %v1141
      %v1190 = vadd.f32 %v1061, %v1146
      %v1191 = vadd.f32 %v1062, %v1149
      %v1192 = vadd.f32 %v1063, %v1154
      %v1193 = vadd.f32 %v1064, %v1157
      %v1194 = vadd.f32 %v1065, %v1162
      %v1195 = vadd.f32 %v1066, %v1165
      %v1196 = vadd.f32 %v1067, %v1170
      %v1197 = vadd.f32 %v1068, %v1173
      %v1198 = vadd.f32 %v1069, %v1178
      %v1199 = vadd.f32 %v1070, %v1181
      %v1200 = vpack.c.bf16 %v258, %v257
      %s1201 = scalar_lea.vmem %s1, 12
      %v1202 = vld [vmem:[%s1201] sm:$0x3]
      %v1204 = vsel %vm360, %v1200, 0
      %v1207 = vsel %vm385, %v1202, 0
      %1209 = vmatprep.subr.bf16.mxu0 0
      %1210 = vmatpush1.bf16.msra.mxu0 %v1207
      %1211 = vmatprep.subr.bf16.mxu0 0
      %1212 = vmatpush1.bf16.msra.mxu0 0
      %1213 = vmatprep.subr.bf16.mxu0 0
      %1214 = vmatpush1.bf16.msra.mxu0 0
      %1215 = vmatprep.subr.bf16.mxu0 0
      %1216 = vmatpush1.bf16.msra.mxu0 0
      %1217 = vmatprep.subr.bf16.mxu0 0
      %1218 = vmatpush1.bf16.msra.mxu0 0
      %1219 = vmatprep.subr.bf16.mxu0 0
      %1220 = vmatpush1.bf16.msra.mxu0 0
      %1221 = vmatprep.subr.bf16.mxu0 0
      %1222 = vmatpush1.bf16.msra.mxu0 0
      %1223 = vmatprep.subr.bf16.mxu0 0
      %1224 = vmatpush1.bf16.msra.mxu0 0
      %1225 = vmatprep.subr.bf16.mxu0 0
      %1226 = vmatpush1.bf16.msra.mxu0 0
      %1227 = vmatprep.subr.bf16.mxu0 0
      %1228 = vmatpush1.bf16.msra.mxu0 0
      %1229 = vmatprep.subr.bf16.mxu0 0
      %1230 = vmatpush1.bf16.msra.mxu0 0
      %1231 = vmatprep.subr.bf16.mxu0 0
      %1232 = vmatpush1.bf16.msra.mxu0 0
      %1233 = vmatprep.subr.bf16.mxu0 0
      %1234 = vmatpush1.bf16.msra.mxu0 0
      %1235 = vmatprep.subr.bf16.mxu0 0
      %1236 = vmatpush1.bf16.msra.mxu0 0
      %1237 = vmatprep.subr.bf16.mxu0 0
      %1238 = vmatpush1.bf16.msra.mxu0 0
      %1239 = vmatprep.subr.bf16.mxu0 0
      %1240 = vmatpush1.bf16.msra.mxu0 0
      %1241 = vmatprep.mubr.bf16.mxu0 0
      %1242 = vmatmul.mubr.bf16.gmra.mrb[0].mxu0 %v493
      %v1243 = vpop.f32.mrb[0].mxu0
      %v1244 = vadd.f32 0.0, %v1243
      %v1245 = vpop.f32.mrb[0].mxu0
      %v1246 = vpop.f32.mrb[0].mxu0
      %v1247 = vadd.f32 0.0, %v1246
      %v1248 = vpop.f32.mrb[0].mxu0
      %1249 = vmatprep.mubr.bf16.mxu0 0
      %1250 = vmatmul.mubr.bf16.gmra.mrb[0].mxu0 %v496
      %v1251 = vpop.f32.mrb[0].mxu0
      %v1252 = vadd.f32 0.0, %v1251
      %v1253 = vpop.f32.mrb[0].mxu0
      %v1254 = vpop.f32.mrb[0].mxu0
      %v1255 = vadd.f32 0.0, %v1254
      %v1256 = vpop.f32.mrb[0].mxu0
      %1257 = vmatprep.mubr.bf16.mxu0 0
      %1258 = vmatmul.mubr.bf16.gmra.mrb[0].mxu0 %v499
      %v1259 = vpop.f32.mrb[0].mxu0
      %v1260 = vadd.f32 0.0, %v1259
      %v1261 = vpop.f32.mrb[0].mxu0
      %v1262 = vpop.f32.mrb[0].mxu0
      %v1263 = vadd.f32 0.0, %v1262
      %v1264 = vpop.f32.mrb[0].mxu0
      %1265 = vmatprep.mubr.bf16.mxu0 0
      %1266 = vmatmul.mubr.bf16.gmra.mrb[0].mxu0 %v502
      %v1267 = vpop.f32.mrb[0].mxu0
      %v1268 = vadd.f32 0.0, %v1267
      %v1269 = vpop.f32.mrb[0].mxu0
      %v1270 = vpop.f32.mrb[0].mxu0
      %v1271 = vadd.f32 0.0, %v1270
      %v1272 = vpop.f32.mrb[0].mxu0
      %1273 = vmatprep.mubr.bf16.mxu0 0
      %1274 = vmatmul.mubr.bf16.gmra.mrb[0].mxu0 %v505
      %v1275 = vpop.f32.mrb[0].mxu0
      %v1276 = vadd.f32 0.0, %v1275
      %v1277 = vpop.f32.mrb[0].mxu0
      %v1278 = vpop.f32.mrb[0].mxu0
      %v1279 = vadd.f32 0.0, %v1278
      %v1280 = vpop.f32.mrb[0].mxu0
      %1281 = vmatprep.mubr.bf16.mxu0 0
      %1282 = vmatmul.mubr.bf16.gmra.mrb[0].mxu0 %v508
      %v1283 = vpop.f32.mrb[0].mxu0
      %v1284 = vadd.f32 0.0, %v1283
      %v1285 = vpop.f32.mrb[0].mxu0
      %v1286 = vpop.f32.mrb[0].mxu0
      %v1287 = vadd.f32 0.0, %v1286
      %v1288 = vpop.f32.mrb[0].mxu0
      %1289 = vmatprep.mubr.bf16.mxu0 0
      %1290 = vmatmul.mubr.bf16.gmra.mrb[0].mxu0 %v821
      %v1291 = vpop.f32.mrb[0].mxu0
      %v1292 = vadd.f32 0.0, %v1291
      %v1293 = vpop.f32.mrb[0].mxu0
      %v1294 = vpop.f32.mrb[0].mxu0
      %v1295 = vadd.f32 0.0, %v1294
      %v1296 = vpop.f32.mrb[0].mxu0
      %1297 = vmatprep.mubr.bf16.mxu0 0
      %1298 = vmatmul.mubr.bf16.gmra.mrb[0].mxu0 %v1204
      %v1299 = vpop.f32.mrb[0].mxu0
      %v1300 = vadd.f32 0.0, %v1299
      %v1301 = vpop.f32.mrb[0].mxu0
      %v1302 = vpop.f32.mrb[0].mxu0
      %v1303 = vadd.f32 0.0, %v1302
      %v1304 = vpop.f32.mrb[0].mxu0
      %1305 = vdwg.mxu0
      %v1306 = vadd.f32 %v1184, %v1244
      %v1307 = vadd.f32 %v1185, %v1247
      %v1308 = vadd.f32 %v1186, %v1252
      %v1309 = vadd.f32 %v1187, %v1255
      %v1310 = vadd.f32 %v1188, %v1260
      %v1311 = vadd.f32 %v1189, %v1263
      %v1312 = vadd.f32 %v1190, %v1268
      %v1313 = vadd.f32 %v1191, %v1271
      %v1314 = vadd.f32 %v1192, %v1276
      %v1315 = vadd.f32 %v1193, %v1279
      %v1316 = vadd.f32 %v1194, %v1284
      %v1317 = vadd.f32 %v1195, %v1287
      %v1318 = vadd.f32 %v1196, %v1292
      %v1319 = vadd.f32 %v1197, %v1295
      %v1320 = vadd.f32 %v1198, %v1300
      %v1321 = vadd.f32 %v1199, %v1303
      %v1325 = vrot.slane %v257, 1
      %v1326 = vrot.slane %v258, 1
      %v1327 = vsel %vm293, %v1325, %v1326
      %v1328 = vrot.slane %v259, 1
      %v1329 = vsel %vm293, %v1326, %v1328
      %v1332 = vpack.c.bf16 %v1329, %v1327
      %s1333 = scalar_lea.vmem %s1, 14
      %v1334 = vld [vmem:[%s1333] sm:$0x3]
      %v1336 = vsel %vm360, %v1332, 0
      %v1339 = vsel %vm385, %v1334, 0
      %1341 = vmatprep.subr.bf16.mxu0 0
      %1342 = vmatpush1.bf16.msra.mxu0 %v1339
      %1343 = vmatprep.subr.bf16.mxu0 0
      %1344 = vmatpush1.bf16.msra.mxu0 0
      %1345 = vmatprep.subr.bf16.mxu0 0
      %1346 = vmatpush1.bf16.msra.mxu0 0
      %1347 = vmatprep.subr.bf16.mxu0 0
      %1348 = vmatpush1.bf16.msra.mxu0 0
      %1349 = vmatprep.subr.bf16.mxu0 0
      %1350 = vmatpush1.bf16.msra.mxu0 0
      %1351 = vmatprep.subr.bf16.mxu0 0
      %1352 = vmatpush1.bf16.msra.mxu0 0
      %1353 = vmatprep.subr.bf16.mxu0 0
      %1354 = vmatpush1.bf16.msra.mxu0 0
      %1355 = vmatprep.subr.bf16.mxu0 0
      %1356 = vmatpush1.bf16.msra.mxu0 0
      %1357 = vmatprep.subr.bf16.mxu0 0
      %1358 = vmatpush1.bf16.msra.mxu0 0
      %1359 = vmatprep.subr.bf16.mxu0 0
      %1360 = vmatpush1.bf16.msra.mxu0 0
      %1361 = vmatprep.subr.bf16.mxu0 0
      %1362 = vmatpush1.bf16.msra.mxu0 0
      %1363 = vmatprep.subr.bf16.mxu0 0
      %1364 = vmatpush1.bf16.msra.mxu0 0
      %1365 = vmatprep.subr.bf16.mxu0 0
      %1366 = vmatpush1.bf16.msra.mxu0 0
      %1367 = vmatprep.subr.bf16.mxu0 0
      %1368 = vmatpush1.bf16.msra.mxu0 0
      %1369 = vmatprep.subr.bf16.mxu0 0
      %1370 = vmatpush1.bf16.msra.mxu0 0
      %1371 = vmatprep.subr.bf16.mxu0 0
      %1372 = vmatpush1.bf16.msra.mxu0 0
      %1373 = vmatprep.mubr.bf16.mxu0 0
      %1374 = vmatmul.mubr.bf16.gmra.mrb[0].mxu0 %v368
      %v1375 = vpop.f32.mrb[0].mxu0
      %v1376 = vadd.f32 0.0, %v1375
      %v1377 = vpop.f32.mrb[0].mxu0
      %v1378 = vpop.f32.mrb[0].mxu0
      %v1379 = vadd.f32 0.0, %v1378
      %v1380 = vpop.f32.mrb[0].mxu0
      %1381 = vmatprep.mubr.bf16.mxu0 0
      %1382 = vmatmul.mubr.bf16.gmra.mrb[0].mxu0 %v371
      %v1383 = vpop.f32.mrb[0].mxu0
      %v1384 = vadd.f32 0.0, %v1383
      %v1385 = vpop.f32.mrb[0].mxu0
      %v1386 = vpop.f32.mrb[0].mxu0
      %v1387 = vadd.f32 0.0, %v1386
      %v1388 = vpop.f32.mrb[0].mxu0
      %1389 = vmatprep.mubr.bf16.mxu0 0
      %1390 = vmatmul.mubr.bf16.gmra.mrb[0].mxu0 %v374
      %v1391 = vpop.f32.mrb[0].mxu0
      %v1392 = vadd.f32 0.0, %v1391
      %v1393 = vpop.f32.mrb[0].mxu0
      %v1394 = vpop.f32.mrb[0].mxu0
      %v1395 = vadd.f32 0.0, %v1394
      %v1396 = vpop.f32.mrb[0].mxu0
      %1397 = vmatprep.mubr.bf16.mxu0 0
      %1398 = vmatmul.mubr.bf16.gmra.mrb[0].mxu0 %v377
      %v1399 = vpop.f32.mrb[0].mxu0
      %v1400 = vadd.f32 0.0, %v1399
      %v1401 = vpop.f32.mrb[0].mxu0
      %v1402 = vpop.f32.mrb[0].mxu0
      %v1403 = vadd.f32 0.0, %v1402
      %v1404 = vpop.f32.mrb[0].mxu0
      %1405 = vmatprep.mubr.bf16.mxu0 0
      %1406 = vmatmul.mubr.bf16.gmra.mrb[0].mxu0 %v380
      %v1407 = vpop.f32.mrb[0].mxu0
      %v1408 = vadd.f32 0.0, %v1407
      %v1409 = vpop.f32.mrb[0].mxu0
      %v1410 = vpop.f32.mrb[0].mxu0
      %v1411 = vadd.f32 0.0, %v1410
      %v1412 = vpop.f32.mrb[0].mxu0
      %1413 = vmatprep.mubr.bf16.mxu0 0
      %1414 = vmatmul.mubr.bf16.gmra.mrb[0].mxu0 %v383
      %v1415 = vpop.f32.mrb[0].mxu0
      %v1416 = vadd.f32 0.0, %v1415
      %v1417 = vpop.f32.mrb[0].mxu0
      %v1418 = vpop.f32.mrb[0].mxu0
      %v1419 = vadd.f32 0.0, %v1418
      %v1420 = vpop.f32.mrb[0].mxu0
      %1421 = vmatprep.mubr.bf16.mxu0 0
      %1422 = vmatmul.mubr.bf16.gmra.mrb[0].mxu0 %v953
      %v1423 = vpop.f32.mrb[0].mxu0
      %v1424 = vadd.f32 0.0, %v1423
      %v1425 = vpop.f32.mrb[0].mxu0
      %v1426 = vpop.f32.mrb[0].mxu0
      %v1427 = vadd.f32 0.0, %v1426
      %v1428 = vpop.f32.mrb[0].mxu0
      %1429 = vmatprep.mubr.bf16.mxu0 0
      %1430 = vmatmul.mubr.bf16.gmra.mrb[0].mxu0 %v1336
      %v1431 = vpop.f32.mrb[0].mxu0
      %v1432 = vadd.f32 0.0, %v1431
      %v1433 = vpop.f32.mrb[0].mxu0
      %v1434 = vpop.f32.mrb[0].mxu0
      %v1435 = vadd.f32 0.0, %v1434
      %v1436 = vpop.f32.mrb[0].mxu0
      %1437 = vdwg.mxu0
      %v1438 = vadd.f32 %v1306, %v1376
      %v1439 = vadd.f32 %v1307, %v1379
      %v1440 = vadd.f32 %v1308, %v1384
      %v1441 = vadd.f32 %v1309, %v1387
      %v1442 = vadd.f32 %v1310, %v1392
      %v1443 = vadd.f32 %v1311, %v1395
      %v1444 = vadd.f32 %v1312, %v1400
      %v1445 = vadd.f32 %v1313, %v1403
      %v1446 = vadd.f32 %v1314, %v1408
      %v1447 = vadd.f32 %v1315, %v1411
      %v1448 = vadd.f32 %v1316, %v1416
      %v1449 = vadd.f32 %v1317, %v1419
      %v1450 = vadd.f32 %v1318, %v1424
      %v1451 = vadd.f32 %v1319, %v1427
      %v1452 = vadd.f32 %v1320, %v1432
      %v1453 = vadd.f32 %v1321, %v1435
      %v1454 = vrot.slane %v257, 2
      %v1455 = vrot.slane %v258, 2
      %v1456 = vsel %vm610, %v1454, %v1455
      %v1457 = vrot.slane %v259, 2
      %v1458 = vsel %vm610, %v1455, %v1457
      %v1461 = vpack.c.bf16 %v1458, %v1456
      %s1462 = scalar_lea.vmem %s1, 16
      %v1463 = vld [vmem:[%s1462] sm:$0x3]
      %v1465 = vsel %vm360, %v1461, 0
      %v1468 = vsel %vm385, %v1463, 0
      %1470 = vmatprep.subr.bf16.mxu0 0
      %1471 = vmatpush1.bf16.msra.mxu0 %v1468
      %1472 = vmatprep.subr.bf16.mxu0 0
      %1473 = vmatpush1.bf16.msra.mxu0 0
      %1474 = vmatprep.subr.bf16.mxu0 0
      %1475 = vmatpush1.bf16.msra.mxu0 0
      %1476 = vmatprep.subr.bf16.mxu0 0
      %1477 = vmatpush1.bf16.msra.mxu0 0
      %1478 = vmatprep.subr.bf16.mxu0 0
      %1479 = vmatpush1.bf16.msra.mxu0 0
      %1480 = vmatprep.subr.bf16.mxu0 0
      %1481 = vmatpush1.bf16.msra.mxu0 0
      %1482 = vmatprep.subr.bf16.mxu0 0
      %1483 = vmatpush1.bf16.msra.mxu0 0
      %1484 = vmatprep.subr.bf16.mxu0 0
      %1485 = vmatpush1.bf16.msra.mxu0 0
      %1486 = vmatprep.subr.bf16.mxu0 0
      %1487 = vmatpush1.bf16.msra.mxu0 0
      %1488 = vmatprep.subr.bf16.mxu0 0
      %1489 = vmatpush1.bf16.msra.mxu0 0
      %1490 = vmatprep.subr.bf16.mxu0 0
      %1491 = vmatpush1.bf16.msra.mxu0 0
      %1492 = vmatprep.subr.bf16.mxu0 0
      %1493 = vmatpush1.bf16.msra.mxu0 0
      %1494 = vmatprep.subr.bf16.mxu0 0
      %1495 = vmatpush1.bf16.msra.mxu0 0
      %1496 = vmatprep.subr.bf16.mxu0 0
      %1497 = vmatpush1.bf16.msra.mxu0 0
      %1498 = vmatprep.subr.bf16.mxu0 0
      %1499 = vmatpush1.bf16.msra.mxu0 0
      %1500 = vmatprep.subr.bf16.mxu0 0
      %1501 = vmatpush1.bf16.msra.mxu0 0
      %1502 = vmatprep.mubr.bf16.mxu0 0
      %1503 = vmatmul.mubr.bf16.gmra.mrb[0].mxu0 %v684
      %v1504 = vpop.f32.mrb[0].mxu0
      %v1505 = vadd.f32 0.0, %v1504
      %v1506 = vpop.f32.mrb[0].mxu0
      %v1507 = vpop.f32.mrb[0].mxu0
      %v1508 = vadd.f32 0.0, %v1507
      %v1509 = vpop.f32.mrb[0].mxu0
      %1510 = vmatprep.mubr.bf16.mxu0 0
      %1511 = vmatmul.mubr.bf16.gmra.mrb[0].mxu0 %v687
      %v1512 = vpop.f32.mrb[0].mxu0
      %v1513 = vadd.f32 0.0, %v1512
      %v1514 = vpop.f32.mrb[0].mxu0
      %v1515 = vpop.f32.mrb[0].mxu0
      %v1516 = vadd.f32 0.0, %v1515
      %v1517 = vpop.f32.mrb[0].mxu0
      %1518 = vmatprep.mubr.bf16.mxu0 0
      %1519 = vmatmul.mubr.bf16.gmra.mrb[0].mxu0 %v690
      %v1520 = vpop.f32.mrb[0].mxu0
      %v1521 = vadd.f32 0.0, %v1520
      %v1522 = vpop.f32.mrb[0].mxu0
      %v1523 = vpop.f32.mrb[0].mxu0
      %v1524 = vadd.f32 0.0, %v1523
      %v1525 = vpop.f32.mrb[0].mxu0
      %1526 = vmatprep.mubr.bf16.mxu0 0
      %1527 = vmatmul.mubr.bf16.gmra.mrb[0].mxu0 %v693
      %v1528 = vpop.f32.mrb[0].mxu0
      %v1529 = vadd.f32 0.0, %v1528
      %v1530 = vpop.f32.mrb[0].mxu0
      %v1531 = vpop.f32.mrb[0].mxu0
      %v1532 = vadd.f32 0.0, %v1531
      %v1533 = vpop.f32.mrb[0].mxu0
      %1534 = vmatprep.mubr.bf16.mxu0 0
      %1535 = vmatmul.mubr.bf16.gmra.mrb[0].mxu0 %v696
      %v1536 = vpop.f32.mrb[0].mxu0
      %v1537 = vadd.f32 0.0, %v1536
      %v1538 = vpop.f32.mrb[0].mxu0
      %v1539 = vpop.f32.mrb[0].mxu0
      %v1540 = vadd.f32 0.0, %v1539
      %v1541 = vpop.f32.mrb[0].mxu0
      %1542 = vmatprep.mubr.bf16.mxu0 0
      %1543 = vmatmul.mubr.bf16.gmra.mrb[0].mxu0 %v699
      %v1544 = vpop.f32.mrb[0].mxu0
      %v1545 = vadd.f32 0.0, %v1544
      %v1546 = vpop.f32.mrb[0].mxu0
      %v1547 = vpop.f32.mrb[0].mxu0
      %v1548 = vadd.f32 0.0, %v1547
      %v1549 = vpop.f32.mrb[0].mxu0
      %1550 = vmatprep.mubr.bf16.mxu0 0
      %1551 = vmatmul.mubr.bf16.gmra.mrb[0].mxu0 %v1082
      %v1552 = vpop.f32.mrb[0].mxu0
      %v1553 = vadd.f32 0.0, %v1552
      %v1554 = vpop.f32.mrb[0].mxu0
      %v1555 = vpop.f32.mrb[0].mxu0
      %v1556 = vadd.f32 0.0, %v1555
      %v1557 = vpop.f32.mrb[0].mxu0
      %1558 = vmatprep.mubr.bf16.mxu0 0
      %1559 = vmatmul.mubr.bf16.gmra.mrb[0].mxu0 %v1465
      %v1560 = vpop.f32.mrb[0].mxu0
      %v1561 = vadd.f32 0.0, %v1560
      %v1562 = vpop.f32.mrb[0].mxu0
      %v1563 = vpop.f32.mrb[0].mxu0
      %v1564 = vadd.f32 0.0, %v1563
      %v1565 = vpop.f32.mrb[0].mxu0
      %1566 = vdwg.mxu0
      %v1567 = vadd.f32 %v1438, %v1505
      %v1568 = vadd.f32 %v1439, %v1508
      %v1569 = vadd.f32 %v1440, %v1513
      %v1570 = vadd.f32 %v1441, %v1516
      %v1571 = vadd.f32 %v1442, %v1521
      %v1572 = vadd.f32 %v1443, %v1524
      %v1573 = vadd.f32 %v1444, %v1529
      %v1574 = vadd.f32 %v1445, %v1532
      %v1575 = vadd.f32 %v1446, %v1537
      %v1576 = vadd.f32 %v1447, %v1540
      %v1577 = vadd.f32 %v1448, %v1545
      %v1578 = vadd.f32 %v1449, %v1548
      %v1579 = vadd.f32 %v1450, %v1553
      %v1580 = vadd.f32 %v1451, %v1556
      %v1581 = vadd.f32 %v1452, %v1561
      %v1582 = vadd.f32 %v1453, %v1564
      %v1583 = vld [vmem:[%s2] sm:$0x1]
      %v1585 = vlaneseq
      %v1586 = vshrl.u32 %v1585, 7
      %v1587 = vsub.s32 0, %v1586
      %v1588 = vrot.slane %v1583, %v1587
      %v1590 = vadd.f32 %v1567, %v1588
      %v1591 = vadd.f32 %v1568, %v1588
      %v1592 = vadd.f32 %v1569, %v1588
      %v1593 = vadd.f32 %v1570, %v1588
      %v1594 = vadd.f32 %v1571, %v1588
      %v1595 = vadd.f32 %v1572, %v1588
      %v1596 = vadd.f32 %v1573, %v1588
      %v1597 = vadd.f32 %v1574, %v1588
      %v1598 = vadd.f32 %v1575, %v1588
      %v1599 = vadd.f32 %v1576, %v1588
      %v1600 = vadd.f32 %v1577, %v1588
      %v1601 = vadd.f32 %v1578, %v1588
      %v1602 = vadd.f32 %v1579, %v1588
      %v1603 = vadd.f32 %v1580, %v1588
      %v1604 = vadd.f32 %v1581, %v1588
      %v1605 = vadd.f32 %v1582, %v1588
      %s1606 = sld [smem:[#allocation2]]
      %vm1607 = vcmp.ge.f32.partialorder %v1590, 0.0
      %vm1608 = vcmp.ge.f32.partialorder %v1591, 0.0
      %vm1609 = vcmp.ge.f32.partialorder %v1592, 0.0
      %vm1610 = vcmp.ge.f32.partialorder %v1593, 0.0
      %vm1611 = vcmp.ge.f32.partialorder %v1594, 0.0
      %vm1612 = vcmp.ge.f32.partialorder %v1595, 0.0
      %vm1613 = vcmp.ge.f32.partialorder %v1596, 0.0
      %vm1614 = vcmp.ge.f32.partialorder %v1597, 0.0
      %vm1615 = vcmp.ge.f32.partialorder %v1598, 0.0
      %vm1616 = vcmp.ge.f32.partialorder %v1599, 0.0
      %vm1617 = vcmp.ge.f32.partialorder %v1600, 0.0
      %vm1618 = vcmp.ge.f32.partialorder %v1601, 0.0
      %vm1619 = vcmp.ge.f32.partialorder %v1602, 0.0
      %vm1620 = vcmp.ge.f32.partialorder %v1603, 0.0
      %vm1621 = vcmp.ge.f32.partialorder %v1604, 0.0
      %vm1622 = vcmp.ge.f32.partialorder %v1605, 0.0
      %v1623 = vstv %s1606
      %v1624 = vmul.f32 %v1623, %v1590
      %v1625 = vmul.f32 %v1623, %v1591
      %v1626 = vmul.f32 %v1623, %v1592
      %v1627 = vmul.f32 %v1623, %v1593
      %v1628 = vmul.f32 %v1623, %v1594
      %v1629 = vmul.f32 %v1623, %v1595
      %v1630 = vmul.f32 %v1623, %v1596
      %v1631 = vmul.f32 %v1623, %v1597
      %v1632 = vmul.f32 %v1623, %v1598
      %v1633 = vmul.f32 %v1623, %v1599
      %v1634 = vmul.f32 %v1623, %v1600
      %v1635 = vmul.f32 %v1623, %v1601
      %v1636 = vmul.f32 %v1623, %v1602
      %v1637 = vmul.f32 %v1623, %v1603
      %v1638 = vmul.f32 %v1623, %v1604
      %v1639 = vmul.f32 %v1623, %v1605
      %v1640 = vsel %vm1607, %v1590, %v1624
      %v1641 = vsel %vm1608, %v1591, %v1625
      %v1642 = vsel %vm1609, %v1592, %v1626
      %v1643 = vsel %vm1610, %v1593, %v1627
      %v1644 = vsel %vm1611, %v1594, %v1628
      %v1645 = vsel %vm1612, %v1595, %v1629
      %v1646 = vsel %vm1613, %v1596, %v1630
      %v1647 = vsel %vm1614, %v1597, %v1631
      %v1648 = vsel %vm1615, %v1598, %v1632
      %v1649 = vsel %vm1616, %v1599, %v1633
      %v1650 = vsel %vm1617, %v1600, %v1634
      %v1651 = vsel %vm1618, %v1601, %v1635
      %v1652 = vsel %vm1619, %v1602, %v1636
      %v1653 = vsel %vm1620, %v1603, %v1637
      %v1654 = vsel %vm1621, %v1604, %v1638
      %v1655 = vsel %vm1622, %v1605, %v1639
      %vm1656 = vcmask 261120
      %1657 = vst.msk [vmem:[%s198] sm:$0xff] %vm1656, %v1640
      %1658 = vst.msk [vmem:[%s198 + $0x8] sm:$0xff] %vm1656, %v1641
      %1659 = vst.msk [vmem:[%s198 + $0x10] sm:$0xff] %vm1656, %v1642
      %1660 = vst.msk [vmem:[%s198 + $0x18] sm:$0xff] %vm1656, %v1643
      %1661 = vst.msk [vmem:[%s198 + $0x20] sm:$0xff] %vm1656, %v1644
      %1662 = vst.msk [vmem:[%s198 + $0x28] sm:$0xff] %vm1656, %v1645
      %1663 = vst.msk [vmem:[%s198 + $0x30] sm:$0xff] %vm1656, %v1646
      %1664 = vst.msk [vmem:[%s198 + $0x38] sm:$0xff] %vm1656, %v1647
      %1665 = vst.msk [vmem:[%s198 + $0x40] sm:$0xff] %vm1656, %v1648
      %1666 = vst.msk [vmem:[%s198 + $0x48] sm:$0xff] %vm1656, %v1649
      %1667 = vst.msk [vmem:[%s198 + $0x50] sm:$0xff] %vm1656, %v1650
      %1668 = vst.msk [vmem:[%s198 + $0x58] sm:$0xff] %vm1656, %v1651
      %1669 = vst.msk [vmem:[%s198 + $0x60] sm:$0xff] %vm1656, %v1652
      %1670 = vst.msk [vmem:[%s198 + $0x68] sm:$0xff] %vm1656, %v1653
      %1671 = vst.msk [vmem:[%s198 + $0x70] sm:$0xff] %vm1656, %v1654
      %1672 = vst.msk [vmem:[%s198 + $0x78] sm:$0xff] %vm1656, %v1655
      %p1673 = scmp.lt.s32.totalorder %s16, 3
      %s1674 = scalar_select %p1673, %s16, 3
      %s1675 = smul.addr %s1674, 16
      %s1676 = smul.addr %s1675, 8
      %s1677 = scalar_lea.vmem %s4, %s1676
      // Predicated region
      $region37: #{local_filter_operation.7} parent=35 // pred_check
        %p1678 = pneg %p123
      $region38: #{local_filter_operation.7} parent=35 // pred_check_branch
        %1680 = sbr.rel (%p1678) target = $region40
      $region39: #{local_filter_operation.7} parent=35 // pred_region
        _
      $region40: #{local_filter_operation.7} parent=35 // pred_fallthru
        _
    $region36: #{local_filter_operation.7} parent=5 // pred_fallthru
      _
    %p1681 = scmp.le.s32.totalorder 2, %s11
    // Predicated region
    $region41: #{local_filter_operation.7} parent=5 // pred_check
      %p1682 = pneg %p1681
    $region42: #{local_filter_operation.7} parent=5 // pred_check_branch
      %1684 = sbr.rel (%p1682) target = $region44
    $region43: #{local_filter_operation.7} parent=5 // pred_region
      %s1685 = ssub.s32 %s11, 2
      // Predicated region
      $region45: #{local_filter_operation.7} parent=43 // pred_check
        %p1686 = pneg %p129
      $region46: #{local_filter_operation.7} parent=43 // pred_check_branch
        %1688 = sbr.rel (%p1686) target = $region48
      $region47: #{local_filter_operation.7} parent=43 // pred_region
        %p1689 = scmp.lt.s32.totalorder %s17, 3
        %s1690 = scalar_select %p1689, %s17, 3
        %s1691 = smul.addr %s1690, 16
        %s1692 = smul.addr %s1691, 8
        %s1693 = scalar_lea.vmem %s4, %s1692
      $region48: #{local_filter_operation.7} parent=43 // pred_fallthru
        _
    $region44: #{local_filter_operation.7} parent=5 // pred_fallthru
      _
  $region6: #{local_filter_operation.7} parent=0 // loop_footer
    %s15 = sadd.s32 1, %s11
  $region7: #{local_filter_operation.7} parent=0 // loop_footer_branch
    %10 = sbr.rel target = $region3
  $region8: #{local_filter_operation.7} parent=0 // loop_exit
    _

// kernel: local_filter_operation.8
$region0: #{local_filter_operation.8}
  #allocation0 [shape = 'u32[]', space=smem, size = 0x4, offset = 0x4, fixed_abs, tag = 'smem constant byte address 0x4 - core index']
  #allocation1 [shape = 'u32[144,128]{1,0:T(1,128)}', space=vmem, size = 0x12000, scoped, tag = 'internal scratch']
  #allocation2 [shape = 'f32[1]{0:T(128)S(6)}', space=smem, size = 0x200, scoped, tag = 'scoped memory for local_filter_operation.8']
  %s0 = inlined_call_operand.vmem [shape: bf16[4,10,18,32], index: 0, kind: input, shape index: {}]
  %s1 = inlined_call_operand.vmem [shape: bf16[9,32,32], index: 1, kind: input, shape index: {}]
  %s2 = inlined_call_operand.vmem [shape: f32[1,32], index: 2, kind: input, shape index: {}]
  %s3 = inlined_call_operand.<no memory space> [shape: f32[1], index: 3, kind: input, shape index: {}]
  %s4 = inlined_call_operand.vmem [shape: f32[4,128,32], index: 4, kind: output, shape index: {}]
  %s5 = sld [smem:[#allocation0]]
  $region49: #{local_filter_operation.8} parent=0
    _
  %s7 = ssub.s32 1, %s5
  %s8 = scalar_select 0, %s7, %s5
  %9 = sst [smem:[#allocation2]] %s3
  loop: start=0, step=1, limit=6
  $region2: #{local_filter_operation.8} parent=0 // loop_pre_header
    _
  $region3: #{local_filter_operation.8} parent=0 // loop_header
    %s11 = sphi 0, %s15
    %p12 = scmp.ge.s32.totalorder %s11, 6
    %s21 = sphi 0, %s23
    %s24 = sphi 0, %s21
    %s25 = sphi 0, %s24
    %s41 = sphi 0, %s25
    %s45 = sphi 0, %s45
    %s47 = sphi 0, %s45
    %s48 = sphi 0, %s47
    %s62 = sphi 0, %s48
    %s66 = sphi 0, %s66
    %s68 = sphi 0, %s66
    %s69 = sphi 0, %s68
    %s83 = sphi 0, %s69
    %s87 = sphi 0, %s87
    %s89 = sphi 0, %s87
    %s90 = sphi 0, %s89
    %s104 = sphi 0, %s90
    %s110 = sphi 0, %s112
    %s113 = sphi 0, %s110
    %s114 = sphi 0, %s113
    %s130 = sphi 0, %s114
  $region4: #{local_filter_operation.8} parent=0 // loop_header_branch
    %14 = sbr.rel (%p12) target = $region8
  $region5: #{local_filter_operation.8} parent=0 // loop_body
    %s16 = ssub.s32 %s11, 1
    %s17 = ssub.s32 %s11, 2
    %s18 = sadd.s32 %s11, 1
    %s19 = ssub.s32 %s11, %s18
    %p20 = scmp.eq.s32.totalorder %s19, 0
    %s22 = sadd.s32 %s21, 1
    %s23 = scalar_select %p20, %s21, %s22
    %p26 = pneg %p20
    %p27 = scmp.eq.s32.totalorder %s11, 3
    %p28 = por %p26, %p27
    %p29 = scmp.ne.s32.totalorder %s21, %s24
    %p30 = scmp.eq.s32.totalorder %s11, 0
    %p31 = por %p29, %p30
    %p32 = scmp.ne.s32.totalorder %s21, %s24
    %p33 = scmp.eq.s32.totalorder %s16, 3
    %p34 = por %p32, %p33
    %p35 = scmp.ne.s32.totalorder %s24, %s25
    %p36 = scmp.eq.s32.totalorder %s16, 0
    %p37 = por %p35, %p36
    %p38 = scmp.ne.s32.totalorder %s24, %s25
    %p39 = scmp.eq.s32.totalorder %s17, 3
    %p40 = por %p38, %p39
    %p42 = scmp.ne.s32.totalorder %s25, %s41
    %p43 = scmp.eq.s32.totalorder %s17, 0
    %p44 = por %p42, %p43
    %s46 = sadd.s32 %s45, 1
    %p49 = scmp.eq.s32.totalorder %s11, 3
    %p50 = scmp.ne.s32.totalorder %s45, %s47
    %p51 = scmp.eq.s32.totalorder %s11, 0
    %p52 = por %p50, %p51
    %p53 = scmp.ne.s32.totalorder %s45, %s47
    %p54 = scmp.eq.s32.totalorder %s16, 3
    %p55 = por %p53, %p54
    %p56 = scmp.ne.s32.totalorder %s47, %s48
    %p57 = scmp.eq.s32.totalorder %s16, 0
    %p58 = por %p56, %p57
    %p59 = scmp.ne.s32.totalorder %s47, %s48
    %p60 = scmp.eq.s32.totalorder %s17, 3
    %p61 = por %p59, %p60
    %p63 = scmp.ne.s32.totalorder %s48, %s62
    %p64 = scmp.eq.s32.totalorder %s17, 0
    %p65 = por %p63, %p64
    %s67 = sadd.s32 %s66, 1
    %p70 = scmp.eq.s32.totalorder %s11, 3
    %p71 = scmp.ne.s32.totalorder %s66, %s68
    %p72 = scmp.eq.s32.totalorder %s11, 0
    %p73 = por %p71, %p72
    %p74 = scmp.ne.s32.totalorder %s66, %s68
    %p75 = scmp.eq.s32.totalorder %s16, 3
    %p76 = por %p74, %p75
    %p77 = scmp.ne.s32.totalorder %s68, %s69
    %p78 = scmp.eq.s32.totalorder %s16, 0
    %p79 = por %p77, %p78
    %p80 = scmp.ne.s32.totalorder %s68, %s69
    %p81 = scmp.eq.s32.totalorder %s17, 3
    %p82 = por %p80, %p81
    %p84 = scmp.ne.s32.totalorder %s69, %s83
    %p85 = scmp.eq.s32.totalorder %s17, 0
    %p86 = por %p84, %p85
    %s88 = sadd.s32 %s87, 1
    %p91 = scmp.eq.s32.totalorder %s11, 3
    %p92 = scmp.ne.s32.totalorder %s87, %s89
    %p93 = scmp.eq.s32.totalorder %s11, 0
    %p94 = por %p92, %p93
    %p95 = scmp.ne.s32.totalorder %s87, %s89
    %p96 = scmp.eq.s32.totalorder %s16, 3
    %p97 = por %p95, %p96
    %p98 = scmp.ne.s32.totalorder %s89, %s90
    %p99 = scmp.eq.s32.totalorder %s16, 0
    %p100 = por %p98, %p99
    %p101 = scmp.ne.s32.totalorder %s89, %s90
    %p102 = scmp.eq.s32.totalorder %s17, 3
    %p103 = por %p101, %p102
    %p105 = scmp.ne.s32.totalorder %s90, %s104
    %p106 = scmp.eq.s32.totalorder %s17, 0
    %p107 = por %p105, %p106
    %s108 = ssub.s32 %s11, %s18
    %p109 = scmp.eq.s32.totalorder %s108, 0
    %s111 = sadd.s32 %s110, 1
    %s112 = scalar_select %p109, %s110, %s111
    %p115 = pneg %p109
    %p116 = scmp.eq.s32.totalorder %s11, 3
    %p117 = por %p115, %p116
    %p118 = scmp.ne.s32.totalorder %s110, %s113
    %p119 = scmp.eq.s32.totalorder %s11, 0
    %p120 = por %p118, %p119
    %p121 = scmp.ne.s32.totalorder %s110, %s113
    %p122 = scmp.eq.s32.totalorder %s16, 3
    %p123 = por %p121, %p122
    %p124 = scmp.ne.s32.totalorder %s113, %s114
    %p125 = scmp.eq.s32.totalorder %s16, 0
    %p126 = por %p124, %p125
    %p127 = scmp.ne.s32.totalorder %s113, %s114
    %p128 = scmp.eq.s32.totalorder %s17, 3
    %p129 = por %p127, %p128
    %p131 = scmp.ne.s32.totalorder %s114, %s130
    %p132 = scmp.eq.s32.totalorder %s17, 0
    %p133 = por %p131, %p132
    %p134 = scmp.le.s32.totalorder 1, %s11
    %p135 = scmp.lt.s32.totalorder %s11, 5
    %p136 = pnand %p134, %p135
    %p137 = pneg %p136
    // Predicated region
    $region9: #{local_filter_operation.8} parent=5 // pred_check
      _
    $region10: #{local_filter_operation.8} parent=5 // pred_check_branch
      %139 = sbr.rel (%p136) target = $region12
    $region11: #{local_filter_operation.8} parent=5 // pred_region
      %s140 = ssub.s32 %s11, 1
      // Predicated region
      $region13: #{local_filter_operation.8} parent=11 // pred_check
        %p141 = pneg %p58
      $region14: #{local_filter_operation.8} parent=11 // pred_check_branch
        %143 = sbr.rel (%p141) target = $region16
      $region15: #{local_filter_operation.8} parent=11 // pred_region
        _
      $region16: #{local_filter_operation.8} parent=11 // pred_fallthru
        _
      // Predicated region
      $region17: #{local_filter_operation.8} parent=11 // pred_check
        %p144 = pneg %p79
      $region18: #{local_filter_operation.8} parent=11 // pred_check_branch
        %146 = sbr.rel (%p144) target = $region20
      $region19: #{local_filter_operation.8} parent=11 // pred_region
        _
      $region20: #{local_filter_operation.8} parent=11 // pred_fallthru
        _
      // Predicated region
      $region21: #{local_filter_operation.8} parent=11 // pred_check
        %p147 = pneg %p100
      $region22: #{local_filter_operation.8} parent=11 // pred_check_branch
        %149 = sbr.rel (%p147) target = $region24
      $region23: #{local_filter_operation.8} parent=11 // pred_region
        _
      $region24: #{local_filter_operation.8} parent=11 // pred_fallthru
        _
    $region12: #{local_filter_operation.8} parent=5 // pred_fallthru
      _
    %p150 = scmp.lt.s32.totalorder %s11, 4
    // Predicated region
    $region25: #{local_filter_operation.8} parent=5 // pred_check
      %p151 = pneg %p150
    $region26: #{local_filter_operation.8} parent=5 // pred_check_branch
      %153 = sbr.rel (%p151) target = $region28
    $region27: #{local_filter_operation.8} parent=5 // pred_region
      // Predicated region
      $region29: #{local_filter_operation.8} parent=27 // pred_check
        %p154 = pneg %p31
      $region30: #{local_filter_operation.8} parent=27 // pred_check_branch
        %156 = sbr.rel (%p154) target = $region32
      $region31: #{local_filter_operation.8} parent=27 // pred_region
        %p157 = scmp.lt.s32.totalorder %s11, 3
        %s158 = scalar_select %p157, %s11, 3
        %s159 = smul.addr %s158, 30
        %s160 = smul.addr %s159, 4
        %s161 = scalar_lea.vmem %s0, %s160
      $region32: #{local_filter_operation.8} parent=27 // pred_fallthru
        _
    $region28: #{local_filter_operation.8} parent=5 // pred_fallthru
      _
    %p162 = scmp.le.s32.totalorder 1, %s11
    %p163 = scmp.lt.s32.totalorder %s11, 5
    %p164 = pnand %p162, %p163
    %p165 = pneg %p164
    // Predicated region
    $region33: #{local_filter_operation.8} parent=5 // pred_check
      _
    $region34: #{local_filter_operation.8} parent=5 // pred_check_branch
      %167 = sbr.rel (%p164) target = $region36
    $region35: #{local_filter_operation.8} parent=5 // pred_region
      %s168 = ssub.s32 %s11, 1
      %p169 = scmp.lt.s32.totalorder %s16, 3
      %s170 = scalar_select %p169, %s16, 3
      %s171 = smul.addr %s170, 30
      %s172 = smul.addr %s171, 4
      %s173 = scalar_lea.vmem %s0, %s172
      %p174 = pneg %p37
      %p175 = pneg %p34
      %p176 = pneg %p58
      %p177 = pneg %p55
      %p178 = pneg %p79
      %p179 = pneg %p76
      %p180 = pneg %p100
      %p181 = pneg %p97
      %p182 = pneg %p126
      %p183 = pneg %p123
      %p184 = scmp.lt.s32.totalorder %s16, 3
      %s185 = scalar_select %p184, %s16, 3
      %s186 = smul.addr %s185, 16
      %s187 = smul.addr %s186, 8
      %s188 = scalar_lea.vmem %s4, %s187
      %p189 = scmp.lt.s32.totalorder %s16, 3
      %s190 = scalar_select %p189, %s16, 3
      %s191 = smul.addr %s190, 30
      %s192 = smul.addr %s191, 4
      %s193 = scalar_lea.vmem %s0, %s192
      %p194 = scmp.lt.s32.totalorder %s16, 3
      %s195 = scalar_select %p194, %s16, 3
      %s196 = smul.addr %s195, 16
      %s197 = smul.addr %s196, 8
      %s198 = scalar_lea.vmem %s4, %s197
      %v200 = vld [vmem:[%s193] sm:$0xf]
      %v201 = vld [vmem:[%s193 + $0x4] sm:$0xf]
      %v202 = vld [vmem:[%s193 + $0x8] sm:$0x1]
      %v203 = vld [vmem:[%s193 + $0xc] sm:$0xf]
      %v204 = vld [vmem:[%s193 + $0x10] sm:$0xf]
      %v205 = vld [vmem:[%s193 + $0x14] sm:$0x1]
      %v206 = vld [vmem:[%s193 + $0x18] sm:$0xf]
      %v207 = vld [vmem:[%s193 + $0x1c] sm:$0xf]
      %v208 = vld [vmem:[%s193 + $0x20] sm:$0x1]
      %v209 = vld [vmem:[%s193 + $0x24] sm:$0xf]
      %v210 = vld [vmem:[%s193 + $0x28] sm:$0xf]
      %v211 = vld [vmem:[%s193 + $0x2c] sm:$0x1]
      %v212 = vld [vmem:[%s193 + $0x30] sm:$0xf]
      %v213 = vld [vmem:[%s193 + $0x34] sm:$0xf]
      %v214 = vld [vmem:[%s193 + $0x38] sm:$0x1]
      %v215 = vld [vmem:[%s193 + $0x3c] sm:$0xf]
      %v216 = vld [vmem:[%s193 + $0x40] sm:$0xf]
      %v217 = vld [vmem:[%s193 + $0x44] sm:$0x1]
      %v218 = vld [vmem:[%s193 + $0x48] sm:$0xf]
      %v219 = vld [vmem:[%s193 + $0x4c] sm:$0xf]
      %v220 = vld [vmem:[%s193 + $0x50] sm:$0x1]
      %v221 = vld [vmem:[%s193 + $0x54] sm:$0xf]
      %v222 = vld [vmem:[%s193 + $0x58] sm:$0xf]
      %v223 = vld [vmem:[%s193 + $0x5c] sm:$0x1]
      %v224 = vld [vmem:[%s193 + $0x60] sm:$0xf]
      %v225 = vld [vmem:[%s193 + $0x64] sm:$0xf]
      %v226 = vld [vmem:[%s193 + $0x68] sm:$0x1]
      %v227 = vld [vmem:[%s193 + $0x6c] sm:$0xf]
      %v228 = vld [vmem:[%s193 + $0x70] sm:$0xf]
      %v229 = vld [vmem:[%s193 + $0x74] sm:$0x1]
      %v230 = vunpack.c.l.bf16 %v200
      %v231 = vunpack.c.l.bf16 %v201
      %v232 = vunpack.c.l.bf16 %v202
      %v233 = vunpack.c.l.bf16 %v203
      %v234 = vunpack.c.l.bf16 %v204
      %v235 = vunpack.c.l.bf16 %v205
      %v236 = vunpack.c.l.bf16 %v206
      %v237 = vunpack.c.l.bf16 %v207
      %v238 = vunpack.c.l.bf16 %v208
      %v239 = vunpack.c.l.bf16 %v209
      %v240 = vunpack.c.l.bf16 %v210
      %v241 = vunpack.c.l.bf16 %v211
      %v242 = vunpack.c.l.bf16 %v212
      %v243 = vunpack.c.l.bf16 %v213
      %v244 = vunpack.c.l.bf16 %v214
      %v245 = vunpack.c.l.bf16 %v215
      %v246 = vunpack.c.l.bf16 %v216
      %v247 = vunpack.c.l.bf16 %v217
      %v248 = vunpack.c.l.bf16 %v218
      %v249 = vunpack.c.l.bf16 %v219
      %v250 = vunpack.c.l.bf16 %v220
      %v251 = vunpack.c.l.bf16 %v221
      %v252 = vunpack.c.l.bf16 %v222
      %v253 = vunpack.c.l.bf16 %v223
      %v254 = vunpack.c.l.bf16 %v224
      %v255 = vunpack.c.l.bf16 %v225
      %v256 = vunpack.c.l.bf16 %v226
      %v257 = vunpack.c.l.bf16 %v227
      %v258 = vunpack.c.l.bf16 %v228
      %v259 = vunpack.c.l.bf16 %v229
      %v260 = vpack.c.bf16 %v231, %v230
      %v261 = vpack.c.bf16 %v234, %v233
      %v262 = vpack.c.bf16 %v237, %v236
      %v263 = vpack.c.bf16 %v240, %v239
      %v264 = vpack.c.bf16 %v243, %v242
      %v265 = vpack.c.bf16 %v246, %v245
      %v266 = vpack.c.bf16 %v249, %v248
      %v267 = vpack.c.bf16 %v252, %v251
      %v268 = vld [vmem:[%s1] sm:$0xf]
      %v269 = vld [vmem:[%s1 + $0x4] sm:$0xf]
      %v270 = vld [vmem:[%s1 + $0x8] sm:$0xf]
      %v271 = vld [vmem:[%s1 + $0xc] sm:$0xf]
      %vm296 = vcmask 1046528
      %v297 = vrot.slane %v230, 1
      %v298 = vrot.slane %v231, 1
      %v299 = vsel %vm296, %v297, %v298
      %v300 = vrot.slane %v232, 1
      %v301 = vsel %vm296, %v298, %v300
      %v302 = vrot.slane %v233, 1
      %v303 = vrot.slane %v234, 1
      %v304 = vsel %vm296, %v302, %v303
      %v305 = vrot.slane %v235, 1
      %v306 = vsel %vm296, %v303, %v305
      %v307 = vrot.slane %v236, 1
      %v308 = vrot.slane %v237, 1
      %v309 = vsel %vm296, %v307, %v308
      %v310 = vrot.slane %v238, 1
      %v311 = vsel %vm296, %v308, %v310
      %v312 = vrot.slane %v239, 1
      %v313 = vrot.slane %v240, 1
      %v314 = vsel %vm296, %v312, %v313
      %v315 = vrot.slane %v241, 1
      %v316 = vsel %vm296, %v313, %v315
      %v317 = vrot.slane %v242, 1
      %v318 = vrot.slane %v243, 1
      %v319 = vsel %vm296, %v317, %v318
      %v320 = vrot.slane %v244, 1
      %v321 = vsel %vm296, %v318, %v320
      %v322 = vrot.slane %v245, 1
      %v323 = vrot.slane %v246, 1
      %v324 = vsel %vm296, %v322, %v323
      %v325 = vrot.slane %v247, 1
      %v326 = vsel %vm296, %v323, %v325
      %v327 = vrot.slane %v248, 1
      %v328 = vrot.slane %v249, 1
      %v329 = vsel %vm296, %v327, %v328
      %v330 = vrot.slane %v250, 1
      %v331 = vsel %vm296, %v328, %v330
      %v332 = vrot.slane %v251, 1
      %v333 = vrot.slane %v252, 1
      %v334 = vsel %vm296, %v332, %v333
      %v335 = vrot.slane %v253, 1
      %v336 = vsel %vm296, %v333, %v335
      %v353 = vpack.c.bf16 %v301, %v299
      %v354 = vpack.c.bf16 %v306, %v304
      %v355 = vpack.c.bf16 %v311, %v309
      %v356 = vpack.c.bf16 %v316, %v314
      %v357 = vpack.c.bf16 %v321, %v319
      %v358 = vpack.c.bf16 %v326, %v324
      %v359 = vpack.c.bf16 %v331, %v329
      %v360 = vpack.c.bf16 %v336, %v334
      %s361 = scalar_lea.vmem %s1, 16
      %v362 = vld [vmem:[%s361] sm:$0xf]
      %v363 = vld [vmem:[%s361 + $0x4] sm:$0xf]
      %v364 = vld [vmem:[%s361 + $0x8] sm:$0xf]
      %v365 = vld [vmem:[%s361 + $0xc] sm:$0xf]
      %v370 = vunpack.c.l.b16 %v362
      %v371 = vunpack.c.l.b16 %v363
      %v372 = vunpack.c.l.b16 %v364
      %v373 = vunpack.c.l.b16 %v365
      %v374 = vpack.c.b16 %v371, %v370
      %v375 = vpack.c.b16 %v373, %v372
      %vm378 = vcmask 261120
      %v380 = vsel %vm378, %v353, 0
      %v383 = vsel %vm378, %v354, 0
      %v386 = vsel %vm378, %v355, 0
      %v389 = vsel %vm378, %v356, 0
      %v392 = vsel %vm378, %v357, 0
      %v395 = vsel %vm378, %v358, 0
      %v398 = vsel %vm378, %v359, 0
      %v401 = vsel %vm378, %v360, 0
      %403 = vmatprep.subr.bf16.mxu0 0
      %404 = vmatpush1.bf16.msra.mxu0 %v374
      %405 = vmatprep.subr.bf16.mxu0 0
      %406 = vmatpush1.bf16.msra.mxu0 %v375
      %407 = vmatprep.subr.bf16.mxu0 0
      %408 = vmatpush1.bf16.msra.mxu0 0
      %409 = vmatprep.subr.bf16.mxu0 0
      %410 = vmatpush1.bf16.msra.mxu0 0
      %411 = vmatprep.subr.bf16.mxu0 0
      %412 = vmatpush1.bf16.msra.mxu0 0
      %413 = vmatprep.subr.bf16.mxu0 0
      %414 = vmatpush1.bf16.msra.mxu0 0
      %415 = vmatprep.subr.bf16.mxu0 0
      %416 = vmatpush1.bf16.msra.mxu0 0
      %417 = vmatprep.subr.bf16.mxu0 0
      %418 = vmatpush1.bf16.msra.mxu0 0
      %419 = vmatprep.subr.bf16.mxu0 0
      %420 = vmatpush1.bf16.msra.mxu0 0
      %421 = vmatprep.subr.bf16.mxu0 0
      %422 = vmatpush1.bf16.msra.mxu0 0
      %423 = vmatprep.subr.bf16.mxu0 0
      %424 = vmatpush1.bf16.msra.mxu0 0
      %425 = vmatprep.subr.bf16.mxu0 0
      %426 = vmatpush1.bf16.msra.mxu0 0
      %427 = vmatprep.subr.bf16.mxu0 0
      %428 = vmatpush1.bf16.msra.mxu0 0
      %429 = vmatprep.subr.bf16.mxu0 0
      %430 = vmatpush1.bf16.msra.mxu0 0
      %431 = vmatprep.subr.bf16.mxu0 0
      %432 = vmatpush1.bf16.msra.mxu0 0
      %433 = vmatprep.subr.bf16.mxu0 0
      %434 = vmatpush1.bf16.msra.mxu0 0
      %435 = vmatprep.mubr.bf16.mxu0 0
      %436 = vmatmul.mubr.bf16.gmra.mrb[0].mxu0 %v380
      %v437 = vpop.f32.mrb[0].mxu0
      %v438 = vadd.f32 0.0, %v437
      %v439 = vpop.f32.mrb[0].mxu0
      %v440 = vpop.f32.mrb[0].mxu0
      %v441 = vadd.f32 0.0, %v440
      %v442 = vpop.f32.mrb[0].mxu0
      %443 = vmatprep.mubr.bf16.mxu0 0
      %444 = vmatmul.mubr.bf16.gmra.mrb[0].mxu0 %v383
      %v445 = vpop.f32.mrb[0].mxu0
      %v446 = vadd.f32 0.0, %v445
      %v447 = vpop.f32.mrb[0].mxu0
      %v448 = vpop.f32.mrb[0].mxu0
      %v449 = vadd.f32 0.0, %v448
      %v450 = vpop.f32.mrb[0].mxu0
      %451 = vmatprep.mubr.bf16.mxu0 0
      %452 = vmatmul.mubr.bf16.gmra.mrb[0].mxu0 %v386
      %v453 = vpop.f32.mrb[0].mxu0
      %v454 = vadd.f32 0.0, %v453
      %v455 = vpop.f32.mrb[0].mxu0
      %v456 = vpop.f32.mrb[0].mxu0
      %v457 = vadd.f32 0.0, %v456
      %v458 = vpop.f32.mrb[0].mxu0
      %459 = vmatprep.mubr.bf16.mxu0 0
      %460 = vmatmul.mubr.bf16.gmra.mrb[0].mxu0 %v389
      %v461 = vpop.f32.mrb[0].mxu0
      %v462 = vadd.f32 0.0, %v461
      %v463 = vpop.f32.mrb[0].mxu0
      %v464 = vpop.f32.mrb[0].mxu0
      %v465 = vadd.f32 0.0, %v464
      %v466 = vpop.f32.mrb[0].mxu0
      %467 = vmatprep.mubr.bf16.mxu0 0
      %468 = vmatmul.mubr.bf16.gmra.mrb[0].mxu0 %v392
      %v469 = vpop.f32.mrb[0].mxu0
      %v470 = vadd.f32 0.0, %v469
      %v471 = vpop.f32.mrb[0].mxu0
      %v472 = vpop.f32.mrb[0].mxu0
      %v473 = vadd.f32 0.0, %v472
      %v474 = vpop.f32.mrb[0].mxu0
      %475 = vmatprep.mubr.bf16.mxu0 0
      %476 = vmatmul.mubr.bf16.gmra.mrb[0].mxu0 %v395
      %v477 = vpop.f32.mrb[0].mxu0
      %v478 = vadd.f32 0.0, %v477
      %v479 = vpop.f32.mrb[0].mxu0
      %v480 = vpop.f32.mrb[0].mxu0
      %v481 = vadd.f32 0.0, %v480
      %v482 = vpop.f32.mrb[0].mxu0
      %483 = vmatprep.mubr.bf16.mxu0 0
      %484 = vmatmul.mubr.bf16.gmra.mrb[0].mxu0 %v398
      %v485 = vpop.f32.mrb[0].mxu0
      %v486 = vadd.f32 0.0, %v485
      %v487 = vpop.f32.mrb[0].mxu0
      %v488 = vpop.f32.mrb[0].mxu0
      %v489 = vadd.f32 0.0, %v488
      %v490 = vpop.f32.mrb[0].mxu0
      %491 = vmatprep.mubr.bf16.mxu0 0
      %492 = vmatmul.mubr.bf16.gmra.mrb[0].mxu0 %v401
      %v493 = vpop.f32.mrb[0].mxu0
      %v494 = vadd.f32 0.0, %v493
      %v495 = vpop.f32.mrb[0].mxu0
      %v496 = vpop.f32.mrb[0].mxu0
      %v497 = vadd.f32 0.0, %v496
      %v498 = vpop.f32.mrb[0].mxu0
      %499 = vdwg.mxu0
      %v504 = vunpack.c.l.b16 %v268
      %v505 = vunpack.c.l.b16 %v269
      %v506 = vunpack.c.l.b16 %v270
      %v507 = vunpack.c.l.b16 %v271
      %v508 = vpack.c.b16 %v505, %v504
      %v509 = vpack.c.b16 %v507, %v506
      %v513 = vsel %vm378, %v260, 0
      %v516 = vsel %vm378, %v261, 0
      %v519 = vsel %vm378, %v262, 0
      %v522 = vsel %vm378, %v263, 0
      %v525 = vsel %vm378, %v264, 0
      %v528 = vsel %vm378, %v265, 0
      %v531 = vsel %vm378, %v266, 0
      %v534 = vsel %vm378, %v267, 0
      %536 = vmatprep.subr.bf16.mxu0 0
      %537 = vmatpush1.bf16.msra.mxu0 %v508
      %538 = vmatprep.subr.bf16.mxu0 0
      %539 = vmatpush1.bf16.msra.mxu0 %v509
      %540 = vmatprep.subr.bf16.mxu0 0
      %541 = vmatpush1.bf16.msra.mxu0 0
      %542 = vmatprep.subr.bf16.mxu0 0
      %543 = vmatpush1.bf16.msra.mxu0 0
      %544 = vmatprep.subr.bf16.mxu0 0
      %545 = vmatpush1.bf16.msra.mxu0 0
      %546 = vmatprep.subr.bf16.mxu0 0
      %547 = vmatpush1.bf16.msra.mxu0 0
      %548 = vmatprep.subr.bf16.mxu0 0
      %549 = vmatpush1.bf16.msra.mxu0 0
      %550 = vmatprep.subr.bf16.mxu0 0
      %551 = vmatpush1.bf16.msra.mxu0 0
      %552 = vmatprep.subr.bf16.mxu0 0
      %553 = vmatpush1.bf16.msra.mxu0 0
      %554 = vmatprep.subr.bf16.mxu0 0
      %555 = vmatpush1.bf16.msra.mxu0 0
      %556 = vmatprep.subr.bf16.mxu0 0
      %557 = vmatpush1.bf16.msra.mxu0 0
      %558 = vmatprep.subr.bf16.mxu0 0
      %559 = vmatpush1.bf16.msra.mxu0 0
      %560 = vmatprep.subr.bf16.mxu0 0
      %561 = vmatpush1.bf16.msra.mxu0 0
      %562 = vmatprep.subr.bf16.mxu0 0
      %563 = vmatpush1.bf16.msra.mxu0 0
      %564 = vmatprep.subr.bf16.mxu0 0
      %565 = vmatpush1.bf16.msra.mxu0 0
      %566 = vmatprep.subr.bf16.mxu0 0
      %567 = vmatpush1.bf16.msra.mxu0 0
      %568 = vmatprep.mubr.bf16.mxu0 0
      %569 = vmatmul.mubr.bf16.gmra.mrb[0].mxu0 %v513
      %v570 = vpop.f32.mrb[0].mxu0
      %v571 = vadd.f32 %v438, %v570
      %v572 = vpop.f32.mrb[0].mxu0
      %v573 = vpop.f32.mrb[0].mxu0
      %v574 = vadd.f32 %v441, %v573
      %v575 = vpop.f32.mrb[0].mxu0
      %576 = vmatprep.mubr.bf16.mxu0 0
      %577 = vmatmul.mubr.bf16.gmra.mrb[0].mxu0 %v516
      %v578 = vpop.f32.mrb[0].mxu0
      %v579 = vadd.f32 %v446, %v578
      %v580 = vpop.f32.mrb[0].mxu0
      %v581 = vpop.f32.mrb[0].mxu0
      %v582 = vadd.f32 %v449, %v581
      %v583 = vpop.f32.mrb[0].mxu0
      %584 = vmatprep.mubr.bf16.mxu0 0
      %585 = vmatmul.mubr.bf16.gmra.mrb[0].mxu0 %v519
      %v586 = vpop.f32.mrb[0].mxu0
      %v587 = vadd.f32 %v454, %v586
      %v588 = vpop.f32.mrb[0].mxu0
      %v589 = vpop.f32.mrb[0].mxu0
      %v590 = vadd.f32 %v457, %v589
      %v591 = vpop.f32.mrb[0].mxu0
      %592 = vmatprep.mubr.bf16.mxu0 0
      %593 = vmatmul.mubr.bf16.gmra.mrb[0].mxu0 %v522
      %v594 = vpop.f32.mrb[0].mxu0
      %v595 = vadd.f32 %v462, %v594
      %v596 = vpop.f32.mrb[0].mxu0
      %v597 = vpop.f32.mrb[0].mxu0
      %v598 = vadd.f32 %v465, %v597
      %v599 = vpop.f32.mrb[0].mxu0
      %600 = vmatprep.mubr.bf16.mxu0 0
      %601 = vmatmul.mubr.bf16.gmra.mrb[0].mxu0 %v525
      %v602 = vpop.f32.mrb[0].mxu0
      %v603 = vadd.f32 %v470, %v602
      %v604 = vpop.f32.mrb[0].mxu0
      %v605 = vpop.f32.mrb[0].mxu0
      %v606 = vadd.f32 %v473, %v605
      %v607 = vpop.f32.mrb[0].mxu0
      %608 = vmatprep.mubr.bf16.mxu0 0
      %609 = vmatmul.mubr.bf16.gmra.mrb[0].mxu0 %v528
      %v610 = vpop.f32.mrb[0].mxu0
      %v611 = vadd.f32 %v478, %v610
      %v612 = vpop.f32.mrb[0].mxu0
      %v613 = vpop.f32.mrb[0].mxu0
      %v614 = vadd.f32 %v481, %v613
      %v615 = vpop.f32.mrb[0].mxu0
      %616 = vmatprep.mubr.bf16.mxu0 0
      %617 = vmatmul.mubr.bf16.gmra.mrb[0].mxu0 %v531
      %v618 = vpop.f32.mrb[0].mxu0
      %v619 = vadd.f32 %v486, %v618
      %v620 = vpop.f32.mrb[0].mxu0
      %v621 = vpop.f32.mrb[0].mxu0
      %v622 = vadd.f32 %v489, %v621
      %v623 = vpop.f32.mrb[0].mxu0
      %624 = vmatprep.mubr.bf16.mxu0 0
      %625 = vmatmul.mubr.bf16.gmra.mrb[0].mxu0 %v534
      %v626 = vpop.f32.mrb[0].mxu0
      %v627 = vadd.f32 %v494, %v626
      %v628 = vpop.f32.mrb[0].mxu0
      %v629 = vpop.f32.mrb[0].mxu0
      %v630 = vadd.f32 %v497, %v629
      %v631 = vpop.f32.mrb[0].mxu0
      %632 = vdwg.mxu0
      %vm633 = vcmask 1045504
      %v634 = vrot.slane %v230, 2
      %v635 = vrot.slane %v231, 2
      %v636 = vsel %vm633, %v634, %v635
      %v637 = vrot.slane %v232, 2
      %v638 = vsel %vm633, %v635, %v637
      %v639 = vrot.slane %v233, 2
      %v640 = vrot.slane %v234, 2
      %v641 = vsel %vm633, %v639, %v640
      %v642 = vrot.slane %v235, 2
      %v643 = vsel %vm633, %v640, %v642
      %v644 = vrot.slane %v236, 2
      %v645 = vrot.slane %v237, 2
      %v646 = vsel %vm633, %v644, %v645
      %v647 = vrot.slane %v238, 2
      %v648 = vsel %vm633, %v645, %v647
      %v649 = vrot.slane %v239, 2
      %v650 = vrot.slane %v240, 2
      %v651 = vsel %vm633, %v649, %v650
      %v652 = vrot.slane %v241, 2
      %v653 = vsel %vm633, %v650, %v652
      %v654 = vrot.slane %v242, 2
      %v655 = vrot.slane %v243, 2
      %v656 = vsel %vm633, %v654, %v655
      %v657 = vrot.slane %v244, 2
      %v658 = vsel %vm633, %v655, %v657
      %v659 = vrot.slane %v245, 2
      %v660 = vrot.slane %v246, 2
      %v661 = vsel %vm633, %v659, %v660
      %v662 = vrot.slane %v247, 2
      %v663 = vsel %vm633, %v660, %v662
      %v664 = vrot.slane %v248, 2
      %v665 = vrot.slane %v249, 2
      %v666 = vsel %vm633, %v664, %v665
      %v667 = vrot.slane %v250, 2
      %v668 = vsel %vm633, %v665, %v667
      %v669 = vrot.slane %v251, 2
      %v670 = vrot.slane %v252, 2
      %v671 = vsel %vm633, %v669, %v670
      %v672 = vrot.slane %v253, 2
      %v673 = vsel %vm633, %v670, %v672
      %v690 = vpack.c.bf16 %v638, %v636
      %v691 = vpack.c.bf16 %v643, %v641
      %v692 = vpack.c.bf16 %v648, %v646
      %v693 = vpack.c.bf16 %v653, %v651
      %v694 = vpack.c.bf16 %v658, %v656
      %v695 = vpack.c.bf16 %v663, %v661
      %v696 = vpack.c.bf16 %v668, %v666
      %v697 = vpack.c.bf16 %v673, %v671
      %s698 = scalar_lea.vmem %s1, 32
      %v699 = vld [vmem:[%s698] sm:$0xf]
      %v700 = vld [vmem:[%s698 + $0x4] sm:$0xf]
      %v701 = vld [vmem:[%s698 + $0x8] sm:$0xf]
      %v702 = vld [vmem:[%s698 + $0xc] sm:$0xf]
      %v707 = vunpack.c.l.b16 %v699
      %v708 = vunpack.c.l.b16 %v700
      %v709 = vunpack.c.l.b16 %v701
      %v710 = vunpack.c.l.b16 %v702
      %v711 = vpack.c.b16 %v708, %v707
      %v712 = vpack.c.b16 %v710, %v709
      %v716 = vsel %vm378, %v690, 0
      %v719 = vsel %vm378, %v691, 0
      %v722 = vsel %vm378, %v692, 0
      %v725 = vsel %vm378, %v693, 0
      %v728 = vsel %vm378, %v694, 0
      %v731 = vsel %vm378, %v695, 0
      %v734 = vsel %vm378, %v696, 0
      %v737 = vsel %vm378, %v697, 0
      %739 = vmatprep.subr.bf16.mxu0 0
      %740 = vmatpush1.bf16.msra.mxu0 %v711
      %741 = vmatprep.subr.bf16.mxu0 0
      %742 = vmatpush1.bf16.msra.mxu0 %v712
      %743 = vmatprep.subr.bf16.mxu0 0
      %744 = vmatpush1.bf16.msra.mxu0 0
      %745 = vmatprep.subr.bf16.mxu0 0
      %746 = vmatpush1.bf16.msra.mxu0 0
      %747 = vmatprep.subr.bf16.mxu0 0
      %748 = vmatpush1.bf16.msra.mxu0 0
      %749 = vmatprep.subr.bf16.mxu0 0
      %750 = vmatpush1.bf16.msra.mxu0 0
      %751 = vmatprep.subr.bf16.mxu0 0
      %752 = vmatpush1.bf16.msra.mxu0 0
      %753 = vmatprep.subr.bf16.mxu0 0
      %754 = vmatpush1.bf16.msra.mxu0 0
      %755 = vmatprep.subr.bf16.mxu0 0
      %756 = vmatpush1.bf16.msra.mxu0 0
      %757 = vmatprep.subr.bf16.mxu0 0
      %758 = vmatpush1.bf16.msra.mxu0 0
      %759 = vmatprep.subr.bf16.mxu0 0
      %760 = vmatpush1.bf16.msra.mxu0 0
      %761 = vmatprep.subr.bf16.mxu0 0
      %762 = vmatpush1.bf16.msra.mxu0 0
      %763 = vmatprep.subr.bf16.mxu0 0
      %764 = vmatpush1.bf16.msra.mxu0 0
      %765 = vmatprep.subr.bf16.mxu0 0
      %766 = vmatpush1.bf16.msra.mxu0 0
      %767 = vmatprep.subr.bf16.mxu0 0
      %768 = vmatpush1.bf16.msra.mxu0 0
      %769 = vmatprep.subr.bf16.mxu0 0
      %770 = vmatpush1.bf16.msra.mxu0 0
      %771 = vmatprep.mubr.bf16.mxu0 0
      %772 = vmatmul.mubr.bf16.gmra.mrb[0].mxu0 %v716
      %v773 = vpop.f32.mrb[0].mxu0
      %v774 = vadd.f32 0.0, %v773
      %v775 = vpop.f32.mrb[0].mxu0
      %v776 = vpop.f32.mrb[0].mxu0
      %v777 = vadd.f32 0.0, %v776
      %v778 = vpop.f32.mrb[0].mxu0
      %779 = vmatprep.mubr.bf16.mxu0 0
      %780 = vmatmul.mubr.bf16.gmra.mrb[0].mxu0 %v719
      %v781 = vpop.f32.mrb[0].mxu0
      %v782 = vadd.f32 0.0, %v781
      %v783 = vpop.f32.mrb[0].mxu0
      %v784 = vpop.f32.mrb[0].mxu0
      %v785 = vadd.f32 0.0, %v784
      %v786 = vpop.f32.mrb[0].mxu0
      %787 = vmatprep.mubr.bf16.mxu0 0
      %788 = vmatmul.mubr.bf16.gmra.mrb[0].mxu0 %v722
      %v789 = vpop.f32.mrb[0].mxu0
      %v790 = vadd.f32 0.0, %v789
      %v791 = vpop.f32.mrb[0].mxu0
      %v792 = vpop.f32.mrb[0].mxu0
      %v793 = vadd.f32 0.0, %v792
      %v794 = vpop.f32.mrb[0].mxu0
      %795 = vmatprep.mubr.bf16.mxu0 0
      %796 = vmatmul.mubr.bf16.gmra.mrb[0].mxu0 %v725
      %v797 = vpop.f32.mrb[0].mxu0
      %v798 = vadd.f32 0.0, %v797
      %v799 = vpop.f32.mrb[0].mxu0
      %v800 = vpop.f32.mrb[0].mxu0
      %v801 = vadd.f32 0.0, %v800
      %v802 = vpop.f32.mrb[0].mxu0
      %803 = vmatprep.mubr.bf16.mxu0 0
      %804 = vmatmul.mubr.bf16.gmra.mrb[0].mxu0 %v728
      %v805 = vpop.f32.mrb[0].mxu0
      %v806 = vadd.f32 0.0, %v805
      %v807 = vpop.f32.mrb[0].mxu0
      %v808 = vpop.f32.mrb[0].mxu0
      %v809 = vadd.f32 0.0, %v808
      %v810 = vpop.f32.mrb[0].mxu0
      %811 = vmatprep.mubr.bf16.mxu0 0
      %812 = vmatmul.mubr.bf16.gmra.mrb[0].mxu0 %v731
      %v813 = vpop.f32.mrb[0].mxu0
      %v814 = vadd.f32 0.0, %v813
      %v815 = vpop.f32.mrb[0].mxu0
      %v816 = vpop.f32.mrb[0].mxu0
      %v817 = vadd.f32 0.0, %v816
      %v818 = vpop.f32.mrb[0].mxu0
      %819 = vmatprep.mubr.bf16.mxu0 0
      %820 = vmatmul.mubr.bf16.gmra.mrb[0].mxu0 %v734
      %v821 = vpop.f32.mrb[0].mxu0
      %v822 = vadd.f32 0.0, %v821
      %v823 = vpop.f32.mrb[0].mxu0
      %v824 = vpop.f32.mrb[0].mxu0
      %v825 = vadd.f32 0.0, %v824
      %v826 = vpop.f32.mrb[0].mxu0
      %827 = vmatprep.mubr.bf16.mxu0 0
      %828 = vmatmul.mubr.bf16.gmra.mrb[0].mxu0 %v737
      %v829 = vpop.f32.mrb[0].mxu0
      %v830 = vadd.f32 0.0, %v829
      %v831 = vpop.f32.mrb[0].mxu0
      %v832 = vpop.f32.mrb[0].mxu0
      %v833 = vadd.f32 0.0, %v832
      %v834 = vpop.f32.mrb[0].mxu0
      %835 = vdwg.mxu0
      %v836 = vadd.f32 %v571, %v774
      %v837 = vadd.f32 %v574, %v777
      %v838 = vadd.f32 %v579, %v782
      %v839 = vadd.f32 %v582, %v785
      %v840 = vadd.f32 %v587, %v790
      %v841 = vadd.f32 %v590, %v793
      %v842 = vadd.f32 %v595, %v798
      %v843 = vadd.f32 %v598, %v801
      %v844 = vadd.f32 %v603, %v806
      %v845 = vadd.f32 %v606, %v809
      %v846 = vadd.f32 %v611, %v814
      %v847 = vadd.f32 %v614, %v817
      %v848 = vadd.f32 %v619, %v822
      %v849 = vadd.f32 %v622, %v825
      %v850 = vadd.f32 %v627, %v830
      %v851 = vadd.f32 %v630, %v833
      %v852 = vpack.c.bf16 %v255, %v254
      %s853 = scalar_lea.vmem %s1, 48
      %v854 = vld [vmem:[%s853] sm:$0xf]
      %v855 = vld [vmem:[%s853 + $0x4] sm:$0xf]
      %v856 = vld [vmem:[%s853 + $0x8] sm:$0xf]
      %v857 = vld [vmem:[%s853 + $0xc] sm:$0xf]
      %v862 = vunpack.c.l.b16 %v854
      %v863 = vunpack.c.l.b16 %v855
      %v864 = vunpack.c.l.b16 %v856
      %v865 = vunpack.c.l.b16 %v857
      %v866 = vpack.c.b16 %v863, %v862
      %v867 = vpack.c.b16 %v865, %v864
      %v871 = vsel %vm378, %v852, 0
      %873 = vmatprep.subr.bf16.mxu0 0
      %874 = vmatpush1.bf16.msra.mxu0 %v866
      %875 = vmatprep.subr.bf16.mxu0 0
      %876 = vmatpush1.bf16.msra.mxu0 %v867
      %877 = vmatprep.subr.bf16.mxu0 0
      %878 = vmatpush1.bf16.msra.mxu0 0
      %879 = vmatprep.subr.bf16.mxu0 0
      %880 = vmatpush1.bf16.msra.mxu0 0
      %881 = vmatprep.subr.bf16.mxu0 0
      %882 = vmatpush1.bf16.msra.mxu0 0
      %883 = vmatprep.subr.bf16.mxu0 0
      %884 = vmatpush1.bf16.msra.mxu0 0
      %885 = vmatprep.subr.bf16.mxu0 0
      %886 = vmatpush1.bf16.msra.mxu0 0
      %887 = vmatprep.subr.bf16.mxu0 0
      %888 = vmatpush1.bf16.msra.mxu0 0
      %889 = vmatprep.subr.bf16.mxu0 0
      %890 = vmatpush1.bf16.msra.mxu0 0
      %891 = vmatprep.subr.bf16.mxu0 0
      %892 = vmatpush1.bf16.msra.mxu0 0
      %893 = vmatprep.subr.bf16.mxu0 0
      %894 = vmatpush1.bf16.msra.mxu0 0
      %895 = vmatprep.subr.bf16.mxu0 0
      %896 = vmatpush1.bf16.msra.mxu0 0
      %897 = vmatprep.subr.bf16.mxu0 0
      %898 = vmatpush1.bf16.msra.mxu0 0
      %899 = vmatprep.subr.bf16.mxu0 0
      %900 = vmatpush1.bf16.msra.mxu0 0
      %901 = vmatprep.subr.bf16.mxu0 0
      %902 = vmatpush1.bf16.msra.mxu0 0
      %903 = vmatprep.subr.bf16.mxu0 0
      %904 = vmatpush1.bf16.msra.mxu0 0
      %905 = vmatprep.mubr.bf16.mxu0 0
      %906 = vmatmul.mubr.bf16.gmra.mrb[0].mxu0 %v516
      %v907 = vpop.f32.mrb[0].mxu0
      %v908 = vadd.f32 0.0, %v907
      %v909 = vpop.f32.mrb[0].mxu0
      %v910 = vpop.f32.mrb[0].mxu0
      %v911 = vadd.f32 0.0, %v910
      %v912 = vpop.f32.mrb[0].mxu0
      %913 = vmatprep.mubr.bf16.mxu0 0
      %914 = vmatmul.mubr.bf16.gmra.mrb[0].mxu0 %v519
      %v915 = vpop.f32.mrb[0].mxu0
      %v916 = vadd.f32 0.0, %v915
      %v917 = vpop.f32.mrb[0].mxu0
      %v918 = vpop.f32.mrb[0].mxu0
      %v919 = vadd.f32 0.0, %v918
      %v920 = vpop.f32.mrb[0].mxu0
      %921 = vmatprep.mubr.bf16.mxu0 0
      %922 = vmatmul.mubr.bf16.gmra.mrb[0].mxu0 %v522
      %v923 = vpop.f32.mrb[0].mxu0
      %v924 = vadd.f32 0.0, %v923
      %v925 = vpop.f32.mrb[0].mxu0
      %v926 = vpop.f32.mrb[0].mxu0
      %v927 = vadd.f32 0.0, %v926
      %v928 = vpop.f32.mrb[0].mxu0
      %929 = vmatprep.mubr.bf16.mxu0 0
      %930 = vmatmul.mubr.bf16.gmra.mrb[0].mxu0 %v525
      %v931 = vpop.f32.mrb[0].mxu0
      %v932 = vadd.f32 0.0, %v931
      %v933 = vpop.f32.mrb[0].mxu0
      %v934 = vpop.f32.mrb[0].mxu0
      %v935 = vadd.f32 0.0, %v934
      %v936 = vpop.f32.mrb[0].mxu0
      %937 = vmatprep.mubr.bf16.mxu0 0
      %938 = vmatmul.mubr.bf16.gmra.mrb[0].mxu0 %v528
      %v939 = vpop.f32.mrb[0].mxu0
      %v940 = vadd.f32 0.0, %v939
      %v941 = vpop.f32.mrb[0].mxu0
      %v942 = vpop.f32.mrb[0].mxu0
      %v943 = vadd.f32 0.0, %v942
      %v944 = vpop.f32.mrb[0].mxu0
      %945 = vmatprep.mubr.bf16.mxu0 0
      %946 = vmatmul.mubr.bf16.gmra.mrb[0].mxu0 %v531
      %v947 = vpop.f32.mrb[0].mxu0
      %v948 = vadd.f32 0.0, %v947
      %v949 = vpop.f32.mrb[0].mxu0
      %v950 = vpop.f32.mrb[0].mxu0
      %v951 = vadd.f32 0.0, %v950
      %v952 = vpop.f32.mrb[0].mxu0
      %953 = vmatprep.mubr.bf16.mxu0 0
      %954 = vmatmul.mubr.bf16.gmra.mrb[0].mxu0 %v534
      %v955 = vpop.f32.mrb[0].mxu0
      %v956 = vadd.f32 0.0, %v955
      %v957 = vpop.f32.mrb[0].mxu0
      %v958 = vpop.f32.mrb[0].mxu0
      %v959 = vadd.f32 0.0, %v958
      %v960 = vpop.f32.mrb[0].mxu0
      %961 = vmatprep.mubr.bf16.mxu0 0
      %962 = vmatmul.mubr.bf16.gmra.mrb[0].mxu0 %v871
      %v963 = vpop.f32.mrb[0].mxu0
      %v964 = vadd.f32 0.0, %v963
      %v965 = vpop.f32.mrb[0].mxu0
      %v966 = vpop.f32.mrb[0].mxu0
      %v967 = vadd.f32 0.0, %v966
      %v968 = vpop.f32.mrb[0].mxu0
      %969 = vdwg.mxu0
      %v970 = vadd.f32 %v836, %v908
      %v971 = vadd.f32 %v837, %v911
      %v972 = vadd.f32 %v838, %v916
      %v973 = vadd.f32 %v839, %v919
      %v974 = vadd.f32 %v840, %v924
      %v975 = vadd.f32 %v841, %v927
      %v976 = vadd.f32 %v842, %v932
      %v977 = vadd.f32 %v843, %v935
      %v978 = vadd.f32 %v844, %v940
      %v979 = vadd.f32 %v845, %v943
      %v980 = vadd.f32 %v846, %v948
      %v981 = vadd.f32 %v847, %v951
      %v982 = vadd.f32 %v848, %v956
      %v983 = vadd.f32 %v849, %v959
      %v984 = vadd.f32 %v850, %v964
      %v985 = vadd.f32 %v851, %v967
      %v989 = vrot.slane %v254, 1
      %v990 = vrot.slane %v255, 1
      %v991 = vsel %vm296, %v989, %v990
      %v992 = vrot.slane %v256, 1
      %v993 = vsel %vm296, %v990, %v992
      %v996 = vpack.c.bf16 %v993, %v991
      %s997 = scalar_lea.vmem %s1, 64
      %v998 = vld [vmem:[%s997] sm:$0xf]
      %v999 = vld [vmem:[%s997 + $0x4] sm:$0xf]
      %v1000 = vld [vmem:[%s997 + $0x8] sm:$0xf]
      %v1001 = vld [vmem:[%s997 + $0xc] sm:$0xf]
      %v1006 = vunpack.c.l.b16 %v998
      %v1007 = vunpack.c.l.b16 %v999
      %v1008 = vunpack.c.l.b16 %v1000
      %v1009 = vunpack.c.l.b16 %v1001
      %v1010 = vpack.c.b16 %v1007, %v1006
      %v1011 = vpack.c.b16 %v1009, %v1008
      %v1015 = vsel %vm378, %v996, 0
      %1017 = vmatprep.subr.bf16.mxu0 0
      %1018 = vmatpush1.bf16.msra.mxu0 %v1010
      %1019 = vmatprep.subr.bf16.mxu0 0
      %1020 = vmatpush1.bf16.msra.mxu0 %v1011
      %1021 = vmatprep.subr.bf16.mxu0 0
      %1022 = vmatpush1.bf16.msra.mxu0 0
      %1023 = vmatprep.subr.bf16.mxu0 0
      %1024 = vmatpush1.bf16.msra.mxu0 0
      %1025 = vmatprep.subr.bf16.mxu0 0
      %1026 = vmatpush1.bf16.msra.mxu0 0
      %1027 = vmatprep.subr.bf16.mxu0 0
      %1028 = vmatpush1.bf16.msra.mxu0 0
      %1029 = vmatprep.subr.bf16.mxu0 0
      %1030 = vmatpush1.bf16.msra.mxu0 0
      %1031 = vmatprep.subr.bf16.mxu0 0
      %1032 = vmatpush1.bf16.msra.mxu0 0
      %1033 = vmatprep.subr.bf16.mxu0 0
      %1034 = vmatpush1.bf16.msra.mxu0 0
      %1035 = vmatprep.subr.bf16.mxu0 0
      %1036 = vmatpush1.bf16.msra.mxu0 0
      %1037 = vmatprep.subr.bf16.mxu0 0
      %1038 = vmatpush1.bf16.msra.mxu0 0
      %1039 = vmatprep.subr.bf16.mxu0 0
      %1040 = vmatpush1.bf16.msra.mxu0 0
      %1041 = vmatprep.subr.bf16.mxu0 0
      %1042 = vmatpush1.bf16.msra.mxu0 0
      %1043 = vmatprep.subr.bf16.mxu0 0
      %1044 = vmatpush1.bf16.msra.mxu0 0
      %1045 = vmatprep.subr.bf16.mxu0 0
      %1046 = vmatpush1.bf16.msra.mxu0 0
      %1047 = vmatprep.subr.bf16.mxu0 0
      %1048 = vmatpush1.bf16.msra.mxu0 0
      %1049 = vmatprep.mubr.bf16.mxu0 0
      %1050 = vmatmul.mubr.bf16.gmra.mrb[0].mxu0 %v383
      %v1051 = vpop.f32.mrb[0].mxu0
      %v1052 = vadd.f32 0.0, %v1051
      %v1053 = vpop.f32.mrb[0].mxu0
      %v1054 = vpop.f32.mrb[0].mxu0
      %v1055 = vadd.f32 0.0, %v1054
      %v1056 = vpop.f32.mrb[0].mxu0
      %1057 = vmatprep.mubr.bf16.mxu0 0
      %1058 = vmatmul.mubr.bf16.gmra.mrb[0].mxu0 %v386
      %v1059 = vpop.f32.mrb[0].mxu0
      %v1060 = vadd.f32 0.0, %v1059
      %v1061 = vpop.f32.mrb[0].mxu0
      %v1062 = vpop.f32.mrb[0].mxu0
      %v1063 = vadd.f32 0.0, %v1062
      %v1064 = vpop.f32.mrb[0].mxu0
      %1065 = vmatprep.mubr.bf16.mxu0 0
      %1066 = vmatmul.mubr.bf16.gmra.mrb[0].mxu0 %v389
      %v1067 = vpop.f32.mrb[0].mxu0
      %v1068 = vadd.f32 0.0, %v1067
      %v1069 = vpop.f32.mrb[0].mxu0
      %v1070 = vpop.f32.mrb[0].mxu0
      %v1071 = vadd.f32 0.0, %v1070
      %v1072 = vpop.f32.mrb[0].mxu0
      %1073 = vmatprep.mubr.bf16.mxu0 0
      %1074 = vmatmul.mubr.bf16.gmra.mrb[0].mxu0 %v392
      %v1075 = vpop.f32.mrb[0].mxu0
      %v1076 = vadd.f32 0.0, %v1075
      %v1077 = vpop.f32.mrb[0].mxu0
      %v1078 = vpop.f32.mrb[0].mxu0
      %v1079 = vadd.f32 0.0, %v1078
      %v1080 = vpop.f32.mrb[0].mxu0
      %1081 = vmatprep.mubr.bf16.mxu0 0
      %1082 = vmatmul.mubr.bf16.gmra.mrb[0].mxu0 %v395
      %v1083 = vpop.f32.mrb[0].mxu0
      %v1084 = vadd.f32 0.0, %v1083
      %v1085 = vpop.f32.mrb[0].mxu0
      %v1086 = vpop.f32.mrb[0].mxu0
      %v1087 = vadd.f32 0.0, %v1086
      %v1088 = vpop.f32.mrb[0].mxu0
      %1089 = vmatprep.mubr.bf16.mxu0 0
      %1090 = vmatmul.mubr.bf16.gmra.mrb[0].mxu0 %v398
      %v1091 = vpop.f32.mrb[0].mxu0
      %v1092 = vadd.f32 0.0, %v1091
      %v1093 = vpop.f32.mrb[0].mxu0
      %v1094 = vpop.f32.mrb[0].mxu0
      %v1095 = vadd.f32 0.0, %v1094
      %v1096 = vpop.f32.mrb[0].mxu0
      %1097 = vmatprep.mubr.bf16.mxu0 0
      %1098 = vmatmul.mubr.bf16.gmra.mrb[0].mxu0 %v401
      %v1099 = vpop.f32.mrb[0].mxu0
      %v1100 = vadd.f32 0.0, %v1099
      %v1101 = vpop.f32.mrb[0].mxu0
      %v1102 = vpop.f32.mrb[0].mxu0
      %v1103 = vadd.f32 0.0, %v1102
      %v1104 = vpop.f32.mrb[0].mxu0
      %1105 = vmatprep.mubr.bf16.mxu0 0
      %1106 = vmatmul.mubr.bf16.gmra.mrb[0].mxu0 %v1015
      %v1107 = vpop.f32.mrb[0].mxu0
      %v1108 = vadd.f32 0.0, %v1107
      %v1109 = vpop.f32.mrb[0].mxu0
      %v1110 = vpop.f32.mrb[0].mxu0
      %v1111 = vadd.f32 0.0, %v1110
      %v1112 = vpop.f32.mrb[0].mxu0
      %1113 = vdwg.mxu0
      %v1114 = vadd.f32 %v970, %v1052
      %v1115 = vadd.f32 %v971, %v1055
      %v1116 = vadd.f32 %v972, %v1060
      %v1117 = vadd.f32 %v973, %v1063
      %v1118 = vadd.f32 %v974, %v1068
      %v1119 = vadd.f32 %v975, %v1071
      %v1120 = vadd.f32 %v976, %v1076
      %v1121 = vadd.f32 %v977, %v1079
      %v1122 = vadd.f32 %v978, %v1084
      %v1123 = vadd.f32 %v979, %v1087
      %v1124 = vadd.f32 %v980, %v1092
      %v1125 = vadd.f32 %v981, %v1095
      %v1126 = vadd.f32 %v982, %v1100
      %v1127 = vadd.f32 %v983, %v1103
      %v1128 = vadd.f32 %v984, %v1108
      %v1129 = vadd.f32 %v985, %v1111
      %v1130 = vrot.slane %v254, 2
      %v1131 = vrot.slane %v255, 2
      %v1132 = vsel %vm633, %v1130, %v1131
      %v1133 = vrot.slane %v256, 2
      %v1134 = vsel %vm633, %v1131, %v1133
      %v1137 = vpack.c.bf16 %v1134, %v1132
      %s1138 = scalar_lea.vmem %s1, 80
      %v1139 = vld [vmem:[%s1138] sm:$0xf]
      %v1140 = vld [vmem:[%s1138 + $0x4] sm:$0xf]
      %v1141 = vld [vmem:[%s1138 + $0x8] sm:$0xf]
      %v1142 = vld [vmem:[%s1138 + $0xc] sm:$0xf]
      %v1147 = vunpack.c.l.b16 %v1139
      %v1148 = vunpack.c.l.b16 %v1140
      %v1149 = vunpack.c.l.b16 %v1141
      %v1150 = vunpack.c.l.b16 %v1142
      %v1151 = vpack.c.b16 %v1148, %v1147
      %v1152 = vpack.c.b16 %v1150, %v1149
      %v1156 = vsel %vm378, %v1137, 0
      %1158 = vmatprep.subr.bf16.mxu0 0
      %1159 = vmatpush1.bf16.msra.mxu0 %v1151
      %1160 = vmatprep.subr.bf16.mxu0 0
      %1161 = vmatpush1.bf16.msra.mxu0 %v1152
      %1162 = vmatprep.subr.bf16.mxu0 0
      %1163 = vmatpush1.bf16.msra.mxu0 0
      %1164 = vmatprep.subr.bf16.mxu0 0
      %1165 = vmatpush1.bf16.msra.mxu0 0
      %1166 = vmatprep.subr.bf16.mxu0 0
      %1167 = vmatpush1.bf16.msra.mxu0 0
      %1168 = vmatprep.subr.bf16.mxu0 0
      %1169 = vmatpush1.bf16.msra.mxu0 0
      %1170 = vmatprep.subr.bf16.mxu0 0
      %1171 = vmatpush1.bf16.msra.mxu0 0
      %1172 = vmatprep.subr.bf16.mxu0 0
      %1173 = vmatpush1.bf16.msra.mxu0 0
      %1174 = vmatprep.subr.bf16.mxu0 0
      %1175 = vmatpush1.bf16.msra.mxu0 0
      %1176 = vmatprep.subr.bf16.mxu0 0
      %1177 = vmatpush1.bf16.msra.mxu0 0
      %1178 = vmatprep.subr.bf16.mxu0 0
      %1179 = vmatpush1.bf16.msra.mxu0 0
      %1180 = vmatprep.subr.bf16.mxu0 0
      %1181 = vmatpush1.bf16.msra.mxu0 0
      %1182 = vmatprep.subr.bf16.mxu0 0
      %1183 = vmatpush1.bf16.msra.mxu0 0
      %1184 = vmatprep.subr.bf16.mxu0 0
      %1185 = vmatpush1.bf16.msra.mxu0 0
      %1186 = vmatprep.subr.bf16.mxu0 0
      %1187 = vmatpush1.bf16.msra.mxu0 0
      %1188 = vmatprep.subr.bf16.mxu0 0
      %1189 = vmatpush1.bf16.msra.mxu0 0
      %1190 = vmatprep.mubr.bf16.mxu0 0
      %1191 = vmatmul.mubr.bf16.gmra.mrb[0].mxu0 %v719
      %v1192 = vpop.f32.mrb[0].mxu0
      %v1193 = vadd.f32 0.0, %v1192
      %v1194 = vpop.f32.mrb[0].mxu0
      %v1195 = vpop.f32.mrb[0].mxu0
      %v1196 = vadd.f32 0.0, %v1195
      %v1197 = vpop.f32.mrb[0].mxu0
      %1198 = vmatprep.mubr.bf16.mxu0 0
      %1199 = vmatmul.mubr.bf16.gmra.mrb[0].mxu0 %v722
      %v1200 = vpop.f32.mrb[0].mxu0
      %v1201 = vadd.f32 0.0, %v1200
      %v1202 = vpop.f32.mrb[0].mxu0
      %v1203 = vpop.f32.mrb[0].mxu0
      %v1204 = vadd.f32 0.0, %v1203
      %v1205 = vpop.f32.mrb[0].mxu0
      %1206 = vmatprep.mubr.bf16.mxu0 0
      %1207 = vmatmul.mubr.bf16.gmra.mrb[0].mxu0 %v725
      %v1208 = vpop.f32.mrb[0].mxu0
      %v1209 = vadd.f32 0.0, %v1208
      %v1210 = vpop.f32.mrb[0].mxu0
      %v1211 = vpop.f32.mrb[0].mxu0
      %v1212 = vadd.f32 0.0, %v1211
      %v1213 = vpop.f32.mrb[0].mxu0
      %1214 = vmatprep.mubr.bf16.mxu0 0
      %1215 = vmatmul.mubr.bf16.gmra.mrb[0].mxu0 %v728
      %v1216 = vpop.f32.mrb[0].mxu0
      %v1217 = vadd.f32 0.0, %v1216
      %v1218 = vpop.f32.mrb[0].mxu0
      %v1219 = vpop.f32.mrb[0].mxu0
      %v1220 = vadd.f32 0.0, %v1219
      %v1221 = vpop.f32.mrb[0].mxu0
      %1222 = vmatprep.mubr.bf16.mxu0 0
      %1223 = vmatmul.mubr.bf16.gmra.mrb[0].mxu0 %v731
      %v1224 = vpop.f32.mrb[0].mxu0
      %v1225 = vadd.f32 0.0, %v1224
      %v1226 = vpop.f32.mrb[0].mxu0
      %v1227 = vpop.f32.mrb[0].mxu0
      %v1228 = vadd.f32 0.0, %v1227
      %v1229 = vpop.f32.mrb[0].mxu0
      %1230 = vmatprep.mubr.bf16.mxu0 0
      %1231 = vmatmul.mubr.bf16.gmra.mrb[0].mxu0 %v734
      %v1232 = vpop.f32.mrb[0].mxu0
      %v1233 = vadd.f32 0.0, %v1232
      %v1234 = vpop.f32.mrb[0].mxu0
      %v1235 = vpop.f32.mrb[0].mxu0
      %v1236 = vadd.f32 0.0, %v1235
      %v1237 = vpop.f32.mrb[0].mxu0
      %1238 = vmatprep.mubr.bf16.mxu0 0
      %1239 = vmatmul.mubr.bf16.gmra.mrb[0].mxu0 %v737
      %v1240 = vpop.f32.mrb[0].mxu0
      %v1241 = vadd.f32 0.0, %v1240
      %v1242 = vpop.f32.mrb[0].mxu0
      %v1243 = vpop.f32.mrb[0].mxu0
      %v1244 = vadd.f32 0.0, %v1243
      %v1245 = vpop.f32.mrb[0].mxu0
      %1246 = vmatprep.mubr.bf16.mxu0 0
      %1247 = vmatmul.mubr.bf16.gmra.mrb[0].mxu0 %v1156
      %v1248 = vpop.f32.mrb[0].mxu0
      %v1249 = vadd.f32 0.0, %v1248
      %v1250 = vpop.f32.mrb[0].mxu0
      %v1251 = vpop.f32.mrb[0].mxu0
      %v1252 = vadd.f32 0.0, %v1251
      %v1253 = vpop.f32.mrb[0].mxu0
      %1254 = vdwg.mxu0
      %v1255 = vadd.f32 %v1114, %v1193
      %v1256 = vadd.f32 %v1115, %v1196
      %v1257 = vadd.f32 %v1116, %v1201
      %v1258 = vadd.f32 %v1117, %v1204
      %v1259 = vadd.f32 %v1118, %v1209
      %v1260 = vadd.f32 %v1119, %v1212
      %v1261 = vadd.f32 %v1120, %v1217
      %v1262 = vadd.f32 %v1121, %v1220
      %v1263 = vadd.f32 %v1122, %v1225
      %v1264 = vadd.f32 %v1123, %v1228
      %v1265 = vadd.f32 %v1124, %v1233
      %v1266 = vadd.f32 %v1125, %v1236
      %v1267 = vadd.f32 %v1126, %v1241
      %v1268 = vadd.f32 %v1127, %v1244
      %v1269 = vadd.f32 %v1128, %v1249
      %v1270 = vadd.f32 %v1129, %v1252
      %v1271 = vpack.c.bf16 %v258, %v257
      %s1272 = scalar_lea.vmem %s1, 96
      %v1273 = vld [vmem:[%s1272] sm:$0xf]
      %v1274 = vld [vmem:[%s1272 + $0x4] sm:$0xf]
      %v1275 = vld [vmem:[%s1272 + $0x8] sm:$0xf]
      %v1276 = vld [vmem:[%s1272 + $0xc] sm:$0xf]
      %v1281 = vunpack.c.l.b16 %v1273
      %v1282 = vunpack.c.l.b16 %v1274
      %v1283 = vunpack.c.l.b16 %v1275
      %v1284 = vunpack.c.l.b16 %v1276
      %v1285 = vpack.c.b16 %v1282, %v1281
      %v1286 = vpack.c.b16 %v1284, %v1283
      %v1290 = vsel %vm378, %v1271, 0
      %1292 = vmatprep.subr.bf16.mxu0 0
      %1293 = vmatpush1.bf16.msra.mxu0 %v1285
      %1294 = vmatprep.subr.bf16.mxu0 0
      %1295 = vmatpush1.bf16.msra.mxu0 %v1286
      %1296 = vmatprep.subr.bf16.mxu0 0
      %1297 = vmatpush1.bf16.msra.mxu0 0
      %1298 = vmatprep.subr.bf16.mxu0 0
      %1299 = vmatpush1.bf16.msra.mxu0 0
      %1300 = vmatprep.subr.bf16.mxu0 0
      %1301 = vmatpush1.bf16.msra.mxu0 0
      %1302 = vmatprep.subr.bf16.mxu0 0
      %1303 = vmatpush1.bf16.msra.mxu0 0
      %1304 = vmatprep.subr.bf16.mxu0 0
      %1305 = vmatpush1.bf16.msra.mxu0 0
      %1306 = vmatprep.subr.bf16.mxu0 0
      %1307 = vmatpush1.bf16.msra.mxu0 0
      %1308 = vmatprep.subr.bf16.mxu0 0
      %1309 = vmatpush1.bf16.msra.mxu0 0
      %1310 = vmatprep.subr.bf16.mxu0 0
      %1311 = vmatpush1.bf16.msra.mxu0 0
      %1312 = vmatprep.subr.bf16.mxu0 0
      %1313 = vmatpush1.bf16.msra.mxu0 0
      %1314 = vmatprep.subr.bf16.mxu0 0
      %1315 = vmatpush1.bf16.msra.mxu0 0
      %1316 = vmatprep.subr.bf16.mxu0 0
      %1317 = vmatpush1.bf16.msra.mxu0 0
      %1318 = vmatprep.subr.bf16.mxu0 0
      %1319 = vmatpush1.bf16.msra.mxu0 0
      %1320 = vmatprep.subr.bf16.mxu0 0
      %1321 = vmatpush1.bf16.msra.mxu0 0
      %1322 = vmatprep.subr.bf16.mxu0 0
      %1323 = vmatpush1.bf16.msra.mxu0 0
      %1324 = vmatprep.mubr.bf16.mxu0 0
      %1325 = vmatmul.mubr.bf16.gmra.mrb[0].mxu0 %v519
      %v1326 = vpop.f32.mrb[0].mxu0
      %v1327 = vadd.f32 0.0, %v1326
      %v1328 = vpop.f32.mrb[0].mxu0
      %v1329 = vpop.f32.mrb[0].mxu0
      %v1330 = vadd.f32 0.0, %v1329
      %v1331 = vpop.f32.mrb[0].mxu0
      %1332 = vmatprep.mubr.bf16.mxu0 0
      %1333 = vmatmul.mubr.bf16.gmra.mrb[0].mxu0 %v522
      %v1334 = vpop.f32.mrb[0].mxu0
      %v1335 = vadd.f32 0.0, %v1334
      %v1336 = vpop.f32.mrb[0].mxu0
      %v1337 = vpop.f32.mrb[0].mxu0
      %v1338 = vadd.f32 0.0, %v1337
      %v1339 = vpop.f32.mrb[0].mxu0
      %1340 = vmatprep.mubr.bf16.mxu0 0
      %1341 = vmatmul.mubr.bf16.gmra.mrb[0].mxu0 %v525
      %v1342 = vpop.f32.mrb[0].mxu0
      %v1343 = vadd.f32 0.0, %v1342
      %v1344 = vpop.f32.mrb[0].mxu0
      %v1345 = vpop.f32.mrb[0].mxu0
      %v1346 = vadd.f32 0.0, %v1345
      %v1347 = vpop.f32.mrb[0].mxu0
      %1348 = vmatprep.mubr.bf16.mxu0 0
      %1349 = vmatmul.mubr.bf16.gmra.mrb[0].mxu0 %v528
      %v1350 = vpop.f32.mrb[0].mxu0
      %v1351 = vadd.f32 0.0, %v1350
      %v1352 = vpop.f32.mrb[0].mxu0
      %v1353 = vpop.f32.mrb[0].mxu0
      %v1354 = vadd.f32 0.0, %v1353
      %v1355 = vpop.f32.mrb[0].mxu0
      %1356 = vmatprep.mubr.bf16.mxu0 0
      %1357 = vmatmul.mubr.bf16.gmra.mrb[0].mxu0 %v531
      %v1358 = vpop.f32.mrb[0].mxu0
      %v1359 = vadd.f32 0.0, %v1358
      %v1360 = vpop.f32.mrb[0].mxu0
      %v1361 = vpop.f32.mrb[0].mxu0
      %v1362 = vadd.f32 0.0, %v1361
      %v1363 = vpop.f32.mrb[0].mxu0
      %1364 = vmatprep.mubr.bf16.mxu0 0
      %1365 = vmatmul.mubr.bf16.gmra.mrb[0].mxu0 %v534
      %v1366 = vpop.f32.mrb[0].mxu0
      %v1367 = vadd.f32 0.0, %v1366
      %v1368 = vpop.f32.mrb[0].mxu0
      %v1369 = vpop.f32.mrb[0].mxu0
      %v1370 = vadd.f32 0.0, %v1369
      %v1371 = vpop.f32.mrb[0].mxu0
      %1372 = vmatprep.mubr.bf16.mxu0 0
      %1373 = vmatmul.mubr.bf16.gmra.mrb[0].mxu0 %v871
      %v1374 = vpop.f32.mrb[0].mxu0
      %v1375 = vadd.f32 0.0, %v1374
      %v1376 = vpop.f32.mrb[0].mxu0
      %v1377 = vpop.f32.mrb[0].mxu0
      %v1378 = vadd.f32 0.0, %v1377
      %v1379 = vpop.f32.mrb[0].mxu0
      %1380 = vmatprep.mubr.bf16.mxu0 0
      %1381 = vmatmul.mubr.bf16.gmra.mrb[0].mxu0 %v1290
      %v1382 = vpop.f32.mrb[0].mxu0
      %v1383 = vadd.f32 0.0, %v1382
      %v1384 = vpop.f32.mrb[0].mxu0
      %v1385 = vpop.f32.mrb[0].mxu0
      %v1386 = vadd.f32 0.0, %v1385
      %v1387 = vpop.f32.mrb[0].mxu0
      %1388 = vdwg.mxu0
      %v1389 = vadd.f32 %v1255, %v1327
      %v1390 = vadd.f32 %v1256, %v1330
      %v1391 = vadd.f32 %v1257, %v1335
      %v1392 = vadd.f32 %v1258, %v1338
      %v1393 = vadd.f32 %v1259, %v1343
      %v1394 = vadd.f32 %v1260, %v1346
      %v1395 = vadd.f32 %v1261, %v1351
      %v1396 = vadd.f32 %v1262, %v1354
      %v1397 = vadd.f32 %v1263, %v1359
      %v1398 = vadd.f32 %v1264, %v1362
      %v1399 = vadd.f32 %v1265, %v1367
      %v1400 = vadd.f32 %v1266, %v1370
      %v1401 = vadd.f32 %v1267, %v1375
      %v1402 = vadd.f32 %v1268, %v1378
      %v1403 = vadd.f32 %v1269, %v1383
      %v1404 = vadd.f32 %v1270, %v1386
      %v1408 = vrot.slane %v257, 1
      %v1409 = vrot.slane %v258, 1
      %v1410 = vsel %vm296, %v1408, %v1409
      %v1411 = vrot.slane %v259, 1
      %v1412 = vsel %vm296, %v1409, %v1411
      %v1415 = vpack.c.bf16 %v1412, %v1410
      %s1416 = scalar_lea.vmem %s1, 112
      %v1417 = vld [vmem:[%s1416] sm:$0xf]
      %v1418 = vld [vmem:[%s1416 + $0x4] sm:$0xf]
      %v1419 = vld [vmem:[%s1416 + $0x8] sm:$0xf]
      %v1420 = vld [vmem:[%s1416 + $0xc] sm:$0xf]
      %v1425 = vunpack.c.l.b16 %v1417
      %v1426 = vunpack.c.l.b16 %v1418
      %v1427 = vunpack.c.l.b16 %v1419
      %v1428 = vunpack.c.l.b16 %v1420
      %v1429 = vpack.c.b16 %v1426, %v1425
      %v1430 = vpack.c.b16 %v1428, %v1427
      %v1434 = vsel %vm378, %v1415, 0
      %1436 = vmatprep.subr.bf16.mxu0 0
      %1437 = vmatpush1.bf16.msra.mxu0 %v1429
      %1438 = vmatprep.subr.bf16.mxu0 0
      %1439 = vmatpush1.bf16.msra.mxu0 %v1430
      %1440 = vmatprep.subr.bf16.mxu0 0
      %1441 = vmatpush1.bf16.msra.mxu0 0
      %1442 = vmatprep.subr.bf16.mxu0 0
      %1443 = vmatpush1.bf16.msra.mxu0 0
      %1444 = vmatprep.subr.bf16.mxu0 0
      %1445 = vmatpush1.bf16.msra.mxu0 0
      %1446 = vmatprep.subr.bf16.mxu0 0
      %1447 = vmatpush1.bf16.msra.mxu0 0
      %1448 = vmatprep.subr.bf16.mxu0 0
      %1449 = vmatpush1.bf16.msra.mxu0 0
      %1450 = vmatprep.subr.bf16.mxu0 0
      %1451 = vmatpush1.bf16.msra.mxu0 0
      %1452 = vmatprep.subr.bf16.mxu0 0
      %1453 = vmatpush1.bf16.msra.mxu0 0
      %1454 = vmatprep.subr.bf16.mxu0 0
      %1455 = vmatpush1.bf16.msra.mxu0 0
      %1456 = vmatprep.subr.bf16.mxu0 0
      %1457 = vmatpush1.bf16.msra.mxu0 0
      %1458 = vmatprep.subr.bf16.mxu0 0
      %1459 = vmatpush1.bf16.msra.mxu0 0
      %1460 = vmatprep.subr.bf16.mxu0 0
      %1461 = vmatpush1.bf16.msra.mxu0 0
      %1462 = vmatprep.subr.bf16.mxu0 0
      %1463 = vmatpush1.bf16.msra.mxu0 0
      %1464 = vmatprep.subr.bf16.mxu0 0
      %1465 = vmatpush1.bf16.msra.mxu0 0
      %1466 = vmatprep.subr.bf16.mxu0 0
      %1467 = vmatpush1.bf16.msra.mxu0 0
      %1468 = vmatprep.mubr.bf16.mxu0 0
      %1469 = vmatmul.mubr.bf16.gmra.mrb[0].mxu0 %v386
      %v1470 = vpop.f32.mrb[0].mxu0
      %v1471 = vadd.f32 0.0, %v1470
      %v1472 = vpop.f32.mrb[0].mxu0
      %v1473 = vpop.f32.mrb[0].mxu0
      %v1474 = vadd.f32 0.0, %v1473
      %v1475 = vpop.f32.mrb[0].mxu0
      %1476 = vmatprep.mubr.bf16.mxu0 0
      %1477 = vmatmul.mubr.bf16.gmra.mrb[0].mxu0 %v389
      %v1478 = vpop.f32.mrb[0].mxu0
      %v1479 = vadd.f32 0.0, %v1478
      %v1480 = vpop.f32.mrb[0].mxu0
      %v1481 = vpop.f32.mrb[0].mxu0
      %v1482 = vadd.f32 0.0, %v1481
      %v1483 = vpop.f32.mrb[0].mxu0
      %1484 = vmatprep.mubr.bf16.mxu0 0
      %1485 = vmatmul.mubr.bf16.gmra.mrb[0].mxu0 %v392
      %v1486 = vpop.f32.mrb[0].mxu0
      %v1487 = vadd.f32 0.0, %v1486
      %v1488 = vpop.f32.mrb[0].mxu0
      %v1489 = vpop.f32.mrb[0].mxu0
      %v1490 = vadd.f32 0.0, %v1489
      %v1491 = vpop.f32.mrb[0].mxu0
      %1492 = vmatprep.mubr.bf16.mxu0 0
      %1493 = vmatmul.mubr.bf16.gmra.mrb[0].mxu0 %v395
      %v1494 = vpop.f32.mrb[0].mxu0
      %v1495 = vadd.f32 0.0, %v1494
      %v1496 = vpop.f32.mrb[0].mxu0
      %v1497 = vpop.f32.mrb[0].mxu0
      %v1498 = vadd.f32 0.0, %v1497
      %v1499 = vpop.f32.mrb[0].mxu0
      %1500 = vmatprep.mubr.bf16.mxu0 0
      %1501 = vmatmul.mubr.bf16.gmra.mrb[0].mxu0 %v398
      %v1502 = vpop.f32.mrb[0].mxu0
      %v1503 = vadd.f32 0.0, %v1502
      %v1504 = vpop.f32.mrb[0].mxu0
      %v1505 = vpop.f32.mrb[0].mxu0
      %v1506 = vadd.f32 0.0, %v1505
      %v1507 = vpop.f32.mrb[0].mxu0
      %1508 = vmatprep.mubr.bf16.mxu0 0
      %1509 = vmatmul.mubr.bf16.gmra.mrb[0].mxu0 %v401
      %v1510 = vpop.f32.mrb[0].mxu0
      %v1511 = vadd.f32 0.0, %v1510
      %v1512 = vpop.f32.mrb[0].mxu0
      %v1513 = vpop.f32.mrb[0].mxu0
      %v1514 = vadd.f32 0.0, %v1513
      %v1515 = vpop.f32.mrb[0].mxu0
      %1516 = vmatprep.mubr.bf16.mxu0 0
      %1517 = vmatmul.mubr.bf16.gmra.mrb[0].mxu0 %v1015
      %v1518 = vpop.f32.mrb[0].mxu0
      %v1519 = vadd.f32 0.0, %v1518
      %v1520 = vpop.f32.mrb[0].mxu0
      %v1521 = vpop.f32.mrb[0].mxu0
      %v1522 = vadd.f32 0.0, %v1521
      %v1523 = vpop.f32.mrb[0].mxu0
      %1524 = vmatprep.mubr.bf16.mxu0 0
      %1525 = vmatmul.mubr.bf16.gmra.mrb[0].mxu0 %v1434
      %v1526 = vpop.f32.mrb[0].mxu0
      %v1527 = vadd.f32 0.0, %v1526
      %v1528 = vpop.f32.mrb[0].mxu0
      %v1529 = vpop.f32.mrb[0].mxu0
      %v1530 = vadd.f32 0.0, %v1529
      %v1531 = vpop.f32.mrb[0].mxu0
      %1532 = vdwg.mxu0
      %v1533 = vadd.f32 %v1389, %v1471
      %v1534 = vadd.f32 %v1390, %v1474
      %v1535 = vadd.f32 %v1391, %v1479
      %v1536 = vadd.f32 %v1392, %v1482
      %v1537 = vadd.f32 %v1393, %v1487
      %v1538 = vadd.f32 %v1394, %v1490
      %v1539 = vadd.f32 %v1395, %v1495
      %v1540 = vadd.f32 %v1396, %v1498
      %v1541 = vadd.f32 %v1397, %v1503
      %v1542 = vadd.f32 %v1398, %v1506
      %v1543 = vadd.f32 %v1399, %v1511
      %v1544 = vadd.f32 %v1400, %v1514
      %v1545 = vadd.f32 %v1401, %v1519
      %v1546 = vadd.f32 %v1402, %v1522
      %v1547 = vadd.f32 %v1403, %v1527
      %v1548 = vadd.f32 %v1404, %v1530
      %v1549 = vrot.slane %v257, 2
      %v1550 = vrot.slane %v258, 2
      %v1551 = vsel %vm633, %v1549, %v1550
      %v1552 = vrot.slane %v259, 2
      %v1553 = vsel %vm633, %v1550, %v1552
      %v1556 = vpack.c.bf16 %v1553, %v1551
      %s1557 = scalar_lea.vmem %s1, 128
      %v1558 = vld [vmem:[%s1557] sm:$0xf]
      %v1559 = vld [vmem:[%s1557 + $0x4] sm:$0xf]
      %v1560 = vld [vmem:[%s1557 + $0x8] sm:$0xf]
      %v1561 = vld [vmem:[%s1557 + $0xc] sm:$0xf]
      %v1566 = vunpack.c.l.b16 %v1558
      %v1567 = vunpack.c.l.b16 %v1559
      %v1568 = vunpack.c.l.b16 %v1560
      %v1569 = vunpack.c.l.b16 %v1561
      %v1570 = vpack.c.b16 %v1567, %v1566
      %v1571 = vpack.c.b16 %v1569, %v1568
      %v1575 = vsel %vm378, %v1556, 0
      %1577 = vmatprep.subr.bf16.mxu0 0
      %1578 = vmatpush1.bf16.msra.mxu0 %v1570
      %1579 = vmatprep.subr.bf16.mxu0 0
      %1580 = vmatpush1.bf16.msra.mxu0 %v1571
      %1581 = vmatprep.subr.bf16.mxu0 0
      %1582 = vmatpush1.bf16.msra.mxu0 0
      %1583 = vmatprep.subr.bf16.mxu0 0
      %1584 = vmatpush1.bf16.msra.mxu0 0
      %1585 = vmatprep.subr.bf16.mxu0 0
      %1586 = vmatpush1.bf16.msra.mxu0 0
      %1587 = vmatprep.subr.bf16.mxu0 0
      %1588 = vmatpush1.bf16.msra.mxu0 0
      %1589 = vmatprep.subr.bf16.mxu0 0
      %1590 = vmatpush1.bf16.msra.mxu0 0
      %1591 = vmatprep.subr.bf16.mxu0 0
      %1592 = vmatpush1.bf16.msra.mxu0 0
      %1593 = vmatprep.subr.bf16.mxu0 0
      %1594 = vmatpush1.bf16.msra.mxu0 0
      %1595 = vmatprep.subr.bf16.mxu0 0
      %1596 = vmatpush1.bf16.msra.mxu0 0
      %1597 = vmatprep.subr.bf16.mxu0 0
      %1598 = vmatpush1.bf16.msra.mxu0 0
      %1599 = vmatprep.subr.bf16.mxu0 0
      %1600 = vmatpush1.bf16.msra.mxu0 0
      %1601 = vmatprep.subr.bf16.mxu0 0
      %1602 = vmatpush1.bf16.msra.mxu0 0
      %1603 = vmatprep.subr.bf16.mxu0 0
      %1604 = vmatpush1.bf16.msra.mxu0 0
      %1605 = vmatprep.subr.bf16.mxu0 0
      %1606 = vmatpush1.bf16.msra.mxu0 0
      %1607 = vmatprep.subr.bf16.mxu0 0
      %1608 = vmatpush1.bf16.msra.mxu0 0
      %1609 = vmatprep.mubr.bf16.mxu0 0
      %1610 = vmatmul.mubr.bf16.gmra.mrb[0].mxu0 %v722
      %v1611 = vpop.f32.mrb[0].mxu0
      %v1612 = vadd.f32 0.0, %v1611
      %v1613 = vpop.f32.mrb[0].mxu0
      %v1614 = vpop.f32.mrb[0].mxu0
      %v1615 = vadd.f32 0.0, %v1614
      %v1616 = vpop.f32.mrb[0].mxu0
      %1617 = vmatprep.mubr.bf16.mxu0 0
      %1618 = vmatmul.mubr.bf16.gmra.mrb[0].mxu0 %v725
      %v1619 = vpop.f32.mrb[0].mxu0
      %v1620 = vadd.f32 0.0, %v1619
      %v1621 = vpop.f32.mrb[0].mxu0
      %v1622 = vpop.f32.mrb[0].mxu0
      %v1623 = vadd.f32 0.0, %v1622
      %v1624 = vpop.f32.mrb[0].mxu0
      %1625 = vmatprep.mubr.bf16.mxu0 0
      %1626 = vmatmul.mubr.bf16.gmra.mrb[0].mxu0 %v728
      %v1627 = vpop.f32.mrb[0].mxu0
      %v1628 = vadd.f32 0.0, %v1627
      %v1629 = vpop.f32.mrb[0].mxu0
      %v1630 = vpop.f32.mrb[0].mxu0
      %v1631 = vadd.f32 0.0, %v1630
      %v1632 = vpop.f32.mrb[0].mxu0
      %1633 = vmatprep.mubr.bf16.mxu0 0
      %1634 = vmatmul.mubr.bf16.gmra.mrb[0].mxu0 %v731
      %v1635 = vpop.f32.mrb[0].mxu0
      %v1636 = vadd.f32 0.0, %v1635
      %v1637 = vpop.f32.mrb[0].mxu0
      %v1638 = vpop.f32.mrb[0].mxu0
      %v1639 = vadd.f32 0.0, %v1638
      %v1640 = vpop.f32.mrb[0].mxu0
      %1641 = vmatprep.mubr.bf16.mxu0 0
      %1642 = vmatmul.mubr.bf16.gmra.mrb[0].mxu0 %v734
      %v1643 = vpop.f32.mrb[0].mxu0
      %v1644 = vadd.f32 0.0, %v1643
      %v1645 = vpop.f32.mrb[0].mxu0
      %v1646 = vpop.f32.mrb[0].mxu0
      %v1647 = vadd.f32 0.0, %v1646
      %v1648 = vpop.f32.mrb[0].mxu0
      %1649 = vmatprep.mubr.bf16.mxu0 0
      %1650 = vmatmul.mubr.bf16.gmra.mrb[0].mxu0 %v737
      %v1651 = vpop.f32.mrb[0].mxu0
      %v1652 = vadd.f32 0.0, %v1651
      %v1653 = vpop.f32.mrb[0].mxu0
      %v1654 = vpop.f32.mrb[0].mxu0
      %v1655 = vadd.f32 0.0, %v1654
      %v1656 = vpop.f32.mrb[0].mxu0
      %1657 = vmatprep.mubr.bf16.mxu0 0
      %1658 = vmatmul.mubr.bf16.gmra.mrb[0].mxu0 %v1156
      %v1659 = vpop.f32.mrb[0].mxu0
      %v1660 = vadd.f32 0.0, %v1659
      %v1661 = vpop.f32.mrb[0].mxu0
      %v1662 = vpop.f32.mrb[0].mxu0
      %v1663 = vadd.f32 0.0, %v1662
      %v1664 = vpop.f32.mrb[0].mxu0
      %1665 = vmatprep.mubr.bf16.mxu0 0
      %1666 = vmatmul.mubr.bf16.gmra.mrb[0].mxu0 %v1575
      %v1667 = vpop.f32.mrb[0].mxu0
      %v1668 = vadd.f32 0.0, %v1667
      %v1669 = vpop.f32.mrb[0].mxu0
      %v1670 = vpop.f32.mrb[0].mxu0
      %v1671 = vadd.f32 0.0, %v1670
      %v1672 = vpop.f32.mrb[0].mxu0
      %1673 = vdwg.mxu0
      %v1674 = vadd.f32 %v1533, %v1612
      %v1675 = vadd.f32 %v1534, %v1615
      %v1676 = vadd.f32 %v1535, %v1620
      %v1677 = vadd.f32 %v1536, %v1623
      %v1678 = vadd.f32 %v1537, %v1628
      %v1679 = vadd.f32 %v1538, %v1631
      %v1680 = vadd.f32 %v1539, %v1636
      %v1681 = vadd.f32 %v1540, %v1639
      %v1682 = vadd.f32 %v1541, %v1644
      %v1683 = vadd.f32 %v1542, %v1647
      %v1684 = vadd.f32 %v1543, %v1652
      %v1685 = vadd.f32 %v1544, %v1655
      %v1686 = vadd.f32 %v1545, %v1660
      %v1687 = vadd.f32 %v1546, %v1663
      %v1688 = vadd.f32 %v1547, %v1668
      %v1689 = vadd.f32 %v1548, %v1671
      %v1690 = vld [vmem:[%s2] sm:$0x1]
      %v1692 = vlaneseq
      %v1693 = vshrl.u32 %v1692, 7
      %v1694 = vsub.s32 0, %v1693
      %v1695 = vrot.slane %v1690, %v1694
      %v1697 = vadd.f32 %v1674, %v1695
      %v1698 = vadd.f32 %v1675, %v1695
      %v1699 = vadd.f32 %v1676, %v1695
      %v1700 = vadd.f32 %v1677, %v1695
      %v1701 = vadd.f32 %v1678, %v1695
      %v1702 = vadd.f32 %v1679, %v1695
      %v1703 = vadd.f32 %v1680, %v1695
      %v1704 = vadd.f32 %v1681, %v1695
      %v1705 = vadd.f32 %v1682, %v1695
      %v1706 = vadd.f32 %v1683, %v1695
      %v1707 = vadd.f32 %v1684, %v1695
      %v1708 = vadd.f32 %v1685, %v1695
      %v1709 = vadd.f32 %v1686, %v1695
      %v1710 = vadd.f32 %v1687, %v1695
      %v1711 = vadd.f32 %v1688, %v1695
      %v1712 = vadd.f32 %v1689, %v1695
      %s1713 = sld [smem:[#allocation2]]
      %vm1714 = vcmp.ge.f32.partialorder %v1697, 0.0
      %vm1715 = vcmp.ge.f32.partialorder %v1698, 0.0
      %vm1716 = vcmp.ge.f32.partialorder %v1699, 0.0
      %vm1717 = vcmp.ge.f32.partialorder %v1700, 0.0
      %vm1718 = vcmp.ge.f32.partialorder %v1701, 0.0
      %vm1719 = vcmp.ge.f32.partialorder %v1702, 0.0
      %vm1720 = vcmp.ge.f32.partialorder %v1703, 0.0
      %vm1721 = vcmp.ge.f32.partialorder %v1704, 0.0
      %vm1722 = vcmp.ge.f32.partialorder %v1705, 0.0
      %vm1723 = vcmp.ge.f32.partialorder %v1706, 0.0
      %vm1724 = vcmp.ge.f32.partialorder %v1707, 0.0
      %vm1725 = vcmp.ge.f32.partialorder %v1708, 0.0
      %vm1726 = vcmp.ge.f32.partialorder %v1709, 0.0
      %vm1727 = vcmp.ge.f32.partialorder %v1710, 0.0
      %vm1728 = vcmp.ge.f32.partialorder %v1711, 0.0
      %vm1729 = vcmp.ge.f32.partialorder %v1712, 0.0
      %v1730 = vstv %s1713
      %v1731 = vmul.f32 %v1730, %v1697
      %v1732 = vmul.f32 %v1730, %v1698
      %v1733 = vmul.f32 %v1730, %v1699
      %v1734 = vmul.f32 %v1730, %v1700
      %v1735 = vmul.f32 %v1730, %v1701
      %v1736 = vmul.f32 %v1730, %v1702
      %v1737 = vmul.f32 %v1730, %v1703
      %v1738 = vmul.f32 %v1730, %v1704
      %v1739 = vmul.f32 %v1730, %v1705
      %v1740 = vmul.f32 %v1730, %v1706
      %v1741 = vmul.f32 %v1730, %v1707
      %v1742 = vmul.f32 %v1730, %v1708
      %v1743 = vmul.f32 %v1730, %v1709
      %v1744 = vmul.f32 %v1730, %v1710
      %v1745 = vmul.f32 %v1730, %v1711
      %v1746 = vmul.f32 %v1730, %v1712
      %v1747 = vsel %vm1714, %v1697, %v1731
      %v1748 = vsel %vm1715, %v1698, %v1732
      %v1749 = vsel %vm1716, %v1699, %v1733
      %v1750 = vsel %vm1717, %v1700, %v1734
      %v1751 = vsel %vm1718, %v1701, %v1735
      %v1752 = vsel %vm1719, %v1702, %v1736
      %v1753 = vsel %vm1720, %v1703, %v1737
      %v1754 = vsel %vm1721, %v1704, %v1738
      %v1755 = vsel %vm1722, %v1705, %v1739
      %v1756 = vsel %vm1723, %v1706, %v1740
      %v1757 = vsel %vm1724, %v1707, %v1741
      %v1758 = vsel %vm1725, %v1708, %v1742
      %v1759 = vsel %vm1726, %v1709, %v1743
      %v1760 = vsel %vm1727, %v1710, %v1744
      %v1761 = vsel %vm1728, %v1711, %v1745
      %v1762 = vsel %vm1729, %v1712, %v1746
      %1763 = vst.msk [vmem:[%s198] sm:$0xff] %vm378, %v1747
      %1764 = vst.msk [vmem:[%s198 + $0x8] sm:$0xff] %vm378, %v1748
      %1765 = vst.msk [vmem:[%s198 + $0x10] sm:$0xff] %vm378, %v1749
      %1766 = vst.msk [vmem:[%s198 + $0x18] sm:$0xff] %vm378, %v1750
      %1767 = vst.msk [vmem:[%s198 + $0x20] sm:$0xff] %vm378, %v1751
      %1768 = vst.msk [vmem:[%s198 + $0x28] sm:$0xff] %vm378, %v1752
      %1769 = vst.msk [vmem:[%s198 + $0x30] sm:$0xff] %vm378, %v1753
      %1770 = vst.msk [vmem:[%s198 + $0x38] sm:$0xff] %vm378, %v1754
      %1771 = vst.msk [vmem:[%s198 + $0x40] sm:$0xff] %vm378, %v1755
      %1772 = vst.msk [vmem:[%s198 + $0x48] sm:$0xff] %vm378, %v1756
      %1773 = vst.msk [vmem:[%s198 + $0x50] sm:$0xff] %vm378, %v1757
      %1774 = vst.msk [vmem:[%s198 + $0x58] sm:$0xff] %vm378, %v1758
      %1775 = vst.msk [vmem:[%s198 + $0x60] sm:$0xff] %vm378, %v1759
      %1776 = vst.msk [vmem:[%s198 + $0x68] sm:$0xff] %vm378, %v1760
      %1777 = vst.msk [vmem:[%s198 + $0x70] sm:$0xff] %vm378, %v1761
      %1778 = vst.msk [vmem:[%s198 + $0x78] sm:$0xff] %vm378, %v1762
      %p1779 = scmp.lt.s32.totalorder %s16, 3
      %s1780 = scalar_select %p1779, %s16, 3
      %s1781 = smul.addr %s1780, 16
      %s1782 = smul.addr %s1781, 8
      %s1783 = scalar_lea.vmem %s4, %s1782
      // Predicated region
      $region37: #{local_filter_operation.8} parent=35 // pred_check
        %p1784 = pneg %p123
      $region38: #{local_filter_operation.8} parent=35 // pred_check_branch
        %1786 = sbr.rel (%p1784) target = $region40
      $region39: #{local_filter_operation.8} parent=35 // pred_region
        _
      $region40: #{local_filter_operation.8} parent=35 // pred_fallthru
        _
    $region36: #{local_filter_operation.8} parent=5 // pred_fallthru
      _
    %p1787 = scmp.le.s32.totalorder 2, %s11
    // Predicated region
    $region41: #{local_filter_operation.8} parent=5 // pred_check
      %p1788 = pneg %p1787
    $region42: #{local_filter_operation.8} parent=5 // pred_check_branch
      %1790 = sbr.rel (%p1788) target = $region44
    $region43: #{local_filter_operation.8} parent=5 // pred_region
      %s1791 = ssub.s32 %s11, 2
      // Predicated region
      $region45: #{local_filter_operation.8} parent=43 // pred_check
        %p1792 = pneg %p129
      $region46: #{local_filter_operation.8} parent=43 // pred_check_branch
        %1794 = sbr.rel (%p1792) target = $region48
      $region47: #{local_filter_operation.8} parent=43 // pred_region
        %p1795 = scmp.lt.s32.totalorder %s17, 3
        %s1796 = scalar_select %p1795, %s17, 3
        %s1797 = smul.addr %s1796, 16
        %s1798 = smul.addr %s1797, 8
        %s1799 = scalar_lea.vmem %s4, %s1798
      $region48: #{local_filter_operation.8} parent=43 // pred_fallthru
        _
    $region44: #{local_filter_operation.8} parent=5 // pred_fallthru
      _
  $region6: #{local_filter_operation.8} parent=0 // loop_footer
    %s15 = sadd.s32 1, %s11
  $region7: #{local_filter_operation.8} parent=0 // loop_footer_branch
    %10 = sbr.rel target = $region3
  $region8: #{local_filter_operation.8} parent=0 // loop_exit
    _

// kernel: local_filter_operation.11
$region0: #{local_filter_operation.11}
  #allocation0 [shape = 'u32[]', space=smem, size = 0x4, offset = 0x4, fixed_abs, tag = 'smem constant byte address 0x4 - core index']
  #allocation1 [shape = 'u32[144,128]{1,0:T(1,128)}', space=vmem, size = 0x12000, scoped, tag = 'internal scratch']
  #allocation2 [shape = 'f32[1]{0:T(128)S(6)}', space=smem, size = 0x200, scoped, tag = 'scoped memory for local_filter_operation.11']
  %s0 = inlined_call_operand.vmem [shape: bf16[4,10,18,64], index: 0, kind: input, shape index: {}]
  %s1 = inlined_call_operand.vmem [shape: bf16[9,64,32], index: 1, kind: input, shape index: {}]
  %s2 = inlined_call_operand.vmem [shape: f32[1,32], index: 2, kind: input, shape index: {}]
  %s3 = inlined_call_operand.<no memory space> [shape: f32[1], index: 3, kind: input, shape index: {}]
  %s4 = inlined_call_operand.vmem [shape: f32[4,128,32], index: 4, kind: output, shape index: {}]
  %s5 = sld [smem:[#allocation0]]
  $region49: #{local_filter_operation.11} parent=0
    _
  %s7 = ssub.s32 1, %s5
  %s8 = scalar_select 0, %s7, %s5
  %9 = sst [smem:[#allocation2]] %s3
  loop: start=0, step=1, limit=6
  $region2: #{local_filter_operation.11} parent=0 // loop_pre_header
    _
  $region3: #{local_filter_operation.11} parent=0 // loop_header
    %s11 = sphi 0, %s15
    %p12 = scmp.ge.s32.totalorder %s11, 6
    %s21 = sphi 0, %s23
    %s24 = sphi 0, %s21
    %s25 = sphi 0, %s24
    %s41 = sphi 0, %s25
    %s45 = sphi 0, %s45
    %s47 = sphi 0, %s45
    %s48 = sphi 0, %s47
    %s62 = sphi 0, %s48
    %s66 = sphi 0, %s66
    %s68 = sphi 0, %s66
    %s69 = sphi 0, %s68
    %s83 = sphi 0, %s69
    %s87 = sphi 0, %s87
    %s89 = sphi 0, %s87
    %s90 = sphi 0, %s89
    %s104 = sphi 0, %s90
    %s110 = sphi 0, %s112
    %s113 = sphi 0, %s110
    %s114 = sphi 0, %s113
    %s130 = sphi 0, %s114
  $region4: #{local_filter_operation.11} parent=0 // loop_header_branch
    %14 = sbr.rel (%p12) target = $region8
  $region5: #{local_filter_operation.11} parent=0 // loop_body
    %s16 = ssub.s32 %s11, 1
    %s17 = ssub.s32 %s11, 2
    %s18 = sadd.s32 %s11, 1
    %s19 = ssub.s32 %s11, %s18
    %p20 = scmp.eq.s32.totalorder %s19, 0
    %s22 = sadd.s32 %s21, 1
    %s23 = scalar_select %p20, %s21, %s22
    %p26 = pneg %p20
    %p27 = scmp.eq.s32.totalorder %s11, 3
    %p28 = por %p26, %p27
    %p29 = scmp.ne.s32.totalorder %s21, %s24
    %p30 = scmp.eq.s32.totalorder %s11, 0
    %p31 = por %p29, %p30
    %p32 = scmp.ne.s32.totalorder %s21, %s24
    %p33 = scmp.eq.s32.totalorder %s16, 3
    %p34 = por %p32, %p33
    %p35 = scmp.ne.s32.totalorder %s24, %s25
    %p36 = scmp.eq.s32.totalorder %s16, 0
    %p37 = por %p35, %p36
    %p38 = scmp.ne.s32.totalorder %s24, %s25
    %p39 = scmp.eq.s32.totalorder %s17, 3
    %p40 = por %p38, %p39
    %p42 = scmp.ne.s32.totalorder %s25, %s41
    %p43 = scmp.eq.s32.totalorder %s17, 0
    %p44 = por %p42, %p43
    %s46 = sadd.s32 %s45, 1
    %p49 = scmp.eq.s32.totalorder %s11, 3
    %p50 = scmp.ne.s32.totalorder %s45, %s47
    %p51 = scmp.eq.s32.totalorder %s11, 0
    %p52 = por %p50, %p51
    %p53 = scmp.ne.s32.totalorder %s45, %s47
    %p54 = scmp.eq.s32.totalorder %s16, 3
    %p55 = por %p53, %p54
    %p56 = scmp.ne.s32.totalorder %s47, %s48
    %p57 = scmp.eq.s32.totalorder %s16, 0
    %p58 = por %p56, %p57
    %p59 = scmp.ne.s32.totalorder %s47, %s48
    %p60 = scmp.eq.s32.totalorder %s17, 3
    %p61 = por %p59, %p60
    %p63 = scmp.ne.s32.totalorder %s48, %s62
    %p64 = scmp.eq.s32.totalorder %s17, 0
    %p65 = por %p63, %p64
    %s67 = sadd.s32 %s66, 1
    %p70 = scmp.eq.s32.totalorder %s11, 3
    %p71 = scmp.ne.s32.totalorder %s66, %s68
    %p72 = scmp.eq.s32.totalorder %s11, 0
    %p73 = por %p71, %p72
    %p74 = scmp.ne.s32.totalorder %s66, %s68
    %p75 = scmp.eq.s32.totalorder %s16, 3
    %p76 = por %p74, %p75
    %p77 = scmp.ne.s32.totalorder %s68, %s69
    %p78 = scmp.eq.s32.totalorder %s16, 0
    %p79 = por %p77, %p78
    %p80 = scmp.ne.s32.totalorder %s68, %s69
    %p81 = scmp.eq.s32.totalorder %s17, 3
    %p82 = por %p80, %p81
    %p84 = scmp.ne.s32.totalorder %s69, %s83
    %p85 = scmp.eq.s32.totalorder %s17, 0
    %p86 = por %p84, %p85
    %s88 = sadd.s32 %s87, 1
    %p91 = scmp.eq.s32.totalorder %s11, 3
    %p92 = scmp.ne.s32.totalorder %s87, %s89
    %p93 = scmp.eq.s32.totalorder %s11, 0
    %p94 = por %p92, %p93
    %p95 = scmp.ne.s32.totalorder %s87, %s89
    %p96 = scmp.eq.s32.totalorder %s16, 3
    %p97 = por %p95, %p96
    %p98 = scmp.ne.s32.totalorder %s89, %s90
    %p99 = scmp.eq.s32.totalorder %s16, 0
    %p100 = por %p98, %p99
    %p101 = scmp.ne.s32.totalorder %s89, %s90
    %p102 = scmp.eq.s32.totalorder %s17, 3
    %p103 = por %p101, %p102
    %p105 = scmp.ne.s32.totalorder %s90, %s104
    %p106 = scmp.eq.s32.totalorder %s17, 0
    %p107 = por %p105, %p106
    %s108 = ssub.s32 %s11, %s18
    %p109 = scmp.eq.s32.totalorder %s108, 0
    %s111 = sadd.s32 %s110, 1
    %s112 = scalar_select %p109, %s110, %s111
    %p115 = pneg %p109
    %p116 = scmp.eq.s32.totalorder %s11, 3
    %p117 = por %p115, %p116
    %p118 = scmp.ne.s32.totalorder %s110, %s113
    %p119 = scmp.eq.s32.totalorder %s11, 0
    %p120 = por %p118, %p119
    %p121 = scmp.ne.s32.totalorder %s110, %s113
    %p122 = scmp.eq.s32.totalorder %s16, 3
    %p123 = por %p121, %p122
    %p124 = scmp.ne.s32.totalorder %s113, %s114
    %p125 = scmp.eq.s32.totalorder %s16, 0
    %p126 = por %p124, %p125
    %p127 = scmp.ne.s32.totalorder %s113, %s114
    %p128 = scmp.eq.s32.totalorder %s17, 3
    %p129 = por %p127, %p128
    %p131 = scmp.ne.s32.totalorder %s114, %s130
    %p132 = scmp.eq.s32.totalorder %s17, 0
    %p133 = por %p131, %p132
    %p134 = scmp.le.s32.totalorder 1, %s11
    %p135 = scmp.lt.s32.totalorder %s11, 5
    %p136 = pnand %p134, %p135
    %p137 = pneg %p136
    // Predicated region
    $region9: #{local_filter_operation.11} parent=5 // pred_check
      _
    $region10: #{local_filter_operation.11} parent=5 // pred_check_branch
      %139 = sbr.rel (%p136) target = $region12
    $region11: #{local_filter_operation.11} parent=5 // pred_region
      %s140 = ssub.s32 %s11, 1
      // Predicated region
      $region13: #{local_filter_operation.11} parent=11 // pred_check
        %p141 = pneg %p58
      $region14: #{local_filter_operation.11} parent=11 // pred_check_branch
        %143 = sbr.rel (%p141) target = $region16
      $region15: #{local_filter_operation.11} parent=11 // pred_region
        _
      $region16: #{local_filter_operation.11} parent=11 // pred_fallthru
        _
      // Predicated region
      $region17: #{local_filter_operation.11} parent=11 // pred_check
        %p144 = pneg %p79
      $region18: #{local_filter_operation.11} parent=11 // pred_check_branch
        %146 = sbr.rel (%p144) target = $region20
      $region19: #{local_filter_operation.11} parent=11 // pred_region
        _
      $region20: #{local_filter_operation.11} parent=11 // pred_fallthru
        _
      // Predicated region
      $region21: #{local_filter_operation.11} parent=11 // pred_check
        %p147 = pneg %p100
      $region22: #{local_filter_operation.11} parent=11 // pred_check_branch
        %149 = sbr.rel (%p147) target = $region24
      $region23: #{local_filter_operation.11} parent=11 // pred_region
        _
      $region24: #{local_filter_operation.11} parent=11 // pred_fallthru
        _
    $region12: #{local_filter_operation.11} parent=5 // pred_fallthru
      _
    %p150 = scmp.lt.s32.totalorder %s11, 4
    // Predicated region
    $region25: #{local_filter_operation.11} parent=5 // pred_check
      %p151 = pneg %p150
    $region26: #{local_filter_operation.11} parent=5 // pred_check_branch
      %153 = sbr.rel (%p151) target = $region28
    $region27: #{local_filter_operation.11} parent=5 // pred_region
      // Predicated region
      $region29: #{local_filter_operation.11} parent=27 // pred_check
        %p154 = pneg %p31
      $region30: #{local_filter_operation.11} parent=27 // pred_check_branch
        %156 = sbr.rel (%p154) target = $region32
      $region31: #{local_filter_operation.11} parent=27 // pred_region
        %p157 = scmp.lt.s32.totalorder %s11, 3
        %s158 = scalar_select %p157, %s11, 3
        %s159 = smul.addr %s158, 30
        %s160 = smul.addr %s159, 4
        %s161 = scalar_lea.vmem %s0, %s160
      $region32: #{local_filter_operation.11} parent=27 // pred_fallthru
        _
    $region28: #{local_filter_operation.11} parent=5 // pred_fallthru
      _
    %p162 = scmp.le.s32.totalorder 1, %s11
    %p163 = scmp.lt.s32.totalorder %s11, 5
    %p164 = pnand %p162, %p163
    %p165 = pneg %p164
    // Predicated region
    $region33: #{local_filter_operation.11} parent=5 // pred_check
      _
    $region34: #{local_filter_operation.11} parent=5 // pred_check_branch
      %167 = sbr.rel (%p164) target = $region36
    $region35: #{local_filter_operation.11} parent=5 // pred_region
      %s168 = ssub.s32 %s11, 1
      %p169 = scmp.lt.s32.totalorder %s16, 3
      %s170 = scalar_select %p169, %s16, 3
      %s171 = smul.addr %s170, 30
      %s172 = smul.addr %s171, 4
      %s173 = scalar_lea.vmem %s0, %s172
      %p174 = pneg %p37
      %p175 = pneg %p34
      %p176 = pneg %p58
      %p177 = pneg %p55
      %p178 = pneg %p79
      %p179 = pneg %p76
      %p180 = pneg %p100
      %p181 = pneg %p97
      %p182 = pneg %p126
      %p183 = pneg %p123
      %p184 = scmp.lt.s32.totalorder %s16, 3
      %s185 = scalar_select %p184, %s16, 3
      %s186 = smul.addr %s185, 16
      %s187 = smul.addr %s186, 8
      %s188 = scalar_lea.vmem %s4, %s187
      %p189 = scmp.lt.s32.totalorder %s16, 3
      %s190 = scalar_select %p189, %s16, 3
      %s191 = smul.addr %s190, 30
      %s192 = smul.addr %s191, 4
      %s193 = scalar_lea.vmem %s0, %s192
      %p194 = scmp.lt.s32.totalorder %s16, 3
      %s195 = scalar_select %p194, %s16, 3
      %s196 = smul.addr %s195, 16
      %s197 = smul.addr %s196, 8
      %s198 = scalar_lea.vmem %s4, %s197
      %v200 = vld [vmem:[%s193] sm:$0xf]
      %v201 = vld [vmem:[%s193 + $0x4] sm:$0xf]
      %v202 = vld [vmem:[%s193 + $0x8] sm:$0x1]
      %v203 = vld [vmem:[%s193 + $0xc] sm:$0xf]
      %v204 = vld [vmem:[%s193 + $0x10] sm:$0xf]
      %v205 = vld [vmem:[%s193 + $0x14] sm:$0x1]
      %v206 = vld [vmem:[%s193 + $0x18] sm:$0xf]
      %v207 = vld [vmem:[%s193 + $0x1c] sm:$0xf]
      %v208 = vld [vmem:[%s193 + $0x20] sm:$0x1]
      %v209 = vld [vmem:[%s193 + $0x24] sm:$0xf]
      %v210 = vld [vmem:[%s193 + $0x28] sm:$0xf]
      %v211 = vld [vmem:[%s193 + $0x2c] sm:$0x1]
      %v212 = vld [vmem:[%s193 + $0x30] sm:$0xf]
      %v213 = vld [vmem:[%s193 + $0x34] sm:$0xf]
      %v214 = vld [vmem:[%s193 + $0x38] sm:$0x1]
      %v215 = vld [vmem:[%s193 + $0x3c] sm:$0xf]
      %v216 = vld [vmem:[%s193 + $0x40] sm:$0xf]
      %v217 = vld [vmem:[%s193 + $0x44] sm:$0x1]
      %v218 = vld [vmem:[%s193 + $0x48] sm:$0xf]
      %v219 = vld [vmem:[%s193 + $0x4c] sm:$0xf]
      %v220 = vld [vmem:[%s193 + $0x50] sm:$0x1]
      %v221 = vld [vmem:[%s193 + $0x54] sm:$0xf]
      %v222 = vld [vmem:[%s193 + $0x58] sm:$0xf]
      %v223 = vld [vmem:[%s193 + $0x5c] sm:$0x1]
      %v224 = vld [vmem:[%s193 + $0x60] sm:$0xf]
      %v225 = vld [vmem:[%s193 + $0x64] sm:$0xf]
      %v226 = vld [vmem:[%s193 + $0x68] sm:$0x1]
      %v227 = vld [vmem:[%s193 + $0x6c] sm:$0xf]
      %v228 = vld [vmem:[%s193 + $0x70] sm:$0xf]
      %v229 = vld [vmem:[%s193 + $0x74] sm:$0x1]
      %v230 = vunpack.c.l.bf16 %v200
      %v231 = vunpack.c.l.bf16 %v201
      %v232 = vunpack.c.l.bf16 %v202
      %v233 = vunpack.c.l.bf16 %v203
      %v234 = vunpack.c.l.bf16 %v204
      %v235 = vunpack.c.l.bf16 %v205
      %v236 = vunpack.c.l.bf16 %v206
      %v237 = vunpack.c.l.bf16 %v207
      %v238 = vunpack.c.l.bf16 %v208
      %v239 = vunpack.c.l.bf16 %v209
      %v240 = vunpack.c.l.bf16 %v210
      %v241 = vunpack.c.l.bf16 %v211
      %v242 = vunpack.c.l.bf16 %v212
      %v243 = vunpack.c.l.bf16 %v213
      %v244 = vunpack.c.l.bf16 %v214
      %v245 = vunpack.c.l.bf16 %v215
      %v246 = vunpack.c.l.bf16 %v216
      %v247 = vunpack.c.l.bf16 %v217
      %v248 = vunpack.c.l.bf16 %v218
      %v249 = vunpack.c.l.bf16 %v219
      %v250 = vunpack.c.l.bf16 %v220
      %v251 = vunpack.c.l.bf16 %v221
      %v252 = vunpack.c.l.bf16 %v222
      %v253 = vunpack.c.l.bf16 %v223
      %v254 = vunpack.c.l.bf16 %v224
      %v255 = vunpack.c.l.bf16 %v225
      %v256 = vunpack.c.l.bf16 %v226
      %v257 = vunpack.c.l.bf16 %v227
      %v258 = vunpack.c.l.bf16 %v228
      %v259 = vunpack.c.l.bf16 %v229
      %v260 = vpack.c.bf16 %v231, %v230
      %v261 = vpack.c.bf16 %v234, %v233
      %v262 = vpack.c.bf16 %v237, %v236
      %v263 = vpack.c.bf16 %v240, %v239
      %v264 = vpack.c.bf16 %v243, %v242
      %v265 = vpack.c.bf16 %v246, %v245
      %v266 = vpack.c.bf16 %v249, %v248
      %v267 = vpack.c.bf16 %v252, %v251
      %v268 = vld [vmem:[%s1] sm:$0xf]
      %v269 = vld [vmem:[%s1 + $0x4] sm:$0xf]
      %v270 = vld [vmem:[%s1 + $0x8] sm:$0xf]
      %v271 = vld [vmem:[%s1 + $0xc] sm:$0xf]
      %v272 = vld [vmem:[%s1 + $0x10] sm:$0xf]
      %v273 = vld [vmem:[%s1 + $0x14] sm:$0xf]
      %v274 = vld [vmem:[%s1 + $0x18] sm:$0xf]
      %v275 = vld [vmem:[%s1 + $0x1c] sm:$0xf]
      %vm300 = vcmask 1046528
      %v301 = vrot.slane %v230, 1
      %v302 = vrot.slane %v231, 1
      %v303 = vsel %vm300, %v301, %v302
      %v304 = vrot.slane %v232, 1
      %v305 = vsel %vm300, %v302, %v304
      %v306 = vrot.slane %v233, 1
      %v307 = vrot.slane %v234, 1
      %v308 = vsel %vm300, %v306, %v307
      %v309 = vrot.slane %v235, 1
      %v310 = vsel %vm300, %v307, %v309
      %v311 = vrot.slane %v236, 1
      %v312 = vrot.slane %v237, 1
      %v313 = vsel %vm300, %v311, %v312
      %v314 = vrot.slane %v238, 1
      %v315 = vsel %vm300, %v312, %v314
      %v316 = vrot.slane %v239, 1
      %v317 = vrot.slane %v240, 1
      %v318 = vsel %vm300, %v316, %v317
      %v319 = vrot.slane %v241, 1
      %v320 = vsel %vm300, %v317, %v319
      %v321 = vrot.slane %v242, 1
      %v322 = vrot.slane %v243, 1
      %v323 = vsel %vm300, %v321, %v322
      %v324 = vrot.slane %v244, 1
      %v325 = vsel %vm300, %v322, %v324
      %v326 = vrot.slane %v245, 1
      %v327 = vrot.slane %v246, 1
      %v328 = vsel %vm300, %v326, %v327
      %v329 = vrot.slane %v247, 1
      %v330 = vsel %vm300, %v327, %v329
      %v331 = vrot.slane %v248, 1
      %v332 = vrot.slane %v249, 1
      %v333 = vsel %vm300, %v331, %v332
      %v334 = vrot.slane %v250, 1
      %v335 = vsel %vm300, %v332, %v334
      %v336 = vrot.slane %v251, 1
      %v337 = vrot.slane %v252, 1
      %v338 = vsel %vm300, %v336, %v337
      %v339 = vrot.slane %v253, 1
      %v340 = vsel %vm300, %v337, %v339
      %v357 = vpack.c.bf16 %v305, %v303
      %v358 = vpack.c.bf16 %v310, %v308
      %v359 = vpack.c.bf16 %v315, %v313
      %v360 = vpack.c.bf16 %v320, %v318
      %v361 = vpack.c.bf16 %v325, %v323
      %v362 = vpack.c.bf16 %v330, %v328
      %v363 = vpack.c.bf16 %v335, %v333
      %v364 = vpack.c.bf16 %v340, %v338
      %s365 = scalar_lea.vmem %s1, 32
      %v366 = vld [vmem:[%s365] sm:$0xf]
      %v367 = vld [vmem:[%s365 + $0x4] sm:$0xf]
      %v368 = vld [vmem:[%s365 + $0x8] sm:$0xf]
      %v369 = vld [vmem:[%s365 + $0xc] sm:$0xf]
      %v370 = vld [vmem:[%s365 + $0x10] sm:$0xf]
      %v371 = vld [vmem:[%s365 + $0x14] sm:$0xf]
      %v372 = vld [vmem:[%s365 + $0x18] sm:$0xf]
      %v373 = vld [vmem:[%s365 + $0x1c] sm:$0xf]
      %v382 = vunpack.c.l.b16 %v366
      %v383 = vunpack.c.l.b16 %v367
      %v384 = vunpack.c.l.b16 %v368
      %v385 = vunpack.c.l.b16 %v369
      %v386 = vunpack.c.l.b16 %v370
      %v387 = vunpack.c.l.b16 %v371
      %v388 = vunpack.c.l.b16 %v372
      %v389 = vunpack.c.l.b16 %v373
      %v390 = vpack.c.b16 %v383, %v382
      %v391 = vpack.c.b16 %v385, %v384
      %v392 = vpack.c.b16 %v387, %v386
      %v393 = vpack.c.b16 %v389, %v388
      %vm398 = vcmask 523264
      %v400 = vsel %vm398, %v357, 0
      %v403 = vsel %vm398, %v358, 0
      %v406 = vsel %vm398, %v359, 0
      %v409 = vsel %vm398, %v360, 0
      %v412 = vsel %vm398, %v361, 0
      %v415 = vsel %vm398, %v362, 0
      %v418 = vsel %vm398, %v363, 0
      %v421 = vsel %vm398, %v364, 0
      %423 = vmatprep.subr.bf16.mxu0 0
      %424 = vmatpush1.bf16.msra.mxu0 %v390
      %425 = vmatprep.subr.bf16.mxu0 0
      %426 = vmatpush1.bf16.msra.mxu0 %v391
      %427 = vmatprep.subr.bf16.mxu0 0
      %428 = vmatpush1.bf16.msra.mxu0 %v392
      %429 = vmatprep.subr.bf16.mxu0 0
      %430 = vmatpush1.bf16.msra.mxu0 %v393
      %431 = vmatprep.subr.bf16.mxu0 0
      %432 = vmatpush1.bf16.msra.mxu0 0
      %433 = vmatprep.subr.bf16.mxu0 0
      %434 = vmatpush1.bf16.msra.mxu0 0
      %435 = vmatprep.subr.bf16.mxu0 0
      %436 = vmatpush1.bf16.msra.mxu0 0
      %437 = vmatprep.subr.bf16.mxu0 0
      %438 = vmatpush1.bf16.msra.mxu0 0
      %439 = vmatprep.subr.bf16.mxu0 0
      %440 = vmatpush1.bf16.msra.mxu0 0
      %441 = vmatprep.subr.bf16.mxu0 0
      %442 = vmatpush1.bf16.msra.mxu0 0
      %443 = vmatprep.subr.bf16.mxu0 0
      %444 = vmatpush1.bf16.msra.mxu0 0
      %445 = vmatprep.subr.bf16.mxu0 0
      %446 = vmatpush1.bf16.msra.mxu0 0
      %447 = vmatprep.subr.bf16.mxu0 0
      %448 = vmatpush1.bf16.msra.mxu0 0
      %449 = vmatprep.subr.bf16.mxu0 0
      %450 = vmatpush1.bf16.msra.mxu0 0
      %451 = vmatprep.subr.bf16.mxu0 0
      %452 = vmatpush1.bf16.msra.mxu0 0
      %453 = vmatprep.subr.bf16.mxu0 0
      %454 = vmatpush1.bf16.msra.mxu0 0
      %455 = vmatprep.mubr.bf16.mxu0 0
      %456 = vmatmul.mubr.bf16.gmra.mrb[0].mxu0 %v400
      %v457 = vpop.f32.mrb[0].mxu0
      %v458 = vadd.f32 0.0, %v457
      %v459 = vpop.f32.mrb[0].mxu0
      %v460 = vpop.f32.mrb[0].mxu0
      %v461 = vadd.f32 0.0, %v460
      %v462 = vpop.f32.mrb[0].mxu0
      %463 = vmatprep.mubr.bf16.mxu0 0
      %464 = vmatmul.mubr.bf16.gmra.mrb[0].mxu0 %v403
      %v465 = vpop.f32.mrb[0].mxu0
      %v466 = vadd.f32 0.0, %v465
      %v467 = vpop.f32.mrb[0].mxu0
      %v468 = vpop.f32.mrb[0].mxu0
      %v469 = vadd.f32 0.0, %v468
      %v470 = vpop.f32.mrb[0].mxu0
      %471 = vmatprep.mubr.bf16.mxu0 0
      %472 = vmatmul.mubr.bf16.gmra.mrb[0].mxu0 %v406
      %v473 = vpop.f32.mrb[0].mxu0
      %v474 = vadd.f32 0.0, %v473
      %v475 = vpop.f32.mrb[0].mxu0
      %v476 = vpop.f32.mrb[0].mxu0
      %v477 = vadd.f32 0.0, %v476
      %v478 = vpop.f32.mrb[0].mxu0
      %479 = vmatprep.mubr.bf16.mxu0 0
      %480 = vmatmul.mubr.bf16.gmra.mrb[0].mxu0 %v409
      %v481 = vpop.f32.mrb[0].mxu0
      %v482 = vadd.f32 0.0, %v481
      %v483 = vpop.f32.mrb[0].mxu0
      %v484 = vpop.f32.mrb[0].mxu0
      %v485 = vadd.f32 0.0, %v484
      %v486 = vpop.f32.mrb[0].mxu0
      %487 = vmatprep.mubr.bf16.mxu0 0
      %488 = vmatmul.mubr.bf16.gmra.mrb[0].mxu0 %v412
      %v489 = vpop.f32.mrb[0].mxu0
      %v490 = vadd.f32 0.0, %v489
      %v491 = vpop.f32.mrb[0].mxu0
      %v492 = vpop.f32.mrb[0].mxu0
      %v493 = vadd.f32 0.0, %v492
      %v494 = vpop.f32.mrb[0].mxu0
      %495 = vmatprep.mubr.bf16.mxu0 0
      %496 = vmatmul.mubr.bf16.gmra.mrb[0].mxu0 %v415
      %v497 = vpop.f32.mrb[0].mxu0
      %v498 = vadd.f32 0.0, %v497
      %v499 = vpop.f32.mrb[0].mxu0
      %v500 = vpop.f32.mrb[0].mxu0
      %v501 = vadd.f32 0.0, %v500
      %v502 = vpop.f32.mrb[0].mxu0
      %503 = vmatprep.mubr.bf16.mxu0 0
      %504 = vmatmul.mubr.bf16.gmra.mrb[0].mxu0 %v418
      %v505 = vpop.f32.mrb[0].mxu0
      %v506 = vadd.f32 0.0, %v505
      %v507 = vpop.f32.mrb[0].mxu0
      %v508 = vpop.f32.mrb[0].mxu0
      %v509 = vadd.f32 0.0, %v508
      %v510 = vpop.f32.mrb[0].mxu0
      %511 = vmatprep.mubr.bf16.mxu0 0
      %512 = vmatmul.mubr.bf16.gmra.mrb[0].mxu0 %v421
      %v513 = vpop.f32.mrb[0].mxu0
      %v514 = vadd.f32 0.0, %v513
      %v515 = vpop.f32.mrb[0].mxu0
      %v516 = vpop.f32.mrb[0].mxu0
      %v517 = vadd.f32 0.0, %v516
      %v518 = vpop.f32.mrb[0].mxu0
      %519 = vdwg.mxu0
      %v528 = vunpack.c.l.b16 %v268
      %v529 = vunpack.c.l.b16 %v269
      %v530 = vunpack.c.l.b16 %v270
      %v531 = vunpack.c.l.b16 %v271
      %v532 = vunpack.c.l.b16 %v272
      %v533 = vunpack.c.l.b16 %v273
      %v534 = vunpack.c.l.b16 %v274
      %v535 = vunpack.c.l.b16 %v275
      %v536 = vpack.c.b16 %v529, %v528
      %v537 = vpack.c.b16 %v531, %v530
      %v538 = vpack.c.b16 %v533, %v532
      %v539 = vpack.c.b16 %v535, %v534
      %v545 = vsel %vm398, %v260, 0
      %v548 = vsel %vm398, %v261, 0
      %v551 = vsel %vm398, %v262, 0
      %v554 = vsel %vm398, %v263, 0
      %v557 = vsel %vm398, %v264, 0
      %v560 = vsel %vm398, %v265, 0
      %v563 = vsel %vm398, %v266, 0
      %v566 = vsel %vm398, %v267, 0
      %568 = vmatprep.subr.bf16.mxu0 0
      %569 = vmatpush1.bf16.msra.mxu0 %v536
      %570 = vmatprep.subr.bf16.mxu0 0
      %571 = vmatpush1.bf16.msra.mxu0 %v537
      %572 = vmatprep.subr.bf16.mxu0 0
      %573 = vmatpush1.bf16.msra.mxu0 %v538
      %574 = vmatprep.subr.bf16.mxu0 0
      %575 = vmatpush1.bf16.msra.mxu0 %v539
      %576 = vmatprep.subr.bf16.mxu0 0
      %577 = vmatpush1.bf16.msra.mxu0 0
      %578 = vmatprep.subr.bf16.mxu0 0
      %579 = vmatpush1.bf16.msra.mxu0 0
      %580 = vmatprep.subr.bf16.mxu0 0
      %581 = vmatpush1.bf16.msra.mxu0 0
      %582 = vmatprep.subr.bf16.mxu0 0
      %583 = vmatpush1.bf16.msra.mxu0 0
      %584 = vmatprep.subr.bf16.mxu0 0
      %585 = vmatpush1.bf16.msra.mxu0 0
      %586 = vmatprep.subr.bf16.mxu0 0
      %587 = vmatpush1.bf16.msra.mxu0 0
      %588 = vmatprep.subr.bf16.mxu0 0
      %589 = vmatpush1.bf16.msra.mxu0 0
      %590 = vmatprep.subr.bf16.mxu0 0
      %591 = vmatpush1.bf16.msra.mxu0 0
      %592 = vmatprep.subr.bf16.mxu0 0
      %593 = vmatpush1.bf16.msra.mxu0 0
      %594 = vmatprep.subr.bf16.mxu0 0
      %595 = vmatpush1.bf16.msra.mxu0 0
      %596 = vmatprep.subr.bf16.mxu0 0
      %597 = vmatpush1.bf16.msra.mxu0 0
      %598 = vmatprep.subr.bf16.mxu0 0
      %599 = vmatpush1.bf16.msra.mxu0 0
      %600 = vmatprep.mubr.bf16.mxu0 0
      %601 = vmatmul.mubr.bf16.gmra.mrb[0].mxu0 %v545
      %v602 = vpop.f32.mrb[0].mxu0
      %v603 = vadd.f32 %v458, %v602
      %v604 = vpop.f32.mrb[0].mxu0
      %v605 = vpop.f32.mrb[0].mxu0
      %v606 = vadd.f32 %v461, %v605
      %v607 = vpop.f32.mrb[0].mxu0
      %608 = vmatprep.mubr.bf16.mxu0 0
      %609 = vmatmul.mubr.bf16.gmra.mrb[0].mxu0 %v548
      %v610 = vpop.f32.mrb[0].mxu0
      %v611 = vadd.f32 %v466, %v610
      %v612 = vpop.f32.mrb[0].mxu0
      %v613 = vpop.f32.mrb[0].mxu0
      %v614 = vadd.f32 %v469, %v613
      %v615 = vpop.f32.mrb[0].mxu0
      %616 = vmatprep.mubr.bf16.mxu0 0
      %617 = vmatmul.mubr.bf16.gmra.mrb[0].mxu0 %v551
      %v618 = vpop.f32.mrb[0].mxu0
      %v619 = vadd.f32 %v474, %v618
      %v620 = vpop.f32.mrb[0].mxu0
      %v621 = vpop.f32.mrb[0].mxu0
      %v622 = vadd.f32 %v477, %v621
      %v623 = vpop.f32.mrb[0].mxu0
      %624 = vmatprep.mubr.bf16.mxu0 0
      %625 = vmatmul.mubr.bf16.gmra.mrb[0].mxu0 %v554
      %v626 = vpop.f32.mrb[0].mxu0
      %v627 = vadd.f32 %v482, %v626
      %v628 = vpop.f32.mrb[0].mxu0
      %v629 = vpop.f32.mrb[0].mxu0
      %v630 = vadd.f32 %v485, %v629
      %v631 = vpop.f32.mrb[0].mxu0
      %632 = vmatprep.mubr.bf16.mxu0 0
      %633 = vmatmul.mubr.bf16.gmra.mrb[0].mxu0 %v557
      %v634 = vpop.f32.mrb[0].mxu0
      %v635 = vadd.f32 %v490, %v634
      %v636 = vpop.f32.mrb[0].mxu0
      %v637 = vpop.f32.mrb[0].mxu0
      %v638 = vadd.f32 %v493, %v637
      %v639 = vpop.f32.mrb[0].mxu0
      %640 = vmatprep.mubr.bf16.mxu0 0
      %641 = vmatmul.mubr.bf16.gmra.mrb[0].mxu0 %v560
      %v642 = vpop.f32.mrb[0].mxu0
      %v643 = vadd.f32 %v498, %v642
      %v644 = vpop.f32.mrb[0].mxu0
      %v645 = vpop.f32.mrb[0].mxu0
      %v646 = vadd.f32 %v501, %v645
      %v647 = vpop.f32.mrb[0].mxu0
      %648 = vmatprep.mubr.bf16.mxu0 0
      %649 = vmatmul.mubr.bf16.gmra.mrb[0].mxu0 %v563
      %v650 = vpop.f32.mrb[0].mxu0
      %v651 = vadd.f32 %v506, %v650
      %v652 = vpop.f32.mrb[0].mxu0
      %v653 = vpop.f32.mrb[0].mxu0
      %v654 = vadd.f32 %v509, %v653
      %v655 = vpop.f32.mrb[0].mxu0
      %656 = vmatprep.mubr.bf16.mxu0 0
      %657 = vmatmul.mubr.bf16.gmra.mrb[0].mxu0 %v566
      %v658 = vpop.f32.mrb[0].mxu0
      %v659 = vadd.f32 %v514, %v658
      %v660 = vpop.f32.mrb[0].mxu0
      %v661 = vpop.f32.mrb[0].mxu0
      %v662 = vadd.f32 %v517, %v661
      %v663 = vpop.f32.mrb[0].mxu0
      %664 = vdwg.mxu0
      %vm665 = vcmask 1045504
      %v666 = vrot.slane %v230, 2
      %v667 = vrot.slane %v231, 2
      %v668 = vsel %vm665, %v666, %v667
      %v669 = vrot.slane %v232, 2
      %v670 = vsel %vm665, %v667, %v669
      %v671 = vrot.slane %v233, 2
      %v672 = vrot.slane %v234, 2
      %v673 = vsel %vm665, %v671, %v672
      %v674 = vrot.slane %v235, 2
      %v675 = vsel %vm665, %v672, %v674
      %v676 = vrot.slane %v236, 2
      %v677 = vrot.slane %v237, 2
      %v678 = vsel %vm665, %v676, %v677
      %v679 = vrot.slane %v238, 2
      %v680 = vsel %vm665, %v677, %v679
      %v681 = vrot.slane %v239, 2
      %v682 = vrot.slane %v240, 2
      %v683 = vsel %vm665, %v681, %v682
      %v684 = vrot.slane %v241, 2
      %v685 = vsel %vm665, %v682, %v684
      %v686 = vrot.slane %v242, 2
      %v687 = vrot.slane %v243, 2
      %v688 = vsel %vm665, %v686, %v687
      %v689 = vrot.slane %v244, 2
      %v690 = vsel %vm665, %v687, %v689
      %v691 = vrot.slane %v245, 2
      %v692 = vrot.slane %v246, 2
      %v693 = vsel %vm665, %v691, %v692
      %v694 = vrot.slane %v247, 2
      %v695 = vsel %vm665, %v692, %v694
      %v696 = vrot.slane %v248, 2
      %v697 = vrot.slane %v249, 2
      %v698 = vsel %vm665, %v696, %v697
      %v699 = vrot.slane %v250, 2
      %v700 = vsel %vm665, %v697, %v699
      %v701 = vrot.slane %v251, 2
      %v702 = vrot.slane %v252, 2
      %v703 = vsel %vm665, %v701, %v702
      %v704 = vrot.slane %v253, 2
      %v705 = vsel %vm665, %v702, %v704
      %v722 = vpack.c.bf16 %v670, %v668
      %v723 = vpack.c.bf16 %v675, %v673
      %v724 = vpack.c.bf16 %v680, %v678
      %v725 = vpack.c.bf16 %v685, %v683
      %v726 = vpack.c.bf16 %v690, %v688
      %v727 = vpack.c.bf16 %v695, %v693
      %v728 = vpack.c.bf16 %v700, %v698
      %v729 = vpack.c.bf16 %v705, %v703
      %s730 = scalar_lea.vmem %s1, 64
      %v731 = vld [vmem:[%s730] sm:$0xf]
      %v732 = vld [vmem:[%s730 + $0x4] sm:$0xf]
      %v733 = vld [vmem:[%s730 + $0x8] sm:$0xf]
      %v734 = vld [vmem:[%s730 + $0xc] sm:$0xf]
      %v735 = vld [vmem:[%s730 + $0x10] sm:$0xf]
      %v736 = vld [vmem:[%s730 + $0x14] sm:$0xf]
      %v737 = vld [vmem:[%s730 + $0x18] sm:$0xf]
      %v738 = vld [vmem:[%s730 + $0x1c] sm:$0xf]
      %v747 = vunpack.c.l.b16 %v731
      %v748 = vunpack.c.l.b16 %v732
      %v749 = vunpack.c.l.b16 %v733
      %v750 = vunpack.c.l.b16 %v734
      %v751 = vunpack.c.l.b16 %v735
      %v752 = vunpack.c.l.b16 %v736
      %v753 = vunpack.c.l.b16 %v737
      %v754 = vunpack.c.l.b16 %v738
      %v755 = vpack.c.b16 %v748, %v747
      %v756 = vpack.c.b16 %v750, %v749
      %v757 = vpack.c.b16 %v752, %v751
      %v758 = vpack.c.b16 %v754, %v753
      %v764 = vsel %vm398, %v722, 0
      %v767 = vsel %vm398, %v723, 0
      %v770 = vsel %vm398, %v724, 0
      %v773 = vsel %vm398, %v725, 0
      %v776 = vsel %vm398, %v726, 0
      %v779 = vsel %vm398, %v727, 0
      %v782 = vsel %vm398, %v728, 0
      %v785 = vsel %vm398, %v729, 0
      %787 = vmatprep.subr.bf16.mxu0 0
      %788 = vmatpush1.bf16.msra.mxu0 %v755
      %789 = vmatprep.subr.bf16.mxu0 0
      %790 = vmatpush1.bf16.msra.mxu0 %v756
      %791 = vmatprep.subr.bf16.mxu0 0
      %792 = vmatpush1.bf16.msra.mxu0 %v757
      %793 = vmatprep.subr.bf16.mxu0 0
      %794 = vmatpush1.bf16.msra.mxu0 %v758
      %795 = vmatprep.subr.bf16.mxu0 0
      %796 = vmatpush1.bf16.msra.mxu0 0
      %797 = vmatprep.subr.bf16.mxu0 0
      %798 = vmatpush1.bf16.msra.mxu0 0
      %799 = vmatprep.subr.bf16.mxu0 0
      %800 = vmatpush1.bf16.msra.mxu0 0
      %801 = vmatprep.subr.bf16.mxu0 0
      %802 = vmatpush1.bf16.msra.mxu0 0
      %803 = vmatprep.subr.bf16.mxu0 0
      %804 = vmatpush1.bf16.msra.mxu0 0
      %805 = vmatprep.subr.bf16.mxu0 0
      %806 = vmatpush1.bf16.msra.mxu0 0
      %807 = vmatprep.subr.bf16.mxu0 0
      %808 = vmatpush1.bf16.msra.mxu0 0
      %809 = vmatprep.subr.bf16.mxu0 0
      %810 = vmatpush1.bf16.msra.mxu0 0
      %811 = vmatprep.subr.bf16.mxu0 0
      %812 = vmatpush1.bf16.msra.mxu0 0
      %813 = vmatprep.subr.bf16.mxu0 0
      %814 = vmatpush1.bf16.msra.mxu0 0
      %815 = vmatprep.subr.bf16.mxu0 0
      %816 = vmatpush1.bf16.msra.mxu0 0
      %817 = vmatprep.subr.bf16.mxu0 0
      %818 = vmatpush1.bf16.msra.mxu0 0
      %819 = vmatprep.mubr.bf16.mxu0 0
      %820 = vmatmul.mubr.bf16.gmra.mrb[0].mxu0 %v764
      %v821 = vpop.f32.mrb[0].mxu0
      %v822 = vadd.f32 0.0, %v821
      %v823 = vpop.f32.mrb[0].mxu0
      %v824 = vpop.f32.mrb[0].mxu0
      %v825 = vadd.f32 0.0, %v824
      %v826 = vpop.f32.mrb[0].mxu0
      %827 = vmatprep.mubr.bf16.mxu0 0
      %828 = vmatmul.mubr.bf16.gmra.mrb[0].mxu0 %v767
      %v829 = vpop.f32.mrb[0].mxu0
      %v830 = vadd.f32 0.0, %v829
      %v831 = vpop.f32.mrb[0].mxu0
      %v832 = vpop.f32.mrb[0].mxu0
      %v833 = vadd.f32 0.0, %v832
      %v834 = vpop.f32.mrb[0].mxu0
      %835 = vmatprep.mubr.bf16.mxu0 0
      %836 = vmatmul.mubr.bf16.gmra.mrb[0].mxu0 %v770
      %v837 = vpop.f32.mrb[0].mxu0
      %v838 = vadd.f32 0.0, %v837
      %v839 = vpop.f32.mrb[0].mxu0
      %v840 = vpop.f32.mrb[0].mxu0
      %v841 = vadd.f32 0.0, %v840
      %v842 = vpop.f32.mrb[0].mxu0
      %843 = vmatprep.mubr.bf16.mxu0 0
      %844 = vmatmul.mubr.bf16.gmra.mrb[0].mxu0 %v773
      %v845 = vpop.f32.mrb[0].mxu0
      %v846 = vadd.f32 0.0, %v845
      %v847 = vpop.f32.mrb[0].mxu0
      %v848 = vpop.f32.mrb[0].mxu0
      %v849 = vadd.f32 0.0, %v848
      %v850 = vpop.f32.mrb[0].mxu0
      %851 = vmatprep.mubr.bf16.mxu0 0
      %852 = vmatmul.mubr.bf16.gmra.mrb[0].mxu0 %v776
      %v853 = vpop.f32.mrb[0].mxu0
      %v854 = vadd.f32 0.0, %v853
      %v855 = vpop.f32.mrb[0].mxu0
      %v856 = vpop.f32.mrb[0].mxu0
      %v857 = vadd.f32 0.0, %v856
      %v858 = vpop.f32.mrb[0].mxu0
      %859 = vmatprep.mubr.bf16.mxu0 0
      %860 = vmatmul.mubr.bf16.gmra.mrb[0].mxu0 %v779
      %v861 = vpop.f32.mrb[0].mxu0
      %v862 = vadd.f32 0.0, %v861
      %v863 = vpop.f32.mrb[0].mxu0
      %v864 = vpop.f32.mrb[0].mxu0
      %v865 = vadd.f32 0.0, %v864
      %v866 = vpop.f32.mrb[0].mxu0
      %867 = vmatprep.mubr.bf16.mxu0 0
      %868 = vmatmul.mubr.bf16.gmra.mrb[0].mxu0 %v782
      %v869 = vpop.f32.mrb[0].mxu0
      %v870 = vadd.f32 0.0, %v869
      %v871 = vpop.f32.mrb[0].mxu0
      %v872 = vpop.f32.mrb[0].mxu0
      %v873 = vadd.f32 0.0, %v872
      %v874 = vpop.f32.mrb[0].mxu0
      %875 = vmatprep.mubr.bf16.mxu0 0
      %876 = vmatmul.mubr.bf16.gmra.mrb[0].mxu0 %v785
      %v877 = vpop.f32.mrb[0].mxu0
      %v878 = vadd.f32 0.0, %v877
      %v879 = vpop.f32.mrb[0].mxu0
      %v880 = vpop.f32.mrb[0].mxu0
      %v881 = vadd.f32 0.0, %v880
      %v882 = vpop.f32.mrb[0].mxu0
      %883 = vdwg.mxu0
      %v884 = vadd.f32 %v603, %v822
      %v885 = vadd.f32 %v606, %v825
      %v886 = vadd.f32 %v611, %v830
      %v887 = vadd.f32 %v614, %v833
      %v888 = vadd.f32 %v619, %v838
      %v889 = vadd.f32 %v622, %v841
      %v890 = vadd.f32 %v627, %v846
      %v891 = vadd.f32 %v630, %v849
      %v892 = vadd.f32 %v635, %v854
      %v893 = vadd.f32 %v638, %v857
      %v894 = vadd.f32 %v643, %v862
      %v895 = vadd.f32 %v646, %v865
      %v896 = vadd.f32 %v651, %v870
      %v897 = vadd.f32 %v654, %v873
      %v898 = vadd.f32 %v659, %v878
      %v899 = vadd.f32 %v662, %v881
      %v900 = vpack.c.bf16 %v255, %v254
      %s901 = scalar_lea.vmem %s1, 96
      %v902 = vld [vmem:[%s901] sm:$0xf]
      %v903 = vld [vmem:[%s901 + $0x4] sm:$0xf]
      %v904 = vld [vmem:[%s901 + $0x8] sm:$0xf]
      %v905 = vld [vmem:[%s901 + $0xc] sm:$0xf]
      %v906 = vld [vmem:[%s901 + $0x10] sm:$0xf]
      %v907 = vld [vmem:[%s901 + $0x14] sm:$0xf]
      %v908 = vld [vmem:[%s901 + $0x18] sm:$0xf]
      %v909 = vld [vmem:[%s901 + $0x1c] sm:$0xf]
      %v918 = vunpack.c.l.b16 %v902
      %v919 = vunpack.c.l.b16 %v903
      %v920 = vunpack.c.l.b16 %v904
      %v921 = vunpack.c.l.b16 %v905
      %v922 = vunpack.c.l.b16 %v906
      %v923 = vunpack.c.l.b16 %v907
      %v924 = vunpack.c.l.b16 %v908
      %v925 = vunpack.c.l.b16 %v909
      %v926 = vpack.c.b16 %v919, %v918
      %v927 = vpack.c.b16 %v921, %v920
      %v928 = vpack.c.b16 %v923, %v922
      %v929 = vpack.c.b16 %v925, %v924
      %v935 = vsel %vm398, %v900, 0
      %937 = vmatprep.subr.bf16.mxu0 0
      %938 = vmatpush1.bf16.msra.mxu0 %v926
      %939 = vmatprep.subr.bf16.mxu0 0
      %940 = vmatpush1.bf16.msra.mxu0 %v927
      %941 = vmatprep.subr.bf16.mxu0 0
      %942 = vmatpush1.bf16.msra.mxu0 %v928
      %943 = vmatprep.subr.bf16.mxu0 0
      %944 = vmatpush1.bf16.msra.mxu0 %v929
      %945 = vmatprep.subr.bf16.mxu0 0
      %946 = vmatpush1.bf16.msra.mxu0 0
      %947 = vmatprep.subr.bf16.mxu0 0
      %948 = vmatpush1.bf16.msra.mxu0 0
      %949 = vmatprep.subr.bf16.mxu0 0
      %950 = vmatpush1.bf16.msra.mxu0 0
      %951 = vmatprep.subr.bf16.mxu0 0
      %952 = vmatpush1.bf16.msra.mxu0 0
      %953 = vmatprep.subr.bf16.mxu0 0
      %954 = vmatpush1.bf16.msra.mxu0 0
      %955 = vmatprep.subr.bf16.mxu0 0
      %956 = vmatpush1.bf16.msra.mxu0 0
      %957 = vmatprep.subr.bf16.mxu0 0
      %958 = vmatpush1.bf16.msra.mxu0 0
      %959 = vmatprep.subr.bf16.mxu0 0
      %960 = vmatpush1.bf16.msra.mxu0 0
      %961 = vmatprep.subr.bf16.mxu0 0
      %962 = vmatpush1.bf16.msra.mxu0 0
      %963 = vmatprep.subr.bf16.mxu0 0
      %964 = vmatpush1.bf16.msra.mxu0 0
      %965 = vmatprep.subr.bf16.mxu0 0
      %966 = vmatpush1.bf16.msra.mxu0 0
      %967 = vmatprep.subr.bf16.mxu0 0
      %968 = vmatpush1.bf16.msra.mxu0 0
      %969 = vmatprep.mubr.bf16.mxu0 0
      %970 = vmatmul.mubr.bf16.gmra.mrb[0].mxu0 %v548
      %v971 = vpop.f32.mrb[0].mxu0
      %v972 = vadd.f32 0.0, %v971
      %v973 = vpop.f32.mrb[0].mxu0
      %v974 = vpop.f32.mrb[0].mxu0
      %v975 = vadd.f32 0.0, %v974
      %v976 = vpop.f32.mrb[0].mxu0
      %977 = vmatprep.mubr.bf16.mxu0 0
      %978 = vmatmul.mubr.bf16.gmra.mrb[0].mxu0 %v551
      %v979 = vpop.f32.mrb[0].mxu0
      %v980 = vadd.f32 0.0, %v979
      %v981 = vpop.f32.mrb[0].mxu0
      %v982 = vpop.f32.mrb[0].mxu0
      %v983 = vadd.f32 0.0, %v982
      %v984 = vpop.f32.mrb[0].mxu0
      %985 = vmatprep.mubr.bf16.mxu0 0
      %986 = vmatmul.mubr.bf16.gmra.mrb[0].mxu0 %v554
      %v987 = vpop.f32.mrb[0].mxu0
      %v988 = vadd.f32 0.0, %v987
      %v989 = vpop.f32.mrb[0].mxu0
      %v990 = vpop.f32.mrb[0].mxu0
      %v991 = vadd.f32 0.0, %v990
      %v992 = vpop.f32.mrb[0].mxu0
      %993 = vmatprep.mubr.bf16.mxu0 0
      %994 = vmatmul.mubr.bf16.gmra.mrb[0].mxu0 %v557
      %v995 = vpop.f32.mrb[0].mxu0
      %v996 = vadd.f32 0.0, %v995
      %v997 = vpop.f32.mrb[0].mxu0
      %v998 = vpop.f32.mrb[0].mxu0
      %v999 = vadd.f32 0.0, %v998
      %v1000 = vpop.f32.mrb[0].mxu0
      %1001 = vmatprep.mubr.bf16.mxu0 0
      %1002 = vmatmul.mubr.bf16.gmra.mrb[0].mxu0 %v560
      %v1003 = vpop.f32.mrb[0].mxu0
      %v1004 = vadd.f32 0.0, %v1003
      %v1005 = vpop.f32.mrb[0].mxu0
      %v1006 = vpop.f32.mrb[0].mxu0
      %v1007 = vadd.f32 0.0, %v1006
      %v1008 = vpop.f32.mrb[0].mxu0
      %1009 = vmatprep.mubr.bf16.mxu0 0
      %1010 = vmatmul.mubr.bf16.gmra.mrb[0].mxu0 %v563
      %v1011 = vpop.f32.mrb[0].mxu0
      %v1012 = vadd.f32 0.0, %v1011
      %v1013 = vpop.f32.mrb[0].mxu0
      %v1014 = vpop.f32.mrb[0].mxu0
      %v1015 = vadd.f32 0.0, %v1014
      %v1016 = vpop.f32.mrb[0].mxu0
      %1017 = vmatprep.mubr.bf16.mxu0 0
      %1018 = vmatmul.mubr.bf16.gmra.mrb[0].mxu0 %v566
      %v1019 = vpop.f32.mrb[0].mxu0
      %v1020 = vadd.f32 0.0, %v1019
      %v1021 = vpop.f32.mrb[0].mxu0
      %v1022 = vpop.f32.mrb[0].mxu0
      %v1023 = vadd.f32 0.0, %v1022
      %v1024 = vpop.f32.mrb[0].mxu0
      %1025 = vmatprep.mubr.bf16.mxu0 0
      %1026 = vmatmul.mubr.bf16.gmra.mrb[0].mxu0 %v935
      %v1027 = vpop.f32.mrb[0].mxu0
      %v1028 = vadd.f32 0.0, %v1027
      %v1029 = vpop.f32.mrb[0].mxu0
      %v1030 = vpop.f32.mrb[0].mxu0
      %v1031 = vadd.f32 0.0, %v1030
      %v1032 = vpop.f32.mrb[0].mxu0
      %1033 = vdwg.mxu0
      %v1034 = vadd.f32 %v884, %v972
      %v1035 = vadd.f32 %v885, %v975
      %v1036 = vadd.f32 %v886, %v980
      %v1037 = vadd.f32 %v887, %v983
      %v1038 = vadd.f32 %v888, %v988
      %v1039 = vadd.f32 %v889, %v991
      %v1040 = vadd.f32 %v890, %v996
      %v1041 = vadd.f32 %v891, %v999
      %v1042 = vadd.f32 %v892, %v1004
      %v1043 = vadd.f32 %v893, %v1007
      %v1044 = vadd.f32 %v894, %v1012
      %v1045 = vadd.f32 %v895, %v1015
      %v1046 = vadd.f32 %v896, %v1020
      %v1047 = vadd.f32 %v897, %v1023
      %v1048 = vadd.f32 %v898, %v1028
      %v1049 = vadd.f32 %v899, %v1031
      %v1053 = vrot.slane %v254, 1
      %v1054 = vrot.slane %v255, 1
      %v1055 = vsel %vm300, %v1053, %v1054
      %v1056 = vrot.slane %v256, 1
      %v1057 = vsel %vm300, %v1054, %v1056
      %v1060 = vpack.c.bf16 %v1057, %v1055
      %s1061 = scalar_lea.vmem %s1, 128
      %v1062 = vld [vmem:[%s1061] sm:$0xf]
      %v1063 = vld [vmem:[%s1061 + $0x4] sm:$0xf]
      %v1064 = vld [vmem:[%s1061 + $0x8] sm:$0xf]
      %v1065 = vld [vmem:[%s1061 + $0xc] sm:$0xf]
      %v1066 = vld [vmem:[%s1061 + $0x10] sm:$0xf]
      %v1067 = vld [vmem:[%s1061 + $0x14] sm:$0xf]
      %v1068 = vld [vmem:[%s1061 + $0x18] sm:$0xf]
      %v1069 = vld [vmem:[%s1061 + $0x1c] sm:$0xf]
      %v1078 = vunpack.c.l.b16 %v1062
      %v1079 = vunpack.c.l.b16 %v1063
      %v1080 = vunpack.c.l.b16 %v1064
      %v1081 = vunpack.c.l.b16 %v1065
      %v1082 = vunpack.c.l.b16 %v1066
      %v1083 = vunpack.c.l.b16 %v1067
      %v1084 = vunpack.c.l.b16 %v1068
      %v1085 = vunpack.c.l.b16 %v1069
      %v1086 = vpack.c.b16 %v1079, %v1078
      %v1087 = vpack.c.b16 %v1081, %v1080
      %v1088 = vpack.c.b16 %v1083, %v1082
      %v1089 = vpack.c.b16 %v1085, %v1084
      %v1095 = vsel %vm398, %v1060, 0
      %1097 = vmatprep.subr.bf16.mxu0 0
      %1098 = vmatpush1.bf16.msra.mxu0 %v1086
      %1099 = vmatprep.subr.bf16.mxu0 0
      %1100 = vmatpush1.bf16.msra.mxu0 %v1087
      %1101 = vmatprep.subr.bf16.mxu0 0
      %1102 = vmatpush1.bf16.msra.mxu0 %v1088
      %1103 = vmatprep.subr.bf16.mxu0 0
      %1104 = vmatpush1.bf16.msra.mxu0 %v1089
      %1105 = vmatprep.subr.bf16.mxu0 0
      %1106 = vmatpush1.bf16.msra.mxu0 0
      %1107 = vmatprep.subr.bf16.mxu0 0
      %1108 = vmatpush1.bf16.msra.mxu0 0
      %1109 = vmatprep.subr.bf16.mxu0 0
      %1110 = vmatpush1.bf16.msra.mxu0 0
      %1111 = vmatprep.subr.bf16.mxu0 0
      %1112 = vmatpush1.bf16.msra.mxu0 0
      %1113 = vmatprep.subr.bf16.mxu0 0
      %1114 = vmatpush1.bf16.msra.mxu0 0
      %1115 = vmatprep.subr.bf16.mxu0 0
      %1116 = vmatpush1.bf16.msra.mxu0 0
      %1117 = vmatprep.subr.bf16.mxu0 0
      %1118 = vmatpush1.bf16.msra.mxu0 0
      %1119 = vmatprep.subr.bf16.mxu0 0
      %1120 = vmatpush1.bf16.msra.mxu0 0
      %1121 = vmatprep.subr.bf16.mxu0 0
      %1122 = vmatpush1.bf16.msra.mxu0 0
      %1123 = vmatprep.subr.bf16.mxu0 0
      %1124 = vmatpush1.bf16.msra.mxu0 0
      %1125 = vmatprep.subr.bf16.mxu0 0
      %1126 = vmatpush1.bf16.msra.mxu0 0
      %1127 = vmatprep.subr.bf16.mxu0 0
      %1128 = vmatpush1.bf16.msra.mxu0 0
      %1129 = vmatprep.mubr.bf16.mxu0 0
      %1130 = vmatmul.mubr.bf16.gmra.mrb[0].mxu0 %v403
      %v1131 = vpop.f32.mrb[0].mxu0
      %v1132 = vadd.f32 0.0, %v1131
      %v1133 = vpop.f32.mrb[0].mxu0
      %v1134 = vpop.f32.mrb[0].mxu0
      %v1135 = vadd.f32 0.0, %v1134
      %v1136 = vpop.f32.mrb[0].mxu0
      %1137 = vmatprep.mubr.bf16.mxu0 0
      %1138 = vmatmul.mubr.bf16.gmra.mrb[0].mxu0 %v406
      %v1139 = vpop.f32.mrb[0].mxu0
      %v1140 = vadd.f32 0.0, %v1139
      %v1141 = vpop.f32.mrb[0].mxu0
      %v1142 = vpop.f32.mrb[0].mxu0
      %v1143 = vadd.f32 0.0, %v1142
      %v1144 = vpop.f32.mrb[0].mxu0
      %1145 = vmatprep.mubr.bf16.mxu0 0
      %1146 = vmatmul.mubr.bf16.gmra.mrb[0].mxu0 %v409
      %v1147 = vpop.f32.mrb[0].mxu0
      %v1148 = vadd.f32 0.0, %v1147
      %v1149 = vpop.f32.mrb[0].mxu0
      %v1150 = vpop.f32.mrb[0].mxu0
      %v1151 = vadd.f32 0.0, %v1150
      %v1152 = vpop.f32.mrb[0].mxu0
      %1153 = vmatprep.mubr.bf16.mxu0 0
      %1154 = vmatmul.mubr.bf16.gmra.mrb[0].mxu0 %v412
      %v1155 = vpop.f32.mrb[0].mxu0
      %v1156 = vadd.f32 0.0, %v1155
      %v1157 = vpop.f32.mrb[0].mxu0
      %v1158 = vpop.f32.mrb[0].mxu0
      %v1159 = vadd.f32 0.0, %v1158
      %v1160 = vpop.f32.mrb[0].mxu0
      %1161 = vmatprep.mubr.bf16.mxu0 0
      %1162 = vmatmul.mubr.bf16.gmra.mrb[0].mxu0 %v415
      %v1163 = vpop.f32.mrb[0].mxu0
      %v1164 = vadd.f32 0.0, %v1163
      %v1165 = vpop.f32.mrb[0].mxu0
      %v1166 = vpop.f32.mrb[0].mxu0
      %v1167 = vadd.f32 0.0, %v1166
      %v1168 = vpop.f32.mrb[0].mxu0
      %1169 = vmatprep.mubr.bf16.mxu0 0
      %1170 = vmatmul.mubr.bf16.gmra.mrb[0].mxu0 %v418
      %v1171 = vpop.f32.mrb[0].mxu0
      %v1172 = vadd.f32 0.0, %v1171
      %v1173 = vpop.f32.mrb[0].mxu0
      %v1174 = vpop.f32.mrb[0].mxu0
      %v1175 = vadd.f32 0.0, %v1174
      %v1176 = vpop.f32.mrb[0].mxu0
      %1177 = vmatprep.mubr.bf16.mxu0 0
      %1178 = vmatmul.mubr.bf16.gmra.mrb[0].mxu0 %v421
      %v1179 = vpop.f32.mrb[0].mxu0
      %v1180 = vadd.f32 0.0, %v1179
      %v1181 = vpop.f32.mrb[0].mxu0
      %v1182 = vpop.f32.mrb[0].mxu0
      %v1183 = vadd.f32 0.0, %v1182
      %v1184 = vpop.f32.mrb[0].mxu0
      %1185 = vmatprep.mubr.bf16.mxu0 0
      %1186 = vmatmul.mubr.bf16.gmra.mrb[0].mxu0 %v1095
      %v1187 = vpop.f32.mrb[0].mxu0
      %v1188 = vadd.f32 0.0, %v1187
      %v1189 = vpop.f32.mrb[0].mxu0
      %v1190 = vpop.f32.mrb[0].mxu0
      %v1191 = vadd.f32 0.0, %v1190
      %v1192 = vpop.f32.mrb[0].mxu0
      %1193 = vdwg.mxu0
      %v1194 = vadd.f32 %v1034, %v1132
      %v1195 = vadd.f32 %v1035, %v1135
      %v1196 = vadd.f32 %v1036, %v1140
      %v1197 = vadd.f32 %v1037, %v1143
      %v1198 = vadd.f32 %v1038, %v1148
      %v1199 = vadd.f32 %v1039, %v1151
      %v1200 = vadd.f32 %v1040, %v1156
      %v1201 = vadd.f32 %v1041, %v1159
      %v1202 = vadd.f32 %v1042, %v1164
      %v1203 = vadd.f32 %v1043, %v1167
      %v1204 = vadd.f32 %v1044, %v1172
      %v1205 = vadd.f32 %v1045, %v1175
      %v1206 = vadd.f32 %v1046, %v1180
      %v1207 = vadd.f32 %v1047, %v1183
      %v1208 = vadd.f32 %v1048, %v1188
      %v1209 = vadd.f32 %v1049, %v1191
      %v1210 = vrot.slane %v254, 2
      %v1211 = vrot.slane %v255, 2
      %v1212 = vsel %vm665, %v1210, %v1211
      %v1213 = vrot.slane %v256, 2
      %v1214 = vsel %vm665, %v1211, %v1213
      %v1217 = vpack.c.bf16 %v1214, %v1212
      %s1218 = scalar_lea.vmem %s1, 160
      %v1219 = vld [vmem:[%s1218] sm:$0xf]
      %v1220 = vld [vmem:[%s1218 + $0x4] sm:$0xf]
      %v1221 = vld [vmem:[%s1218 + $0x8] sm:$0xf]
      %v1222 = vld [vmem:[%s1218 + $0xc] sm:$0xf]
      %v1223 = vld [vmem:[%s1218 + $0x10] sm:$0xf]
      %v1224 = vld [vmem:[%s1218 + $0x14] sm:$0xf]
      %v1225 = vld [vmem:[%s1218 + $0x18] sm:$0xf]
      %v1226 = vld [vmem:[%s1218 + $0x1c] sm:$0xf]
      %v1235 = vunpack.c.l.b16 %v1219
      %v1236 = vunpack.c.l.b16 %v1220
      %v1237 = vunpack.c.l.b16 %v1221
      %v1238 = vunpack.c.l.b16 %v1222
      %v1239 = vunpack.c.l.b16 %v1223
      %v1240 = vunpack.c.l.b16 %v1224
      %v1241 = vunpack.c.l.b16 %v1225
      %v1242 = vunpack.c.l.b16 %v1226
      %v1243 = vpack.c.b16 %v1236, %v1235
      %v1244 = vpack.c.b16 %v1238, %v1237
      %v1245 = vpack.c.b16 %v1240, %v1239
      %v1246 = vpack.c.b16 %v1242, %v1241
      %v1252 = vsel %vm398, %v1217, 0
      %1254 = vmatprep.subr.bf16.mxu0 0
      %1255 = vmatpush1.bf16.msra.mxu0 %v1243
      %1256 = vmatprep.subr.bf16.mxu0 0
      %1257 = vmatpush1.bf16.msra.mxu0 %v1244
      %1258 = vmatprep.subr.bf16.mxu0 0
      %1259 = vmatpush1.bf16.msra.mxu0 %v1245
      %1260 = vmatprep.subr.bf16.mxu0 0
      %1261 = vmatpush1.bf16.msra.mxu0 %v1246
      %1262 = vmatprep.subr.bf16.mxu0 0
      %1263 = vmatpush1.bf16.msra.mxu0 0
      %1264 = vmatprep.subr.bf16.mxu0 0
      %1265 = vmatpush1.bf16.msra.mxu0 0
      %1266 = vmatprep.subr.bf16.mxu0 0
      %1267 = vmatpush1.bf16.msra.mxu0 0
      %1268 = vmatprep.subr.bf16.mxu0 0
      %1269 = vmatpush1.bf16.msra.mxu0 0
      %1270 = vmatprep.subr.bf16.mxu0 0
      %1271 = vmatpush1.bf16.msra.mxu0 0
      %1272 = vmatprep.subr.bf16.mxu0 0
      %1273 = vmatpush1.bf16.msra.mxu0 0
      %1274 = vmatprep.subr.bf16.mxu0 0
      %1275 = vmatpush1.bf16.msra.mxu0 0
      %1276 = vmatprep.subr.bf16.mxu0 0
      %1277 = vmatpush1.bf16.msra.mxu0 0
      %1278 = vmatprep.subr.bf16.mxu0 0
      %1279 = vmatpush1.bf16.msra.mxu0 0
      %1280 = vmatprep.subr.bf16.mxu0 0
      %1281 = vmatpush1.bf16.msra.mxu0 0
      %1282 = vmatprep.subr.bf16.mxu0 0
      %1283 = vmatpush1.bf16.msra.mxu0 0
      %1284 = vmatprep.subr.bf16.mxu0 0
      %1285 = vmatpush1.bf16.msra.mxu0 0
      %1286 = vmatprep.mubr.bf16.mxu0 0
      %1287 = vmatmul.mubr.bf16.gmra.mrb[0].mxu0 %v767
      %v1288 = vpop.f32.mrb[0].mxu0
      %v1289 = vadd.f32 0.0, %v1288
      %v1290 = vpop.f32.mrb[0].mxu0
      %v1291 = vpop.f32.mrb[0].mxu0
      %v1292 = vadd.f32 0.0, %v1291
      %v1293 = vpop.f32.mrb[0].mxu0
      %1294 = vmatprep.mubr.bf16.mxu0 0
      %1295 = vmatmul.mubr.bf16.gmra.mrb[0].mxu0 %v770
      %v1296 = vpop.f32.mrb[0].mxu0
      %v1297 = vadd.f32 0.0, %v1296
      %v1298 = vpop.f32.mrb[0].mxu0
      %v1299 = vpop.f32.mrb[0].mxu0
      %v1300 = vadd.f32 0.0, %v1299
      %v1301 = vpop.f32.mrb[0].mxu0
      %1302 = vmatprep.mubr.bf16.mxu0 0
      %1303 = vmatmul.mubr.bf16.gmra.mrb[0].mxu0 %v773
      %v1304 = vpop.f32.mrb[0].mxu0
      %v1305 = vadd.f32 0.0, %v1304
      %v1306 = vpop.f32.mrb[0].mxu0
      %v1307 = vpop.f32.mrb[0].mxu0
      %v1308 = vadd.f32 0.0, %v1307
      %v1309 = vpop.f32.mrb[0].mxu0
      %1310 = vmatprep.mubr.bf16.mxu0 0
      %1311 = vmatmul.mubr.bf16.gmra.mrb[0].mxu0 %v776
      %v1312 = vpop.f32.mrb[0].mxu0
      %v1313 = vadd.f32 0.0, %v1312
      %v1314 = vpop.f32.mrb[0].mxu0
      %v1315 = vpop.f32.mrb[0].mxu0
      %v1316 = vadd.f32 0.0, %v1315
      %v1317 = vpop.f32.mrb[0].mxu0
      %1318 = vmatprep.mubr.bf16.mxu0 0
      %1319 = vmatmul.mubr.bf16.gmra.mrb[0].mxu0 %v779
      %v1320 = vpop.f32.mrb[0].mxu0
      %v1321 = vadd.f32 0.0, %v1320
      %v1322 = vpop.f32.mrb[0].mxu0
      %v1323 = vpop.f32.mrb[0].mxu0
      %v1324 = vadd.f32 0.0, %v1323
      %v1325 = vpop.f32.mrb[0].mxu0
      %1326 = vmatprep.mubr.bf16.mxu0 0
      %1327 = vmatmul.mubr.bf16.gmra.mrb[0].mxu0 %v782
      %v1328 = vpop.f32.mrb[0].mxu0
      %v1329 = vadd.f32 0.0, %v1328
      %v1330 = vpop.f32.mrb[0].mxu0
      %v1331 = vpop.f32.mrb[0].mxu0
      %v1332 = vadd.f32 0.0, %v1331
      %v1333 = vpop.f32.mrb[0].mxu0
      %1334 = vmatprep.mubr.bf16.mxu0 0
      %1335 = vmatmul.mubr.bf16.gmra.mrb[0].mxu0 %v785
      %v1336 = vpop.f32.mrb[0].mxu0
      %v1337 = vadd.f32 0.0, %v1336
      %v1338 = vpop.f32.mrb[0].mxu0
      %v1339 = vpop.f32.mrb[0].mxu0
      %v1340 = vadd.f32 0.0, %v1339
      %v1341 = vpop.f32.mrb[0].mxu0
      %1342 = vmatprep.mubr.bf16.mxu0 0
      %1343 = vmatmul.mubr.bf16.gmra.mrb[0].mxu0 %v1252
      %v1344 = vpop.f32.mrb[0].mxu0
      %v1345 = vadd.f32 0.0, %v1344
      %v1346 = vpop.f32.mrb[0].mxu0
      %v1347 = vpop.f32.mrb[0].mxu0
      %v1348 = vadd.f32 0.0, %v1347
      %v1349 = vpop.f32.mrb[0].mxu0
      %1350 = vdwg.mxu0
      %v1351 = vadd.f32 %v1194, %v1289
      %v1352 = vadd.f32 %v1195, %v1292
      %v1353 = vadd.f32 %v1196, %v1297
      %v1354 = vadd.f32 %v1197, %v1300
      %v1355 = vadd.f32 %v1198, %v1305
      %v1356 = vadd.f32 %v1199, %v1308
      %v1357 = vadd.f32 %v1200, %v1313
      %v1358 = vadd.f32 %v1201, %v1316
      %v1359 = vadd.f32 %v1202, %v1321
      %v1360 = vadd.f32 %v1203, %v1324
      %v1361 = vadd.f32 %v1204, %v1329
      %v1362 = vadd.f32 %v1205, %v1332
      %v1363 = vadd.f32 %v1206, %v1337
      %v1364 = vadd.f32 %v1207, %v1340
      %v1365 = vadd.f32 %v1208, %v1345
      %v1366 = vadd.f32 %v1209, %v1348
      %v1367 = vpack.c.bf16 %v258, %v257
      %s1368 = scalar_lea.vmem %s1, 192
      %v1369 = vld [vmem:[%s1368] sm:$0xf]
      %v1370 = vld [vmem:[%s1368 + $0x4] sm:$0xf]
      %v1371 = vld [vmem:[%s1368 + $0x8] sm:$0xf]
      %v1372 = vld [vmem:[%s1368 + $0xc] sm:$0xf]
      %v1373 = vld [vmem:[%s1368 + $0x10] sm:$0xf]
      %v1374 = vld [vmem:[%s1368 + $0x14] sm:$0xf]
      %v1375 = vld [vmem:[%s1368 + $0x18] sm:$0xf]
      %v1376 = vld [vmem:[%s1368 + $0x1c] sm:$0xf]
      %v1385 = vunpack.c.l.b16 %v1369
      %v1386 = vunpack.c.l.b16 %v1370
      %v1387 = vunpack.c.l.b16 %v1371
      %v1388 = vunpack.c.l.b16 %v1372
      %v1389 = vunpack.c.l.b16 %v1373
      %v1390 = vunpack.c.l.b16 %v1374
      %v1391 = vunpack.c.l.b16 %v1375
      %v1392 = vunpack.c.l.b16 %v1376
      %v1393 = vpack.c.b16 %v1386, %v1385
      %v1394 = vpack.c.b16 %v1388, %v1387
      %v1395 = vpack.c.b16 %v1390, %v1389
      %v1396 = vpack.c.b16 %v1392, %v1391
      %v1402 = vsel %vm398, %v1367, 0
      %1404 = vmatprep.subr.bf16.mxu0 0
      %1405 = vmatpush1.bf16.msra.mxu0 %v1393
      %1406 = vmatprep.subr.bf16.mxu0 0
      %1407 = vmatpush1.bf16.msra.mxu0 %v1394
      %1408 = vmatprep.subr.bf16.mxu0 0
      %1409 = vmatpush1.bf16.msra.mxu0 %v1395
      %1410 = vmatprep.subr.bf16.mxu0 0
      %1411 = vmatpush1.bf16.msra.mxu0 %v1396
      %1412 = vmatprep.subr.bf16.mxu0 0
      %1413 = vmatpush1.bf16.msra.mxu0 0
      %1414 = vmatprep.subr.bf16.mxu0 0
      %1415 = vmatpush1.bf16.msra.mxu0 0
      %1416 = vmatprep.subr.bf16.mxu0 0
      %1417 = vmatpush1.bf16.msra.mxu0 0
      %1418 = vmatprep.subr.bf16.mxu0 0
      %1419 = vmatpush1.bf16.msra.mxu0 0
      %1420 = vmatprep.subr.bf16.mxu0 0
      %1421 = vmatpush1.bf16.msra.mxu0 0
      %1422 = vmatprep.subr.bf16.mxu0 0
      %1423 = vmatpush1.bf16.msra.mxu0 0
      %1424 = vmatprep.subr.bf16.mxu0 0
      %1425 = vmatpush1.bf16.msra.mxu0 0
      %1426 = vmatprep.subr.bf16.mxu0 0
      %1427 = vmatpush1.bf16.msra.mxu0 0
      %1428 = vmatprep.subr.bf16.mxu0 0
      %1429 = vmatpush1.bf16.msra.mxu0 0
      %1430 = vmatprep.subr.bf16.mxu0 0
      %1431 = vmatpush1.bf16.msra.mxu0 0
      %1432 = vmatprep.subr.bf16.mxu0 0
      %1433 = vmatpush1.bf16.msra.mxu0 0
      %1434 = vmatprep.subr.bf16.mxu0 0
      %1435 = vmatpush1.bf16.msra.mxu0 0
      %1436 = vmatprep.mubr.bf16.mxu0 0
      %1437 = vmatmul.mubr.bf16.gmra.mrb[0].mxu0 %v551
      %v1438 = vpop.f32.mrb[0].mxu0
      %v1439 = vadd.f32 0.0, %v1438
      %v1440 = vpop.f32.mrb[0].mxu0
      %v1441 = vpop.f32.mrb[0].mxu0
      %v1442 = vadd.f32 0.0, %v1441
      %v1443 = vpop.f32.mrb[0].mxu0
      %1444 = vmatprep.mubr.bf16.mxu0 0
      %1445 = vmatmul.mubr.bf16.gmra.mrb[0].mxu0 %v554
      %v1446 = vpop.f32.mrb[0].mxu0
      %v1447 = vadd.f32 0.0, %v1446
      %v1448 = vpop.f32.mrb[0].mxu0
      %v1449 = vpop.f32.mrb[0].mxu0
      %v1450 = vadd.f32 0.0, %v1449
      %v1451 = vpop.f32.mrb[0].mxu0
      %1452 = vmatprep.mubr.bf16.mxu0 0
      %1453 = vmatmul.mubr.bf16.gmra.mrb[0].mxu0 %v557
      %v1454 = vpop.f32.mrb[0].mxu0
      %v1455 = vadd.f32 0.0, %v1454
      %v1456 = vpop.f32.mrb[0].mxu0
      %v1457 = vpop.f32.mrb[0].mxu0
      %v1458 = vadd.f32 0.0, %v1457
      %v1459 = vpop.f32.mrb[0].mxu0
      %1460 = vmatprep.mubr.bf16.mxu0 0
      %1461 = vmatmul.mubr.bf16.gmra.mrb[0].mxu0 %v560
      %v1462 = vpop.f32.mrb[0].mxu0
      %v1463 = vadd.f32 0.0, %v1462
      %v1464 = vpop.f32.mrb[0].mxu0
      %v1465 = vpop.f32.mrb[0].mxu0
      %v1466 = vadd.f32 0.0, %v1465
      %v1467 = vpop.f32.mrb[0].mxu0
      %1468 = vmatprep.mubr.bf16.mxu0 0
      %1469 = vmatmul.mubr.bf16.gmra.mrb[0].mxu0 %v563
      %v1470 = vpop.f32.mrb[0].mxu0
      %v1471 = vadd.f32 0.0, %v1470
      %v1472 = vpop.f32.mrb[0].mxu0
      %v1473 = vpop.f32.mrb[0].mxu0
      %v1474 = vadd.f32 0.0, %v1473
      %v1475 = vpop.f32.mrb[0].mxu0
      %1476 = vmatprep.mubr.bf16.mxu0 0
      %1477 = vmatmul.mubr.bf16.gmra.mrb[0].mxu0 %v566
      %v1478 = vpop.f32.mrb[0].mxu0
      %v1479 = vadd.f32 0.0, %v1478
      %v1480 = vpop.f32.mrb[0].mxu0
      %v1481 = vpop.f32.mrb[0].mxu0
      %v1482 = vadd.f32 0.0, %v1481
      %v1483 = vpop.f32.mrb[0].mxu0
      %1484 = vmatprep.mubr.bf16.mxu0 0
      %1485 = vmatmul.mubr.bf16.gmra.mrb[0].mxu0 %v935
      %v1486 = vpop.f32.mrb[0].mxu0
      %v1487 = vadd.f32 0.0, %v1486
      %v1488 = vpop.f32.mrb[0].mxu0
      %v1489 = vpop.f32.mrb[0].mxu0
      %v1490 = vadd.f32 0.0, %v1489
      %v1491 = vpop.f32.mrb[0].mxu0
      %1492 = vmatprep.mubr.bf16.mxu0 0
      %1493 = vmatmul.mubr.bf16.gmra.mrb[0].mxu0 %v1402
      %v1494 = vpop.f32.mrb[0].mxu0
      %v1495 = vadd.f32 0.0, %v1494
      %v1496 = vpop.f32.mrb[0].mxu0
      %v1497 = vpop.f32.mrb[0].mxu0
      %v1498 = vadd.f32 0.0, %v1497
      %v1499 = vpop.f32.mrb[0].mxu0
      %1500 = vdwg.mxu0
      %v1501 = vadd.f32 %v1351, %v1439
      %v1502 = vadd.f32 %v1352, %v1442
      %v1503 = vadd.f32 %v1353, %v1447
      %v1504 = vadd.f32 %v1354, %v1450
      %v1505 = vadd.f32 %v1355, %v1455
      %v1506 = vadd.f32 %v1356, %v1458
      %v1507 = vadd.f32 %v1357, %v1463
      %v1508 = vadd.f32 %v1358, %v1466
      %v1509 = vadd.f32 %v1359, %v1471
      %v1510 = vadd.f32 %v1360, %v1474
      %v1511 = vadd.f32 %v1361, %v1479
      %v1512 = vadd.f32 %v1362, %v1482
      %v1513 = vadd.f32 %v1363, %v1487
      %v1514 = vadd.f32 %v1364, %v1490
      %v1515 = vadd.f32 %v1365, %v1495
      %v1516 = vadd.f32 %v1366, %v1498
      %v1520 = vrot.slane %v257, 1
      %v1521 = vrot.slane %v258, 1
      %v1522 = vsel %vm300, %v1520, %v1521
      %v1523 = vrot.slane %v259, 1
      %v1524 = vsel %vm300, %v1521, %v1523
      %v1527 = vpack.c.bf16 %v1524, %v1522
      %s1528 = scalar_lea.vmem %s1, 224
      %v1529 = vld [vmem:[%s1528] sm:$0xf]
      %v1530 = vld [vmem:[%s1528 + $0x4] sm:$0xf]
      %v1531 = vld [vmem:[%s1528 + $0x8] sm:$0xf]
      %v1532 = vld [vmem:[%s1528 + $0xc] sm:$0xf]
      %v1533 = vld [vmem:[%s1528 + $0x10] sm:$0xf]
      %v1534 = vld [vmem:[%s1528 + $0x14] sm:$0xf]
      %v1535 = vld [vmem:[%s1528 + $0x18] sm:$0xf]
      %v1536 = vld [vmem:[%s1528 + $0x1c] sm:$0xf]
      %v1545 = vunpack.c.l.b16 %v1529
      %v1546 = vunpack.c.l.b16 %v1530
      %v1547 = vunpack.c.l.b16 %v1531
      %v1548 = vunpack.c.l.b16 %v1532
      %v1549 = vunpack.c.l.b16 %v1533
      %v1550 = vunpack.c.l.b16 %v1534
      %v1551 = vunpack.c.l.b16 %v1535
      %v1552 = vunpack.c.l.b16 %v1536
      %v1553 = vpack.c.b16 %v1546, %v1545
      %v1554 = vpack.c.b16 %v1548, %v1547
      %v1555 = vpack.c.b16 %v1550, %v1549
      %v1556 = vpack.c.b16 %v1552, %v1551
      %v1562 = vsel %vm398, %v1527, 0
      %1564 = vmatprep.subr.bf16.mxu0 0
      %1565 = vmatpush1.bf16.msra.mxu0 %v1553
      %1566 = vmatprep.subr.bf16.mxu0 0
      %1567 = vmatpush1.bf16.msra.mxu0 %v1554
      %1568 = vmatprep.subr.bf16.mxu0 0
      %1569 = vmatpush1.bf16.msra.mxu0 %v1555
      %1570 = vmatprep.subr.bf16.mxu0 0
      %1571 = vmatpush1.bf16.msra.mxu0 %v1556
      %1572 = vmatprep.subr.bf16.mxu0 0
      %1573 = vmatpush1.bf16.msra.mxu0 0
      %1574 = vmatprep.subr.bf16.mxu0 0
      %1575 = vmatpush1.bf16.msra.mxu0 0
      %1576 = vmatprep.subr.bf16.mxu0 0
      %1577 = vmatpush1.bf16.msra.mxu0 0
      %1578 = vmatprep.subr.bf16.mxu0 0
      %1579 = vmatpush1.bf16.msra.mxu0 0
      %1580 = vmatprep.subr.bf16.mxu0 0
      %1581 = vmatpush1.bf16.msra.mxu0 0
      %1582 = vmatprep.subr.bf16.mxu0 0
      %1583 = vmatpush1.bf16.msra.mxu0 0
      %1584 = vmatprep.subr.bf16.mxu0 0
      %1585 = vmatpush1.bf16.msra.mxu0 0
      %1586 = vmatprep.subr.bf16.mxu0 0
      %1587 = vmatpush1.bf16.msra.mxu0 0
      %1588 = vmatprep.subr.bf16.mxu0 0
      %1589 = vmatpush1.bf16.msra.mxu0 0
      %1590 = vmatprep.subr.bf16.mxu0 0
      %1591 = vmatpush1.bf16.msra.mxu0 0
      %1592 = vmatprep.subr.bf16.mxu0 0
      %1593 = vmatpush1.bf16.msra.mxu0 0
      %1594 = vmatprep.subr.bf16.mxu0 0
      %1595 = vmatpush1.bf16.msra.mxu0 0
      %1596 = vmatprep.mubr.bf16.mxu0 0
      %1597 = vmatmul.mubr.bf16.gmra.mrb[0].mxu0 %v406
      %v1598 = vpop.f32.mrb[0].mxu0
      %v1599 = vadd.f32 0.0, %v1598
      %v1600 = vpop.f32.mrb[0].mxu0
      %v1601 = vpop.f32.mrb[0].mxu0
      %v1602 = vadd.f32 0.0, %v1601
      %v1603 = vpop.f32.mrb[0].mxu0
      %1604 = vmatprep.mubr.bf16.mxu0 0
      %1605 = vmatmul.mubr.bf16.gmra.mrb[0].mxu0 %v409
      %v1606 = vpop.f32.mrb[0].mxu0
      %v1607 = vadd.f32 0.0, %v1606
      %v1608 = vpop.f32.mrb[0].mxu0
      %v1609 = vpop.f32.mrb[0].mxu0
      %v1610 = vadd.f32 0.0, %v1609
      %v1611 = vpop.f32.mrb[0].mxu0
      %1612 = vmatprep.mubr.bf16.mxu0 0
      %1613 = vmatmul.mubr.bf16.gmra.mrb[0].mxu0 %v412
      %v1614 = vpop.f32.mrb[0].mxu0
      %v1615 = vadd.f32 0.0, %v1614
      %v1616 = vpop.f32.mrb[0].mxu0
      %v1617 = vpop.f32.mrb[0].mxu0
      %v1618 = vadd.f32 0.0, %v1617
      %v1619 = vpop.f32.mrb[0].mxu0
      %1620 = vmatprep.mubr.bf16.mxu0 0
      %1621 = vmatmul.mubr.bf16.gmra.mrb[0].mxu0 %v415
      %v1622 = vpop.f32.mrb[0].mxu0
      %v1623 = vadd.f32 0.0, %v1622
      %v1624 = vpop.f32.mrb[0].mxu0
      %v1625 = vpop.f32.mrb[0].mxu0
      %v1626 = vadd.f32 0.0, %v1625
      %v1627 = vpop.f32.mrb[0].mxu0
      %1628 = vmatprep.mubr.bf16.mxu0 0
      %1629 = vmatmul.mubr.bf16.gmra.mrb[0].mxu0 %v418
      %v1630 = vpop.f32.mrb[0].mxu0
      %v1631 = vadd.f32 0.0, %v1630
      %v1632 = vpop.f32.mrb[0].mxu0
      %v1633 = vpop.f32.mrb[0].mxu0
      %v1634 = vadd.f32 0.0, %v1633
      %v1635 = vpop.f32.mrb[0].mxu0
      %1636 = vmatprep.mubr.bf16.mxu0 0
      %1637 = vmatmul.mubr.bf16.gmra.mrb[0].mxu0 %v421
      %v1638 = vpop.f32.mrb[0].mxu0
      %v1639 = vadd.f32 0.0, %v1638
      %v1640 = vpop.f32.mrb[0].mxu0
      %v1641 = vpop.f32.mrb[0].mxu0
      %v1642 = vadd.f32 0.0, %v1641
      %v1643 = vpop.f32.mrb[0].mxu0
      %1644 = vmatprep.mubr.bf16.mxu0 0
      %1645 = vmatmul.mubr.bf16.gmra.mrb[0].mxu0 %v1095
      %v1646 = vpop.f32.mrb[0].mxu0
      %v1647 = vadd.f32 0.0, %v1646
      %v1648 = vpop.f32.mrb[0].mxu0
      %v1649 = vpop.f32.mrb[0].mxu0
      %v1650 = vadd.f32 0.0, %v1649
      %v1651 = vpop.f32.mrb[0].mxu0
      %1652 = vmatprep.mubr.bf16.mxu0 0
      %1653 = vmatmul.mubr.bf16.gmra.mrb[0].mxu0 %v1562
      %v1654 = vpop.f32.mrb[0].mxu0
      %v1655 = vadd.f32 0.0, %v1654
      %v1656 = vpop.f32.mrb[0].mxu0
      %v1657 = vpop.f32.mrb[0].mxu0
      %v1658 = vadd.f32 0.0, %v1657
      %v1659 = vpop.f32.mrb[0].mxu0
      %1660 = vdwg.mxu0
      %v1661 = vadd.f32 %v1501, %v1599
      %v1662 = vadd.f32 %v1502, %v1602
      %v1663 = vadd.f32 %v1503, %v1607
      %v1664 = vadd.f32 %v1504, %v1610
      %v1665 = vadd.f32 %v1505, %v1615
      %v1666 = vadd.f32 %v1506, %v1618
      %v1667 = vadd.f32 %v1507, %v1623
      %v1668 = vadd.f32 %v1508, %v1626
      %v1669 = vadd.f32 %v1509, %v1631
      %v1670 = vadd.f32 %v1510, %v1634
      %v1671 = vadd.f32 %v1511, %v1639
      %v1672 = vadd.f32 %v1512, %v1642
      %v1673 = vadd.f32 %v1513, %v1647
      %v1674 = vadd.f32 %v1514, %v1650
      %v1675 = vadd.f32 %v1515, %v1655
      %v1676 = vadd.f32 %v1516, %v1658
      %v1677 = vrot.slane %v257, 2
      %v1678 = vrot.slane %v258, 2
      %v1679 = vsel %vm665, %v1677, %v1678
      %v1680 = vrot.slane %v259, 2
      %v1681 = vsel %vm665, %v1678, %v1680
      %v1684 = vpack.c.bf16 %v1681, %v1679
      %s1685 = scalar_lea.vmem %s1, 256
      %v1686 = vld [vmem:[%s1685] sm:$0xf]
      %v1687 = vld [vmem:[%s1685 + $0x4] sm:$0xf]
      %v1688 = vld [vmem:[%s1685 + $0x8] sm:$0xf]
      %v1689 = vld [vmem:[%s1685 + $0xc] sm:$0xf]
      %v1690 = vld [vmem:[%s1685 + $0x10] sm:$0xf]
      %v1691 = vld [vmem:[%s1685 + $0x14] sm:$0xf]
      %v1692 = vld [vmem:[%s1685 + $0x18] sm:$0xf]
      %v1693 = vld [vmem:[%s1685 + $0x1c] sm:$0xf]
      %v1702 = vunpack.c.l.b16 %v1686
      %v1703 = vunpack.c.l.b16 %v1687
      %v1704 = vunpack.c.l.b16 %v1688
      %v1705 = vunpack.c.l.b16 %v1689
      %v1706 = vunpack.c.l.b16 %v1690
      %v1707 = vunpack.c.l.b16 %v1691
      %v1708 = vunpack.c.l.b16 %v1692
      %v1709 = vunpack.c.l.b16 %v1693
      %v1710 = vpack.c.b16 %v1703, %v1702
      %v1711 = vpack.c.b16 %v1705, %v1704
      %v1712 = vpack.c.b16 %v1707, %v1706
      %v1713 = vpack.c.b16 %v1709, %v1708
      %v1719 = vsel %vm398, %v1684, 0
      %1721 = vmatprep.subr.bf16.mxu0 0
      %1722 = vmatpush1.bf16.msra.mxu0 %v1710
      %1723 = vmatprep.subr.bf16.mxu0 0
      %1724 = vmatpush1.bf16.msra.mxu0 %v1711
      %1725 = vmatprep.subr.bf16.mxu0 0
      %1726 = vmatpush1.bf16.msra.mxu0 %v1712
      %1727 = vmatprep.subr.bf16.mxu0 0
      %1728 = vmatpush1.bf16.msra.mxu0 %v1713
      %1729 = vmatprep.subr.bf16.mxu0 0
      %1730 = vmatpush1.bf16.msra.mxu0 0
      %1731 = vmatprep.subr.bf16.mxu0 0
      %1732 = vmatpush1.bf16.msra.mxu0 0
      %1733 = vmatprep.subr.bf16.mxu0 0
      %1734 = vmatpush1.bf16.msra.mxu0 0
      %1735 = vmatprep.subr.bf16.mxu0 0
      %1736 = vmatpush1.bf16.msra.mxu0 0
      %1737 = vmatprep.subr.bf16.mxu0 0
      %1738 = vmatpush1.bf16.msra.mxu0 0
      %1739 = vmatprep.subr.bf16.mxu0 0
      %1740 = vmatpush1.bf16.msra.mxu0 0
      %1741 = vmatprep.subr.bf16.mxu0 0
      %1742 = vmatpush1.bf16.msra.mxu0 0
      %1743 = vmatprep.subr.bf16.mxu0 0
      %1744 = vmatpush1.bf16.msra.mxu0 0
      %1745 = vmatprep.subr.bf16.mxu0 0
      %1746 = vmatpush1.bf16.msra.mxu0 0
      %1747 = vmatprep.subr.bf16.mxu0 0
      %1748 = vmatpush1.bf16.msra.mxu0 0
      %1749 = vmatprep.subr.bf16.mxu0 0
      %1750 = vmatpush1.bf16.msra.mxu0 0
      %1751 = vmatprep.subr.bf16.mxu0 0
      %1752 = vmatpush1.bf16.msra.mxu0 0
      %1753 = vmatprep.mubr.bf16.mxu0 0
      %1754 = vmatmul.mubr.bf16.gmra.mrb[0].mxu0 %v770
      %v1755 = vpop.f32.mrb[0].mxu0
      %v1756 = vadd.f32 0.0, %v1755
      %v1757 = vpop.f32.mrb[0].mxu0
      %v1758 = vpop.f32.mrb[0].mxu0
      %v1759 = vadd.f32 0.0, %v1758
      %v1760 = vpop.f32.mrb[0].mxu0
      %1761 = vmatprep.mubr.bf16.mxu0 0
      %1762 = vmatmul.mubr.bf16.gmra.mrb[0].mxu0 %v773
      %v1763 = vpop.f32.mrb[0].mxu0
      %v1764 = vadd.f32 0.0, %v1763
      %v1765 = vpop.f32.mrb[0].mxu0
      %v1766 = vpop.f32.mrb[0].mxu0
      %v1767 = vadd.f32 0.0, %v1766
      %v1768 = vpop.f32.mrb[0].mxu0
      %1769 = vmatprep.mubr.bf16.mxu0 0
      %1770 = vmatmul.mubr.bf16.gmra.mrb[0].mxu0 %v776
      %v1771 = vpop.f32.mrb[0].mxu0
      %v1772 = vadd.f32 0.0, %v1771
      %v1773 = vpop.f32.mrb[0].mxu0
      %v1774 = vpop.f32.mrb[0].mxu0
      %v1775 = vadd.f32 0.0, %v1774
      %v1776 = vpop.f32.mrb[0].mxu0
      %1777 = vmatprep.mubr.bf16.mxu0 0
      %1778 = vmatmul.mubr.bf16.gmra.mrb[0].mxu0 %v779
      %v1779 = vpop.f32.mrb[0].mxu0
      %v1780 = vadd.f32 0.0, %v1779
      %v1781 = vpop.f32.mrb[0].mxu0
      %v1782 = vpop.f32.mrb[0].mxu0
      %v1783 = vadd.f32 0.0, %v1782
      %v1784 = vpop.f32.mrb[0].mxu0
      %1785 = vmatprep.mubr.bf16.mxu0 0
      %1786 = vmatmul.mubr.bf16.gmra.mrb[0].mxu0 %v782
      %v1787 = vpop.f32.mrb[0].mxu0
      %v1788 = vadd.f32 0.0, %v1787
      %v1789 = vpop.f32.mrb[0].mxu0
      %v1790 = vpop.f32.mrb[0].mxu0
      %v1791 = vadd.f32 0.0, %v1790
      %v1792 = vpop.f32.mrb[0].mxu0
      %1793 = vmatprep.mubr.bf16.mxu0 0
      %1794 = vmatmul.mubr.bf16.gmra.mrb[0].mxu0 %v785
      %v1795 = vpop.f32.mrb[0].mxu0
      %v1796 = vadd.f32 0.0, %v1795
      %v1797 = vpop.f32.mrb[0].mxu0
      %v1798 = vpop.f32.mrb[0].mxu0
      %v1799 = vadd.f32 0.0, %v1798
      %v1800 = vpop.f32.mrb[0].mxu0
      %1801 = vmatprep.mubr.bf16.mxu0 0
      %1802 = vmatmul.mubr.bf16.gmra.mrb[0].mxu0 %v1252
      %v1803 = vpop.f32.mrb[0].mxu0
      %v1804 = vadd.f32 0.0, %v1803
      %v1805 = vpop.f32.mrb[0].mxu0
      %v1806 = vpop.f32.mrb[0].mxu0
      %v1807 = vadd.f32 0.0, %v1806
      %v1808 = vpop.f32.mrb[0].mxu0
      %1809 = vmatprep.mubr.bf16.mxu0 0
      %1810 = vmatmul.mubr.bf16.gmra.mrb[0].mxu0 %v1719
      %v1811 = vpop.f32.mrb[0].mxu0
      %v1812 = vadd.f32 0.0, %v1811
      %v1813 = vpop.f32.mrb[0].mxu0
      %v1814 = vpop.f32.mrb[0].mxu0
      %v1815 = vadd.f32 0.0, %v1814
      %v1816 = vpop.f32.mrb[0].mxu0
      %1817 = vdwg.mxu0
      %v1818 = vadd.f32 %v1661, %v1756
      %v1819 = vadd.f32 %v1662, %v1759
      %v1820 = vadd.f32 %v1663, %v1764
      %v1821 = vadd.f32 %v1664, %v1767
      %v1822 = vadd.f32 %v1665, %v1772
      %v1823 = vadd.f32 %v1666, %v1775
      %v1824 = vadd.f32 %v1667, %v1780
      %v1825 = vadd.f32 %v1668, %v1783
      %v1826 = vadd.f32 %v1669, %v1788
      %v1827 = vadd.f32 %v1670, %v1791
      %v1828 = vadd.f32 %v1671, %v1796
      %v1829 = vadd.f32 %v1672, %v1799
      %v1830 = vadd.f32 %v1673, %v1804
      %v1831 = vadd.f32 %v1674, %v1807
      %v1832 = vadd.f32 %v1675, %v1812
      %v1833 = vadd.f32 %v1676, %v1815
      %v1834 = vld [vmem:[%s2] sm:$0x1]
      %v1836 = vlaneseq
      %v1837 = vshrl.u32 %v1836, 7
      %v1838 = vsub.s32 0, %v1837
      %v1839 = vrot.slane %v1834, %v1838
      %v1841 = vadd.f32 %v1818, %v1839
      %v1842 = vadd.f32 %v1819, %v1839
      %v1843 = vadd.f32 %v1820, %v1839
      %v1844 = vadd.f32 %v1821, %v1839
      %v1845 = vadd.f32 %v1822, %v1839
      %v1846 = vadd.f32 %v1823, %v1839
      %v1847 = vadd.f32 %v1824, %v1839
      %v1848 = vadd.f32 %v1825, %v1839
      %v1849 = vadd.f32 %v1826, %v1839
      %v1850 = vadd.f32 %v1827, %v1839
      %v1851 = vadd.f32 %v1828, %v1839
      %v1852 = vadd.f32 %v1829, %v1839
      %v1853 = vadd.f32 %v1830, %v1839
      %v1854 = vadd.f32 %v1831, %v1839
      %v1855 = vadd.f32 %v1832, %v1839
      %v1856 = vadd.f32 %v1833, %v1839
      %s1857 = sld [smem:[#allocation2]]
      %vm1858 = vcmp.ge.f32.partialorder %v1841, 0.0
      %vm1859 = vcmp.ge.f32.partialorder %v1842, 0.0
      %vm1860 = vcmp.ge.f32.partialorder %v1843, 0.0
      %vm1861 = vcmp.ge.f32.partialorder %v1844, 0.0
      %vm1862 = vcmp.ge.f32.partialorder %v1845, 0.0
      %vm1863 = vcmp.ge.f32.partialorder %v1846, 0.0
      %vm1864 = vcmp.ge.f32.partialorder %v1847, 0.0
      %vm1865 = vcmp.ge.f32.partialorder %v1848, 0.0
      %vm1866 = vcmp.ge.f32.partialorder %v1849, 0.0
      %vm1867 = vcmp.ge.f32.partialorder %v1850, 0.0
      %vm1868 = vcmp.ge.f32.partialorder %v1851, 0.0
      %vm1869 = vcmp.ge.f32.partialorder %v1852, 0.0
      %vm1870 = vcmp.ge.f32.partialorder %v1853, 0.0
      %vm1871 = vcmp.ge.f32.partialorder %v1854, 0.0
      %vm1872 = vcmp.ge.f32.partialorder %v1855, 0.0
      %vm1873 = vcmp.ge.f32.partialorder %v1856, 0.0
      %v1874 = vstv %s1857
      %v1875 = vmul.f32 %v1874, %v1841
      %v1876 = vmul.f32 %v1874, %v1842
      %v1877 = vmul.f32 %v1874, %v1843
      %v1878 = vmul.f32 %v1874, %v1844
      %v1879 = vmul.f32 %v1874, %v1845
      %v1880 = vmul.f32 %v1874, %v1846
      %v1881 = vmul.f32 %v1874, %v1847
      %v1882 = vmul.f32 %v1874, %v1848
      %v1883 = vmul.f32 %v1874, %v1849
      %v1884 = vmul.f32 %v1874, %v1850
      %v1885 = vmul.f32 %v1874, %v1851
      %v1886 = vmul.f32 %v1874, %v1852
      %v1887 = vmul.f32 %v1874, %v1853
      %v1888 = vmul.f32 %v1874, %v1854
      %v1889 = vmul.f32 %v1874, %v1855
      %v1890 = vmul.f32 %v1874, %v1856
      %v1891 = vsel %vm1858, %v1841, %v1875
      %v1892 = vsel %vm1859, %v1842, %v1876
      %v1893 = vsel %vm1860, %v1843, %v1877
      %v1894 = vsel %vm1861, %v1844, %v1878
      %v1895 = vsel %vm1862, %v1845, %v1879
      %v1896 = vsel %vm1863, %v1846, %v1880
      %v1897 = vsel %vm1864, %v1847, %v1881
      %v1898 = vsel %vm1865, %v1848, %v1882
      %v1899 = vsel %vm1866, %v1849, %v1883
      %v1900 = vsel %vm1867, %v1850, %v1884
      %v1901 = vsel %vm1868, %v1851, %v1885
      %v1902 = vsel %vm1869, %v1852, %v1886
      %v1903 = vsel %vm1870, %v1853, %v1887
      %v1904 = vsel %vm1871, %v1854, %v1888
      %v1905 = vsel %vm1872, %v1855, %v1889
      %v1906 = vsel %vm1873, %v1856, %v1890
      %vm1907 = vcmask 261120
      %1908 = vst.msk [vmem:[%s198] sm:$0xff] %vm1907, %v1891
      %1909 = vst.msk [vmem:[%s198 + $0x8] sm:$0xff] %vm1907, %v1892
      %1910 = vst.msk [vmem:[%s198 + $0x10] sm:$0xff] %vm1907, %v1893
      %1911 = vst.msk [vmem:[%s198 + $0x18] sm:$0xff] %vm1907, %v1894
      %1912 = vst.msk [vmem:[%s198 + $0x20] sm:$0xff] %vm1907, %v1895
      %1913 = vst.msk [vmem:[%s198 + $0x28] sm:$0xff] %vm1907, %v1896
      %1914 = vst.msk [vmem:[%s198 + $0x30] sm:$0xff] %vm1907, %v1897
      %1915 = vst.msk [vmem:[%s198 + $0x38] sm:$0xff] %vm1907, %v1898
      %1916 = vst.msk [vmem:[%s198 + $0x40] sm:$0xff] %vm1907, %v1899
      %1917 = vst.msk [vmem:[%s198 + $0x48] sm:$0xff] %vm1907, %v1900
      %1918 = vst.msk [vmem:[%s198 + $0x50] sm:$0xff] %vm1907, %v1901
      %1919 = vst.msk [vmem:[%s198 + $0x58] sm:$0xff] %vm1907, %v1902
      %1920 = vst.msk [vmem:[%s198 + $0x60] sm:$0xff] %vm1907, %v1903
      %1921 = vst.msk [vmem:[%s198 + $0x68] sm:$0xff] %vm1907, %v1904
      %1922 = vst.msk [vmem:[%s198 + $0x70] sm:$0xff] %vm1907, %v1905
      %1923 = vst.msk [vmem:[%s198 + $0x78] sm:$0xff] %vm1907, %v1906
      %p1924 = scmp.lt.s32.totalorder %s16, 3
      %s1925 = scalar_select %p1924, %s16, 3
      %s1926 = smul.addr %s1925, 16
      %s1927 = smul.addr %s1926, 8
      %s1928 = scalar_lea.vmem %s4, %s1927
      // Predicated region
      $region37: #{local_filter_operation.11} parent=35 // pred_check
        %p1929 = pneg %p123
      $region38: #{local_filter_operation.11} parent=35 // pred_check_branch
        %1931 = sbr.rel (%p1929) target = $region40
      $region39: #{local_filter_operation.11} parent=35 // pred_region
        _
      $region40: #{local_filter_operation.11} parent=35 // pred_fallthru
        _
    $region36: #{local_filter_operation.11} parent=5 // pred_fallthru
      _
    %p1932 = scmp.le.s32.totalorder 2, %s11
    // Predicated region
    $region41: #{local_filter_operation.11} parent=5 // pred_check
      %p1933 = pneg %p1932
    $region42: #{local_filter_operation.11} parent=5 // pred_check_branch
      %1935 = sbr.rel (%p1933) target = $region44
    $region43: #{local_filter_operation.11} parent=5 // pred_region
      %s1936 = ssub.s32 %s11, 2
      // Predicated region
      $region45: #{local_filter_operation.11} parent=43 // pred_check
        %p1937 = pneg %p129
      $region46: #{local_filter_operation.11} parent=43 // pred_check_branch
        %1939 = sbr.rel (%p1937) target = $region48
      $region47: #{local_filter_operation.11} parent=43 // pred_region
        %p1940 = scmp.lt.s32.totalorder %s17, 3
        %s1941 = scalar_select %p1940, %s17, 3
        %s1942 = smul.addr %s1941, 16
        %s1943 = smul.addr %s1942, 8
        %s1944 = scalar_lea.vmem %s4, %s1943
      $region48: #{local_filter_operation.11} parent=43 // pred_fallthru
        _
    $region44: #{local_filter_operation.11} parent=5 // pred_fallthru
      _
  $region6: #{local_filter_operation.11} parent=0 // loop_footer
    %s15 = sadd.s32 1, %s11
  $region7: #{local_filter_operation.11} parent=0 // loop_footer_branch
    %10 = sbr.rel target = $region3
  $region8: #{local_filter_operation.11} parent=0 // loop_exit
    _

// kernel: local_filter_operation.13
$region0: #{local_filter_operation.13}
  #allocation0 [shape = 'u32[]', space=smem, size = 0x4, offset = 0x4, fixed_abs, tag = 'smem constant byte address 0x4 - core index']
  #allocation1 [shape = 'u32[144,128]{1,0:T(1,128)}', space=vmem, size = 0x12000, scoped, tag = 'internal scratch']
  %s0 = inlined_call_operand.vmem [shape: bf16[4,10,18,64], index: 0, kind: input, shape index: {}]
  %s1 = inlined_call_operand.vmem [shape: f32[4,10,18,4], index: 1, kind: input, shape index: {}]
  %s2 = inlined_call_operand.vmem [shape: bf16[9,64,36], index: 2, kind: input, shape index: {}]
  %s3 = inlined_call_operand.vmem [shape: f32[1,36], index: 3, kind: input, shape index: {}]
  %s4 = inlined_call_operand.vmem [shape: f32[4,128,1], index: 4, kind: output, shape index: {}]
  %s5 = sld [smem:[#allocation0]]
  $region49: #{local_filter_operation.13} parent=0
    _
  %s7 = ssub.s32 1, %s5
  %s8 = scalar_select 0, %s7, %s5
  loop: start=0, step=1, limit=6
  $region2: #{local_filter_operation.13} parent=0 // loop_pre_header
    _
  $region3: #{local_filter_operation.13} parent=0 // loop_header
    %s10 = sphi 0, %s14
    %p11 = scmp.ge.s32.totalorder %s10, 6
    %s20 = sphi 0, %s22
    %s23 = sphi 0, %s20
    %s24 = sphi 0, %s23
    %s40 = sphi 0, %s24
    %s46 = sphi 0, %s48
    %s49 = sphi 0, %s46
    %s50 = sphi 0, %s49
    %s66 = sphi 0, %s50
    %s70 = sphi 0, %s70
    %s72 = sphi 0, %s70
    %s73 = sphi 0, %s72
    %s87 = sphi 0, %s73
    %s91 = sphi 0, %s91
    %s93 = sphi 0, %s91
    %s94 = sphi 0, %s93
    %s108 = sphi 0, %s94
    %s114 = sphi 0, %s116
    %s117 = sphi 0, %s114
    %s118 = sphi 0, %s117
    %s134 = sphi 0, %s118
  $region4: #{local_filter_operation.13} parent=0 // loop_header_branch
    %13 = sbr.rel (%p11) target = $region8
  $region5: #{local_filter_operation.13} parent=0 // loop_body
    %s15 = ssub.s32 %s10, 1
    %s16 = ssub.s32 %s10, 2
    %s17 = sadd.s32 %s10, 1
    %s18 = ssub.s32 %s10, %s17
    %p19 = scmp.eq.s32.totalorder %s18, 0
    %s21 = sadd.s32 %s20, 1
    %s22 = scalar_select %p19, %s20, %s21
    %p25 = pneg %p19
    %p26 = scmp.eq.s32.totalorder %s10, 3
    %p27 = por %p25, %p26
    %p28 = scmp.ne.s32.totalorder %s20, %s23
    %p29 = scmp.eq.s32.totalorder %s10, 0
    %p30 = por %p28, %p29
    %p31 = scmp.ne.s32.totalorder %s20, %s23
    %p32 = scmp.eq.s32.totalorder %s15, 3
    %p33 = por %p31, %p32
    %p34 = scmp.ne.s32.totalorder %s23, %s24
    %p35 = scmp.eq.s32.totalorder %s15, 0
    %p36 = por %p34, %p35
    %p37 = scmp.ne.s32.totalorder %s23, %s24
    %p38 = scmp.eq.s32.totalorder %s16, 3
    %p39 = por %p37, %p38
    %p41 = scmp.ne.s32.totalorder %s24, %s40
    %p42 = scmp.eq.s32.totalorder %s16, 0
    %p43 = por %p41, %p42
    %s44 = ssub.s32 %s10, %s17
    %p45 = scmp.eq.s32.totalorder %s44, 0
    %s47 = sadd.s32 %s46, 1
    %s48 = scalar_select %p45, %s46, %s47
    %p51 = pneg %p45
    %p52 = scmp.eq.s32.totalorder %s10, 3
    %p53 = por %p51, %p52
    %p54 = scmp.ne.s32.totalorder %s46, %s49
    %p55 = scmp.eq.s32.totalorder %s10, 0
    %p56 = por %p54, %p55
    %p57 = scmp.ne.s32.totalorder %s46, %s49
    %p58 = scmp.eq.s32.totalorder %s15, 3
    %p59 = por %p57, %p58
    %p60 = scmp.ne.s32.totalorder %s49, %s50
    %p61 = scmp.eq.s32.totalorder %s15, 0
    %p62 = por %p60, %p61
    %p63 = scmp.ne.s32.totalorder %s49, %s50
    %p64 = scmp.eq.s32.totalorder %s16, 3
    %p65 = por %p63, %p64
    %p67 = scmp.ne.s32.totalorder %s50, %s66
    %p68 = scmp.eq.s32.totalorder %s16, 0
    %p69 = por %p67, %p68
    %s71 = sadd.s32 %s70, 1
    %p74 = scmp.eq.s32.totalorder %s10, 3
    %p75 = scmp.ne.s32.totalorder %s70, %s72
    %p76 = scmp.eq.s32.totalorder %s10, 0
    %p77 = por %p75, %p76
    %p78 = scmp.ne.s32.totalorder %s70, %s72
    %p79 = scmp.eq.s32.totalorder %s15, 3
    %p80 = por %p78, %p79
    %p81 = scmp.ne.s32.totalorder %s72, %s73
    %p82 = scmp.eq.s32.totalorder %s15, 0
    %p83 = por %p81, %p82
    %p84 = scmp.ne.s32.totalorder %s72, %s73
    %p85 = scmp.eq.s32.totalorder %s16, 3
    %p86 = por %p84, %p85
    %p88 = scmp.ne.s32.totalorder %s73, %s87
    %p89 = scmp.eq.s32.totalorder %s16, 0
    %p90 = por %p88, %p89
    %s92 = sadd.s32 %s91, 1
    %p95 = scmp.eq.s32.totalorder %s10, 3
    %p96 = scmp.ne.s32.totalorder %s91, %s93
    %p97 = scmp.eq.s32.totalorder %s10, 0
    %p98 = por %p96, %p97
    %p99 = scmp.ne.s32.totalorder %s91, %s93
    %p100 = scmp.eq.s32.totalorder %s15, 3
    %p101 = por %p99, %p100
    %p102 = scmp.ne.s32.totalorder %s93, %s94
    %p103 = scmp.eq.s32.totalorder %s15, 0
    %p104 = por %p102, %p103
    %p105 = scmp.ne.s32.totalorder %s93, %s94
    %p106 = scmp.eq.s32.totalorder %s16, 3
    %p107 = por %p105, %p106
    %p109 = scmp.ne.s32.totalorder %s94, %s108
    %p110 = scmp.eq.s32.totalorder %s16, 0
    %p111 = por %p109, %p110
    %s112 = ssub.s32 %s10, %s17
    %p113 = scmp.eq.s32.totalorder %s112, 0
    %s115 = sadd.s32 %s114, 1
    %s116 = scalar_select %p113, %s114, %s115
    %p119 = pneg %p113
    %p120 = scmp.eq.s32.totalorder %s10, 3
    %p121 = por %p119, %p120
    %p122 = scmp.ne.s32.totalorder %s114, %s117
    %p123 = scmp.eq.s32.totalorder %s10, 0
    %p124 = por %p122, %p123
    %p125 = scmp.ne.s32.totalorder %s114, %s117
    %p126 = scmp.eq.s32.totalorder %s15, 3
    %p127 = por %p125, %p126
    %p128 = scmp.ne.s32.totalorder %s117, %s118
    %p129 = scmp.eq.s32.totalorder %s15, 0
    %p130 = por %p128, %p129
    %p131 = scmp.ne.s32.totalorder %s117, %s118
    %p132 = scmp.eq.s32.totalorder %s16, 3
    %p133 = por %p131, %p132
    %p135 = scmp.ne.s32.totalorder %s118, %s134
    %p136 = scmp.eq.s32.totalorder %s16, 0
    %p137 = por %p135, %p136
    %p138 = scmp.le.s32.totalorder 1, %s10
    %p139 = scmp.lt.s32.totalorder %s10, 5
    %p140 = pnand %p138, %p139
    %p141 = pneg %p140
    // Predicated region
    $region9: #{local_filter_operation.13} parent=5 // pred_check
      _
    $region10: #{local_filter_operation.13} parent=5 // pred_check_branch
      %143 = sbr.rel (%p140) target = $region12
    $region11: #{local_filter_operation.13} parent=5 // pred_region
      %s144 = ssub.s32 %s10, 1
      // Predicated region
      $region13: #{local_filter_operation.13} parent=11 // pred_check
        %p145 = pneg %p83
      $region14: #{local_filter_operation.13} parent=11 // pred_check_branch
        %147 = sbr.rel (%p145) target = $region16
      $region15: #{local_filter_operation.13} parent=11 // pred_region
        _
      $region16: #{local_filter_operation.13} parent=11 // pred_fallthru
        _
      // Predicated region
      $region17: #{local_filter_operation.13} parent=11 // pred_check
        %p148 = pneg %p104
      $region18: #{local_filter_operation.13} parent=11 // pred_check_branch
        %150 = sbr.rel (%p148) target = $region20
      $region19: #{local_filter_operation.13} parent=11 // pred_region
        _
      $region20: #{local_filter_operation.13} parent=11 // pred_fallthru
        _
    $region12: #{local_filter_operation.13} parent=5 // pred_fallthru
      _
    %p151 = scmp.lt.s32.totalorder %s10, 4
    // Predicated region
    $region21: #{local_filter_operation.13} parent=5 // pred_check
      %p152 = pneg %p151
    $region22: #{local_filter_operation.13} parent=5 // pred_check_branch
      %154 = sbr.rel (%p152) target = $region24
    $region23: #{local_filter_operation.13} parent=5 // pred_region
      // Predicated region
      $region25: #{local_filter_operation.13} parent=23 // pred_check
        %p155 = pneg %p30
      $region26: #{local_filter_operation.13} parent=23 // pred_check_branch
        %157 = sbr.rel (%p155) target = $region28
      $region27: #{local_filter_operation.13} parent=23 // pred_region
        %p158 = scmp.lt.s32.totalorder %s10, 3
        %s159 = scalar_select %p158, %s10, 3
        %s160 = smul.addr %s159, 30
        %s161 = smul.addr %s160, 4
        %s162 = scalar_lea.vmem %s0, %s161
      $region28: #{local_filter_operation.13} parent=23 // pred_fallthru
        _
      // Predicated region
      $region29: #{local_filter_operation.13} parent=23 // pred_check
        %p163 = pneg %p56
      $region30: #{local_filter_operation.13} parent=23 // pred_check_branch
        %165 = sbr.rel (%p163) target = $region32
      $region31: #{local_filter_operation.13} parent=23 // pred_region
        %p166 = scmp.lt.s32.totalorder %s10, 3
        %s167 = scalar_select %p166, %s10, 3
        %s168 = smul.addr %s167, 30
        %s169 = smul.addr %s168, 8
        %s170 = scalar_lea.vmem %s1, %s169
      $region32: #{local_filter_operation.13} parent=23 // pred_fallthru
        _
    $region24: #{local_filter_operation.13} parent=5 // pred_fallthru
      _
    %p171 = scmp.le.s32.totalorder 1, %s10
    %p172 = scmp.lt.s32.totalorder %s10, 5
    %p173 = pnand %p171, %p172
    %p174 = pneg %p173
    // Predicated region
    $region33: #{local_filter_operation.13} parent=5 // pred_check
      _
    $region34: #{local_filter_operation.13} parent=5 // pred_check_branch
      %176 = sbr.rel (%p173) target = $region36
    $region35: #{local_filter_operation.13} parent=5 // pred_region
      %s177 = ssub.s32 %s10, 1
      %p178 = scmp.lt.s32.totalorder %s15, 3
      %s179 = scalar_select %p178, %s15, 3
      %s180 = smul.addr %s179, 30
      %s181 = smul.addr %s180, 4
      %s182 = scalar_lea.vmem %s0, %s181
      %p183 = pneg %p36
      %p184 = pneg %p33
      %p185 = scmp.lt.s32.totalorder %s15, 3
      %s186 = scalar_select %p185, %s15, 3
      %s187 = smul.addr %s186, 30
      %s188 = smul.addr %s187, 8
      %s189 = scalar_lea.vmem %s1, %s188
      %p190 = pneg %p62
      %p191 = pneg %p59
      %p192 = pneg %p83
      %p193 = pneg %p80
      %p194 = pneg %p104
      %p195 = pneg %p101
      %p196 = pneg %p130
      %p197 = pneg %p127
      %p198 = scmp.lt.s32.totalorder %s15, 3
      %s199 = scalar_select %p198, %s15, 3
      %s200 = smul.addr %s199, 16
      %s201 = smul.addr %s200, 8
      %s202 = scalar_lea.vmem %s4, %s201
      %p203 = scmp.lt.s32.totalorder %s15, 3
      %s204 = scalar_select %p203, %s15, 3
      %s205 = smul.addr %s204, 30
      %s206 = smul.addr %s205, 4
      %s207 = scalar_lea.vmem %s0, %s206
      %p208 = scmp.lt.s32.totalorder %s15, 3
      %s209 = scalar_select %p208, %s15, 3
      %s210 = smul.addr %s209, 30
      %s211 = smul.addr %s210, 8
      %s212 = scalar_lea.vmem %s1, %s211
      %p213 = scmp.lt.s32.totalorder %s15, 3
      %s214 = scalar_select %p213, %s15, 3
      %s215 = smul.addr %s214, 16
      %s216 = smul.addr %s215, 8
      %s217 = scalar_lea.vmem %s4, %s216
      %v219 = vld [vmem:[%s207] sm:$0xf]
      %v220 = vld [vmem:[%s207 + $0x4] sm:$0xf]
      %v221 = vld [vmem:[%s207 + $0x8] sm:$0x1]
      %v222 = vld [vmem:[%s207 + $0xc] sm:$0xf]
      %v223 = vld [vmem:[%s207 + $0x10] sm:$0xf]
      %v224 = vld [vmem:[%s207 + $0x14] sm:$0x1]
      %v225 = vld [vmem:[%s207 + $0x18] sm:$0xf]
      %v226 = vld [vmem:[%s207 + $0x1c] sm:$0xf]
      %v227 = vld [vmem:[%s207 + $0x20] sm:$0x1]
      %v228 = vld [vmem:[%s207 + $0x24] sm:$0xf]
      %v229 = vld [vmem:[%s207 + $0x28] sm:$0xf]
      %v230 = vld [vmem:[%s207 + $0x2c] sm:$0x1]
      %v231 = vld [vmem:[%s207 + $0x30] sm:$0xf]
      %v232 = vld [vmem:[%s207 + $0x34] sm:$0xf]
      %v233 = vld [vmem:[%s207 + $0x38] sm:$0x1]
      %v234 = vld [vmem:[%s207 + $0x3c] sm:$0xf]
      %v235 = vld [vmem:[%s207 + $0x40] sm:$0xf]
      %v236 = vld [vmem:[%s207 + $0x44] sm:$0x1]
      %v237 = vld [vmem:[%s207 + $0x48] sm:$0xf]
      %v238 = vld [vmem:[%s207 + $0x4c] sm:$0xf]
      %v239 = vld [vmem:[%s207 + $0x50] sm:$0x1]
      %v240 = vld [vmem:[%s207 + $0x54] sm:$0xf]
      %v241 = vld [vmem:[%s207 + $0x58] sm:$0xf]
      %v242 = vld [vmem:[%s207 + $0x5c] sm:$0x1]
      %v243 = vld [vmem:[%s207 + $0x60] sm:$0xf]
      %v244 = vld [vmem:[%s207 + $0x64] sm:$0xf]
      %v245 = vld [vmem:[%s207 + $0x68] sm:$0x1]
      %v246 = vld [vmem:[%s207 + $0x6c] sm:$0xf]
      %v247 = vld [vmem:[%s207 + $0x70] sm:$0xf]
      %v248 = vld [vmem:[%s207 + $0x74] sm:$0x1]
      %v249 = vunpack.c.l.bf16 %v219
      %v250 = vunpack.c.l.bf16 %v220
      %v251 = vunpack.c.l.bf16 %v221
      %v252 = vunpack.c.l.bf16 %v222
      %v253 = vunpack.c.l.bf16 %v223
      %v254 = vunpack.c.l.bf16 %v224
      %v255 = vunpack.c.l.bf16 %v225
      %v256 = vunpack.c.l.bf16 %v226
      %v257 = vunpack.c.l.bf16 %v227
      %v258 = vunpack.c.l.bf16 %v228
      %v259 = vunpack.c.l.bf16 %v229
      %v260 = vunpack.c.l.bf16 %v230
      %v261 = vunpack.c.l.bf16 %v231
      %v262 = vunpack.c.l.bf16 %v232
      %v263 = vunpack.c.l.bf16 %v233
      %v264 = vunpack.c.l.bf16 %v234
      %v265 = vunpack.c.l.bf16 %v235
      %v266 = vunpack.c.l.bf16 %v236
      %v267 = vunpack.c.l.bf16 %v237
      %v268 = vunpack.c.l.bf16 %v238
      %v269 = vunpack.c.l.bf16 %v239
      %v270 = vunpack.c.l.bf16 %v240
      %v271 = vunpack.c.l.bf16 %v241
      %v272 = vunpack.c.l.bf16 %v242
      %v273 = vunpack.c.l.bf16 %v243
      %v274 = vunpack.c.l.bf16 %v244
      %v275 = vunpack.c.l.bf16 %v245
      %v276 = vunpack.c.l.bf16 %v246
      %v277 = vunpack.c.l.bf16 %v247
      %v278 = vunpack.c.l.bf16 %v248
      %v279 = vld [vmem:[%s212] sm:$0xff]
      %v280 = vld [vmem:[%s212 + $0x8] sm:$0xff]
      %v281 = vld [vmem:[%s212 + $0x10] sm:$0x3]
      %v282 = vld [vmem:[%s212 + $0x18] sm:$0xff]
      %v283 = vld [vmem:[%s212 + $0x20] sm:$0xff]
      %v284 = vld [vmem:[%s212 + $0x28] sm:$0x3]
      %v285 = vld [vmem:[%s212 + $0x30] sm:$0xff]
      %v286 = vld [vmem:[%s212 + $0x38] sm:$0xff]
      %v287 = vld [vmem:[%s212 + $0x40] sm:$0x3]
      %v288 = vld [vmem:[%s212 + $0x48] sm:$0xff]
      %v289 = vld [vmem:[%s212 + $0x50] sm:$0xff]
      %v290 = vld [vmem:[%s212 + $0x58] sm:$0x3]
      %v291 = vld [vmem:[%s212 + $0x60] sm:$0xff]
      %v292 = vld [vmem:[%s212 + $0x68] sm:$0xff]
      %v293 = vld [vmem:[%s212 + $0x70] sm:$0x3]
      %v294 = vld [vmem:[%s212 + $0x78] sm:$0xff]
      %v295 = vld [vmem:[%s212 + $0x80] sm:$0xff]
      %v296 = vld [vmem:[%s212 + $0x88] sm:$0x3]
      %v297 = vld [vmem:[%s212 + $0x90] sm:$0xff]
      %v298 = vld [vmem:[%s212 + $0x98] sm:$0xff]
      %v299 = vld [vmem:[%s212 + $0xa0] sm:$0x3]
      %v300 = vld [vmem:[%s212 + $0xa8] sm:$0xff]
      %v301 = vld [vmem:[%s212 + $0xb0] sm:$0xff]
      %v302 = vld [vmem:[%s212 + $0xb8] sm:$0x3]
      %v303 = vld [vmem:[%s212 + $0xc0] sm:$0xff]
      %v304 = vld [vmem:[%s212 + $0xc8] sm:$0xff]
      %v305 = vld [vmem:[%s212 + $0xd0] sm:$0x3]
      %v306 = vld [vmem:[%s212 + $0xd8] sm:$0xff]
      %v307 = vld [vmem:[%s212 + $0xe0] sm:$0xff]
      %v308 = vld [vmem:[%s212 + $0xe8] sm:$0x3]
      %v309 = vpack.c.bf16 %v250, %v249
      %v310 = vpack.c.bf16 %v253, %v252
      %v311 = vpack.c.bf16 %v256, %v255
      %v312 = vpack.c.bf16 %v259, %v258
      %v313 = vpack.c.bf16 %v262, %v261
      %v314 = vpack.c.bf16 %v265, %v264
      %v315 = vpack.c.bf16 %v268, %v267
      %v316 = vpack.c.bf16 %v271, %v270
      %v317 = vld [vmem:[%s2] sm:$0xf]
      %v318 = vld [vmem:[%s2 + $0x4] sm:$0xf]
      %v319 = vld [vmem:[%s2 + $0x8] sm:$0xf]
      %v320 = vld [vmem:[%s2 + $0xc] sm:$0xf]
      %v321 = vld [vmem:[%s2 + $0x10] sm:$0xf]
      %v322 = vld [vmem:[%s2 + $0x14] sm:$0xf]
      %v323 = vld [vmem:[%s2 + $0x18] sm:$0xf]
      %v324 = vld [vmem:[%s2 + $0x1c] sm:$0xf]
      %vm349 = vcmask 1046528
      %v350 = vrot.slane %v249, 1
      %v351 = vrot.slane %v250, 1
      %v352 = vsel %vm349, %v350, %v351
      %v353 = vrot.slane %v251, 1
      %v354 = vsel %vm349, %v351, %v353
      %v355 = vrot.slane %v252, 1
      %v356 = vrot.slane %v253, 1
      %v357 = vsel %vm349, %v355, %v356
      %v358 = vrot.slane %v254, 1
      %v359 = vsel %vm349, %v356, %v358
      %v360 = vrot.slane %v255, 1
      %v361 = vrot.slane %v256, 1
      %v362 = vsel %vm349, %v360, %v361
      %v363 = vrot.slane %v257, 1
      %v364 = vsel %vm349, %v361, %v363
      %v365 = vrot.slane %v258, 1
      %v366 = vrot.slane %v259, 1
      %v367 = vsel %vm349, %v365, %v366
      %v368 = vrot.slane %v260, 1
      %v369 = vsel %vm349, %v366, %v368
      %v370 = vrot.slane %v261, 1
      %v371 = vrot.slane %v262, 1
      %v372 = vsel %vm349, %v370, %v371
      %v373 = vrot.slane %v263, 1
      %v374 = vsel %vm349, %v371, %v373
      %v375 = vrot.slane %v264, 1
      %v376 = vrot.slane %v265, 1
      %v377 = vsel %vm349, %v375, %v376
      %v378 = vrot.slane %v266, 1
      %v379 = vsel %vm349, %v376, %v378
      %v380 = vrot.slane %v267, 1
      %v381 = vrot.slane %v268, 1
      %v382 = vsel %vm349, %v380, %v381
      %v383 = vrot.slane %v269, 1
      %v384 = vsel %vm349, %v381, %v383
      %v385 = vrot.slane %v270, 1
      %v386 = vrot.slane %v271, 1
      %v387 = vsel %vm349, %v385, %v386
      %v388 = vrot.slane %v272, 1
      %v389 = vsel %vm349, %v386, %v388
      %v406 = vpack.c.bf16 %v354, %v352
      %v407 = vpack.c.bf16 %v359, %v357
      %v408 = vpack.c.bf16 %v364, %v362
      %v409 = vpack.c.bf16 %v369, %v367
      %v410 = vpack.c.bf16 %v374, %v372
      %v411 = vpack.c.bf16 %v379, %v377
      %v412 = vpack.c.bf16 %v384, %v382
      %v413 = vpack.c.bf16 %v389, %v387
      %s414 = scalar_lea.vmem %s2, 32
      %v415 = vld [vmem:[%s414] sm:$0xf]
      %v416 = vld [vmem:[%s414 + $0x4] sm:$0xf]
      %v417 = vld [vmem:[%s414 + $0x8] sm:$0xf]
      %v418 = vld [vmem:[%s414 + $0xc] sm:$0xf]
      %v419 = vld [vmem:[%s414 + $0x10] sm:$0xf]
      %v420 = vld [vmem:[%s414 + $0x14] sm:$0xf]
      %v421 = vld [vmem:[%s414 + $0x18] sm:$0xf]
      %v422 = vld [vmem:[%s414 + $0x1c] sm:$0xf]
      %v431 = vunpack.c.l.b16 %v415
      %v432 = vunpack.c.l.b16 %v416
      %v433 = vunpack.c.l.b16 %v417
      %v434 = vunpack.c.l.b16 %v418
      %v435 = vunpack.c.l.b16 %v419
      %v436 = vunpack.c.l.b16 %v420
      %v437 = vunpack.c.l.b16 %v421
      %v438 = vunpack.c.l.b16 %v422
      %v439 = vpack.c.b16 %v432, %v431
      %v440 = vpack.c.b16 %v434, %v433
      %v441 = vpack.c.b16 %v436, %v435
      %v442 = vpack.c.b16 %v438, %v437
      %vm447 = vcmask 523264
      %v449 = vsel %vm447, %v406, 0
      %v452 = vsel %vm447, %v407, 0
      %v455 = vsel %vm447, %v408, 0
      %v458 = vsel %vm447, %v409, 0
      %v461 = vsel %vm447, %v410, 0
      %v464 = vsel %vm447, %v411, 0
      %v467 = vsel %vm447, %v412, 0
      %v470 = vsel %vm447, %v413, 0
      %472 = vmatprep.subr.bf16.mxu0 0
      %473 = vmatpush1.bf16.msra.mxu0 %v439
      %474 = vmatprep.subr.bf16.mxu0 0
      %475 = vmatpush1.bf16.msra.mxu0 %v440
      %476 = vmatprep.subr.bf16.mxu0 0
      %477 = vmatpush1.bf16.msra.mxu0 %v441
      %478 = vmatprep.subr.bf16.mxu0 0
      %479 = vmatpush1.bf16.msra.mxu0 %v442
      %480 = vmatprep.subr.bf16.mxu0 0
      %481 = vmatpush1.bf16.msra.mxu0 0
      %482 = vmatprep.subr.bf16.mxu0 0
      %483 = vmatpush1.bf16.msra.mxu0 0
      %484 = vmatprep.subr.bf16.mxu0 0
      %485 = vmatpush1.bf16.msra.mxu0 0
      %486 = vmatprep.subr.bf16.mxu0 0
      %487 = vmatpush1.bf16.msra.mxu0 0
      %488 = vmatprep.subr.bf16.mxu0 0
      %489 = vmatpush1.bf16.msra.mxu0 0
      %490 = vmatprep.subr.bf16.mxu0 0
      %491 = vmatpush1.bf16.msra.mxu0 0
      %492 = vmatprep.subr.bf16.mxu0 0
      %493 = vmatpush1.bf16.msra.mxu0 0
      %494 = vmatprep.subr.bf16.mxu0 0
      %495 = vmatpush1.bf16.msra.mxu0 0
      %496 = vmatprep.subr.bf16.mxu0 0
      %497 = vmatpush1.bf16.msra.mxu0 0
      %498 = vmatprep.subr.bf16.mxu0 0
      %499 = vmatpush1.bf16.msra.mxu0 0
      %500 = vmatprep.subr.bf16.mxu0 0
      %501 = vmatpush1.bf16.msra.mxu0 0
      %502 = vmatprep.subr.bf16.mxu0 0
      %503 = vmatpush1.bf16.msra.mxu0 0
      %504 = vmatprep.mubr.bf16.mxu0 0
      %505 = vmatmul.mubr.bf16.gmra.mrb[0].mxu0 %v449
      %v506 = vpop.f32.mrb[0].mxu0
      %v507 = vadd.f32 0.0, %v506
      %v508 = vpop.f32.mrb[0].mxu0
      %v509 = vpop.f32.mrb[0].mxu0
      %v510 = vadd.f32 0.0, %v509
      %v511 = vpop.f32.mrb[0].mxu0
      %512 = vmatprep.mubr.bf16.mxu0 0
      %513 = vmatmul.mubr.bf16.gmra.mrb[0].mxu0 %v452
      %v514 = vpop.f32.mrb[0].mxu0
      %v515 = vadd.f32 0.0, %v514
      %v516 = vpop.f32.mrb[0].mxu0
      %v517 = vpop.f32.mrb[0].mxu0
      %v518 = vadd.f32 0.0, %v517
      %v519 = vpop.f32.mrb[0].mxu0
      %520 = vmatprep.mubr.bf16.mxu0 0
      %521 = vmatmul.mubr.bf16.gmra.mrb[0].mxu0 %v455
      %v522 = vpop.f32.mrb[0].mxu0
      %v523 = vadd.f32 0.0, %v522
      %v524 = vpop.f32.mrb[0].mxu0
      %v525 = vpop.f32.mrb[0].mxu0
      %v526 = vadd.f32 0.0, %v525
      %v527 = vpop.f32.mrb[0].mxu0
      %528 = vmatprep.mubr.bf16.mxu0 0
      %529 = vmatmul.mubr.bf16.gmra.mrb[0].mxu0 %v458
      %v530 = vpop.f32.mrb[0].mxu0
      %v531 = vadd.f32 0.0, %v530
      %v532 = vpop.f32.mrb[0].mxu0
      %v533 = vpop.f32.mrb[0].mxu0
      %v534 = vadd.f32 0.0, %v533
      %v535 = vpop.f32.mrb[0].mxu0
      %536 = vmatprep.mubr.bf16.mxu0 0
      %537 = vmatmul.mubr.bf16.gmra.mrb[0].mxu0 %v461
      %v538 = vpop.f32.mrb[0].mxu0
      %v539 = vadd.f32 0.0, %v538
      %v540 = vpop.f32.mrb[0].mxu0
      %v541 = vpop.f32.mrb[0].mxu0
      %v542 = vadd.f32 0.0, %v541
      %v543 = vpop.f32.mrb[0].mxu0
      %544 = vmatprep.mubr.bf16.mxu0 0
      %545 = vmatmul.mubr.bf16.gmra.mrb[0].mxu0 %v464
      %v546 = vpop.f32.mrb[0].mxu0
      %v547 = vadd.f32 0.0, %v546
      %v548 = vpop.f32.mrb[0].mxu0
      %v549 = vpop.f32.mrb[0].mxu0
      %v550 = vadd.f32 0.0, %v549
      %v551 = vpop.f32.mrb[0].mxu0
      %552 = vmatprep.mubr.bf16.mxu0 0
      %553 = vmatmul.mubr.bf16.gmra.mrb[0].mxu0 %v467
      %v554 = vpop.f32.mrb[0].mxu0
      %v555 = vadd.f32 0.0, %v554
      %v556 = vpop.f32.mrb[0].mxu0
      %v557 = vpop.f32.mrb[0].mxu0
      %v558 = vadd.f32 0.0, %v557
      %v559 = vpop.f32.mrb[0].mxu0
      %560 = vmatprep.mubr.bf16.mxu0 0
      %561 = vmatmul.mubr.bf16.gmra.mrb[0].mxu0 %v470
      %v562 = vpop.f32.mrb[0].mxu0
      %v563 = vadd.f32 0.0, %v562
      %v564 = vpop.f32.mrb[0].mxu0
      %v565 = vpop.f32.mrb[0].mxu0
      %v566 = vadd.f32 0.0, %v565
      %v567 = vpop.f32.mrb[0].mxu0
      %568 = vdwg.mxu0
      %v577 = vunpack.c.l.b16 %v317
      %v578 = vunpack.c.l.b16 %v318
      %v579 = vunpack.c.l.b16 %v319
      %v580 = vunpack.c.l.b16 %v320
      %v581 = vunpack.c.l.b16 %v321
      %v582 = vunpack.c.l.b16 %v322
      %v583 = vunpack.c.l.b16 %v323
      %v584 = vunpack.c.l.b16 %v324
      %v585 = vpack.c.b16 %v578, %v577
      %v586 = vpack.c.b16 %v580, %v579
      %v587 = vpack.c.b16 %v582, %v581
      %v588 = vpack.c.b16 %v584, %v583
      %v594 = vsel %vm447, %v309, 0
      %v597 = vsel %vm447, %v310, 0
      %v600 = vsel %vm447, %v311, 0
      %v603 = vsel %vm447, %v312, 0
      %v606 = vsel %vm447, %v313, 0
      %v609 = vsel %vm447, %v314, 0
      %v612 = vsel %vm447, %v315, 0
      %v615 = vsel %vm447, %v316, 0
      %617 = vmatprep.subr.bf16.mxu0 0
      %618 = vmatpush1.bf16.msra.mxu0 %v585
      %619 = vmatprep.subr.bf16.mxu0 0
      %620 = vmatpush1.bf16.msra.mxu0 %v586
      %621 = vmatprep.subr.bf16.mxu0 0
      %622 = vmatpush1.bf16.msra.mxu0 %v587
      %623 = vmatprep.subr.bf16.mxu0 0
      %624 = vmatpush1.bf16.msra.mxu0 %v588
      %625 = vmatprep.subr.bf16.mxu0 0
      %626 = vmatpush1.bf16.msra.mxu0 0
      %627 = vmatprep.subr.bf16.mxu0 0
      %628 = vmatpush1.bf16.msra.mxu0 0
      %629 = vmatprep.subr.bf16.mxu0 0
      %630 = vmatpush1.bf16.msra.mxu0 0
      %631 = vmatprep.subr.bf16.mxu0 0
      %632 = vmatpush1.bf16.msra.mxu0 0
      %633 = vmatprep.subr.bf16.mxu0 0
      %634 = vmatpush1.bf16.msra.mxu0 0
      %635 = vmatprep.subr.bf16.mxu0 0
      %636 = vmatpush1.bf16.msra.mxu0 0
      %637 = vmatprep.subr.bf16.mxu0 0
      %638 = vmatpush1.bf16.msra.mxu0 0
      %639 = vmatprep.subr.bf16.mxu0 0
      %640 = vmatpush1.bf16.msra.mxu0 0
      %641 = vmatprep.subr.bf16.mxu0 0
      %642 = vmatpush1.bf16.msra.mxu0 0
      %643 = vmatprep.subr.bf16.mxu0 0
      %644 = vmatpush1.bf16.msra.mxu0 0
      %645 = vmatprep.subr.bf16.mxu0 0
      %646 = vmatpush1.bf16.msra.mxu0 0
      %647 = vmatprep.subr.bf16.mxu0 0
      %648 = vmatpush1.bf16.msra.mxu0 0
      %649 = vmatprep.mubr.bf16.mxu0 0
      %650 = vmatmul.mubr.bf16.gmra.mrb[0].mxu0 %v594
      %v651 = vpop.f32.mrb[0].mxu0
      %v652 = vadd.f32 %v507, %v651
      %v653 = vpop.f32.mrb[0].mxu0
      %v654 = vpop.f32.mrb[0].mxu0
      %v655 = vadd.f32 %v510, %v654
      %v656 = vpop.f32.mrb[0].mxu0
      %657 = vmatprep.mubr.bf16.mxu0 0
      %658 = vmatmul.mubr.bf16.gmra.mrb[0].mxu0 %v597
      %v659 = vpop.f32.mrb[0].mxu0
      %v660 = vadd.f32 %v515, %v659
      %v661 = vpop.f32.mrb[0].mxu0
      %v662 = vpop.f32.mrb[0].mxu0
      %v663 = vadd.f32 %v518, %v662
      %v664 = vpop.f32.mrb[0].mxu0
      %665 = vmatprep.mubr.bf16.mxu0 0
      %666 = vmatmul.mubr.bf16.gmra.mrb[0].mxu0 %v600
      %v667 = vpop.f32.mrb[0].mxu0
      %v668 = vadd.f32 %v523, %v667
      %v669 = vpop.f32.mrb[0].mxu0
      %v670 = vpop.f32.mrb[0].mxu0
      %v671 = vadd.f32 %v526, %v670
      %v672 = vpop.f32.mrb[0].mxu0
      %673 = vmatprep.mubr.bf16.mxu0 0
      %674 = vmatmul.mubr.bf16.gmra.mrb[0].mxu0 %v603
      %v675 = vpop.f32.mrb[0].mxu0
      %v676 = vadd.f32 %v531, %v675
      %v677 = vpop.f32.mrb[0].mxu0
      %v678 = vpop.f32.mrb[0].mxu0
      %v679 = vadd.f32 %v534, %v678
      %v680 = vpop.f32.mrb[0].mxu0
      %681 = vmatprep.mubr.bf16.mxu0 0
      %682 = vmatmul.mubr.bf16.gmra.mrb[0].mxu0 %v606
      %v683 = vpop.f32.mrb[0].mxu0
      %v684 = vadd.f32 %v539, %v683
      %v685 = vpop.f32.mrb[0].mxu0
      %v686 = vpop.f32.mrb[0].mxu0
      %v687 = vadd.f32 %v542, %v686
      %v688 = vpop.f32.mrb[0].mxu0
      %689 = vmatprep.mubr.bf16.mxu0 0
      %690 = vmatmul.mubr.bf16.gmra.mrb[0].mxu0 %v609
      %v691 = vpop.f32.mrb[0].mxu0
      %v692 = vadd.f32 %v547, %v691
      %v693 = vpop.f32.mrb[0].mxu0
      %v694 = vpop.f32.mrb[0].mxu0
      %v695 = vadd.f32 %v550, %v694
      %v696 = vpop.f32.mrb[0].mxu0
      %697 = vmatprep.mubr.bf16.mxu0 0
      %698 = vmatmul.mubr.bf16.gmra.mrb[0].mxu0 %v612
      %v699 = vpop.f32.mrb[0].mxu0
      %v700 = vadd.f32 %v555, %v699
      %v701 = vpop.f32.mrb[0].mxu0
      %v702 = vpop.f32.mrb[0].mxu0
      %v703 = vadd.f32 %v558, %v702
      %v704 = vpop.f32.mrb[0].mxu0
      %705 = vmatprep.mubr.bf16.mxu0 0
      %706 = vmatmul.mubr.bf16.gmra.mrb[0].mxu0 %v615
      %v707 = vpop.f32.mrb[0].mxu0
      %v708 = vadd.f32 %v563, %v707
      %v709 = vpop.f32.mrb[0].mxu0
      %v710 = vpop.f32.mrb[0].mxu0
      %v711 = vadd.f32 %v566, %v710
      %v712 = vpop.f32.mrb[0].mxu0
      %713 = vdwg.mxu0
      %vm714 = vcmask 1045504
      %v715 = vrot.slane %v249, 2
      %v716 = vrot.slane %v250, 2
      %v717 = vsel %vm714, %v715, %v716
      %v718 = vrot.slane %v251, 2
      %v719 = vsel %vm714, %v716, %v718
      %v720 = vrot.slane %v252, 2
      %v721 = vrot.slane %v253, 2
      %v722 = vsel %vm714, %v720, %v721
      %v723 = vrot.slane %v254, 2
      %v724 = vsel %vm714, %v721, %v723
      %v725 = vrot.slane %v255, 2
      %v726 = vrot.slane %v256, 2
      %v727 = vsel %vm714, %v725, %v726
      %v728 = vrot.slane %v257, 2
      %v729 = vsel %vm714, %v726, %v728
      %v730 = vrot.slane %v258, 2
      %v731 = vrot.slane %v259, 2
      %v732 = vsel %vm714, %v730, %v731
      %v733 = vrot.slane %v260, 2
      %v734 = vsel %vm714, %v731, %v733
      %v735 = vrot.slane %v261, 2
      %v736 = vrot.slane %v262, 2
      %v737 = vsel %vm714, %v735, %v736
      %v738 = vrot.slane %v263, 2
      %v739 = vsel %vm714, %v736, %v738
      %v740 = vrot.slane %v264, 2
      %v741 = vrot.slane %v265, 2
      %v742 = vsel %vm714, %v740, %v741
      %v743 = vrot.slane %v266, 2
      %v744 = vsel %vm714, %v741, %v743
      %v745 = vrot.slane %v267, 2
      %v746 = vrot.slane %v268, 2
      %v747 = vsel %vm714, %v745, %v746
      %v748 = vrot.slane %v269, 2
      %v749 = vsel %vm714, %v746, %v748
      %v750 = vrot.slane %v270, 2
      %v751 = vrot.slane %v271, 2
      %v752 = vsel %vm714, %v750, %v751
      %v753 = vrot.slane %v272, 2
      %v754 = vsel %vm714, %v751, %v753
      %v771 = vpack.c.bf16 %v719, %v717
      %v772 = vpack.c.bf16 %v724, %v722
      %v773 = vpack.c.bf16 %v729, %v727
      %v774 = vpack.c.bf16 %v734, %v732
      %v775 = vpack.c.bf16 %v739, %v737
      %v776 = vpack.c.bf16 %v744, %v742
      %v777 = vpack.c.bf16 %v749, %v747
      %v778 = vpack.c.bf16 %v754, %v752
      %s779 = scalar_lea.vmem %s2, 64
      %v780 = vld [vmem:[%s779] sm:$0xf]
      %v781 = vld [vmem:[%s779 + $0x4] sm:$0xf]
      %v782 = vld [vmem:[%s779 + $0x8] sm:$0xf]
      %v783 = vld [vmem:[%s779 + $0xc] sm:$0xf]
      %v784 = vld [vmem:[%s779 + $0x10] sm:$0xf]
      %v785 = vld [vmem:[%s779 + $0x14] sm:$0xf]
      %v786 = vld [vmem:[%s779 + $0x18] sm:$0xf]
      %v787 = vld [vmem:[%s779 + $0x1c] sm:$0xf]
      %v796 = vunpack.c.l.b16 %v780
      %v797 = vunpack.c.l.b16 %v781
      %v798 = vunpack.c.l.b16 %v782
      %v799 = vunpack.c.l.b16 %v783
      %v800 = vunpack.c.l.b16 %v784
      %v801 = vunpack.c.l.b16 %v785
      %v802 = vunpack.c.l.b16 %v786
      %v803 = vunpack.c.l.b16 %v787
      %v804 = vpack.c.b16 %v797, %v796
      %v805 = vpack.c.b16 %v799, %v798
      %v806 = vpack.c.b16 %v801, %v800
      %v807 = vpack.c.b16 %v803, %v802
      %v813 = vsel %vm447, %v771, 0
      %v816 = vsel %vm447, %v772, 0
      %v819 = vsel %vm447, %v773, 0
      %v822 = vsel %vm447, %v774, 0
      %v825 = vsel %vm447, %v775, 0
      %v828 = vsel %vm447, %v776, 0
      %v831 = vsel %vm447, %v777, 0
      %v834 = vsel %vm447, %v778, 0
      %836 = vmatprep.subr.bf16.mxu0 0
      %837 = vmatpush1.bf16.msra.mxu0 %v804
      %838 = vmatprep.subr.bf16.mxu0 0
      %839 = vmatpush1.bf16.msra.mxu0 %v805
      %840 = vmatprep.subr.bf16.mxu0 0
      %841 = vmatpush1.bf16.msra.mxu0 %v806
      %842 = vmatprep.subr.bf16.mxu0 0
      %843 = vmatpush1.bf16.msra.mxu0 %v807
      %844 = vmatprep.subr.bf16.mxu0 0
      %845 = vmatpush1.bf16.msra.mxu0 0
      %846 = vmatprep.subr.bf16.mxu0 0
      %847 = vmatpush1.bf16.msra.mxu0 0
      %848 = vmatprep.subr.bf16.mxu0 0
      %849 = vmatpush1.bf16.msra.mxu0 0
      %850 = vmatprep.subr.bf16.mxu0 0
      %851 = vmatpush1.bf16.msra.mxu0 0
      %852 = vmatprep.subr.bf16.mxu0 0
      %853 = vmatpush1.bf16.msra.mxu0 0
      %854 = vmatprep.subr.bf16.mxu0 0
      %855 = vmatpush1.bf16.msra.mxu0 0
      %856 = vmatprep.subr.bf16.mxu0 0
      %857 = vmatpush1.bf16.msra.mxu0 0
      %858 = vmatprep.subr.bf16.mxu0 0
      %859 = vmatpush1.bf16.msra.mxu0 0
      %860 = vmatprep.subr.bf16.mxu0 0
      %861 = vmatpush1.bf16.msra.mxu0 0
      %862 = vmatprep.subr.bf16.mxu0 0
      %863 = vmatpush1.bf16.msra.mxu0 0
      %864 = vmatprep.subr.bf16.mxu0 0
      %865 = vmatpush1.bf16.msra.mxu0 0
      %866 = vmatprep.subr.bf16.mxu0 0
      %867 = vmatpush1.bf16.msra.mxu0 0
      %868 = vmatprep.mubr.bf16.mxu0 0
      %869 = vmatmul.mubr.bf16.gmra.mrb[0].mxu0 %v813
      %v870 = vpop.f32.mrb[0].mxu0
      %v871 = vadd.f32 0.0, %v870
      %v872 = vpop.f32.mrb[0].mxu0
      %v873 = vpop.f32.mrb[0].mxu0
      %v874 = vadd.f32 0.0, %v873
      %v875 = vpop.f32.mrb[0].mxu0
      %876 = vmatprep.mubr.bf16.mxu0 0
      %877 = vmatmul.mubr.bf16.gmra.mrb[0].mxu0 %v816
      %v878 = vpop.f32.mrb[0].mxu0
      %v879 = vadd.f32 0.0, %v878
      %v880 = vpop.f32.mrb[0].mxu0
      %v881 = vpop.f32.mrb[0].mxu0
      %v882 = vadd.f32 0.0, %v881
      %v883 = vpop.f32.mrb[0].mxu0
      %884 = vmatprep.mubr.bf16.mxu0 0
      %885 = vmatmul.mubr.bf16.gmra.mrb[0].mxu0 %v819
      %v886 = vpop.f32.mrb[0].mxu0
      %v887 = vadd.f32 0.0, %v886
      %v888 = vpop.f32.mrb[0].mxu0
      %v889 = vpop.f32.mrb[0].mxu0
      %v890 = vadd.f32 0.0, %v889
      %v891 = vpop.f32.mrb[0].mxu0
      %892 = vmatprep.mubr.bf16.mxu0 0
      %893 = vmatmul.mubr.bf16.gmra.mrb[0].mxu0 %v822
      %v894 = vpop.f32.mrb[0].mxu0
      %v895 = vadd.f32 0.0, %v894
      %v896 = vpop.f32.mrb[0].mxu0
      %v897 = vpop.f32.mrb[0].mxu0
      %v898 = vadd.f32 0.0, %v897
      %v899 = vpop.f32.mrb[0].mxu0
      %900 = vmatprep.mubr.bf16.mxu0 0
      %901 = vmatmul.mubr.bf16.gmra.mrb[0].mxu0 %v825
      %v902 = vpop.f32.mrb[0].mxu0
      %v903 = vadd.f32 0.0, %v902
      %v904 = vpop.f32.mrb[0].mxu0
      %v905 = vpop.f32.mrb[0].mxu0
      %v906 = vadd.f32 0.0, %v905
      %v907 = vpop.f32.mrb[0].mxu0
      %908 = vmatprep.mubr.bf16.mxu0 0
      %909 = vmatmul.mubr.bf16.gmra.mrb[0].mxu0 %v828
      %v910 = vpop.f32.mrb[0].mxu0
      %v911 = vadd.f32 0.0, %v910
      %v912 = vpop.f32.mrb[0].mxu0
      %v913 = vpop.f32.mrb[0].mxu0
      %v914 = vadd.f32 0.0, %v913
      %v915 = vpop.f32.mrb[0].mxu0
      %916 = vmatprep.mubr.bf16.mxu0 0
      %917 = vmatmul.mubr.bf16.gmra.mrb[0].mxu0 %v831
      %v918 = vpop.f32.mrb[0].mxu0
      %v919 = vadd.f32 0.0, %v918
      %v920 = vpop.f32.mrb[0].mxu0
      %v921 = vpop.f32.mrb[0].mxu0
      %v922 = vadd.f32 0.0, %v921
      %v923 = vpop.f32.mrb[0].mxu0
      %924 = vmatprep.mubr.bf16.mxu0 0
      %925 = vmatmul.mubr.bf16.gmra.mrb[0].mxu0 %v834
      %v926 = vpop.f32.mrb[0].mxu0
      %v927 = vadd.f32 0.0, %v926
      %v928 = vpop.f32.mrb[0].mxu0
      %v929 = vpop.f32.mrb[0].mxu0
      %v930 = vadd.f32 0.0, %v929
      %v931 = vpop.f32.mrb[0].mxu0
      %932 = vdwg.mxu0
      %v933 = vadd.f32 %v652, %v871
      %v934 = vadd.f32 %v655, %v874
      %v935 = vadd.f32 %v660, %v879
      %v936 = vadd.f32 %v663, %v882
      %v937 = vadd.f32 %v668, %v887
      %v938 = vadd.f32 %v671, %v890
      %v939 = vadd.f32 %v676, %v895
      %v940 = vadd.f32 %v679, %v898
      %v941 = vadd.f32 %v684, %v903
      %v942 = vadd.f32 %v687, %v906
      %v943 = vadd.f32 %v692, %v911
      %v944 = vadd.f32 %v695, %v914
      %v945 = vadd.f32 %v700, %v919
      %v946 = vadd.f32 %v703, %v922
      %v947 = vadd.f32 %v708, %v927
      %v948 = vadd.f32 %v711, %v930
      %v949 = vpack.c.bf16 %v274, %v273
      %s950 = scalar_lea.vmem %s2, 96
      %v951 = vld [vmem:[%s950] sm:$0xf]
      %v952 = vld [vmem:[%s950 + $0x4] sm:$0xf]
      %v953 = vld [vmem:[%s950 + $0x8] sm:$0xf]
      %v954 = vld [vmem:[%s950 + $0xc] sm:$0xf]
      %v955 = vld [vmem:[%s950 + $0x10] sm:$0xf]
      %v956 = vld [vmem:[%s950 + $0x14] sm:$0xf]
      %v957 = vld [vmem:[%s950 + $0x18] sm:$0xf]
      %v958 = vld [vmem:[%s950 + $0x1c] sm:$0xf]
      %v967 = vunpack.c.l.b16 %v951
      %v968 = vunpack.c.l.b16 %v952
      %v969 = vunpack.c.l.b16 %v953
      %v970 = vunpack.c.l.b16 %v954
      %v971 = vunpack.c.l.b16 %v955
      %v972 = vunpack.c.l.b16 %v956
      %v973 = vunpack.c.l.b16 %v957
      %v974 = vunpack.c.l.b16 %v958
      %v975 = vpack.c.b16 %v968, %v967
      %v976 = vpack.c.b16 %v970, %v969
      %v977 = vpack.c.b16 %v972, %v971
      %v978 = vpack.c.b16 %v974, %v973
      %v984 = vsel %vm447, %v949, 0
      %986 = vmatprep.subr.bf16.mxu0 0
      %987 = vmatpush1.bf16.msra.mxu0 %v975
      %988 = vmatprep.subr.bf16.mxu0 0
      %989 = vmatpush1.bf16.msra.mxu0 %v976
      %990 = vmatprep.subr.bf16.mxu0 0
      %991 = vmatpush1.bf16.msra.mxu0 %v977
      %992 = vmatprep.subr.bf16.mxu0 0
      %993 = vmatpush1.bf16.msra.mxu0 %v978
      %994 = vmatprep.subr.bf16.mxu0 0
      %995 = vmatpush1.bf16.msra.mxu0 0
      %996 = vmatprep.subr.bf16.mxu0 0
      %997 = vmatpush1.bf16.msra.mxu0 0
      %998 = vmatprep.subr.bf16.mxu0 0
      %999 = vmatpush1.bf16.msra.mxu0 0
      %1000 = vmatprep.subr.bf16.mxu0 0
      %1001 = vmatpush1.bf16.msra.mxu0 0
      %1002 = vmatprep.subr.bf16.mxu0 0
      %1003 = vmatpush1.bf16.msra.mxu0 0
      %1004 = vmatprep.subr.bf16.mxu0 0
      %1005 = vmatpush1.bf16.msra.mxu0 0
      %1006 = vmatprep.subr.bf16.mxu0 0
      %1007 = vmatpush1.bf16.msra.mxu0 0
      %1008 = vmatprep.subr.bf16.mxu0 0
      %1009 = vmatpush1.bf16.msra.mxu0 0
      %1010 = vmatprep.subr.bf16.mxu0 0
      %1011 = vmatpush1.bf16.msra.mxu0 0
      %1012 = vmatprep.subr.bf16.mxu0 0
      %1013 = vmatpush1.bf16.msra.mxu0 0
      %1014 = vmatprep.subr.bf16.mxu0 0
      %1015 = vmatpush1.bf16.msra.mxu0 0
      %1016 = vmatprep.subr.bf16.mxu0 0
      %1017 = vmatpush1.bf16.msra.mxu0 0
      %1018 = vmatprep.mubr.bf16.mxu0 0
      %1019 = vmatmul.mubr.bf16.gmra.mrb[0].mxu0 %v597
      %v1020 = vpop.f32.mrb[0].mxu0
      %v1021 = vadd.f32 0.0, %v1020
      %v1022 = vpop.f32.mrb[0].mxu0
      %v1023 = vpop.f32.mrb[0].mxu0
      %v1024 = vadd.f32 0.0, %v1023
      %v1025 = vpop.f32.mrb[0].mxu0
      %1026 = vmatprep.mubr.bf16.mxu0 0
      %1027 = vmatmul.mubr.bf16.gmra.mrb[0].mxu0 %v600
      %v1028 = vpop.f32.mrb[0].mxu0
      %v1029 = vadd.f32 0.0, %v1028
      %v1030 = vpop.f32.mrb[0].mxu0
      %v1031 = vpop.f32.mrb[0].mxu0
      %v1032 = vadd.f32 0.0, %v1031
      %v1033 = vpop.f32.mrb[0].mxu0
      %1034 = vmatprep.mubr.bf16.mxu0 0
      %1035 = vmatmul.mubr.bf16.gmra.mrb[0].mxu0 %v603
      %v1036 = vpop.f32.mrb[0].mxu0
      %v1037 = vadd.f32 0.0, %v1036
      %v1038 = vpop.f32.mrb[0].mxu0
      %v1039 = vpop.f32.mrb[0].mxu0
      %v1040 = vadd.f32 0.0, %v1039
      %v1041 = vpop.f32.mrb[0].mxu0
      %1042 = vmatprep.mubr.bf16.mxu0 0
      %1043 = vmatmul.mubr.bf16.gmra.mrb[0].mxu0 %v606
      %v1044 = vpop.f32.mrb[0].mxu0
      %v1045 = vadd.f32 0.0, %v1044
      %v1046 = vpop.f32.mrb[0].mxu0
      %v1047 = vpop.f32.mrb[0].mxu0
      %v1048 = vadd.f32 0.0, %v1047
      %v1049 = vpop.f32.mrb[0].mxu0
      %1050 = vmatprep.mubr.bf16.mxu0 0
      %1051 = vmatmul.mubr.bf16.gmra.mrb[0].mxu0 %v609
      %v1052 = vpop.f32.mrb[0].mxu0
      %v1053 = vadd.f32 0.0, %v1052
      %v1054 = vpop.f32.mrb[0].mxu0
      %v1055 = vpop.f32.mrb[0].mxu0
      %v1056 = vadd.f32 0.0, %v1055
      %v1057 = vpop.f32.mrb[0].mxu0
      %1058 = vmatprep.mubr.bf16.mxu0 0
      %1059 = vmatmul.mubr.bf16.gmra.mrb[0].mxu0 %v612
      %v1060 = vpop.f32.mrb[0].mxu0
      %v1061 = vadd.f32 0.0, %v1060
      %v1062 = vpop.f32.mrb[0].mxu0
      %v1063 = vpop.f32.mrb[0].mxu0
      %v1064 = vadd.f32 0.0, %v1063
      %v1065 = vpop.f32.mrb[0].mxu0
      %1066 = vmatprep.mubr.bf16.mxu0 0
      %1067 = vmatmul.mubr.bf16.gmra.mrb[0].mxu0 %v615
      %v1068 = vpop.f32.mrb[0].mxu0
      %v1069 = vadd.f32 0.0, %v1068
      %v1070 = vpop.f32.mrb[0].mxu0
      %v1071 = vpop.f32.mrb[0].mxu0
      %v1072 = vadd.f32 0.0, %v1071
      %v1073 = vpop.f32.mrb[0].mxu0
      %1074 = vmatprep.mubr.bf16.mxu0 0
      %1075 = vmatmul.mubr.bf16.gmra.mrb[0].mxu0 %v984
      %v1076 = vpop.f32.mrb[0].mxu0
      %v1077 = vadd.f32 0.0, %v1076
      %v1078 = vpop.f32.mrb[0].mxu0
      %v1079 = vpop.f32.mrb[0].mxu0
      %v1080 = vadd.f32 0.0, %v1079
      %v1081 = vpop.f32.mrb[0].mxu0
      %1082 = vdwg.mxu0
      %v1083 = vadd.f32 %v933, %v1021
      %v1084 = vadd.f32 %v934, %v1024
      %v1085 = vadd.f32 %v935, %v1029
      %v1086 = vadd.f32 %v936, %v1032
      %v1087 = vadd.f32 %v937, %v1037
      %v1088 = vadd.f32 %v938, %v1040
      %v1089 = vadd.f32 %v939, %v1045
      %v1090 = vadd.f32 %v940, %v1048
      %v1091 = vadd.f32 %v941, %v1053
      %v1092 = vadd.f32 %v942, %v1056
      %v1093 = vadd.f32 %v943, %v1061
      %v1094 = vadd.f32 %v944, %v1064
      %v1095 = vadd.f32 %v945, %v1069
      %v1096 = vadd.f32 %v946, %v1072
      %v1097 = vadd.f32 %v947, %v1077
      %v1098 = vadd.f32 %v948, %v1080
      %v1102 = vrot.slane %v273, 1
      %v1103 = vrot.slane %v274, 1
      %v1104 = vsel %vm349, %v1102, %v1103
      %v1105 = vrot.slane %v275, 1
      %v1106 = vsel %vm349, %v1103, %v1105
      %v1109 = vpack.c.bf16 %v1106, %v1104
      %s1110 = scalar_lea.vmem %s2, 128
      %v1111 = vld [vmem:[%s1110] sm:$0xf]
      %v1112 = vld [vmem:[%s1110 + $0x4] sm:$0xf]
      %v1113 = vld [vmem:[%s1110 + $0x8] sm:$0xf]
      %v1114 = vld [vmem:[%s1110 + $0xc] sm:$0xf]
      %v1115 = vld [vmem:[%s1110 + $0x10] sm:$0xf]
      %v1116 = vld [vmem:[%s1110 + $0x14] sm:$0xf]
      %v1117 = vld [vmem:[%s1110 + $0x18] sm:$0xf]
      %v1118 = vld [vmem:[%s1110 + $0x1c] sm:$0xf]
      %v1127 = vunpack.c.l.b16 %v1111
      %v1128 = vunpack.c.l.b16 %v1112
      %v1129 = vunpack.c.l.b16 %v1113
      %v1130 = vunpack.c.l.b16 %v1114
      %v1131 = vunpack.c.l.b16 %v1115
      %v1132 = vunpack.c.l.b16 %v1116
      %v1133 = vunpack.c.l.b16 %v1117
      %v1134 = vunpack.c.l.b16 %v1118
      %v1135 = vpack.c.b16 %v1128, %v1127
      %v1136 = vpack.c.b16 %v1130, %v1129
      %v1137 = vpack.c.b16 %v1132, %v1131
      %v1138 = vpack.c.b16 %v1134, %v1133
      %v1144 = vsel %vm447, %v1109, 0
      %1146 = vmatprep.subr.bf16.mxu0 0
      %1147 = vmatpush1.bf16.msra.mxu0 %v1135
      %1148 = vmatprep.subr.bf16.mxu0 0
      %1149 = vmatpush1.bf16.msra.mxu0 %v1136
      %1150 = vmatprep.subr.bf16.mxu0 0
      %1151 = vmatpush1.bf16.msra.mxu0 %v1137
      %1152 = vmatprep.subr.bf16.mxu0 0
      %1153 = vmatpush1.bf16.msra.mxu0 %v1138
      %1154 = vmatprep.subr.bf16.mxu0 0
      %1155 = vmatpush1.bf16.msra.mxu0 0
      %1156 = vmatprep.subr.bf16.mxu0 0
      %1157 = vmatpush1.bf16.msra.mxu0 0
      %1158 = vmatprep.subr.bf16.mxu0 0
      %1159 = vmatpush1.bf16.msra.mxu0 0
      %1160 = vmatprep.subr.bf16.mxu0 0
      %1161 = vmatpush1.bf16.msra.mxu0 0
      %1162 = vmatprep.subr.bf16.mxu0 0
      %1163 = vmatpush1.bf16.msra.mxu0 0
      %1164 = vmatprep.subr.bf16.mxu0 0
      %1165 = vmatpush1.bf16.msra.mxu0 0
      %1166 = vmatprep.subr.bf16.mxu0 0
      %1167 = vmatpush1.bf16.msra.mxu0 0
      %1168 = vmatprep.subr.bf16.mxu0 0
      %1169 = vmatpush1.bf16.msra.mxu0 0
      %1170 = vmatprep.subr.bf16.mxu0 0
      %1171 = vmatpush1.bf16.msra.mxu0 0
      %1172 = vmatprep.subr.bf16.mxu0 0
      %1173 = vmatpush1.bf16.msra.mxu0 0
      %1174 = vmatprep.subr.bf16.mxu0 0
      %1175 = vmatpush1.bf16.msra.mxu0 0
      %1176 = vmatprep.subr.bf16.mxu0 0
      %1177 = vmatpush1.bf16.msra.mxu0 0
      %1178 = vmatprep.mubr.bf16.mxu0 0
      %1179 = vmatmul.mubr.bf16.gmra.mrb[0].mxu0 %v452
      %v1180 = vpop.f32.mrb[0].mxu0
      %v1181 = vadd.f32 0.0, %v1180
      %v1182 = vpop.f32.mrb[0].mxu0
      %v1183 = vpop.f32.mrb[0].mxu0
      %v1184 = vadd.f32 0.0, %v1183
      %v1185 = vpop.f32.mrb[0].mxu0
      %1186 = vmatprep.mubr.bf16.mxu0 0
      %1187 = vmatmul.mubr.bf16.gmra.mrb[0].mxu0 %v455
      %v1188 = vpop.f32.mrb[0].mxu0
      %v1189 = vadd.f32 0.0, %v1188
      %v1190 = vpop.f32.mrb[0].mxu0
      %v1191 = vpop.f32.mrb[0].mxu0
      %v1192 = vadd.f32 0.0, %v1191
      %v1193 = vpop.f32.mrb[0].mxu0
      %1194 = vmatprep.mubr.bf16.mxu0 0
      %1195 = vmatmul.mubr.bf16.gmra.mrb[0].mxu0 %v458
      %v1196 = vpop.f32.mrb[0].mxu0
      %v1197 = vadd.f32 0.0, %v1196
      %v1198 = vpop.f32.mrb[0].mxu0
      %v1199 = vpop.f32.mrb[0].mxu0
      %v1200 = vadd.f32 0.0, %v1199
      %v1201 = vpop.f32.mrb[0].mxu0
      %1202 = vmatprep.mubr.bf16.mxu0 0
      %1203 = vmatmul.mubr.bf16.gmra.mrb[0].mxu0 %v461
      %v1204 = vpop.f32.mrb[0].mxu0
      %v1205 = vadd.f32 0.0, %v1204
      %v1206 = vpop.f32.mrb[0].mxu0
      %v1207 = vpop.f32.mrb[0].mxu0
      %v1208 = vadd.f32 0.0, %v1207
      %v1209 = vpop.f32.mrb[0].mxu0
      %1210 = vmatprep.mubr.bf16.mxu0 0
      %1211 = vmatmul.mubr.bf16.gmra.mrb[0].mxu0 %v464
      %v1212 = vpop.f32.mrb[0].mxu0
      %v1213 = vadd.f32 0.0, %v1212
      %v1214 = vpop.f32.mrb[0].mxu0
      %v1215 = vpop.f32.mrb[0].mxu0
      %v1216 = vadd.f32 0.0, %v1215
      %v1217 = vpop.f32.mrb[0].mxu0
      %1218 = vmatprep.mubr.bf16.mxu0 0
      %1219 = vmatmul.mubr.bf16.gmra.mrb[0].mxu0 %v467
      %v1220 = vpop.f32.mrb[0].mxu0
      %v1221 = vadd.f32 0.0, %v1220
      %v1222 = vpop.f32.mrb[0].mxu0
      %v1223 = vpop.f32.mrb[0].mxu0
      %v1224 = vadd.f32 0.0, %v1223
      %v1225 = vpop.f32.mrb[0].mxu0
      %1226 = vmatprep.mubr.bf16.mxu0 0
      %1227 = vmatmul.mubr.bf16.gmra.mrb[0].mxu0 %v470
      %v1228 = vpop.f32.mrb[0].mxu0
      %v1229 = vadd.f32 0.0, %v1228
      %v1230 = vpop.f32.mrb[0].mxu0
      %v1231 = vpop.f32.mrb[0].mxu0
      %v1232 = vadd.f32 0.0, %v1231
      %v1233 = vpop.f32.mrb[0].mxu0
      %1234 = vmatprep.mubr.bf16.mxu0 0
      %1235 = vmatmul.mubr.bf16.gmra.mrb[0].mxu0 %v1144
      %v1236 = vpop.f32.mrb[0].mxu0
      %v1237 = vadd.f32 0.0, %v1236
      %v1238 = vpop.f32.mrb[0].mxu0
      %v1239 = vpop.f32.mrb[0].mxu0
      %v1240 = vadd.f32 0.0, %v1239
      %v1241 = vpop.f32.mrb[0].mxu0
      %1242 = vdwg.mxu0
      %v1243 = vadd.f32 %v1083, %v1181
      %v1244 = vadd.f32 %v1084, %v1184
      %v1245 = vadd.f32 %v1085, %v1189
      %v1246 = vadd.f32 %v1086, %v1192
      %v1247 = vadd.f32 %v1087, %v1197
      %v1248 = vadd.f32 %v1088, %v1200
      %v1249 = vadd.f32 %v1089, %v1205
      %v1250 = vadd.f32 %v1090, %v1208
      %v1251 = vadd.f32 %v1091, %v1213
      %v1252 = vadd.f32 %v1092, %v1216
      %v1253 = vadd.f32 %v1093, %v1221
      %v1254 = vadd.f32 %v1094, %v1224
      %v1255 = vadd.f32 %v1095, %v1229
      %v1256 = vadd.f32 %v1096, %v1232
      %v1257 = vadd.f32 %v1097, %v1237
      %v1258 = vadd.f32 %v1098, %v1240
      %v1259 = vrot.slane %v273, 2
      %v1260 = vrot.slane %v274, 2
      %v1261 = vsel %vm714, %v1259, %v1260
      %v1262 = vrot.slane %v275, 2
      %v1263 = vsel %vm714, %v1260, %v1262
      %v1266 = vpack.c.bf16 %v1263, %v1261
      %s1267 = scalar_lea.vmem %s2, 160
      %v1268 = vld [vmem:[%s1267] sm:$0xf]
      %v1269 = vld [vmem:[%s1267 + $0x4] sm:$0xf]
      %v1270 = vld [vmem:[%s1267 + $0x8] sm:$0xf]
      %v1271 = vld [vmem:[%s1267 + $0xc] sm:$0xf]
      %v1272 = vld [vmem:[%s1267 + $0x10] sm:$0xf]
      %v1273 = vld [vmem:[%s1267 + $0x14] sm:$0xf]
      %v1274 = vld [vmem:[%s1267 + $0x18] sm:$0xf]
      %v1275 = vld [vmem:[%s1267 + $0x1c] sm:$0xf]
      %v1284 = vunpack.c.l.b16 %v1268
      %v1285 = vunpack.c.l.b16 %v1269
      %v1286 = vunpack.c.l.b16 %v1270
      %v1287 = vunpack.c.l.b16 %v1271
      %v1288 = vunpack.c.l.b16 %v1272
      %v1289 = vunpack.c.l.b16 %v1273
      %v1290 = vunpack.c.l.b16 %v1274
      %v1291 = vunpack.c.l.b16 %v1275
      %v1292 = vpack.c.b16 %v1285, %v1284
      %v1293 = vpack.c.b16 %v1287, %v1286
      %v1294 = vpack.c.b16 %v1289, %v1288
      %v1295 = vpack.c.b16 %v1291, %v1290
      %v1301 = vsel %vm447, %v1266, 0
      %1303 = vmatprep.subr.bf16.mxu0 0
      %1304 = vmatpush1.bf16.msra.mxu0 %v1292
      %1305 = vmatprep.subr.bf16.mxu0 0
      %1306 = vmatpush1.bf16.msra.mxu0 %v1293
      %1307 = vmatprep.subr.bf16.mxu0 0
      %1308 = vmatpush1.bf16.msra.mxu0 %v1294
      %1309 = vmatprep.subr.bf16.mxu0 0
      %1310 = vmatpush1.bf16.msra.mxu0 %v1295
      %1311 = vmatprep.subr.bf16.mxu0 0
      %1312 = vmatpush1.bf16.msra.mxu0 0
      %1313 = vmatprep.subr.bf16.mxu0 0
      %1314 = vmatpush1.bf16.msra.mxu0 0
      %1315 = vmatprep.subr.bf16.mxu0 0
      %1316 = vmatpush1.bf16.msra.mxu0 0
      %1317 = vmatprep.subr.bf16.mxu0 0
      %1318 = vmatpush1.bf16.msra.mxu0 0
      %1319 = vmatprep.subr.bf16.mxu0 0
      %1320 = vmatpush1.bf16.msra.mxu0 0
      %1321 = vmatprep.subr.bf16.mxu0 0
      %1322 = vmatpush1.bf16.msra.mxu0 0
      %1323 = vmatprep.subr.bf16.mxu0 0
      %1324 = vmatpush1.bf16.msra.mxu0 0
      %1325 = vmatprep.subr.bf16.mxu0 0
      %1326 = vmatpush1.bf16.msra.mxu0 0
      %1327 = vmatprep.subr.bf16.mxu0 0
      %1328 = vmatpush1.bf16.msra.mxu0 0
      %1329 = vmatprep.subr.bf16.mxu0 0
      %1330 = vmatpush1.bf16.msra.mxu0 0
      %1331 = vmatprep.subr.bf16.mxu0 0
      %1332 = vmatpush1.bf16.msra.mxu0 0
      %1333 = vmatprep.subr.bf16.mxu0 0
      %1334 = vmatpush1.bf16.msra.mxu0 0
      %1335 = vmatprep.mubr.bf16.mxu0 0
      %1336 = vmatmul.mubr.bf16.gmra.mrb[0].mxu0 %v816
      %v1337 = vpop.f32.mrb[0].mxu0
      %v1338 = vadd.f32 0.0, %v1337
      %v1339 = vpop.f32.mrb[0].mxu0
      %v1340 = vpop.f32.mrb[0].mxu0
      %v1341 = vadd.f32 0.0, %v1340
      %v1342 = vpop.f32.mrb[0].mxu0
      %1343 = vmatprep.mubr.bf16.mxu0 0
      %1344 = vmatmul.mubr.bf16.gmra.mrb[0].mxu0 %v819
      %v1345 = vpop.f32.mrb[0].mxu0
      %v1346 = vadd.f32 0.0, %v1345
      %v1347 = vpop.f32.mrb[0].mxu0
      %v1348 = vpop.f32.mrb[0].mxu0
      %v1349 = vadd.f32 0.0, %v1348
      %v1350 = vpop.f32.mrb[0].mxu0
      %1351 = vmatprep.mubr.bf16.mxu0 0
      %1352 = vmatmul.mubr.bf16.gmra.mrb[0].mxu0 %v822
      %v1353 = vpop.f32.mrb[0].mxu0
      %v1354 = vadd.f32 0.0, %v1353
      %v1355 = vpop.f32.mrb[0].mxu0
      %v1356 = vpop.f32.mrb[0].mxu0
      %v1357 = vadd.f32 0.0, %v1356
      %v1358 = vpop.f32.mrb[0].mxu0
      %1359 = vmatprep.mubr.bf16.mxu0 0
      %1360 = vmatmul.mubr.bf16.gmra.mrb[0].mxu0 %v825
      %v1361 = vpop.f32.mrb[0].mxu0
      %v1362 = vadd.f32 0.0, %v1361
      %v1363 = vpop.f32.mrb[0].mxu0
      %v1364 = vpop.f32.mrb[0].mxu0
      %v1365 = vadd.f32 0.0, %v1364
      %v1366 = vpop.f32.mrb[0].mxu0
      %1367 = vmatprep.mubr.bf16.mxu0 0
      %1368 = vmatmul.mubr.bf16.gmra.mrb[0].mxu0 %v828
      %v1369 = vpop.f32.mrb[0].mxu0
      %v1370 = vadd.f32 0.0, %v1369
      %v1371 = vpop.f32.mrb[0].mxu0
      %v1372 = vpop.f32.mrb[0].mxu0
      %v1373 = vadd.f32 0.0, %v1372
      %v1374 = vpop.f32.mrb[0].mxu0
      %1375 = vmatprep.mubr.bf16.mxu0 0
      %1376 = vmatmul.mubr.bf16.gmra.mrb[0].mxu0 %v831
      %v1377 = vpop.f32.mrb[0].mxu0
      %v1378 = vadd.f32 0.0, %v1377
      %v1379 = vpop.f32.mrb[0].mxu0
      %v1380 = vpop.f32.mrb[0].mxu0
      %v1381 = vadd.f32 0.0, %v1380
      %v1382 = vpop.f32.mrb[0].mxu0
      %1383 = vmatprep.mubr.bf16.mxu0 0
      %1384 = vmatmul.mubr.bf16.gmra.mrb[0].mxu0 %v834
      %v1385 = vpop.f32.mrb[0].mxu0
      %v1386 = vadd.f32 0.0, %v1385
      %v1387 = vpop.f32.mrb[0].mxu0
      %v1388 = vpop.f32.mrb[0].mxu0
      %v1389 = vadd.f32 0.0, %v1388
      %v1390 = vpop.f32.mrb[0].mxu0
      %1391 = vmatprep.mubr.bf16.mxu0 0
      %1392 = vmatmul.mubr.bf16.gmra.mrb[0].mxu0 %v1301
      %v1393 = vpop.f32.mrb[0].mxu0
      %v1394 = vadd.f32 0.0, %v1393
      %v1395 = vpop.f32.mrb[0].mxu0
      %v1396 = vpop.f32.mrb[0].mxu0
      %v1397 = vadd.f32 0.0, %v1396
      %v1398 = vpop.f32.mrb[0].mxu0
      %1399 = vdwg.mxu0
      %v1400 = vadd.f32 %v1243, %v1338
      %v1401 = vadd.f32 %v1244, %v1341
      %v1402 = vadd.f32 %v1245, %v1346
      %v1403 = vadd.f32 %v1246, %v1349
      %v1404 = vadd.f32 %v1247, %v1354
      %v1405 = vadd.f32 %v1248, %v1357
      %v1406 = vadd.f32 %v1249, %v1362
      %v1407 = vadd.f32 %v1250, %v1365
      %v1408 = vadd.f32 %v1251, %v1370
      %v1409 = vadd.f32 %v1252, %v1373
      %v1410 = vadd.f32 %v1253, %v1378
      %v1411 = vadd.f32 %v1254, %v1381
      %v1412 = vadd.f32 %v1255, %v1386
      %v1413 = vadd.f32 %v1256, %v1389
      %v1414 = vadd.f32 %v1257, %v1394
      %v1415 = vadd.f32 %v1258, %v1397
      %v1416 = vpack.c.bf16 %v277, %v276
      %s1417 = scalar_lea.vmem %s2, 192
      %v1418 = vld [vmem:[%s1417] sm:$0xf]
      %v1419 = vld [vmem:[%s1417 + $0x4] sm:$0xf]
      %v1420 = vld [vmem:[%s1417 + $0x8] sm:$0xf]
      %v1421 = vld [vmem:[%s1417 + $0xc] sm:$0xf]
      %v1422 = vld [vmem:[%s1417 + $0x10] sm:$0xf]
      %v1423 = vld [vmem:[%s1417 + $0x14] sm:$0xf]
      %v1424 = vld [vmem:[%s1417 + $0x18] sm:$0xf]
      %v1425 = vld [vmem:[%s1417 + $0x1c] sm:$0xf]
      %v1434 = vunpack.c.l.b16 %v1418
      %v1435 = vunpack.c.l.b16 %v1419
      %v1436 = vunpack.c.l.b16 %v1420
      %v1437 = vunpack.c.l.b16 %v1421
      %v1438 = vunpack.c.l.b16 %v1422
      %v1439 = vunpack.c.l.b16 %v1423
      %v1440 = vunpack.c.l.b16 %v1424
      %v1441 = vunpack.c.l.b16 %v1425
      %v1442 = vpack.c.b16 %v1435, %v1434
      %v1443 = vpack.c.b16 %v1437, %v1436
      %v1444 = vpack.c.b16 %v1439, %v1438
      %v1445 = vpack.c.b16 %v1441, %v1440
      %v1451 = vsel %vm447, %v1416, 0
      %1453 = vmatprep.subr.bf16.mxu0 0
      %1454 = vmatpush1.bf16.msra.mxu0 %v1442
      %1455 = vmatprep.subr.bf16.mxu0 0
      %1456 = vmatpush1.bf16.msra.mxu0 %v1443
      %1457 = vmatprep.subr.bf16.mxu0 0
      %1458 = vmatpush1.bf16.msra.mxu0 %v1444
      %1459 = vmatprep.subr.bf16.mxu0 0
      %1460 = vmatpush1.bf16.msra.mxu0 %v1445
      %1461 = vmatprep.subr.bf16.mxu0 0
      %1462 = vmatpush1.bf16.msra.mxu0 0
      %1463 = vmatprep.subr.bf16.mxu0 0
      %1464 = vmatpush1.bf16.msra.mxu0 0
      %1465 = vmatprep.subr.bf16.mxu0 0
      %1466 = vmatpush1.bf16.msra.mxu0 0
      %1467 = vmatprep.subr.bf16.mxu0 0
      %1468 = vmatpush1.bf16.msra.mxu0 0
      %1469 = vmatprep.subr.bf16.mxu0 0
      %1470 = vmatpush1.bf16.msra.mxu0 0
      %1471 = vmatprep.subr.bf16.mxu0 0
      %1472 = vmatpush1.bf16.msra.mxu0 0
      %1473 = vmatprep.subr.bf16.mxu0 0
      %1474 = vmatpush1.bf16.msra.mxu0 0
      %1475 = vmatprep.subr.bf16.mxu0 0
      %1476 = vmatpush1.bf16.msra.mxu0 0
      %1477 = vmatprep.subr.bf16.mxu0 0
      %1478 = vmatpush1.bf16.msra.mxu0 0
      %1479 = vmatprep.subr.bf16.mxu0 0
      %1480 = vmatpush1.bf16.msra.mxu0 0
      %1481 = vmatprep.subr.bf16.mxu0 0
      %1482 = vmatpush1.bf16.msra.mxu0 0
      %1483 = vmatprep.subr.bf16.mxu0 0
      %1484 = vmatpush1.bf16.msra.mxu0 0
      %1485 = vmatprep.mubr.bf16.mxu0 0
      %1486 = vmatmul.mubr.bf16.gmra.mrb[0].mxu0 %v600
      %v1487 = vpop.f32.mrb[0].mxu0
      %v1488 = vadd.f32 0.0, %v1487
      %v1489 = vpop.f32.mrb[0].mxu0
      %v1490 = vpop.f32.mrb[0].mxu0
      %v1491 = vadd.f32 0.0, %v1490
      %v1492 = vpop.f32.mrb[0].mxu0
      %1493 = vmatprep.mubr.bf16.mxu0 0
      %1494 = vmatmul.mubr.bf16.gmra.mrb[0].mxu0 %v603
      %v1495 = vpop.f32.mrb[0].mxu0
      %v1496 = vadd.f32 0.0, %v1495
      %v1497 = vpop.f32.mrb[0].mxu0
      %v1498 = vpop.f32.mrb[0].mxu0
      %v1499 = vadd.f32 0.0, %v1498
      %v1500 = vpop.f32.mrb[0].mxu0
      %1501 = vmatprep.mubr.bf16.mxu0 0
      %1502 = vmatmul.mubr.bf16.gmra.mrb[0].mxu0 %v606
      %v1503 = vpop.f32.mrb[0].mxu0
      %v1504 = vadd.f32 0.0, %v1503
      %v1505 = vpop.f32.mrb[0].mxu0
      %v1506 = vpop.f32.mrb[0].mxu0
      %v1507 = vadd.f32 0.0, %v1506
      %v1508 = vpop.f32.mrb[0].mxu0
      %1509 = vmatprep.mubr.bf16.mxu0 0
      %1510 = vmatmul.mubr.bf16.gmra.mrb[0].mxu0 %v609
      %v1511 = vpop.f32.mrb[0].mxu0
      %v1512 = vadd.f32 0.0, %v1511
      %v1513 = vpop.f32.mrb[0].mxu0
      %v1514 = vpop.f32.mrb[0].mxu0
      %v1515 = vadd.f32 0.0, %v1514
      %v1516 = vpop.f32.mrb[0].mxu0
      %1517 = vmatprep.mubr.bf16.mxu0 0
      %1518 = vmatmul.mubr.bf16.gmra.mrb[0].mxu0 %v612
      %v1519 = vpop.f32.mrb[0].mxu0
      %v1520 = vadd.f32 0.0, %v1519
      %v1521 = vpop.f32.mrb[0].mxu0
      %v1522 = vpop.f32.mrb[0].mxu0
      %v1523 = vadd.f32 0.0, %v1522
      %v1524 = vpop.f32.mrb[0].mxu0
      %1525 = vmatprep.mubr.bf16.mxu0 0
      %1526 = vmatmul.mubr.bf16.gmra.mrb[0].mxu0 %v615
      %v1527 = vpop.f32.mrb[0].mxu0
      %v1528 = vadd.f32 0.0, %v1527
      %v1529 = vpop.f32.mrb[0].mxu0
      %v1530 = vpop.f32.mrb[0].mxu0
      %v1531 = vadd.f32 0.0, %v1530
      %v1532 = vpop.f32.mrb[0].mxu0
      %1533 = vmatprep.mubr.bf16.mxu0 0
      %1534 = vmatmul.mubr.bf16.gmra.mrb[0].mxu0 %v984
      %v1535 = vpop.f32.mrb[0].mxu0
      %v1536 = vadd.f32 0.0, %v1535
      %v1537 = vpop.f32.mrb[0].mxu0
      %v1538 = vpop.f32.mrb[0].mxu0
      %v1539 = vadd.f32 0.0, %v1538
      %v1540 = vpop.f32.mrb[0].mxu0
      %1541 = vmatprep.mubr.bf16.mxu0 0
      %1542 = vmatmul.mubr.bf16.gmra.mrb[0].mxu0 %v1451
      %v1543 = vpop.f32.mrb[0].mxu0
      %v1544 = vadd.f32 0.0, %v1543
      %v1545 = vpop.f32.mrb[0].mxu0
      %v1546 = vpop.f32.mrb[0].mxu0
      %v1547 = vadd.f32 0.0, %v1546
      %v1548 = vpop.f32.mrb[0].mxu0
      %1549 = vdwg.mxu0
      %v1550 = vadd.f32 %v1400, %v1488
      %v1551 = vadd.f32 %v1401, %v1491
      %v1552 = vadd.f32 %v1402, %v1496
      %v1553 = vadd.f32 %v1403, %v1499
      %v1554 = vadd.f32 %v1404, %v1504
      %v1555 = vadd.f32 %v1405, %v1507
      %v1556 = vadd.f32 %v1406, %v1512
      %v1557 = vadd.f32 %v1407, %v1515
      %v1558 = vadd.f32 %v1408, %v1520
      %v1559 = vadd.f32 %v1409, %v1523
      %v1560 = vadd.f32 %v1410, %v1528
      %v1561 = vadd.f32 %v1411, %v1531
      %v1562 = vadd.f32 %v1412, %v1536
      %v1563 = vadd.f32 %v1413, %v1539
      %v1564 = vadd.f32 %v1414, %v1544
      %v1565 = vadd.f32 %v1415, %v1547
      %v1569 = vrot.slane %v276, 1
      %v1570 = vrot.slane %v277, 1
      %v1571 = vsel %vm349, %v1569, %v1570
      %v1572 = vrot.slane %v278, 1
      %v1573 = vsel %vm349, %v1570, %v1572
      %v1576 = vpack.c.bf16 %v1573, %v1571
      %s1577 = scalar_lea.vmem %s2, 224
      %v1578 = vld [vmem:[%s1577] sm:$0xf]
      %v1579 = vld [vmem:[%s1577 + $0x4] sm:$0xf]
      %v1580 = vld [vmem:[%s1577 + $0x8] sm:$0xf]
      %v1581 = vld [vmem:[%s1577 + $0xc] sm:$0xf]
      %v1582 = vld [vmem:[%s1577 + $0x10] sm:$0xf]
      %v1583 = vld [vmem:[%s1577 + $0x14] sm:$0xf]
      %v1584 = vld [vmem:[%s1577 + $0x18] sm:$0xf]
      %v1585 = vld [vmem:[%s1577 + $0x1c] sm:$0xf]
      %v1594 = vunpack.c.l.b16 %v1578
      %v1595 = vunpack.c.l.b16 %v1579
      %v1596 = vunpack.c.l.b16 %v1580
      %v1597 = vunpack.c.l.b16 %v1581
      %v1598 = vunpack.c.l.b16 %v1582
      %v1599 = vunpack.c.l.b16 %v1583
      %v1600 = vunpack.c.l.b16 %v1584
      %v1601 = vunpack.c.l.b16 %v1585
      %v1602 = vpack.c.b16 %v1595, %v1594
      %v1603 = vpack.c.b16 %v1597, %v1596
      %v1604 = vpack.c.b16 %v1599, %v1598
      %v1605 = vpack.c.b16 %v1601, %v1600
      %v1611 = vsel %vm447, %v1576, 0
      %1613 = vmatprep.subr.bf16.mxu0 0
      %1614 = vmatpush1.bf16.msra.mxu0 %v1602
      %1615 = vmatprep.subr.bf16.mxu0 0
      %1616 = vmatpush1.bf16.msra.mxu0 %v1603
      %1617 = vmatprep.subr.bf16.mxu0 0
      %1618 = vmatpush1.bf16.msra.mxu0 %v1604
      %1619 = vmatprep.subr.bf16.mxu0 0
      %1620 = vmatpush1.bf16.msra.mxu0 %v1605
      %1621 = vmatprep.subr.bf16.mxu0 0
      %1622 = vmatpush1.bf16.msra.mxu0 0
      %1623 = vmatprep.subr.bf16.mxu0 0
      %1624 = vmatpush1.bf16.msra.mxu0 0
      %1625 = vmatprep.subr.bf16.mxu0 0
      %1626 = vmatpush1.bf16.msra.mxu0 0
      %1627 = vmatprep.subr.bf16.mxu0 0
      %1628 = vmatpush1.bf16.msra.mxu0 0
      %1629 = vmatprep.subr.bf16.mxu0 0
      %1630 = vmatpush1.bf16.msra.mxu0 0
      %1631 = vmatprep.subr.bf16.mxu0 0
      %1632 = vmatpush1.bf16.msra.mxu0 0
      %1633 = vmatprep.subr.bf16.mxu0 0
      %1634 = vmatpush1.bf16.msra.mxu0 0
      %1635 = vmatprep.subr.bf16.mxu0 0
      %1636 = vmatpush1.bf16.msra.mxu0 0
      %1637 = vmatprep.subr.bf16.mxu0 0
      %1638 = vmatpush1.bf16.msra.mxu0 0
      %1639 = vmatprep.subr.bf16.mxu0 0
      %1640 = vmatpush1.bf16.msra.mxu0 0
      %1641 = vmatprep.subr.bf16.mxu0 0
      %1642 = vmatpush1.bf16.msra.mxu0 0
      %1643 = vmatprep.subr.bf16.mxu0 0
      %1644 = vmatpush1.bf16.msra.mxu0 0
      %1645 = vmatprep.mubr.bf16.mxu0 0
      %1646 = vmatmul.mubr.bf16.gmra.mrb[0].mxu0 %v455
      %v1647 = vpop.f32.mrb[0].mxu0
      %v1648 = vadd.f32 0.0, %v1647
      %v1649 = vpop.f32.mrb[0].mxu0
      %v1650 = vpop.f32.mrb[0].mxu0
      %v1651 = vadd.f32 0.0, %v1650
      %v1652 = vpop.f32.mrb[0].mxu0
      %1653 = vmatprep.mubr.bf16.mxu0 0
      %1654 = vmatmul.mubr.bf16.gmra.mrb[0].mxu0 %v458
      %v1655 = vpop.f32.mrb[0].mxu0
      %v1656 = vadd.f32 0.0, %v1655
      %v1657 = vpop.f32.mrb[0].mxu0
      %v1658 = vpop.f32.mrb[0].mxu0
      %v1659 = vadd.f32 0.0, %v1658
      %v1660 = vpop.f32.mrb[0].mxu0
      %1661 = vmatprep.mubr.bf16.mxu0 0
      %1662 = vmatmul.mubr.bf16.gmra.mrb[0].mxu0 %v461
      %v1663 = vpop.f32.mrb[0].mxu0
      %v1664 = vadd.f32 0.0, %v1663
      %v1665 = vpop.f32.mrb[0].mxu0
      %v1666 = vpop.f32.mrb[0].mxu0
      %v1667 = vadd.f32 0.0, %v1666
      %v1668 = vpop.f32.mrb[0].mxu0
      %1669 = vmatprep.mubr.bf16.mxu0 0
      %1670 = vmatmul.mubr.bf16.gmra.mrb[0].mxu0 %v464
      %v1671 = vpop.f32.mrb[0].mxu0
      %v1672 = vadd.f32 0.0, %v1671
      %v1673 = vpop.f32.mrb[0].mxu0
      %v1674 = vpop.f32.mrb[0].mxu0
      %v1675 = vadd.f32 0.0, %v1674
      %v1676 = vpop.f32.mrb[0].mxu0
      %1677 = vmatprep.mubr.bf16.mxu0 0
      %1678 = vmatmul.mubr.bf16.gmra.mrb[0].mxu0 %v467
      %v1679 = vpop.f32.mrb[0].mxu0
      %v1680 = vadd.f32 0.0, %v1679
      %v1681 = vpop.f32.mrb[0].mxu0
      %v1682 = vpop.f32.mrb[0].mxu0
      %v1683 = vadd.f32 0.0, %v1682
      %v1684 = vpop.f32.mrb[0].mxu0
      %1685 = vmatprep.mubr.bf16.mxu0 0
      %1686 = vmatmul.mubr.bf16.gmra.mrb[0].mxu0 %v470
      %v1687 = vpop.f32.mrb[0].mxu0
      %v1688 = vadd.f32 0.0, %v1687
      %v1689 = vpop.f32.mrb[0].mxu0
      %v1690 = vpop.f32.mrb[0].mxu0
      %v1691 = vadd.f32 0.0, %v1690
      %v1692 = vpop.f32.mrb[0].mxu0
      %1693 = vmatprep.mubr.bf16.mxu0 0
      %1694 = vmatmul.mubr.bf16.gmra.mrb[0].mxu0 %v1144
      %v1695 = vpop.f32.mrb[0].mxu0
      %v1696 = vadd.f32 0.0, %v1695
      %v1697 = vpop.f32.mrb[0].mxu0
      %v1698 = vpop.f32.mrb[0].mxu0
      %v1699 = vadd.f32 0.0, %v1698
      %v1700 = vpop.f32.mrb[0].mxu0
      %1701 = vmatprep.mubr.bf16.mxu0 0
      %1702 = vmatmul.mubr.bf16.gmra.mrb[0].mxu0 %v1611
      %v1703 = vpop.f32.mrb[0].mxu0
      %v1704 = vadd.f32 0.0, %v1703
      %v1705 = vpop.f32.mrb[0].mxu0
      %v1706 = vpop.f32.mrb[0].mxu0
      %v1707 = vadd.f32 0.0, %v1706
      %v1708 = vpop.f32.mrb[0].mxu0
      %1709 = vdwg.mxu0
      %v1710 = vadd.f32 %v1550, %v1648
      %v1711 = vadd.f32 %v1551, %v1651
      %v1712 = vadd.f32 %v1552, %v1656
      %v1713 = vadd.f32 %v1553, %v1659
      %v1714 = vadd.f32 %v1554, %v1664
      %v1715 = vadd.f32 %v1555, %v1667
      %v1716 = vadd.f32 %v1556, %v1672
      %v1717 = vadd.f32 %v1557, %v1675
      %v1718 = vadd.f32 %v1558, %v1680
      %v1719 = vadd.f32 %v1559, %v1683
      %v1720 = vadd.f32 %v1560, %v1688
      %v1721 = vadd.f32 %v1561, %v1691
      %v1722 = vadd.f32 %v1562, %v1696
      %v1723 = vadd.f32 %v1563, %v1699
      %v1724 = vadd.f32 %v1564, %v1704
      %v1725 = vadd.f32 %v1565, %v1707
      %v1726 = vrot.slane %v276, 2
      %v1727 = vrot.slane %v277, 2
      %v1728 = vsel %vm714, %v1726, %v1727
      %v1729 = vrot.slane %v278, 2
      %v1730 = vsel %vm714, %v1727, %v1729
      %v1733 = vpack.c.bf16 %v1730, %v1728
      %s1734 = scalar_lea.vmem %s2, 256
      %v1735 = vld [vmem:[%s1734] sm:$0xf]
      %v1736 = vld [vmem:[%s1734 + $0x4] sm:$0xf]
      %v1737 = vld [vmem:[%s1734 + $0x8] sm:$0xf]
      %v1738 = vld [vmem:[%s1734 + $0xc] sm:$0xf]
      %v1739 = vld [vmem:[%s1734 + $0x10] sm:$0xf]
      %v1740 = vld [vmem:[%s1734 + $0x14] sm:$0xf]
      %v1741 = vld [vmem:[%s1734 + $0x18] sm:$0xf]
      %v1742 = vld [vmem:[%s1734 + $0x1c] sm:$0xf]
      %v1751 = vunpack.c.l.b16 %v1735
      %v1752 = vunpack.c.l.b16 %v1736
      %v1753 = vunpack.c.l.b16 %v1737
      %v1754 = vunpack.c.l.b16 %v1738
      %v1755 = vunpack.c.l.b16 %v1739
      %v1756 = vunpack.c.l.b16 %v1740
      %v1757 = vunpack.c.l.b16 %v1741
      %v1758 = vunpack.c.l.b16 %v1742
      %v1759 = vpack.c.b16 %v1752, %v1751
      %v1760 = vpack.c.b16 %v1754, %v1753
      %v1761 = vpack.c.b16 %v1756, %v1755
      %v1762 = vpack.c.b16 %v1758, %v1757
      %v1768 = vsel %vm447, %v1733, 0
      %1770 = vmatprep.subr.bf16.mxu0 0
      %1771 = vmatpush1.bf16.msra.mxu0 %v1759
      %1772 = vmatprep.subr.bf16.mxu0 0
      %1773 = vmatpush1.bf16.msra.mxu0 %v1760
      %1774 = vmatprep.subr.bf16.mxu0 0
      %1775 = vmatpush1.bf16.msra.mxu0 %v1761
      %1776 = vmatprep.subr.bf16.mxu0 0
      %1777 = vmatpush1.bf16.msra.mxu0 %v1762
      %1778 = vmatprep.subr.bf16.mxu0 0
      %1779 = vmatpush1.bf16.msra.mxu0 0
      %1780 = vmatprep.subr.bf16.mxu0 0
      %1781 = vmatpush1.bf16.msra.mxu0 0
      %1782 = vmatprep.subr.bf16.mxu0 0
      %1783 = vmatpush1.bf16.msra.mxu0 0
      %1784 = vmatprep.subr.bf16.mxu0 0
      %1785 = vmatpush1.bf16.msra.mxu0 0
      %1786 = vmatprep.subr.bf16.mxu0 0
      %1787 = vmatpush1.bf16.msra.mxu0 0
      %1788 = vmatprep.subr.bf16.mxu0 0
      %1789 = vmatpush1.bf16.msra.mxu0 0
      %1790 = vmatprep.subr.bf16.mxu0 0
      %1791 = vmatpush1.bf16.msra.mxu0 0
      %1792 = vmatprep.subr.bf16.mxu0 0
      %1793 = vmatpush1.bf16.msra.mxu0 0
      %1794 = vmatprep.subr.bf16.mxu0 0
      %1795 = vmatpush1.bf16.msra.mxu0 0
      %1796 = vmatprep.subr.bf16.mxu0 0
      %1797 = vmatpush1.bf16.msra.mxu0 0
      %1798 = vmatprep.subr.bf16.mxu0 0
      %1799 = vmatpush1.bf16.msra.mxu0 0
      %1800 = vmatprep.subr.bf16.mxu0 0
      %1801 = vmatpush1.bf16.msra.mxu0 0
      %1802 = vmatprep.mubr.bf16.mxu0 0
      %1803 = vmatmul.mubr.bf16.gmra.mrb[0].mxu0 %v819
      %v1804 = vpop.f32.mrb[0].mxu0
      %v1805 = vadd.f32 0.0, %v1804
      %v1806 = vpop.f32.mrb[0].mxu0
      %v1807 = vpop.f32.mrb[0].mxu0
      %v1808 = vadd.f32 0.0, %v1807
      %v1809 = vpop.f32.mrb[0].mxu0
      %1810 = vmatprep.mubr.bf16.mxu0 0
      %1811 = vmatmul.mubr.bf16.gmra.mrb[0].mxu0 %v822
      %v1812 = vpop.f32.mrb[0].mxu0
      %v1813 = vadd.f32 0.0, %v1812
      %v1814 = vpop.f32.mrb[0].mxu0
      %v1815 = vpop.f32.mrb[0].mxu0
      %v1816 = vadd.f32 0.0, %v1815
      %v1817 = vpop.f32.mrb[0].mxu0
      %1818 = vmatprep.mubr.bf16.mxu0 0
      %1819 = vmatmul.mubr.bf16.gmra.mrb[0].mxu0 %v825
      %v1820 = vpop.f32.mrb[0].mxu0
      %v1821 = vadd.f32 0.0, %v1820
      %v1822 = vpop.f32.mrb[0].mxu0
      %v1823 = vpop.f32.mrb[0].mxu0
      %v1824 = vadd.f32 0.0, %v1823
      %v1825 = vpop.f32.mrb[0].mxu0
      %1826 = vmatprep.mubr.bf16.mxu0 0
      %1827 = vmatmul.mubr.bf16.gmra.mrb[0].mxu0 %v828
      %v1828 = vpop.f32.mrb[0].mxu0
      %v1829 = vadd.f32 0.0, %v1828
      %v1830 = vpop.f32.mrb[0].mxu0
      %v1831 = vpop.f32.mrb[0].mxu0
      %v1832 = vadd.f32 0.0, %v1831
      %v1833 = vpop.f32.mrb[0].mxu0
      %1834 = vmatprep.mubr.bf16.mxu0 0
      %1835 = vmatmul.mubr.bf16.gmra.mrb[0].mxu0 %v831
      %v1836 = vpop.f32.mrb[0].mxu0
      %v1837 = vadd.f32 0.0, %v1836
      %v1838 = vpop.f32.mrb[0].mxu0
      %v1839 = vpop.f32.mrb[0].mxu0
      %v1840 = vadd.f32 0.0, %v1839
      %v1841 = vpop.f32.mrb[0].mxu0
      %1842 = vmatprep.mubr.bf16.mxu0 0
      %1843 = vmatmul.mubr.bf16.gmra.mrb[0].mxu0 %v834
      %v1844 = vpop.f32.mrb[0].mxu0
      %v1845 = vadd.f32 0.0, %v1844
      %v1846 = vpop.f32.mrb[0].mxu0
      %v1847 = vpop.f32.mrb[0].mxu0
      %v1848 = vadd.f32 0.0, %v1847
      %v1849 = vpop.f32.mrb[0].mxu0
      %1850 = vmatprep.mubr.bf16.mxu0 0
      %1851 = vmatmul.mubr.bf16.gmra.mrb[0].mxu0 %v1301
      %v1852 = vpop.f32.mrb[0].mxu0
      %v1853 = vadd.f32 0.0, %v1852
      %v1854 = vpop.f32.mrb[0].mxu0
      %v1855 = vpop.f32.mrb[0].mxu0
      %v1856 = vadd.f32 0.0, %v1855
      %v1857 = vpop.f32.mrb[0].mxu0
      %1858 = vmatprep.mubr.bf16.mxu0 0
      %1859 = vmatmul.mubr.bf16.gmra.mrb[0].mxu0 %v1768
      %v1860 = vpop.f32.mrb[0].mxu0
      %v1861 = vadd.f32 0.0, %v1860
      %v1862 = vpop.f32.mrb[0].mxu0
      %v1863 = vpop.f32.mrb[0].mxu0
      %v1864 = vadd.f32 0.0, %v1863
      %v1865 = vpop.f32.mrb[0].mxu0
      %1866 = vdwg.mxu0
      %v1867 = vadd.f32 %v1710, %v1805
      %v1868 = vadd.f32 %v1711, %v1808
      %v1869 = vadd.f32 %v1712, %v1813
      %v1870 = vadd.f32 %v1713, %v1816
      %v1871 = vadd.f32 %v1714, %v1821
      %v1872 = vadd.f32 %v1715, %v1824
      %v1873 = vadd.f32 %v1716, %v1829
      %v1874 = vadd.f32 %v1717, %v1832
      %v1875 = vadd.f32 %v1718, %v1837
      %v1876 = vadd.f32 %v1719, %v1840
      %v1877 = vadd.f32 %v1720, %v1845
      %v1878 = vadd.f32 %v1721, %v1848
      %v1879 = vadd.f32 %v1722, %v1853
      %v1880 = vadd.f32 %v1723, %v1856
      %v1881 = vadd.f32 %v1724, %v1861
      %v1882 = vadd.f32 %v1725, %v1864
      %v1883 = vld [vmem:[%s3] sm:$0x1]
      %v1885 = vlaneseq
      %v1886 = vshrl.u32 %v1885, 7
      %v1887 = vsub.s32 0, %v1886
      %v1888 = vrot.slane %v1883, %v1887
      %v1890 = vadd.f32 %v1867, %v1888
      %v1891 = vadd.f32 %v1868, %v1888
      %v1892 = vadd.f32 %v1869, %v1888
      %v1893 = vadd.f32 %v1870, %v1888
      %v1894 = vadd.f32 %v1871, %v1888
      %v1895 = vadd.f32 %v1872, %v1888
      %v1896 = vadd.f32 %v1873, %v1888
      %v1897 = vadd.f32 %v1874, %v1888
      %v1898 = vadd.f32 %v1875, %v1888
      %v1899 = vadd.f32 %v1876, %v1888
      %v1900 = vadd.f32 %v1877, %v1888
      %v1901 = vadd.f32 %v1878, %v1888
      %v1902 = vadd.f32 %v1879, %v1888
      %v1903 = vadd.f32 %v1880, %v1888
      %v1904 = vadd.f32 %v1881, %v1888
      %v1905 = vadd.f32 %v1882, %v1888
      %vm1906 = vcmask 293888
      %v1907 = vsel %vm1906, %v1890, -inf
      %1908 = vmax.xlane.f32.xlu0 %v1907
      %v1909 = vpop.xlane.xlu0 %1908
      %v1910 = vsel %vm1906, %v1891, -inf
      %1911 = vmax.xlane.f32.xlu0 %v1910
      %v1912 = vpop.xlane.xlu0 %1911
      %v1913 = vsel %vm1906, %v1892, -inf
      %1914 = vmax.xlane.f32.xlu0 %v1913
      %v1915 = vpop.xlane.xlu0 %1914
      %v1916 = vsel %vm1906, %v1893, -inf
      %1917 = vmax.xlane.f32.xlu0 %v1916
      %v1918 = vpop.xlane.xlu0 %1917
      %v1919 = vsel %vm1906, %v1894, -inf
      %1920 = vmax.xlane.f32.xlu0 %v1919
      %v1921 = vpop.xlane.xlu0 %1920
      %v1922 = vsel %vm1906, %v1895, -inf
      %1923 = vmax.xlane.f32.xlu0 %v1922
      %v1924 = vpop.xlane.xlu0 %1923
      %v1925 = vsel %vm1906, %v1896, -inf
      %1926 = vmax.xlane.f32.xlu0 %v1925
      %v1927 = vpop.xlane.xlu0 %1926
      %v1928 = vsel %vm1906, %v1897, -inf
      %1929 = vmax.xlane.f32.xlu0 %v1928
      %v1930 = vpop.xlane.xlu0 %1929
      %v1931 = vsel %vm1906, %v1898, -inf
      %1932 = vmax.xlane.f32.xlu0 %v1931
      %v1933 = vpop.xlane.xlu0 %1932
      %v1934 = vsel %vm1906, %v1899, -inf
      %1935 = vmax.xlane.f32.xlu0 %v1934
      %v1936 = vpop.xlane.xlu0 %1935
      %v1937 = vsel %vm1906, %v1900, -inf
      %1938 = vmax.xlane.f32.xlu0 %v1937
      %v1939 = vpop.xlane.xlu0 %1938
      %v1940 = vsel %vm1906, %v1901, -inf
      %1941 = vmax.xlane.f32.xlu0 %v1940
      %v1942 = vpop.xlane.xlu0 %1941
      %v1943 = vsel %vm1906, %v1902, -inf
      %1944 = vmax.xlane.f32.xlu0 %v1943
      %v1945 = vpop.xlane.xlu0 %1944
      %v1946 = vsel %vm1906, %v1903, -inf
      %1947 = vmax.xlane.f32.xlu0 %v1946
      %v1948 = vpop.xlane.xlu0 %1947
      %v1949 = vsel %vm1906, %v1904, -inf
      %1950 = vmax.xlane.f32.xlu0 %v1949
      %v1951 = vpop.xlane.xlu0 %1950
      %v1952 = vsel %vm1906, %v1905, -inf
      %1953 = vmax.xlane.f32.xlu0 %v1952
      %v1954 = vpop.xlane.xlu0 %1953
      %v1955 = vsub.f32 %v1890, %v1909
      %v1956 = vsub.f32 %v1891, %v1912
      %v1957 = vsub.f32 %v1892, %v1915
      %v1958 = vsub.f32 %v1893, %v1918
      %v1959 = vsub.f32 %v1894, %v1921
      %v1960 = vsub.f32 %v1895, %v1924
      %v1961 = vsub.f32 %v1896, %v1927
      %v1962 = vsub.f32 %v1897, %v1930
      %v1963 = vsub.f32 %v1898, %v1933
      %v1964 = vsub.f32 %v1899, %v1936
      %v1965 = vsub.f32 %v1900, %v1939
      %v1966 = vsub.f32 %v1901, %v1942
      %v1967 = vsub.f32 %v1902, %v1945
      %v1968 = vsub.f32 %v1903, %v1948
      %v1969 = vsub.f32 %v1904, %v1951
      %v1970 = vsub.f32 %v1905, %v1954
      %v1971 = vmul.f32 %v1955, 1.442695
      %v1972 = vpow.pop %v1971
      %v1973 = vmul.f32 %v1956, 1.442695
      %v1974 = vpow.pop %v1973
      %v1975 = vmul.f32 %v1957, 1.442695
      %v1976 = vpow.pop %v1975
      %v1977 = vmul.f32 %v1958, 1.442695
      %v1978 = vpow.pop %v1977
      %v1979 = vmul.f32 %v1959, 1.442695
      %v1980 = vpow.pop %v1979
      %v1981 = vmul.f32 %v1960, 1.442695
      %v1982 = vpow.pop %v1981
      %v1983 = vmul.f32 %v1961, 1.442695
      %v1984 = vpow.pop %v1983
      %v1985 = vmul.f32 %v1962, 1.442695
      %v1986 = vpow.pop %v1985
      %v1987 = vmul.f32 %v1963, 1.442695
      %v1988 = vpow.pop %v1987
      %v1989 = vmul.f32 %v1964, 1.442695
      %v1990 = vpow.pop %v1989
      %v1991 = vmul.f32 %v1965, 1.442695
      %v1992 = vpow.pop %v1991
      %v1993 = vmul.f32 %v1966, 1.442695
      %v1994 = vpow.pop %v1993
      %v1995 = vmul.f32 %v1967, 1.442695
      %v1996 = vpow.pop %v1995
      %v1997 = vmul.f32 %v1968, 1.442695
      %v1998 = vpow.pop %v1997
      %v1999 = vmul.f32 %v1969, 1.442695
      %v2000 = vpow.pop %v1999
      %v2001 = vmul.f32 %v1970, 1.442695
      %v2002 = vpow.pop %v2001
      %v2003 = vsel %vm1906, %v1972, 0.0
      %2004 = vadd.xlane.f32.xlu0 %v2003
      %v2005 = vpop.xlane.xlu0 %2004
      %v2006 = vsel %vm1906, %v1974, 0.0
      %2007 = vadd.xlane.f32.xlu0 %v2006
      %v2008 = vpop.xlane.xlu0 %2007
      %v2009 = vsel %vm1906, %v1976, 0.0
      %2010 = vadd.xlane.f32.xlu0 %v2009
      %v2011 = vpop.xlane.xlu0 %2010
      %v2012 = vsel %vm1906, %v1978, 0.0
      %2013 = vadd.xlane.f32.xlu0 %v2012
      %v2014 = vpop.xlane.xlu0 %2013
      %v2015 = vsel %vm1906, %v1980, 0.0
      %2016 = vadd.xlane.f32.xlu0 %v2015
      %v2017 = vpop.xlane.xlu0 %2016
      %v2018 = vsel %vm1906, %v1982, 0.0
      %2019 = vadd.xlane.f32.xlu0 %v2018
      %v2020 = vpop.xlane.xlu0 %2019
      %v2021 = vsel %vm1906, %v1984, 0.0
      %2022 = vadd.xlane.f32.xlu0 %v2021
      %v2023 = vpop.xlane.xlu0 %2022
      %v2024 = vsel %vm1906, %v1986, 0.0
      %2025 = vadd.xlane.f32.xlu0 %v2024
      %v2026 = vpop.xlane.xlu0 %2025
      %v2027 = vsel %vm1906, %v1988, 0.0
      %2028 = vadd.xlane.f32.xlu0 %v2027
      %v2029 = vpop.xlane.xlu0 %2028
      %v2030 = vsel %vm1906, %v1990, 0.0
      %2031 = vadd.xlane.f32.xlu0 %v2030
      %v2032 = vpop.xlane.xlu0 %2031
      %v2033 = vsel %vm1906, %v1992, 0.0
      %2034 = vadd.xlane.f32.xlu0 %v2033
      %v2035 = vpop.xlane.xlu0 %2034
      %v2036 = vsel %vm1906, %v1994, 0.0
      %2037 = vadd.xlane.f32.xlu0 %v2036
      %v2038 = vpop.xlane.xlu0 %2037
      %v2039 = vsel %vm1906, %v1996, 0.0
      %2040 = vadd.xlane.f32.xlu0 %v2039
      %v2041 = vpop.xlane.xlu0 %2040
      %v2042 = vsel %vm1906, %v1998, 0.0
      %2043 = vadd.xlane.f32.xlu0 %v2042
      %v2044 = vpop.xlane.xlu0 %2043
      %v2045 = vsel %vm1906, %v2000, 0.0
      %2046 = vadd.xlane.f32.xlu0 %v2045
      %v2047 = vpop.xlane.xlu0 %2046
      %v2048 = vsel %vm1906, %v2002, 0.0
      %2049 = vadd.xlane.f32.xlu0 %v2048
      %v2050 = vpop.xlane.xlu0 %2049
      %v2051 = vmul.f32 %v1972, %v279
      %v2052 = vmul.f32 %v1974, %v280
      %v2053 = vmul.f32 %v1976, %v282
      %v2054 = vmul.f32 %v1978, %v283
      %v2055 = vmul.f32 %v1980, %v285
      %v2056 = vmul.f32 %v1982, %v286
      %v2057 = vmul.f32 %v1984, %v288
      %v2058 = vmul.f32 %v1986, %v289
      %v2059 = vmul.f32 %v1988, %v291
      %v2060 = vmul.f32 %v1990, %v292
      %v2061 = vmul.f32 %v1992, %v294
      %v2062 = vmul.f32 %v1994, %v295
      %v2063 = vmul.f32 %v1996, %v297
      %v2064 = vmul.f32 %v1998, %v298
      %v2065 = vmul.f32 %v2000, %v300
      %v2066 = vmul.f32 %v2002, %v301
      %vm2067 = vcmask 31744
      %v2068 = vsel %vm2067, %v2051, 0.0
      %2069 = vadd.xlane.f32.xlu0 %v2068
      %v2070 = vpop.xlane.xlu0 %2069
      %v2071 = vsel %vm2067, %v2052, 0.0
      %2072 = vadd.xlane.f32.xlu0 %v2071
      %v2073 = vpop.xlane.xlu0 %2072
      %v2074 = vsel %vm2067, %v2053, 0.0
      %2075 = vadd.xlane.f32.xlu0 %v2074
      %v2076 = vpop.xlane.xlu0 %2075
      %v2077 = vsel %vm2067, %v2054, 0.0
      %2078 = vadd.xlane.f32.xlu0 %v2077
      %v2079 = vpop.xlane.xlu0 %2078
      %v2080 = vsel %vm2067, %v2055, 0.0
      %2081 = vadd.xlane.f32.xlu0 %v2080
      %v2082 = vpop.xlane.xlu0 %2081
      %v2083 = vsel %vm2067, %v2056, 0.0
      %2084 = vadd.xlane.f32.xlu0 %v2083
      %v2085 = vpop.xlane.xlu0 %2084
      %v2086 = vsel %vm2067, %v2057, 0.0
      %2087 = vadd.xlane.f32.xlu0 %v2086
      %v2088 = vpop.xlane.xlu0 %2087
      %v2089 = vsel %vm2067, %v2058, 0.0
      %2090 = vadd.xlane.f32.xlu0 %v2089
      %v2091 = vpop.xlane.xlu0 %2090
      %v2092 = vsel %vm2067, %v2059, 0.0
      %2093 = vadd.xlane.f32.xlu0 %v2092
      %v2094 = vpop.xlane.xlu0 %2093
      %v2095 = vsel %vm2067, %v2060, 0.0
      %2096 = vadd.xlane.f32.xlu0 %v2095
      %v2097 = vpop.xlane.xlu0 %2096
      %v2098 = vsel %vm2067, %v2061, 0.0
      %2099 = vadd.xlane.f32.xlu0 %v2098
      %v2100 = vpop.xlane.xlu0 %2099
      %v2101 = vsel %vm2067, %v2062, 0.0
      %2102 = vadd.xlane.f32.xlu0 %v2101
      %v2103 = vpop.xlane.xlu0 %2102
      %v2104 = vsel %vm2067, %v2063, 0.0
      %2105 = vadd.xlane.f32.xlu0 %v2104
      %v2106 = vpop.xlane.xlu0 %2105
      %v2107 = vsel %vm2067, %v2064, 0.0
      %2108 = vadd.xlane.f32.xlu0 %v2107
      %v2109 = vpop.xlane.xlu0 %2108
      %v2110 = vsel %vm2067, %v2065, 0.0
      %2111 = vadd.xlane.f32.xlu0 %v2110
      %v2112 = vpop.xlane.xlu0 %2111
      %v2113 = vsel %vm2067, %v2066, 0.0
      %2114 = vadd.xlane.f32.xlu0 %v2113
      %v2115 = vpop.xlane.xlu0 %2114
      %v2116 = vadd.f32 %v2070, 0.0
      %v2117 = vadd.f32 %v2073, 0.0
      %v2118 = vadd.f32 %v2076, 0.0
      %v2119 = vadd.f32 %v2079, 0.0
      %v2120 = vadd.f32 %v2082, 0.0
      %v2121 = vadd.f32 %v2085, 0.0
      %v2122 = vadd.f32 %v2088, 0.0
      %v2123 = vadd.f32 %v2091, 0.0
      %v2124 = vadd.f32 %v2094, 0.0
      %v2125 = vadd.f32 %v2097, 0.0
      %v2126 = vadd.f32 %v2100, 0.0
      %v2127 = vadd.f32 %v2103, 0.0
      %v2128 = vadd.f32 %v2106, 0.0
      %v2129 = vadd.f32 %v2109, 0.0
      %v2130 = vadd.f32 %v2112, 0.0
      %v2131 = vadd.f32 %v2115, 0.0
      %v2156 = vrot.slane %v279, 1
      %v2157 = vrot.slane %v280, 1
      %v2158 = vsel %vm349, %v2156, %v2157
      %v2159 = vrot.slane %v281, 1
      %v2160 = vsel %vm349, %v2157, %v2159
      %v2161 = vrot.slane %v282, 1
      %v2162 = vrot.slane %v283, 1
      %v2163 = vsel %vm349, %v2161, %v2162
      %v2164 = vrot.slane %v284, 1
      %v2165 = vsel %vm349, %v2162, %v2164
      %v2166 = vrot.slane %v285, 1
      %v2167 = vrot.slane %v286, 1
      %v2168 = vsel %vm349, %v2166, %v2167
      %v2169 = vrot.slane %v287, 1
      %v2170 = vsel %vm349, %v2167, %v2169
      %v2171 = vrot.slane %v288, 1
      %v2172 = vrot.slane %v289, 1
      %v2173 = vsel %vm349, %v2171, %v2172
      %v2174 = vrot.slane %v290, 1
      %v2175 = vsel %vm349, %v2172, %v2174
      %v2176 = vrot.slane %v291, 1
      %v2177 = vrot.slane %v292, 1
      %v2178 = vsel %vm349, %v2176, %v2177
      %v2179 = vrot.slane %v293, 1
      %v2180 = vsel %vm349, %v2177, %v2179
      %v2181 = vrot.slane %v294, 1
      %v2182 = vrot.slane %v295, 1
      %v2183 = vsel %vm349, %v2181, %v2182
      %v2184 = vrot.slane %v296, 1
      %v2185 = vsel %vm349, %v2182, %v2184
      %v2186 = vrot.slane %v297, 1
      %v2187 = vrot.slane %v298, 1
      %v2188 = vsel %vm349, %v2186, %v2187
      %v2189 = vrot.slane %v299, 1
      %v2190 = vsel %vm349, %v2187, %v2189
      %v2191 = vrot.slane %v300, 1
      %v2192 = vrot.slane %v301, 1
      %v2193 = vsel %vm349, %v2191, %v2192
      %v2194 = vrot.slane %v302, 1
      %v2195 = vsel %vm349, %v2192, %v2194
      %2196 = vrot.lane.b32.xlu0 %v2158, 4
      %v2197 = vpop.permute.xlu0 %2196
      %2198 = vrot.lane.b32.xlu0 %v2160, 4
      %v2199 = vpop.permute.xlu0 %2198
      %2200 = vrot.lane.b32.xlu0 %v2163, 4
      %v2201 = vpop.permute.xlu0 %2200
      %2202 = vrot.lane.b32.xlu0 %v2165, 4
      %v2203 = vpop.permute.xlu0 %2202
      %2204 = vrot.lane.b32.xlu0 %v2168, 4
      %v2205 = vpop.permute.xlu0 %2204
      %2206 = vrot.lane.b32.xlu0 %v2170, 4
      %v2207 = vpop.permute.xlu0 %2206
      %2208 = vrot.lane.b32.xlu0 %v2173, 4
      %v2209 = vpop.permute.xlu0 %2208
      %2210 = vrot.lane.b32.xlu0 %v2175, 4
      %v2211 = vpop.permute.xlu0 %2210
      %2212 = vrot.lane.b32.xlu0 %v2178, 4
      %v2213 = vpop.permute.xlu0 %2212
      %2214 = vrot.lane.b32.xlu0 %v2180, 4
      %v2215 = vpop.permute.xlu0 %2214
      %2216 = vrot.lane.b32.xlu0 %v2183, 4
      %v2217 = vpop.permute.xlu0 %2216
      %2218 = vrot.lane.b32.xlu0 %v2185, 4
      %v2219 = vpop.permute.xlu0 %2218
      %2220 = vrot.lane.b32.xlu0 %v2188, 4
      %v2221 = vpop.permute.xlu0 %2220
      %2222 = vrot.lane.b32.xlu0 %v2190, 4
      %v2223 = vpop.permute.xlu0 %2222
      %2224 = vrot.lane.b32.xlu0 %v2193, 4
      %v2225 = vpop.permute.xlu0 %2224
      %2226 = vrot.lane.b32.xlu0 %v2195, 4
      %v2227 = vpop.permute.xlu0 %2226
      %v2244 = vmul.f32 %v1972, %v2197
      %v2245 = vmul.f32 %v1974, %v2199
      %v2246 = vmul.f32 %v1976, %v2201
      %v2247 = vmul.f32 %v1978, %v2203
      %v2248 = vmul.f32 %v1980, %v2205
      %v2249 = vmul.f32 %v1982, %v2207
      %v2250 = vmul.f32 %v1984, %v2209
      %v2251 = vmul.f32 %v1986, %v2211
      %v2252 = vmul.f32 %v1988, %v2213
      %v2253 = vmul.f32 %v1990, %v2215
      %v2254 = vmul.f32 %v1992, %v2217
      %v2255 = vmul.f32 %v1994, %v2219
      %v2256 = vmul.f32 %v1996, %v2221
      %v2257 = vmul.f32 %v1998, %v2223
      %v2258 = vmul.f32 %v2000, %v2225
      %v2259 = vmul.f32 %v2002, %v2227
      %2276 = vrot.lane.b32.xlu0 %v2244, 124
      %v2277 = vpop.permute.xlu0 %2276
      %2278 = vrot.lane.b32.xlu0 %v2245, 124
      %v2279 = vpop.permute.xlu0 %2278
      %2280 = vrot.lane.b32.xlu0 %v2246, 124
      %v2281 = vpop.permute.xlu0 %2280
      %2282 = vrot.lane.b32.xlu0 %v2247, 124
      %v2283 = vpop.permute.xlu0 %2282
      %2284 = vrot.lane.b32.xlu0 %v2248, 124
      %v2285 = vpop.permute.xlu0 %2284
      %2286 = vrot.lane.b32.xlu0 %v2249, 124
      %v2287 = vpop.permute.xlu0 %2286
      %2288 = vrot.lane.b32.xlu0 %v2250, 124
      %v2289 = vpop.permute.xlu0 %2288
      %2290 = vrot.lane.b32.xlu0 %v2251, 124
      %v2291 = vpop.permute.xlu0 %2290
      %2292 = vrot.lane.b32.xlu0 %v2252, 124
      %v2293 = vpop.permute.xlu0 %2292
      %2294 = vrot.lane.b32.xlu0 %v2253, 124
      %v2295 = vpop.permute.xlu0 %2294
      %2296 = vrot.lane.b32.xlu0 %v2254, 124
      %v2297 = vpop.permute.xlu0 %2296
      %2298 = vrot.lane.b32.xlu0 %v2255, 124
      %v2299 = vpop.permute.xlu0 %2298
      %2300 = vrot.lane.b32.xlu0 %v2256, 124
      %v2301 = vpop.permute.xlu0 %2300
      %2302 = vrot.lane.b32.xlu0 %v2257, 124
      %v2303 = vpop.permute.xlu0 %2302
      %2304 = vrot.lane.b32.xlu0 %v2258, 124
      %v2305 = vpop.permute.xlu0 %2304
      %2306 = vrot.lane.b32.xlu0 %v2259, 124
      %v2307 = vpop.permute.xlu0 %2306
      %v2324 = vsel %vm2067, %v2277, 0.0
      %2325 = vadd.xlane.f32.xlu0 %v2324
      %v2326 = vpop.xlane.xlu0 %2325
      %v2327 = vsel %vm2067, %v2279, 0.0
      %2328 = vadd.xlane.f32.xlu0 %v2327
      %v2329 = vpop.xlane.xlu0 %2328
      %v2330 = vsel %vm2067, %v2281, 0.0
      %2331 = vadd.xlane.f32.xlu0 %v2330
      %v2332 = vpop.xlane.xlu0 %2331
      %v2333 = vsel %vm2067, %v2283, 0.0
      %2334 = vadd.xlane.f32.xlu0 %v2333
      %v2335 = vpop.xlane.xlu0 %2334
      %v2336 = vsel %vm2067, %v2285, 0.0
      %2337 = vadd.xlane.f32.xlu0 %v2336
      %v2338 = vpop.xlane.xlu0 %2337
      %v2339 = vsel %vm2067, %v2287, 0.0
      %2340 = vadd.xlane.f32.xlu0 %v2339
      %v2341 = vpop.xlane.xlu0 %2340
      %v2342 = vsel %vm2067, %v2289, 0.0
      %2343 = vadd.xlane.f32.xlu0 %v2342
      %v2344 = vpop.xlane.xlu0 %2343
      %v2345 = vsel %vm2067, %v2291, 0.0
      %2346 = vadd.xlane.f32.xlu0 %v2345
      %v2347 = vpop.xlane.xlu0 %2346
      %v2348 = vsel %vm2067, %v2293, 0.0
      %2349 = vadd.xlane.f32.xlu0 %v2348
      %v2350 = vpop.xlane.xlu0 %2349
      %v2351 = vsel %vm2067, %v2295, 0.0
      %2352 = vadd.xlane.f32.xlu0 %v2351
      %v2353 = vpop.xlane.xlu0 %2352
      %v2354 = vsel %vm2067, %v2297, 0.0
      %2355 = vadd.xlane.f32.xlu0 %v2354
      %v2356 = vpop.xlane.xlu0 %2355
      %v2357 = vsel %vm2067, %v2299, 0.0
      %2358 = vadd.xlane.f32.xlu0 %v2357
      %v2359 = vpop.xlane.xlu0 %2358
      %v2360 = vsel %vm2067, %v2301, 0.0
      %2361 = vadd.xlane.f32.xlu0 %v2360
      %v2362 = vpop.xlane.xlu0 %2361
      %v2363 = vsel %vm2067, %v2303, 0.0
      %2364 = vadd.xlane.f32.xlu0 %v2363
      %v2365 = vpop.xlane.xlu0 %2364
      %v2366 = vsel %vm2067, %v2305, 0.0
      %2367 = vadd.xlane.f32.xlu0 %v2366
      %v2368 = vpop.xlane.xlu0 %2367
      %v2369 = vsel %vm2067, %v2307, 0.0
      %2370 = vadd.xlane.f32.xlu0 %v2369
      %v2371 = vpop.xlane.xlu0 %2370
      %v2372 = vadd.f32 %v2116, %v2326
      %v2373 = vadd.f32 %v2117, %v2329
      %v2374 = vadd.f32 %v2118, %v2332
      %v2375 = vadd.f32 %v2119, %v2335
      %v2376 = vadd.f32 %v2120, %v2338
      %v2377 = vadd.f32 %v2121, %v2341
      %v2378 = vadd.f32 %v2122, %v2344
      %v2379 = vadd.f32 %v2123, %v2347
      %v2380 = vadd.f32 %v2124, %v2350
      %v2381 = vadd.f32 %v2125, %v2353
      %v2382 = vadd.f32 %v2126, %v2356
      %v2383 = vadd.f32 %v2127, %v2359
      %v2384 = vadd.f32 %v2128, %v2362
      %v2385 = vadd.f32 %v2129, %v2365
      %v2386 = vadd.f32 %v2130, %v2368
      %v2387 = vadd.f32 %v2131, %v2371
      %v2388 = vrot.slane %v279, 2
      %v2389 = vrot.slane %v280, 2
      %v2390 = vsel %vm714, %v2388, %v2389
      %v2391 = vrot.slane %v281, 2
      %v2392 = vsel %vm714, %v2389, %v2391
      %v2393 = vrot.slane %v282, 2
      %v2394 = vrot.slane %v283, 2
      %v2395 = vsel %vm714, %v2393, %v2394
      %v2396 = vrot.slane %v284, 2
      %v2397 = vsel %vm714, %v2394, %v2396
      %v2398 = vrot.slane %v285, 2
      %v2399 = vrot.slane %v286, 2
      %v2400 = vsel %vm714, %v2398, %v2399
      %v2401 = vrot.slane %v287, 2
      %v2402 = vsel %vm714, %v2399, %v2401
      %v2403 = vrot.slane %v288, 2
      %v2404 = vrot.slane %v289, 2
      %v2405 = vsel %vm714, %v2403, %v2404
      %v2406 = vrot.slane %v290, 2
      %v2407 = vsel %vm714, %v2404, %v2406
      %v2408 = vrot.slane %v291, 2
      %v2409 = vrot.slane %v292, 2
      %v2410 = vsel %vm714, %v2408, %v2409
      %v2411 = vrot.slane %v293, 2
      %v2412 = vsel %vm714, %v2409, %v2411
      %v2413 = vrot.slane %v294, 2
      %v2414 = vrot.slane %v295, 2
      %v2415 = vsel %vm714, %v2413, %v2414
      %v2416 = vrot.slane %v296, 2
      %v2417 = vsel %vm714, %v2414, %v2416
      %v2418 = vrot.slane %v297, 2
      %v2419 = vrot.slane %v298, 2
      %v2420 = vsel %vm714, %v2418, %v2419
      %v2421 = vrot.slane %v299, 2
      %v2422 = vsel %vm714, %v2419, %v2421
      %v2423 = vrot.slane %v300, 2
      %v2424 = vrot.slane %v301, 2
      %v2425 = vsel %vm714, %v2423, %v2424
      %v2426 = vrot.slane %v302, 2
      %v2427 = vsel %vm714, %v2424, %v2426
      %2428 = vrot.lane.b32.xlu0 %v2390, 8
      %v2429 = vpop.permute.xlu0 %2428
      %2430 = vrot.lane.b32.xlu0 %v2392, 8
      %v2431 = vpop.permute.xlu0 %2430
      %2432 = vrot.lane.b32.xlu0 %v2395, 8
      %v2433 = vpop.permute.xlu0 %2432
      %2434 = vrot.lane.b32.xlu0 %v2397, 8
      %v2435 = vpop.permute.xlu0 %2434
      %2436 = vrot.lane.b32.xlu0 %v2400, 8
      %v2437 = vpop.permute.xlu0 %2436
      %2438 = vrot.lane.b32.xlu0 %v2402, 8
      %v2439 = vpop.permute.xlu0 %2438
      %2440 = vrot.lane.b32.xlu0 %v2405, 8
      %v2441 = vpop.permute.xlu0 %2440
      %2442 = vrot.lane.b32.xlu0 %v2407, 8
      %v2443 = vpop.permute.xlu0 %2442
      %2444 = vrot.lane.b32.xlu0 %v2410, 8
      %v2445 = vpop.permute.xlu0 %2444
      %2446 = vrot.lane.b32.xlu0 %v2412, 8
      %v2447 = vpop.permute.xlu0 %2446
      %2448 = vrot.lane.b32.xlu0 %v2415, 8
      %v2449 = vpop.permute.xlu0 %2448
      %2450 = vrot.lane.b32.xlu0 %v2417, 8
      %v2451 = vpop.permute.xlu0 %2450
      %2452 = vrot.lane.b32.xlu0 %v2420, 8
      %v2453 = vpop.permute.xlu0 %2452
      %2454 = vrot.lane.b32.xlu0 %v2422, 8
      %v2455 = vpop.permute.xlu0 %2454
      %2456 = vrot.lane.b32.xlu0 %v2425, 8
      %v2457 = vpop.permute.xlu0 %2456
      %2458 = vrot.lane.b32.xlu0 %v2427, 8
      %v2459 = vpop.permute.xlu0 %2458
      %v2476 = vmul.f32 %v1972, %v2429
      %v2477 = vmul.f32 %v1974, %v2431
      %v2478 = vmul.f32 %v1976, %v2433
      %v2479 = vmul.f32 %v1978, %v2435
      %v2480 = vmul.f32 %v1980, %v2437
      %v2481 = vmul.f32 %v1982, %v2439
      %v2482 = vmul.f32 %v1984, %v2441
      %v2483 = vmul.f32 %v1986, %v2443
      %v2484 = vmul.f32 %v1988, %v2445
      %v2485 = vmul.f32 %v1990, %v2447
      %v2486 = vmul.f32 %v1992, %v2449
      %v2487 = vmul.f32 %v1994, %v2451
      %v2488 = vmul.f32 %v1996, %v2453
      %v2489 = vmul.f32 %v1998, %v2455
      %v2490 = vmul.f32 %v2000, %v2457
      %v2491 = vmul.f32 %v2002, %v2459
      %2508 = vrot.lane.b32.xlu0 %v2476, 120
      %v2509 = vpop.permute.xlu0 %2508
      %2510 = vrot.lane.b32.xlu0 %v2477, 120
      %v2511 = vpop.permute.xlu0 %2510
      %2512 = vrot.lane.b32.xlu0 %v2478, 120
      %v2513 = vpop.permute.xlu0 %2512
      %2514 = vrot.lane.b32.xlu0 %v2479, 120
      %v2515 = vpop.permute.xlu0 %2514
      %2516 = vrot.lane.b32.xlu0 %v2480, 120
      %v2517 = vpop.permute.xlu0 %2516
      %2518 = vrot.lane.b32.xlu0 %v2481, 120
      %v2519 = vpop.permute.xlu0 %2518
      %2520 = vrot.lane.b32.xlu0 %v2482, 120
      %v2521 = vpop.permute.xlu0 %2520
      %2522 = vrot.lane.b32.xlu0 %v2483, 120
      %v2523 = vpop.permute.xlu0 %2522
      %2524 = vrot.lane.b32.xlu0 %v2484, 120
      %v2525 = vpop.permute.xlu0 %2524
      %2526 = vrot.lane.b32.xlu0 %v2485, 120
      %v2527 = vpop.permute.xlu0 %2526
      %2528 = vrot.lane.b32.xlu0 %v2486, 120
      %v2529 = vpop.permute.xlu0 %2528
      %2530 = vrot.lane.b32.xlu0 %v2487, 120
      %v2531 = vpop.permute.xlu0 %2530
      %2532 = vrot.lane.b32.xlu0 %v2488, 120
      %v2533 = vpop.permute.xlu0 %2532
      %2534 = vrot.lane.b32.xlu0 %v2489, 120
      %v2535 = vpop.permute.xlu0 %2534
      %2536 = vrot.lane.b32.xlu0 %v2490, 120
      %v2537 = vpop.permute.xlu0 %2536
      %2538 = vrot.lane.b32.xlu0 %v2491, 120
      %v2539 = vpop.permute.xlu0 %2538
      %v2556 = vsel %vm2067, %v2509, 0.0
      %2557 = vadd.xlane.f32.xlu0 %v2556
      %v2558 = vpop.xlane.xlu0 %2557
      %v2559 = vsel %vm2067, %v2511, 0.0
      %2560 = vadd.xlane.f32.xlu0 %v2559
      %v2561 = vpop.xlane.xlu0 %2560
      %v2562 = vsel %vm2067, %v2513, 0.0
      %2563 = vadd.xlane.f32.xlu0 %v2562
      %v2564 = vpop.xlane.xlu0 %2563
      %v2565 = vsel %vm2067, %v2515, 0.0
      %2566 = vadd.xlane.f32.xlu0 %v2565
      %v2567 = vpop.xlane.xlu0 %2566
      %v2568 = vsel %vm2067, %v2517, 0.0
      %2569 = vadd.xlane.f32.xlu0 %v2568
      %v2570 = vpop.xlane.xlu0 %2569
      %v2571 = vsel %vm2067, %v2519, 0.0
      %2572 = vadd.xlane.f32.xlu0 %v2571
      %v2573 = vpop.xlane.xlu0 %2572
      %v2574 = vsel %vm2067, %v2521, 0.0
      %2575 = vadd.xlane.f32.xlu0 %v2574
      %v2576 = vpop.xlane.xlu0 %2575
      %v2577 = vsel %vm2067, %v2523, 0.0
      %2578 = vadd.xlane.f32.xlu0 %v2577
      %v2579 = vpop.xlane.xlu0 %2578
      %v2580 = vsel %vm2067, %v2525, 0.0
      %2581 = vadd.xlane.f32.xlu0 %v2580
      %v2582 = vpop.xlane.xlu0 %2581
      %v2583 = vsel %vm2067, %v2527, 0.0
      %2584 = vadd.xlane.f32.xlu0 %v2583
      %v2585 = vpop.xlane.xlu0 %2584
      %v2586 = vsel %vm2067, %v2529, 0.0
      %2587 = vadd.xlane.f32.xlu0 %v2586
      %v2588 = vpop.xlane.xlu0 %2587
      %v2589 = vsel %vm2067, %v2531, 0.0
      %2590 = vadd.xlane.f32.xlu0 %v2589
      %v2591 = vpop.xlane.xlu0 %2590
      %v2592 = vsel %vm2067, %v2533, 0.0
      %2593 = vadd.xlane.f32.xlu0 %v2592
      %v2594 = vpop.xlane.xlu0 %2593
      %v2595 = vsel %vm2067, %v2535, 0.0
      %2596 = vadd.xlane.f32.xlu0 %v2595
      %v2597 = vpop.xlane.xlu0 %2596
      %v2598 = vsel %vm2067, %v2537, 0.0
      %2599 = vadd.xlane.f32.xlu0 %v2598
      %v2600 = vpop.xlane.xlu0 %2599
      %v2601 = vsel %vm2067, %v2539, 0.0
      %2602 = vadd.xlane.f32.xlu0 %v2601
      %v2603 = vpop.xlane.xlu0 %2602
      %v2604 = vadd.f32 %v2372, %v2558
      %v2605 = vadd.f32 %v2373, %v2561
      %v2606 = vadd.f32 %v2374, %v2564
      %v2607 = vadd.f32 %v2375, %v2567
      %v2608 = vadd.f32 %v2376, %v2570
      %v2609 = vadd.f32 %v2377, %v2573
      %v2610 = vadd.f32 %v2378, %v2576
      %v2611 = vadd.f32 %v2379, %v2579
      %v2612 = vadd.f32 %v2380, %v2582
      %v2613 = vadd.f32 %v2381, %v2585
      %v2614 = vadd.f32 %v2382, %v2588
      %v2615 = vadd.f32 %v2383, %v2591
      %v2616 = vadd.f32 %v2384, %v2594
      %v2617 = vadd.f32 %v2385, %v2597
      %v2618 = vadd.f32 %v2386, %v2600
      %v2619 = vadd.f32 %v2387, %v2603
      %2622 = vrot.lane.b32.xlu0 %v282, 12
      %v2623 = vpop.permute.xlu0 %2622
      %2624 = vrot.lane.b32.xlu0 %v283, 12
      %v2625 = vpop.permute.xlu0 %2624
      %2626 = vrot.lane.b32.xlu0 %v285, 12
      %v2627 = vpop.permute.xlu0 %2626
      %2628 = vrot.lane.b32.xlu0 %v286, 12
      %v2629 = vpop.permute.xlu0 %2628
      %2630 = vrot.lane.b32.xlu0 %v288, 12
      %v2631 = vpop.permute.xlu0 %2630
      %2632 = vrot.lane.b32.xlu0 %v289, 12
      %v2633 = vpop.permute.xlu0 %2632
      %2634 = vrot.lane.b32.xlu0 %v291, 12
      %v2635 = vpop.permute.xlu0 %2634
      %2636 = vrot.lane.b32.xlu0 %v292, 12
      %v2637 = vpop.permute.xlu0 %2636
      %2638 = vrot.lane.b32.xlu0 %v294, 12
      %v2639 = vpop.permute.xlu0 %2638
      %2640 = vrot.lane.b32.xlu0 %v295, 12
      %v2641 = vpop.permute.xlu0 %2640
      %2642 = vrot.lane.b32.xlu0 %v297, 12
      %v2643 = vpop.permute.xlu0 %2642
      %2644 = vrot.lane.b32.xlu0 %v298, 12
      %v2645 = vpop.permute.xlu0 %2644
      %2646 = vrot.lane.b32.xlu0 %v300, 12
      %v2647 = vpop.permute.xlu0 %2646
      %2648 = vrot.lane.b32.xlu0 %v301, 12
      %v2649 = vpop.permute.xlu0 %2648
      %2650 = vrot.lane.b32.xlu0 %v303, 12
      %v2651 = vpop.permute.xlu0 %2650
      %2652 = vrot.lane.b32.xlu0 %v304, 12
      %v2653 = vpop.permute.xlu0 %2652
      %v2670 = vmul.f32 %v1972, %v2623
      %v2671 = vmul.f32 %v1974, %v2625
      %v2672 = vmul.f32 %v1976, %v2627
      %v2673 = vmul.f32 %v1978, %v2629
      %v2674 = vmul.f32 %v1980, %v2631
      %v2675 = vmul.f32 %v1982, %v2633
      %v2676 = vmul.f32 %v1984, %v2635
      %v2677 = vmul.f32 %v1986, %v2637
      %v2678 = vmul.f32 %v1988, %v2639
      %v2679 = vmul.f32 %v1990, %v2641
      %v2680 = vmul.f32 %v1992, %v2643
      %v2681 = vmul.f32 %v1994, %v2645
      %v2682 = vmul.f32 %v1996, %v2647
      %v2683 = vmul.f32 %v1998, %v2649
      %v2684 = vmul.f32 %v2000, %v2651
      %v2685 = vmul.f32 %v2002, %v2653
      %2702 = vrot.lane.b32.xlu0 %v2670, 116
      %v2703 = vpop.permute.xlu0 %2702
      %2704 = vrot.lane.b32.xlu0 %v2671, 116
      %v2705 = vpop.permute.xlu0 %2704
      %2706 = vrot.lane.b32.xlu0 %v2672, 116
      %v2707 = vpop.permute.xlu0 %2706
      %2708 = vrot.lane.b32.xlu0 %v2673, 116
      %v2709 = vpop.permute.xlu0 %2708
      %2710 = vrot.lane.b32.xlu0 %v2674, 116
      %v2711 = vpop.permute.xlu0 %2710
      %2712 = vrot.lane.b32.xlu0 %v2675, 116
      %v2713 = vpop.permute.xlu0 %2712
      %2714 = vrot.lane.b32.xlu0 %v2676, 116
      %v2715 = vpop.permute.xlu0 %2714
      %2716 = vrot.lane.b32.xlu0 %v2677, 116
      %v2717 = vpop.permute.xlu0 %2716
      %2718 = vrot.lane.b32.xlu0 %v2678, 116
      %v2719 = vpop.permute.xlu0 %2718
      %2720 = vrot.lane.b32.xlu0 %v2679, 116
      %v2721 = vpop.permute.xlu0 %2720
      %2722 = vrot.lane.b32.xlu0 %v2680, 116
      %v2723 = vpop.permute.xlu0 %2722
      %2724 = vrot.lane.b32.xlu0 %v2681, 116
      %v2725 = vpop.permute.xlu0 %2724
      %2726 = vrot.lane.b32.xlu0 %v2682, 116
      %v2727 = vpop.permute.xlu0 %2726
      %2728 = vrot.lane.b32.xlu0 %v2683, 116
      %v2729 = vpop.permute.xlu0 %2728
      %2730 = vrot.lane.b32.xlu0 %v2684, 116
      %v2731 = vpop.permute.xlu0 %2730
      %2732 = vrot.lane.b32.xlu0 %v2685, 116
      %v2733 = vpop.permute.xlu0 %2732
      %v2750 = vsel %vm2067, %v2703, 0.0
      %2751 = vadd.xlane.f32.xlu0 %v2750
      %v2752 = vpop.xlane.xlu0 %2751
      %v2753 = vsel %vm2067, %v2705, 0.0
      %2754 = vadd.xlane.f32.xlu0 %v2753
      %v2755 = vpop.xlane.xlu0 %2754
      %v2756 = vsel %vm2067, %v2707, 0.0
      %2757 = vadd.xlane.f32.xlu0 %v2756
      %v2758 = vpop.xlane.xlu0 %2757
      %v2759 = vsel %vm2067, %v2709, 0.0
      %2760 = vadd.xlane.f32.xlu0 %v2759
      %v2761 = vpop.xlane.xlu0 %2760
      %v2762 = vsel %vm2067, %v2711, 0.0
      %2763 = vadd.xlane.f32.xlu0 %v2762
      %v2764 = vpop.xlane.xlu0 %2763
      %v2765 = vsel %vm2067, %v2713, 0.0
      %2766 = vadd.xlane.f32.xlu0 %v2765
      %v2767 = vpop.xlane.xlu0 %2766
      %v2768 = vsel %vm2067, %v2715, 0.0
      %2769 = vadd.xlane.f32.xlu0 %v2768
      %v2770 = vpop.xlane.xlu0 %2769
      %v2771 = vsel %vm2067, %v2717, 0.0
      %2772 = vadd.xlane.f32.xlu0 %v2771
      %v2773 = vpop.xlane.xlu0 %2772
      %v2774 = vsel %vm2067, %v2719, 0.0
      %2775 = vadd.xlane.f32.xlu0 %v2774
      %v2776 = vpop.xlane.xlu0 %2775
      %v2777 = vsel %vm2067, %v2721, 0.0
      %2778 = vadd.xlane.f32.xlu0 %v2777
      %v2779 = vpop.xlane.xlu0 %2778
      %v2780 = vsel %vm2067, %v2723, 0.0
      %2781 = vadd.xlane.f32.xlu0 %v2780
      %v2782 = vpop.xlane.xlu0 %2781
      %v2783 = vsel %vm2067, %v2725, 0.0
      %2784 = vadd.xlane.f32.xlu0 %v2783
      %v2785 = vpop.xlane.xlu0 %2784
      %v2786 = vsel %vm2067, %v2727, 0.0
      %2787 = vadd.xlane.f32.xlu0 %v2786
      %v2788 = vpop.xlane.xlu0 %2787
      %v2789 = vsel %vm2067, %v2729, 0.0
      %2790 = vadd.xlane.f32.xlu0 %v2789
      %v2791 = vpop.xlane.xlu0 %2790
      %v2792 = vsel %vm2067, %v2731, 0.0
      %2793 = vadd.xlane.f32.xlu0 %v2792
      %v2794 = vpop.xlane.xlu0 %2793
      %v2795 = vsel %vm2067, %v2733, 0.0
      %2796 = vadd.xlane.f32.xlu0 %v2795
      %v2797 = vpop.xlane.xlu0 %2796
      %v2798 = vadd.f32 %v2604, %v2752
      %v2799 = vadd.f32 %v2605, %v2755
      %v2800 = vadd.f32 %v2606, %v2758
      %v2801 = vadd.f32 %v2607, %v2761
      %v2802 = vadd.f32 %v2608, %v2764
      %v2803 = vadd.f32 %v2609, %v2767
      %v2804 = vadd.f32 %v2610, %v2770
      %v2805 = vadd.f32 %v2611, %v2773
      %v2806 = vadd.f32 %v2612, %v2776
      %v2807 = vadd.f32 %v2613, %v2779
      %v2808 = vadd.f32 %v2614, %v2782
      %v2809 = vadd.f32 %v2615, %v2785
      %v2810 = vadd.f32 %v2616, %v2788
      %v2811 = vadd.f32 %v2617, %v2791
      %v2812 = vadd.f32 %v2618, %v2794
      %v2813 = vadd.f32 %v2619, %v2797
      %v2815 = vrot.slane %v303, 1
      %v2816 = vrot.slane %v304, 1
      %v2817 = vsel %vm349, %v2815, %v2816
      %v2818 = vrot.slane %v305, 1
      %v2819 = vsel %vm349, %v2816, %v2818
      %2820 = vrot.lane.b32.xlu0 %v2163, 16
      %v2821 = vpop.permute.xlu0 %2820
      %2822 = vrot.lane.b32.xlu0 %v2165, 16
      %v2823 = vpop.permute.xlu0 %2822
      %2824 = vrot.lane.b32.xlu0 %v2168, 16
      %v2825 = vpop.permute.xlu0 %2824
      %2826 = vrot.lane.b32.xlu0 %v2170, 16
      %v2827 = vpop.permute.xlu0 %2826
      %2828 = vrot.lane.b32.xlu0 %v2173, 16
      %v2829 = vpop.permute.xlu0 %2828
      %2830 = vrot.lane.b32.xlu0 %v2175, 16
      %v2831 = vpop.permute.xlu0 %2830
      %2832 = vrot.lane.b32.xlu0 %v2178, 16
      %v2833 = vpop.permute.xlu0 %2832
      %2834 = vrot.lane.b32.xlu0 %v2180, 16
      %v2835 = vpop.permute.xlu0 %2834
      %2836 = vrot.lane.b32.xlu0 %v2183, 16
      %v2837 = vpop.permute.xlu0 %2836
      %2838 = vrot.lane.b32.xlu0 %v2185, 16
      %v2839 = vpop.permute.xlu0 %2838
      %2840 = vrot.lane.b32.xlu0 %v2188, 16
      %v2841 = vpop.permute.xlu0 %2840
      %2842 = vrot.lane.b32.xlu0 %v2190, 16
      %v2843 = vpop.permute.xlu0 %2842
      %2844 = vrot.lane.b32.xlu0 %v2193, 16
      %v2845 = vpop.permute.xlu0 %2844
      %2846 = vrot.lane.b32.xlu0 %v2195, 16
      %v2847 = vpop.permute.xlu0 %2846
      %2848 = vrot.lane.b32.xlu0 %v2817, 16
      %v2849 = vpop.permute.xlu0 %2848
      %2850 = vrot.lane.b32.xlu0 %v2819, 16
      %v2851 = vpop.permute.xlu0 %2850
      %v2868 = vmul.f32 %v1972, %v2821
      %v2869 = vmul.f32 %v1974, %v2823
      %v2870 = vmul.f32 %v1976, %v2825
      %v2871 = vmul.f32 %v1978, %v2827
      %v2872 = vmul.f32 %v1980, %v2829
      %v2873 = vmul.f32 %v1982, %v2831
      %v2874 = vmul.f32 %v1984, %v2833
      %v2875 = vmul.f32 %v1986, %v2835
      %v2876 = vmul.f32 %v1988, %v2837
      %v2877 = vmul.f32 %v1990, %v2839
      %v2878 = vmul.f32 %v1992, %v2841
      %v2879 = vmul.f32 %v1994, %v2843
      %v2880 = vmul.f32 %v1996, %v2845
      %v2881 = vmul.f32 %v1998, %v2847
      %v2882 = vmul.f32 %v2000, %v2849
      %v2883 = vmul.f32 %v2002, %v2851
      %2900 = vrot.lane.b32.xlu0 %v2868, 112
      %v2901 = vpop.permute.xlu0 %2900
      %2902 = vrot.lane.b32.xlu0 %v2869, 112
      %v2903 = vpop.permute.xlu0 %2902
      %2904 = vrot.lane.b32.xlu0 %v2870, 112
      %v2905 = vpop.permute.xlu0 %2904
      %2906 = vrot.lane.b32.xlu0 %v2871, 112
      %v2907 = vpop.permute.xlu0 %2906
      %2908 = vrot.lane.b32.xlu0 %v2872, 112
      %v2909 = vpop.permute.xlu0 %2908
      %2910 = vrot.lane.b32.xlu0 %v2873, 112
      %v2911 = vpop.permute.xlu0 %2910
      %2912 = vrot.lane.b32.xlu0 %v2874, 112
      %v2913 = vpop.permute.xlu0 %2912
      %2914 = vrot.lane.b32.xlu0 %v2875, 112
      %v2915 = vpop.permute.xlu0 %2914
      %2916 = vrot.lane.b32.xlu0 %v2876, 112
      %v2917 = vpop.permute.xlu0 %2916
      %2918 = vrot.lane.b32.xlu0 %v2877, 112
      %v2919 = vpop.permute.xlu0 %2918
      %2920 = vrot.lane.b32.xlu0 %v2878, 112
      %v2921 = vpop.permute.xlu0 %2920
      %2922 = vrot.lane.b32.xlu0 %v2879, 112
      %v2923 = vpop.permute.xlu0 %2922
      %2924 = vrot.lane.b32.xlu0 %v2880, 112
      %v2925 = vpop.permute.xlu0 %2924
      %2926 = vrot.lane.b32.xlu0 %v2881, 112
      %v2927 = vpop.permute.xlu0 %2926
      %2928 = vrot.lane.b32.xlu0 %v2882, 112
      %v2929 = vpop.permute.xlu0 %2928
      %2930 = vrot.lane.b32.xlu0 %v2883, 112
      %v2931 = vpop.permute.xlu0 %2930
      %v2948 = vsel %vm2067, %v2901, 0.0
      %2949 = vadd.xlane.f32.xlu0 %v2948
      %v2950 = vpop.xlane.xlu0 %2949
      %v2951 = vsel %vm2067, %v2903, 0.0
      %2952 = vadd.xlane.f32.xlu0 %v2951
      %v2953 = vpop.xlane.xlu0 %2952
      %v2954 = vsel %vm2067, %v2905, 0.0
      %2955 = vadd.xlane.f32.xlu0 %v2954
      %v2956 = vpop.xlane.xlu0 %2955
      %v2957 = vsel %vm2067, %v2907, 0.0
      %2958 = vadd.xlane.f32.xlu0 %v2957
      %v2959 = vpop.xlane.xlu0 %2958
      %v2960 = vsel %vm2067, %v2909, 0.0
      %2961 = vadd.xlane.f32.xlu0 %v2960
      %v2962 = vpop.xlane.xlu0 %2961
      %v2963 = vsel %vm2067, %v2911, 0.0
      %2964 = vadd.xlane.f32.xlu0 %v2963
      %v2965 = vpop.xlane.xlu0 %2964
      %v2966 = vsel %vm2067, %v2913, 0.0
      %2967 = vadd.xlane.f32.xlu0 %v2966
      %v2968 = vpop.xlane.xlu0 %2967
      %v2969 = vsel %vm2067, %v2915, 0.0
      %2970 = vadd.xlane.f32.xlu0 %v2969
      %v2971 = vpop.xlane.xlu0 %2970
      %v2972 = vsel %vm2067, %v2917, 0.0
      %2973 = vadd.xlane.f32.xlu0 %v2972
      %v2974 = vpop.xlane.xlu0 %2973
      %v2975 = vsel %vm2067, %v2919, 0.0
      %2976 = vadd.xlane.f32.xlu0 %v2975
      %v2977 = vpop.xlane.xlu0 %2976
      %v2978 = vsel %vm2067, %v2921, 0.0
      %2979 = vadd.xlane.f32.xlu0 %v2978
      %v2980 = vpop.xlane.xlu0 %2979
      %v2981 = vsel %vm2067, %v2923, 0.0
      %2982 = vadd.xlane.f32.xlu0 %v2981
      %v2983 = vpop.xlane.xlu0 %2982
      %v2984 = vsel %vm2067, %v2925, 0.0
      %2985 = vadd.xlane.f32.xlu0 %v2984
      %v2986 = vpop.xlane.xlu0 %2985
      %v2987 = vsel %vm2067, %v2927, 0.0
      %2988 = vadd.xlane.f32.xlu0 %v2987
      %v2989 = vpop.xlane.xlu0 %2988
      %v2990 = vsel %vm2067, %v2929, 0.0
      %2991 = vadd.xlane.f32.xlu0 %v2990
      %v2992 = vpop.xlane.xlu0 %2991
      %v2993 = vsel %vm2067, %v2931, 0.0
      %2994 = vadd.xlane.f32.xlu0 %v2993
      %v2995 = vpop.xlane.xlu0 %2994
      %v2996 = vadd.f32 %v2798, %v2950
      %v2997 = vadd.f32 %v2799, %v2953
      %v2998 = vadd.f32 %v2800, %v2956
      %v2999 = vadd.f32 %v2801, %v2959
      %v3000 = vadd.f32 %v2802, %v2962
      %v3001 = vadd.f32 %v2803, %v2965
      %v3002 = vadd.f32 %v2804, %v2968
      %v3003 = vadd.f32 %v2805, %v2971
      %v3004 = vadd.f32 %v2806, %v2974
      %v3005 = vadd.f32 %v2807, %v2977
      %v3006 = vadd.f32 %v2808, %v2980
      %v3007 = vadd.f32 %v2809, %v2983
      %v3008 = vadd.f32 %v2810, %v2986
      %v3009 = vadd.f32 %v2811, %v2989
      %v3010 = vadd.f32 %v2812, %v2992
      %v3011 = vadd.f32 %v2813, %v2995
      %v3012 = vrot.slane %v303, 2
      %v3013 = vrot.slane %v304, 2
      %v3014 = vsel %vm714, %v3012, %v3013
      %v3015 = vrot.slane %v305, 2
      %v3016 = vsel %vm714, %v3013, %v3015
      %3017 = vrot.lane.b32.xlu0 %v2395, 20
      %v3018 = vpop.permute.xlu0 %3017
      %3019 = vrot.lane.b32.xlu0 %v2397, 20
      %v3020 = vpop.permute.xlu0 %3019
      %3021 = vrot.lane.b32.xlu0 %v2400, 20
      %v3022 = vpop.permute.xlu0 %3021
      %3023 = vrot.lane.b32.xlu0 %v2402, 20
      %v3024 = vpop.permute.xlu0 %3023
      %3025 = vrot.lane.b32.xlu0 %v2405, 20
      %v3026 = vpop.permute.xlu0 %3025
      %3027 = vrot.lane.b32.xlu0 %v2407, 20
      %v3028 = vpop.permute.xlu0 %3027
      %3029 = vrot.lane.b32.xlu0 %v2410, 20
      %v3030 = vpop.permute.xlu0 %3029
      %3031 = vrot.lane.b32.xlu0 %v2412, 20
      %v3032 = vpop.permute.xlu0 %3031
      %3033 = vrot.lane.b32.xlu0 %v2415, 20
      %v3034 = vpop.permute.xlu0 %3033
      %3035 = vrot.lane.b32.xlu0 %v2417, 20
      %v3036 = vpop.permute.xlu0 %3035
      %3037 = vrot.lane.b32.xlu0 %v2420, 20
      %v3038 = vpop.permute.xlu0 %3037
      %3039 = vrot.lane.b32.xlu0 %v2422, 20
      %v3040 = vpop.permute.xlu0 %3039
      %3041 = vrot.lane.b32.xlu0 %v2425, 20
      %v3042 = vpop.permute.xlu0 %3041
      %3043 = vrot.lane.b32.xlu0 %v2427, 20
      %v3044 = vpop.permute.xlu0 %3043
      %3045 = vrot.lane.b32.xlu0 %v3014, 20
      %v3046 = vpop.permute.xlu0 %3045
      %3047 = vrot.lane.b32.xlu0 %v3016, 20
      %v3048 = vpop.permute.xlu0 %3047
      %v3065 = vmul.f32 %v1972, %v3018
      %v3066 = vmul.f32 %v1974, %v3020
      %v3067 = vmul.f32 %v1976, %v3022
      %v3068 = vmul.f32 %v1978, %v3024
      %v3069 = vmul.f32 %v1980, %v3026
      %v3070 = vmul.f32 %v1982, %v3028
      %v3071 = vmul.f32 %v1984, %v3030
      %v3072 = vmul.f32 %v1986, %v3032
      %v3073 = vmul.f32 %v1988, %v3034
      %v3074 = vmul.f32 %v1990, %v3036
      %v3075 = vmul.f32 %v1992, %v3038
      %v3076 = vmul.f32 %v1994, %v3040
      %v3077 = vmul.f32 %v1996, %v3042
      %v3078 = vmul.f32 %v1998, %v3044
      %v3079 = vmul.f32 %v2000, %v3046
      %v3080 = vmul.f32 %v2002, %v3048
      %3097 = vrot.lane.b32.xlu0 %v3065, 108
      %v3098 = vpop.permute.xlu0 %3097
      %3099 = vrot.lane.b32.xlu0 %v3066, 108
      %v3100 = vpop.permute.xlu0 %3099
      %3101 = vrot.lane.b32.xlu0 %v3067, 108
      %v3102 = vpop.permute.xlu0 %3101
      %3103 = vrot.lane.b32.xlu0 %v3068, 108
      %v3104 = vpop.permute.xlu0 %3103
      %3105 = vrot.lane.b32.xlu0 %v3069, 108
      %v3106 = vpop.permute.xlu0 %3105
      %3107 = vrot.lane.b32.xlu0 %v3070, 108
      %v3108 = vpop.permute.xlu0 %3107
      %3109 = vrot.lane.b32.xlu0 %v3071, 108
      %v3110 = vpop.permute.xlu0 %3109
      %3111 = vrot.lane.b32.xlu0 %v3072, 108
      %v3112 = vpop.permute.xlu0 %3111
      %3113 = vrot.lane.b32.xlu0 %v3073, 108
      %v3114 = vpop.permute.xlu0 %3113
      %3115 = vrot.lane.b32.xlu0 %v3074, 108
      %v3116 = vpop.permute.xlu0 %3115
      %3117 = vrot.lane.b32.xlu0 %v3075, 108
      %v3118 = vpop.permute.xlu0 %3117
      %3119 = vrot.lane.b32.xlu0 %v3076, 108
      %v3120 = vpop.permute.xlu0 %3119
      %3121 = vrot.lane.b32.xlu0 %v3077, 108
      %v3122 = vpop.permute.xlu0 %3121
      %3123 = vrot.lane.b32.xlu0 %v3078, 108
      %v3124 = vpop.permute.xlu0 %3123
      %3125 = vrot.lane.b32.xlu0 %v3079, 108
      %v3126 = vpop.permute.xlu0 %3125
      %3127 = vrot.lane.b32.xlu0 %v3080, 108
      %v3128 = vpop.permute.xlu0 %3127
      %v3145 = vsel %vm2067, %v3098, 0.0
      %3146 = vadd.xlane.f32.xlu0 %v3145
      %v3147 = vpop.xlane.xlu0 %3146
      %v3148 = vsel %vm2067, %v3100, 0.0
      %3149 = vadd.xlane.f32.xlu0 %v3148
      %v3150 = vpop.xlane.xlu0 %3149
      %v3151 = vsel %vm2067, %v3102, 0.0
      %3152 = vadd.xlane.f32.xlu0 %v3151
      %v3153 = vpop.xlane.xlu0 %3152
      %v3154 = vsel %vm2067, %v3104, 0.0
      %3155 = vadd.xlane.f32.xlu0 %v3154
      %v3156 = vpop.xlane.xlu0 %3155
      %v3157 = vsel %vm2067, %v3106, 0.0
      %3158 = vadd.xlane.f32.xlu0 %v3157
      %v3159 = vpop.xlane.xlu0 %3158
      %v3160 = vsel %vm2067, %v3108, 0.0
      %3161 = vadd.xlane.f32.xlu0 %v3160
      %v3162 = vpop.xlane.xlu0 %3161
      %v3163 = vsel %vm2067, %v3110, 0.0
      %3164 = vadd.xlane.f32.xlu0 %v3163
      %v3165 = vpop.xlane.xlu0 %3164
      %v3166 = vsel %vm2067, %v3112, 0.0
      %3167 = vadd.xlane.f32.xlu0 %v3166
      %v3168 = vpop.xlane.xlu0 %3167
      %v3169 = vsel %vm2067, %v3114, 0.0
      %3170 = vadd.xlane.f32.xlu0 %v3169
      %v3171 = vpop.xlane.xlu0 %3170
      %v3172 = vsel %vm2067, %v3116, 0.0
      %3173 = vadd.xlane.f32.xlu0 %v3172
      %v3174 = vpop.xlane.xlu0 %3173
      %v3175 = vsel %vm2067, %v3118, 0.0
      %3176 = vadd.xlane.f32.xlu0 %v3175
      %v3177 = vpop.xlane.xlu0 %3176
      %v3178 = vsel %vm2067, %v3120, 0.0
      %3179 = vadd.xlane.f32.xlu0 %v3178
      %v3180 = vpop.xlane.xlu0 %3179
      %v3181 = vsel %vm2067, %v3122, 0.0
      %3182 = vadd.xlane.f32.xlu0 %v3181
      %v3183 = vpop.xlane.xlu0 %3182
      %v3184 = vsel %vm2067, %v3124, 0.0
      %3185 = vadd.xlane.f32.xlu0 %v3184
      %v3186 = vpop.xlane.xlu0 %3185
      %v3187 = vsel %vm2067, %v3126, 0.0
      %3188 = vadd.xlane.f32.xlu0 %v3187
      %v3189 = vpop.xlane.xlu0 %3188
      %v3190 = vsel %vm2067, %v3128, 0.0
      %3191 = vadd.xlane.f32.xlu0 %v3190
      %v3192 = vpop.xlane.xlu0 %3191
      %v3193 = vadd.f32 %v2996, %v3147
      %v3194 = vadd.f32 %v2997, %v3150
      %v3195 = vadd.f32 %v2998, %v3153
      %v3196 = vadd.f32 %v2999, %v3156
      %v3197 = vadd.f32 %v3000, %v3159
      %v3198 = vadd.f32 %v3001, %v3162
      %v3199 = vadd.f32 %v3002, %v3165
      %v3200 = vadd.f32 %v3003, %v3168
      %v3201 = vadd.f32 %v3004, %v3171
      %v3202 = vadd.f32 %v3005, %v3174
      %v3203 = vadd.f32 %v3006, %v3177
      %v3204 = vadd.f32 %v3007, %v3180
      %v3205 = vadd.f32 %v3008, %v3183
      %v3206 = vadd.f32 %v3009, %v3186
      %v3207 = vadd.f32 %v3010, %v3189
      %v3208 = vadd.f32 %v3011, %v3192
      %3211 = vrot.lane.b32.xlu0 %v285, 24
      %v3212 = vpop.permute.xlu0 %3211
      %3213 = vrot.lane.b32.xlu0 %v286, 24
      %v3214 = vpop.permute.xlu0 %3213
      %3215 = vrot.lane.b32.xlu0 %v288, 24
      %v3216 = vpop.permute.xlu0 %3215
      %3217 = vrot.lane.b32.xlu0 %v289, 24
      %v3218 = vpop.permute.xlu0 %3217
      %3219 = vrot.lane.b32.xlu0 %v291, 24
      %v3220 = vpop.permute.xlu0 %3219
      %3221 = vrot.lane.b32.xlu0 %v292, 24
      %v3222 = vpop.permute.xlu0 %3221
      %3223 = vrot.lane.b32.xlu0 %v294, 24
      %v3224 = vpop.permute.xlu0 %3223
      %3225 = vrot.lane.b32.xlu0 %v295, 24
      %v3226 = vpop.permute.xlu0 %3225
      %3227 = vrot.lane.b32.xlu0 %v297, 24
      %v3228 = vpop.permute.xlu0 %3227
      %3229 = vrot.lane.b32.xlu0 %v298, 24
      %v3230 = vpop.permute.xlu0 %3229
      %3231 = vrot.lane.b32.xlu0 %v300, 24
      %v3232 = vpop.permute.xlu0 %3231
      %3233 = vrot.lane.b32.xlu0 %v301, 24
      %v3234 = vpop.permute.xlu0 %3233
      %3235 = vrot.lane.b32.xlu0 %v303, 24
      %v3236 = vpop.permute.xlu0 %3235
      %3237 = vrot.lane.b32.xlu0 %v304, 24
      %v3238 = vpop.permute.xlu0 %3237
      %3239 = vrot.lane.b32.xlu0 %v306, 24
      %v3240 = vpop.permute.xlu0 %3239
      %3241 = vrot.lane.b32.xlu0 %v307, 24
      %v3242 = vpop.permute.xlu0 %3241
      %v3259 = vmul.f32 %v1972, %v3212
      %v3260 = vmul.f32 %v1974, %v3214
      %v3261 = vmul.f32 %v1976, %v3216
      %v3262 = vmul.f32 %v1978, %v3218
      %v3263 = vmul.f32 %v1980, %v3220
      %v3264 = vmul.f32 %v1982, %v3222
      %v3265 = vmul.f32 %v1984, %v3224
      %v3266 = vmul.f32 %v1986, %v3226
      %v3267 = vmul.f32 %v1988, %v3228
      %v3268 = vmul.f32 %v1990, %v3230
      %v3269 = vmul.f32 %v1992, %v3232
      %v3270 = vmul.f32 %v1994, %v3234
      %v3271 = vmul.f32 %v1996, %v3236
      %v3272 = vmul.f32 %v1998, %v3238
      %v3273 = vmul.f32 %v2000, %v3240
      %v3274 = vmul.f32 %v2002, %v3242
      %3291 = vrot.lane.b32.xlu0 %v3259, 104
      %v3292 = vpop.permute.xlu0 %3291
      %3293 = vrot.lane.b32.xlu0 %v3260, 104
      %v3294 = vpop.permute.xlu0 %3293
      %3295 = vrot.lane.b32.xlu0 %v3261, 104
      %v3296 = vpop.permute.xlu0 %3295
      %3297 = vrot.lane.b32.xlu0 %v3262, 104
      %v3298 = vpop.permute.xlu0 %3297
      %3299 = vrot.lane.b32.xlu0 %v3263, 104
      %v3300 = vpop.permute.xlu0 %3299
      %3301 = vrot.lane.b32.xlu0 %v3264, 104
      %v3302 = vpop.permute.xlu0 %3301
      %3303 = vrot.lane.b32.xlu0 %v3265, 104
      %v3304 = vpop.permute.xlu0 %3303
      %3305 = vrot.lane.b32.xlu0 %v3266, 104
      %v3306 = vpop.permute.xlu0 %3305
      %3307 = vrot.lane.b32.xlu0 %v3267, 104
      %v3308 = vpop.permute.xlu0 %3307
      %3309 = vrot.lane.b32.xlu0 %v3268, 104
      %v3310 = vpop.permute.xlu0 %3309
      %3311 = vrot.lane.b32.xlu0 %v3269, 104
      %v3312 = vpop.permute.xlu0 %3311
      %3313 = vrot.lane.b32.xlu0 %v3270, 104
      %v3314 = vpop.permute.xlu0 %3313
      %3315 = vrot.lane.b32.xlu0 %v3271, 104
      %v3316 = vpop.permute.xlu0 %3315
      %3317 = vrot.lane.b32.xlu0 %v3272, 104
      %v3318 = vpop.permute.xlu0 %3317
      %3319 = vrot.lane.b32.xlu0 %v3273, 104
      %v3320 = vpop.permute.xlu0 %3319
      %3321 = vrot.lane.b32.xlu0 %v3274, 104
      %v3322 = vpop.permute.xlu0 %3321
      %v3339 = vsel %vm2067, %v3292, 0.0
      %3340 = vadd.xlane.f32.xlu0 %v3339
      %v3341 = vpop.xlane.xlu0 %3340
      %v3342 = vsel %vm2067, %v3294, 0.0
      %3343 = vadd.xlane.f32.xlu0 %v3342
      %v3344 = vpop.xlane.xlu0 %3343
      %v3345 = vsel %vm2067, %v3296, 0.0
      %3346 = vadd.xlane.f32.xlu0 %v3345
      %v3347 = vpop.xlane.xlu0 %3346
      %v3348 = vsel %vm2067, %v3298, 0.0
      %3349 = vadd.xlane.f32.xlu0 %v3348
      %v3350 = vpop.xlane.xlu0 %3349
      %v3351 = vsel %vm2067, %v3300, 0.0
      %3352 = vadd.xlane.f32.xlu0 %v3351
      %v3353 = vpop.xlane.xlu0 %3352
      %v3354 = vsel %vm2067, %v3302, 0.0
      %3355 = vadd.xlane.f32.xlu0 %v3354
      %v3356 = vpop.xlane.xlu0 %3355
      %v3357 = vsel %vm2067, %v3304, 0.0
      %3358 = vadd.xlane.f32.xlu0 %v3357
      %v3359 = vpop.xlane.xlu0 %3358
      %v3360 = vsel %vm2067, %v3306, 0.0
      %3361 = vadd.xlane.f32.xlu0 %v3360
      %v3362 = vpop.xlane.xlu0 %3361
      %v3363 = vsel %vm2067, %v3308, 0.0
      %3364 = vadd.xlane.f32.xlu0 %v3363
      %v3365 = vpop.xlane.xlu0 %3364
      %v3366 = vsel %vm2067, %v3310, 0.0
      %3367 = vadd.xlane.f32.xlu0 %v3366
      %v3368 = vpop.xlane.xlu0 %3367
      %v3369 = vsel %vm2067, %v3312, 0.0
      %3370 = vadd.xlane.f32.xlu0 %v3369
      %v3371 = vpop.xlane.xlu0 %3370
      %v3372 = vsel %vm2067, %v3314, 0.0
      %3373 = vadd.xlane.f32.xlu0 %v3372
      %v3374 = vpop.xlane.xlu0 %3373
      %v3375 = vsel %vm2067, %v3316, 0.0
      %3376 = vadd.xlane.f32.xlu0 %v3375
      %v3377 = vpop.xlane.xlu0 %3376
      %v3378 = vsel %vm2067, %v3318, 0.0
      %3379 = vadd.xlane.f32.xlu0 %v3378
      %v3380 = vpop.xlane.xlu0 %3379
      %v3381 = vsel %vm2067, %v3320, 0.0
      %3382 = vadd.xlane.f32.xlu0 %v3381
      %v3383 = vpop.xlane.xlu0 %3382
      %v3384 = vsel %vm2067, %v3322, 0.0
      %3385 = vadd.xlane.f32.xlu0 %v3384
      %v3386 = vpop.xlane.xlu0 %3385
      %v3387 = vadd.f32 %v3193, %v3341
      %v3388 = vadd.f32 %v3194, %v3344
      %v3389 = vadd.f32 %v3195, %v3347
      %v3390 = vadd.f32 %v3196, %v3350
      %v3391 = vadd.f32 %v3197, %v3353
      %v3392 = vadd.f32 %v3198, %v3356
      %v3393 = vadd.f32 %v3199, %v3359
      %v3394 = vadd.f32 %v3200, %v3362
      %v3395 = vadd.f32 %v3201, %v3365
      %v3396 = vadd.f32 %v3202, %v3368
      %v3397 = vadd.f32 %v3203, %v3371
      %v3398 = vadd.f32 %v3204, %v3374
      %v3399 = vadd.f32 %v3205, %v3377
      %v3400 = vadd.f32 %v3206, %v3380
      %v3401 = vadd.f32 %v3207, %v3383
      %v3402 = vadd.f32 %v3208, %v3386
      %v3404 = vrot.slane %v306, 1
      %v3405 = vrot.slane %v307, 1
      %v3406 = vsel %vm349, %v3404, %v3405
      %v3407 = vrot.slane %v308, 1
      %v3408 = vsel %vm349, %v3405, %v3407
      %3409 = vrot.lane.b32.xlu0 %v2168, 28
      %v3410 = vpop.permute.xlu0 %3409
      %3411 = vrot.lane.b32.xlu0 %v2170, 28
      %v3412 = vpop.permute.xlu0 %3411
      %3413 = vrot.lane.b32.xlu0 %v2173, 28
      %v3414 = vpop.permute.xlu0 %3413
      %3415 = vrot.lane.b32.xlu0 %v2175, 28
      %v3416 = vpop.permute.xlu0 %3415
      %3417 = vrot.lane.b32.xlu0 %v2178, 28
      %v3418 = vpop.permute.xlu0 %3417
      %3419 = vrot.lane.b32.xlu0 %v2180, 28
      %v3420 = vpop.permute.xlu0 %3419
      %3421 = vrot.lane.b32.xlu0 %v2183, 28
      %v3422 = vpop.permute.xlu0 %3421
      %3423 = vrot.lane.b32.xlu0 %v2185, 28
      %v3424 = vpop.permute.xlu0 %3423
      %3425 = vrot.lane.b32.xlu0 %v2188, 28
      %v3426 = vpop.permute.xlu0 %3425
      %3427 = vrot.lane.b32.xlu0 %v2190, 28
      %v3428 = vpop.permute.xlu0 %3427
      %3429 = vrot.lane.b32.xlu0 %v2193, 28
      %v3430 = vpop.permute.xlu0 %3429
      %3431 = vrot.lane.b32.xlu0 %v2195, 28
      %v3432 = vpop.permute.xlu0 %3431
      %3433 = vrot.lane.b32.xlu0 %v2817, 28
      %v3434 = vpop.permute.xlu0 %3433
      %3435 = vrot.lane.b32.xlu0 %v2819, 28
      %v3436 = vpop.permute.xlu0 %3435
      %3437 = vrot.lane.b32.xlu0 %v3406, 28
      %v3438 = vpop.permute.xlu0 %3437
      %3439 = vrot.lane.b32.xlu0 %v3408, 28
      %v3440 = vpop.permute.xlu0 %3439
      %v3457 = vmul.f32 %v1972, %v3410
      %v3458 = vmul.f32 %v1974, %v3412
      %v3459 = vmul.f32 %v1976, %v3414
      %v3460 = vmul.f32 %v1978, %v3416
      %v3461 = vmul.f32 %v1980, %v3418
      %v3462 = vmul.f32 %v1982, %v3420
      %v3463 = vmul.f32 %v1984, %v3422
      %v3464 = vmul.f32 %v1986, %v3424
      %v3465 = vmul.f32 %v1988, %v3426
      %v3466 = vmul.f32 %v1990, %v3428
      %v3467 = vmul.f32 %v1992, %v3430
      %v3468 = vmul.f32 %v1994, %v3432
      %v3469 = vmul.f32 %v1996, %v3434
      %v3470 = vmul.f32 %v1998, %v3436
      %v3471 = vmul.f32 %v2000, %v3438
      %v3472 = vmul.f32 %v2002, %v3440
      %3489 = vrot.lane.b32.xlu0 %v3457, 100
      %v3490 = vpop.permute.xlu0 %3489
      %3491 = vrot.lane.b32.xlu0 %v3458, 100
      %v3492 = vpop.permute.xlu0 %3491
      %3493 = vrot.lane.b32.xlu0 %v3459, 100
      %v3494 = vpop.permute.xlu0 %3493
      %3495 = vrot.lane.b32.xlu0 %v3460, 100
      %v3496 = vpop.permute.xlu0 %3495
      %3497 = vrot.lane.b32.xlu0 %v3461, 100
      %v3498 = vpop.permute.xlu0 %3497
      %3499 = vrot.lane.b32.xlu0 %v3462, 100
      %v3500 = vpop.permute.xlu0 %3499
      %3501 = vrot.lane.b32.xlu0 %v3463, 100
      %v3502 = vpop.permute.xlu0 %3501
      %3503 = vrot.lane.b32.xlu0 %v3464, 100
      %v3504 = vpop.permute.xlu0 %3503
      %3505 = vrot.lane.b32.xlu0 %v3465, 100
      %v3506 = vpop.permute.xlu0 %3505
      %3507 = vrot.lane.b32.xlu0 %v3466, 100
      %v3508 = vpop.permute.xlu0 %3507
      %3509 = vrot.lane.b32.xlu0 %v3467, 100
      %v3510 = vpop.permute.xlu0 %3509
      %3511 = vrot.lane.b32.xlu0 %v3468, 100
      %v3512 = vpop.permute.xlu0 %3511
      %3513 = vrot.lane.b32.xlu0 %v3469, 100
      %v3514 = vpop.permute.xlu0 %3513
      %3515 = vrot.lane.b32.xlu0 %v3470, 100
      %v3516 = vpop.permute.xlu0 %3515
      %3517 = vrot.lane.b32.xlu0 %v3471, 100
      %v3518 = vpop.permute.xlu0 %3517
      %3519 = vrot.lane.b32.xlu0 %v3472, 100
      %v3520 = vpop.permute.xlu0 %3519
      %v3537 = vsel %vm2067, %v3490, 0.0
      %3538 = vadd.xlane.f32.xlu0 %v3537
      %v3539 = vpop.xlane.xlu0 %3538
      %v3540 = vsel %vm2067, %v3492, 0.0
      %3541 = vadd.xlane.f32.xlu0 %v3540
      %v3542 = vpop.xlane.xlu0 %3541
      %v3543 = vsel %vm2067, %v3494, 0.0
      %3544 = vadd.xlane.f32.xlu0 %v3543
      %v3545 = vpop.xlane.xlu0 %3544
      %v3546 = vsel %vm2067, %v3496, 0.0
      %3547 = vadd.xlane.f32.xlu0 %v3546
      %v3548 = vpop.xlane.xlu0 %3547
      %v3549 = vsel %vm2067, %v3498, 0.0
      %3550 = vadd.xlane.f32.xlu0 %v3549
      %v3551 = vpop.xlane.xlu0 %3550
      %v3552 = vsel %vm2067, %v3500, 0.0
      %3553 = vadd.xlane.f32.xlu0 %v3552
      %v3554 = vpop.xlane.xlu0 %3553
      %v3555 = vsel %vm2067, %v3502, 0.0
      %3556 = vadd.xlane.f32.xlu0 %v3555
      %v3557 = vpop.xlane.xlu0 %3556
      %v3558 = vsel %vm2067, %v3504, 0.0
      %3559 = vadd.xlane.f32.xlu0 %v3558
      %v3560 = vpop.xlane.xlu0 %3559
      %v3561 = vsel %vm2067, %v3506, 0.0
      %3562 = vadd.xlane.f32.xlu0 %v3561
      %v3563 = vpop.xlane.xlu0 %3562
      %v3564 = vsel %vm2067, %v3508, 0.0
      %3565 = vadd.xlane.f32.xlu0 %v3564
      %v3566 = vpop.xlane.xlu0 %3565
      %v3567 = vsel %vm2067, %v3510, 0.0
      %3568 = vadd.xlane.f32.xlu0 %v3567
      %v3569 = vpop.xlane.xlu0 %3568
      %v3570 = vsel %vm2067, %v3512, 0.0
      %3571 = vadd.xlane.f32.xlu0 %v3570
      %v3572 = vpop.xlane.xlu0 %3571
      %v3573 = vsel %vm2067, %v3514, 0.0
      %3574 = vadd.xlane.f32.xlu0 %v3573
      %v3575 = vpop.xlane.xlu0 %3574
      %v3576 = vsel %vm2067, %v3516, 0.0
      %3577 = vadd.xlane.f32.xlu0 %v3576
      %v3578 = vpop.xlane.xlu0 %3577
      %v3579 = vsel %vm2067, %v3518, 0.0
      %3580 = vadd.xlane.f32.xlu0 %v3579
      %v3581 = vpop.xlane.xlu0 %3580
      %v3582 = vsel %vm2067, %v3520, 0.0
      %3583 = vadd.xlane.f32.xlu0 %v3582
      %v3584 = vpop.xlane.xlu0 %3583
      %v3585 = vadd.f32 %v3387, %v3539
      %v3586 = vadd.f32 %v3388, %v3542
      %v3587 = vadd.f32 %v3389, %v3545
      %v3588 = vadd.f32 %v3390, %v3548
      %v3589 = vadd.f32 %v3391, %v3551
      %v3590 = vadd.f32 %v3392, %v3554
      %v3591 = vadd.f32 %v3393, %v3557
      %v3592 = vadd.f32 %v3394, %v3560
      %v3593 = vadd.f32 %v3395, %v3563
      %v3594 = vadd.f32 %v3396, %v3566
      %v3595 = vadd.f32 %v3397, %v3569
      %v3596 = vadd.f32 %v3398, %v3572
      %v3597 = vadd.f32 %v3399, %v3575
      %v3598 = vadd.f32 %v3400, %v3578
      %v3599 = vadd.f32 %v3401, %v3581
      %v3600 = vadd.f32 %v3402, %v3584
      %v3601 = vrot.slane %v306, 2
      %v3602 = vrot.slane %v307, 2
      %v3603 = vsel %vm714, %v3601, %v3602
      %v3604 = vrot.slane %v308, 2
      %v3605 = vsel %vm714, %v3602, %v3604
      %3606 = vrot.lane.b32.xlu0 %v2400, 32
      %v3607 = vpop.permute.xlu0 %3606
      %3608 = vrot.lane.b32.xlu0 %v2402, 32
      %v3609 = vpop.permute.xlu0 %3608
      %3610 = vrot.lane.b32.xlu0 %v2405, 32
      %v3611 = vpop.permute.xlu0 %3610
      %3612 = vrot.lane.b32.xlu0 %v2407, 32
      %v3613 = vpop.permute.xlu0 %3612
      %3614 = vrot.lane.b32.xlu0 %v2410, 32
      %v3615 = vpop.permute.xlu0 %3614
      %3616 = vrot.lane.b32.xlu0 %v2412, 32
      %v3617 = vpop.permute.xlu0 %3616
      %3618 = vrot.lane.b32.xlu0 %v2415, 32
      %v3619 = vpop.permute.xlu0 %3618
      %3620 = vrot.lane.b32.xlu0 %v2417, 32
      %v3621 = vpop.permute.xlu0 %3620
      %3622 = vrot.lane.b32.xlu0 %v2420, 32
      %v3623 = vpop.permute.xlu0 %3622
      %3624 = vrot.lane.b32.xlu0 %v2422, 32
      %v3625 = vpop.permute.xlu0 %3624
      %3626 = vrot.lane.b32.xlu0 %v2425, 32
      %v3627 = vpop.permute.xlu0 %3626
      %3628 = vrot.lane.b32.xlu0 %v2427, 32
      %v3629 = vpop.permute.xlu0 %3628
      %3630 = vrot.lane.b32.xlu0 %v3014, 32
      %v3631 = vpop.permute.xlu0 %3630
      %3632 = vrot.lane.b32.xlu0 %v3016, 32
      %v3633 = vpop.permute.xlu0 %3632
      %3634 = vrot.lane.b32.xlu0 %v3603, 32
      %v3635 = vpop.permute.xlu0 %3634
      %3636 = vrot.lane.b32.xlu0 %v3605, 32
      %v3637 = vpop.permute.xlu0 %3636
      %v3654 = vmul.f32 %v1972, %v3607
      %v3655 = vmul.f32 %v1974, %v3609
      %v3656 = vmul.f32 %v1976, %v3611
      %v3657 = vmul.f32 %v1978, %v3613
      %v3658 = vmul.f32 %v1980, %v3615
      %v3659 = vmul.f32 %v1982, %v3617
      %v3660 = vmul.f32 %v1984, %v3619
      %v3661 = vmul.f32 %v1986, %v3621
      %v3662 = vmul.f32 %v1988, %v3623
      %v3663 = vmul.f32 %v1990, %v3625
      %v3664 = vmul.f32 %v1992, %v3627
      %v3665 = vmul.f32 %v1994, %v3629
      %v3666 = vmul.f32 %v1996, %v3631
      %v3667 = vmul.f32 %v1998, %v3633
      %v3668 = vmul.f32 %v2000, %v3635
      %v3669 = vmul.f32 %v2002, %v3637
      %3686 = vrot.lane.b32.xlu0 %v3654, 96
      %v3687 = vpop.permute.xlu0 %3686
      %3688 = vrot.lane.b32.xlu0 %v3655, 96
      %v3689 = vpop.permute.xlu0 %3688
      %3690 = vrot.lane.b32.xlu0 %v3656, 96
      %v3691 = vpop.permute.xlu0 %3690
      %3692 = vrot.lane.b32.xlu0 %v3657, 96
      %v3693 = vpop.permute.xlu0 %3692
      %3694 = vrot.lane.b32.xlu0 %v3658, 96
      %v3695 = vpop.permute.xlu0 %3694
      %3696 = vrot.lane.b32.xlu0 %v3659, 96
      %v3697 = vpop.permute.xlu0 %3696
      %3698 = vrot.lane.b32.xlu0 %v3660, 96
      %v3699 = vpop.permute.xlu0 %3698
      %3700 = vrot.lane.b32.xlu0 %v3661, 96
      %v3701 = vpop.permute.xlu0 %3700
      %3702 = vrot.lane.b32.xlu0 %v3662, 96
      %v3703 = vpop.permute.xlu0 %3702
      %3704 = vrot.lane.b32.xlu0 %v3663, 96
      %v3705 = vpop.permute.xlu0 %3704
      %3706 = vrot.lane.b32.xlu0 %v3664, 96
      %v3707 = vpop.permute.xlu0 %3706
      %3708 = vrot.lane.b32.xlu0 %v3665, 96
      %v3709 = vpop.permute.xlu0 %3708
      %3710 = vrot.lane.b32.xlu0 %v3666, 96
      %v3711 = vpop.permute.xlu0 %3710
      %3712 = vrot.lane.b32.xlu0 %v3667, 96
      %v3713 = vpop.permute.xlu0 %3712
      %3714 = vrot.lane.b32.xlu0 %v3668, 96
      %v3715 = vpop.permute.xlu0 %3714
      %3716 = vrot.lane.b32.xlu0 %v3669, 96
      %v3717 = vpop.permute.xlu0 %3716
      %v3734 = vsel %vm2067, %v3687, 0.0
      %3735 = vadd.xlane.f32.xlu0 %v3734
      %v3736 = vpop.xlane.xlu0 %3735
      %v3737 = vsel %vm2067, %v3689, 0.0
      %3738 = vadd.xlane.f32.xlu0 %v3737
      %v3739 = vpop.xlane.xlu0 %3738
      %v3740 = vsel %vm2067, %v3691, 0.0
      %3741 = vadd.xlane.f32.xlu0 %v3740
      %v3742 = vpop.xlane.xlu0 %3741
      %v3743 = vsel %vm2067, %v3693, 0.0
      %3744 = vadd.xlane.f32.xlu0 %v3743
      %v3745 = vpop.xlane.xlu0 %3744
      %v3746 = vsel %vm2067, %v3695, 0.0
      %3747 = vadd.xlane.f32.xlu0 %v3746
      %v3748 = vpop.xlane.xlu0 %3747
      %v3749 = vsel %vm2067, %v3697, 0.0
      %3750 = vadd.xlane.f32.xlu0 %v3749
      %v3751 = vpop.xlane.xlu0 %3750
      %v3752 = vsel %vm2067, %v3699, 0.0
      %3753 = vadd.xlane.f32.xlu0 %v3752
      %v3754 = vpop.xlane.xlu0 %3753
      %v3755 = vsel %vm2067, %v3701, 0.0
      %3756 = vadd.xlane.f32.xlu0 %v3755
      %v3757 = vpop.xlane.xlu0 %3756
      %v3758 = vsel %vm2067, %v3703, 0.0
      %3759 = vadd.xlane.f32.xlu0 %v3758
      %v3760 = vpop.xlane.xlu0 %3759
      %v3761 = vsel %vm2067, %v3705, 0.0
      %3762 = vadd.xlane.f32.xlu0 %v3761
      %v3763 = vpop.xlane.xlu0 %3762
      %v3764 = vsel %vm2067, %v3707, 0.0
      %3765 = vadd.xlane.f32.xlu0 %v3764
      %v3766 = vpop.xlane.xlu0 %3765
      %v3767 = vsel %vm2067, %v3709, 0.0
      %3768 = vadd.xlane.f32.xlu0 %v3767
      %v3769 = vpop.xlane.xlu0 %3768
      %v3770 = vsel %vm2067, %v3711, 0.0
      %3771 = vadd.xlane.f32.xlu0 %v3770
      %v3772 = vpop.xlane.xlu0 %3771
      %v3773 = vsel %vm2067, %v3713, 0.0
      %3774 = vadd.xlane.f32.xlu0 %v3773
      %v3775 = vpop.xlane.xlu0 %3774
      %v3776 = vsel %vm2067, %v3715, 0.0
      %3777 = vadd.xlane.f32.xlu0 %v3776
      %v3778 = vpop.xlane.xlu0 %3777
      %v3779 = vsel %vm2067, %v3717, 0.0
      %3780 = vadd.xlane.f32.xlu0 %v3779
      %v3781 = vpop.xlane.xlu0 %3780
      %v3782 = vadd.f32 %v3585, %v3736
      %v3783 = vadd.f32 %v3586, %v3739
      %v3784 = vadd.f32 %v3587, %v3742
      %v3785 = vadd.f32 %v3588, %v3745
      %v3786 = vadd.f32 %v3589, %v3748
      %v3787 = vadd.f32 %v3590, %v3751
      %v3788 = vadd.f32 %v3591, %v3754
      %v3789 = vadd.f32 %v3592, %v3757
      %v3790 = vadd.f32 %v3593, %v3760
      %v3791 = vadd.f32 %v3594, %v3763
      %v3792 = vadd.f32 %v3595, %v3766
      %v3793 = vadd.f32 %v3596, %v3769
      %v3794 = vadd.f32 %v3597, %v3772
      %v3795 = vadd.f32 %v3598, %v3775
      %v3796 = vadd.f32 %v3599, %v3778
      %v3797 = vadd.f32 %v3600, %v3781
      %v3798 = vrcp.pop %v2005
      %v3799 = vrcp.pop %v2008
      %v3800 = vrcp.pop %v2011
      %v3801 = vrcp.pop %v2014
      %v3802 = vrcp.pop %v2017
      %v3803 = vrcp.pop %v2020
      %v3804 = vrcp.pop %v2023
      %v3805 = vrcp.pop %v2026
      %v3806 = vrcp.pop %v2029
      %v3807 = vrcp.pop %v2032
      %v3808 = vrcp.pop %v2035
      %v3809 = vrcp.pop %v2038
      %v3810 = vrcp.pop %v2041
      %v3811 = vrcp.pop %v2044
      %v3812 = vrcp.pop %v2047
      %v3813 = vrcp.pop %v2050
      %v3814 = vmul.f32 %v3782, %v3798
      %v3815 = vmul.f32 %v3783, %v3799
      %v3816 = vmul.f32 %v3784, %v3800
      %v3817 = vmul.f32 %v3785, %v3801
      %v3818 = vmul.f32 %v3786, %v3802
      %v3819 = vmul.f32 %v3787, %v3803
      %v3820 = vmul.f32 %v3788, %v3804
      %v3821 = vmul.f32 %v3789, %v3805
      %v3822 = vmul.f32 %v3790, %v3806
      %v3823 = vmul.f32 %v3791, %v3807
      %v3824 = vmul.f32 %v3792, %v3808
      %v3825 = vmul.f32 %v3793, %v3809
      %v3826 = vmul.f32 %v3794, %v3810
      %v3827 = vmul.f32 %v3795, %v3811
      %v3828 = vmul.f32 %v3796, %v3812
      %v3829 = vmul.f32 %v3797, %v3813
      %vm3830 = vcmask 7168
      %3831 = vst.msk [vmem:[%s217] sm:$0xff] %vm3830, %v3814
      %3832 = vst.msk [vmem:[%s217 + $0x8] sm:$0xff] %vm3830, %v3815
      %3833 = vst.msk [vmem:[%s217 + $0x10] sm:$0xff] %vm3830, %v3816
      %3834 = vst.msk [vmem:[%s217 + $0x18] sm:$0xff] %vm3830, %v3817
      %3835 = vst.msk [vmem:[%s217 + $0x20] sm:$0xff] %vm3830, %v3818
      %3836 = vst.msk [vmem:[%s217 + $0x28] sm:$0xff] %vm3830, %v3819
      %3837 = vst.msk [vmem:[%s217 + $0x30] sm:$0xff] %vm3830, %v3820
      %3838 = vst.msk [vmem:[%s217 + $0x38] sm:$0xff] %vm3830, %v3821
      %3839 = vst.msk [vmem:[%s217 + $0x40] sm:$0xff] %vm3830, %v3822
      %3840 = vst.msk [vmem:[%s217 + $0x48] sm:$0xff] %vm3830, %v3823
      %3841 = vst.msk [vmem:[%s217 + $0x50] sm:$0xff] %vm3830, %v3824
      %3842 = vst.msk [vmem:[%s217 + $0x58] sm:$0xff] %vm3830, %v3825
      %3843 = vst.msk [vmem:[%s217 + $0x60] sm:$0xff] %vm3830, %v3826
      %3844 = vst.msk [vmem:[%s217 + $0x68] sm:$0xff] %vm3830, %v3827
      %3845 = vst.msk [vmem:[%s217 + $0x70] sm:$0xff] %vm3830, %v3828
      %3846 = vst.msk [vmem:[%s217 + $0x78] sm:$0xff] %vm3830, %v3829
      %p3847 = scmp.lt.s32.totalorder %s15, 3
      %s3848 = scalar_select %p3847, %s15, 3
      %s3849 = smul.addr %s3848, 16
      %s3850 = smul.addr %s3849, 8
      %s3851 = scalar_lea.vmem %s4, %s3850
      // Predicated region
      $region37: #{local_filter_operation.13} parent=35 // pred_check
        %p3852 = pneg %p127
      $region38: #{local_filter_operation.13} parent=35 // pred_check_branch
        %3854 = sbr.rel (%p3852) target = $region40
      $region39: #{local_filter_operation.13} parent=35 // pred_region
        _
      $region40: #{local_filter_operation.13} parent=35 // pred_fallthru
        _
    $region36: #{local_filter_operation.13} parent=5 // pred_fallthru
      _
    %p3855 = scmp.le.s32.totalorder 2, %s10
    // Predicated region
    $region41: #{local_filter_operation.13} parent=5 // pred_check
      %p3856 = pneg %p3855
    $region42: #{local_filter_operation.13} parent=5 // pred_check_branch
      %3858 = sbr.rel (%p3856) target = $region44
    $region43: #{local_filter_operation.13} parent=5 // pred_region
      %s3859 = ssub.s32 %s10, 2
      // Predicated region
      $region45: #{local_filter_operation.13} parent=43 // pred_check
        %p3860 = pneg %p133
      $region46: #{local_filter_operation.13} parent=43 // pred_check_branch
        %3862 = sbr.rel (%p3860) target = $region48
      $region47: #{local_filter_operation.13} parent=43 // pred_region
        %p3863 = scmp.lt.s32.totalorder %s16, 3
        %s3864 = scalar_select %p3863, %s16, 3
        %s3865 = smul.addr %s3864, 16
        %s3866 = smul.addr %s3865, 8
        %s3867 = scalar_lea.vmem %s4, %s3866
      $region48: #{local_filter_operation.13} parent=43 // pred_fallthru
        _
    $region44: #{local_filter_operation.13} parent=5 // pred_fallthru
      _
  $region6: #{local_filter_operation.13} parent=0 // loop_footer
    %s14 = sadd.s32 1, %s10
  $region7: #{local_filter_operation.13} parent=0 // loop_footer_branch
    %9 = sbr.rel target = $region3
  $region8: #{local_filter_operation.13} parent=0 // loop_exit
    _

</llo_original>
